<compile_context>
chip_gen: v6e
topology: v6e:2x2x1
jax: 0.10.0
libtpu: 0.0.40
codegen_flags: <defaults>
</compile_context>

<pallas_src>
import math

import jax
import jax.numpy as jnp
from jax.experimental import pallas as pl
from jax.experimental.pallas import tpu as pltpu

# ----------------------- model hyper-parameters (small) -----------------------
D_MODEL = 32
N_HEAD = 4
HEAD_DIM = D_MODEL // N_HEAD
N_LAYERS = 2
MLP_RATIO = 4.0
INNER_DIM = int(D_MODEL * MLP_RATIO)
LN_EPS_BLOCK = 1e-5   # nn.LayerNorm default inside Block
LN_EPS_FINAL = 1e-6   # FlashTransformer.norm eps


# ----------------------------- in-kernel helpers ------------------------------
def _erf(x):
    # Abramowitz & Stegun 7.1.26 (max abs err ~1.5e-7): matches exact erf-GELU
    # to float32 precision using only Mosaic-supported elementwise ops.
    a1, a2, a3, a4, a5 = 0.254829592, -0.284496736, 1.421413741, -1.453152027, 1.061405429
    p = 0.3275911
    sgn = jnp.where(x >= 0.0, 1.0, -1.0)
    ax = jnp.abs(x)
    t = 1.0 / (1.0 + p * ax)
    poly = ((((a5 * t + a4) * t + a3) * t + a2) * t + a1) * t
    return sgn * (1.0 - poly * jnp.exp(-ax * ax))


def _gelu_exact(x):
    # nn.GELU() default (erf formulation)
    return 0.5 * x * (1.0 + _erf(x * 0.7071067811865475))


def _layernorm(x, w, b, eps):
    mu = jnp.mean(x, axis=-1, keepdims=True)
    xc = x - mu
    var = jnp.mean(xc * xc, axis=-1, keepdims=True)
    return xc * jax.lax.rsqrt(var + eps) * w + b


# ------------------------------ fused Pallas kernel ---------------------------
def fused_transformer_kernel(x_ref,
                             ln1w_ref, ln1b_ref,
                             wq_ref, wk_ref, wv_ref,
                             bq_ref, bk_ref, bv_ref,
                             wo_ref, bo_ref,
                             ln2w_ref, ln2b_ref,
                             w1_ref, b1_ref, w2_ref, b2_ref,
                             lnfw_ref, lnfb_ref,
                             out_ref):
    h = x_ref[0]                       # (S, D) f32 activation, resident in VMEM/vregs
    res = jnp.zeros_like(h)            # residual starts as None in the reference
    scale = 1.0 / math.sqrt(HEAD_DIM)
    S = h.shape[0]

    for l in range(N_LAYERS):          # static unroll over layers (all fused)
        # residual branch 1 + pre-norm
        res1 = h + res
        hn = _layernorm(res1, ln1w_ref[l], ln1b_ref[l], LN_EPS_BLOCK)

        # ---- self-attention (MHA, non-causal) ----
        # Per-head projections come straight from per-head weight slabs; the
        # out-projection is accumulated per head (no activation slicing / concat).
        attn = jnp.zeros((S, D_MODEL), jnp.float32)
        for hh in range(N_HEAD):       # static unroll over heads
            q = jnp.dot(hn, wq_ref[l, hh], preferred_element_type=jnp.float32) + bq_ref[l, hh]
            k = jnp.dot(hn, wk_ref[l, hh], preferred_element_type=jnp.float32) + bk_ref[l, hh]
            v = jnp.dot(hn, wv_ref[l, hh], preferred_element_type=jnp.float32) + bv_ref[l, hh]
            s = jax.lax.dot_general(q, k, (((1,), (1,)), ((), ())),
                                    preferred_element_type=jnp.float32) * scale
            s = s - jnp.max(s, axis=-1, keepdims=True)
            e = jnp.exp(s)
            p = e * pl.reciprocal(jnp.sum(e, axis=-1, keepdims=True), approx=True)
            pv = jnp.dot(p, v, preferred_element_type=jnp.float32)          # (S, HD)
            attn = attn + jnp.dot(pv, wo_ref[l, hh],
                                  preferred_element_type=jnp.float32)       # (S, D)
        attn = attn + bo_ref[l]

        # residual branch 2 + MLP
        res2 = attn + res1
        hn2 = _layernorm(res2, ln2w_ref[l], ln2b_ref[l], LN_EPS_BLOCK)
        m = jnp.dot(hn2, w1_ref[l], preferred_element_type=jnp.float32) + b1_ref[l]
        m = _gelu_exact(m)
        m = jnp.dot(m, w2_ref[l], preferred_element_type=jnp.float32) + b2_ref[l]

        h = m
        res = res2

    # final: dropout/drop_path identity -> out = LayerNorm(hidden + residual)
    out_ref[0] = _layernorm(h + res, lnfw_ref[...], lnfb_ref[...], LN_EPS_FINAL)


# ------------------------------ wrapper (glue) ---------------------------------
WEIGHT_ORDER = ("ln1w", "ln1b", "wq", "wk", "wv", "bq", "bk", "bv",
                "wo", "bo", "ln2w", "ln2b", "w1", "b1", "w2", "b2",
                "lnfw", "lnfb")


def _weight_spec(shape):
    nd = len(shape)
    return pl.BlockSpec(shape, lambda b, _nd=nd: (0,) * _nd)


@jax.jit
def flash_transformer_forward(hidden, params):
    B, S, D = hidden.shape
    act_spec = pl.BlockSpec((1, S, D), lambda b: (b, 0, 0))
    weight_args = tuple(params[name] for name in WEIGHT_ORDER)
    return pl.pallas_call(
        fused_transformer_kernel,
        grid=(B,),
        in_specs=[act_spec] + [_weight_spec(w.shape) for w in weight_args],
        out_specs=act_spec,
        out_shape=jax.ShapeDtypeStruct((B, S, D), jnp.float32),
        compiler_params=pltpu.CompilerParams(dimension_semantics=("parallel",)),
    )(hidden, *weight_args)


# ----------------------------- parameter creation ------------------------------
def _trunc_normal(key, shape, std=0.02):
    # timm/ViT init: trunc_normal_(std=0.02), truncation at +/- 2 std
    return std * jax.random.truncated_normal(key, -2.0, 2.0, shape, jnp.float32)


def init_params(key):
    ln1w, ln1b, wq, wk, wv, bq, bk, bv = [], [], [], [], [], [], [], []
    wo, bo, ln2w, ln2b, w1, b1, w2, b2 = [], [], [], [], [], [], [], []

    def split_head_cols(w2d):   # (D_in, D) fused-block -> (H, D_in, HD), head-major cols
        return w2d.reshape(D_MODEL, N_HEAD, HEAD_DIM).transpose(1, 0, 2)

    for _ in range(N_LAYERS):
        key, k1, k2, k3, k4 = jax.random.split(key, 5)

        ln1w.append(jnp.ones((1, D_MODEL), jnp.float32))
        ln1b.append(jnp.zeros((1, D_MODEL), jnp.float32))

        # torch Linear weight is (out, in); transpose -> (in, out) = (D, 3D).
        # Fused-qkv output feature layout is "(three h d)" (q|k|v blocks, head-major).
        wqkv_t = _trunc_normal(k1, (3 * D_MODEL, D_MODEL)).T
        bqkv = jnp.zeros((3 * D_MODEL,), jnp.float32)
        wq.append(split_head_cols(wqkv_t[:, 0:D_MODEL]))
        wk.append(split_head_cols(wqkv_t[:, D_MODEL:2 * D_MODEL]))
        wv.append(split_head_cols(wqkv_t[:, 2 * D_MODEL:3 * D_MODEL]))
        bq.append(bqkv[0:D_MODEL].reshape(N_HEAD, 1, HEAD_DIM))
        bk.append(bqkv[D_MODEL:2 * D_MODEL].reshape(N_HEAD, 1, HEAD_DIM))
        bv.append(bqkv[2 * D_MODEL:3 * D_MODEL].reshape(N_HEAD, 1, HEAD_DIM))

        # out-projection input feature layout is "(h d)" head-major rows.
        wout_t = _trunc_normal(k2, (D_MODEL, D_MODEL)).T          # (in, out)
        wo.append(wout_t.reshape(N_HEAD, HEAD_DIM, D_MODEL))      # (H, HD, D)
        bo.append(jnp.zeros((1, D_MODEL), jnp.float32))

        ln2w.append(jnp.ones((1, D_MODEL), jnp.float32))
        ln2b.append(jnp.zeros((1, D_MODEL), jnp.float32))

        w1.append(_trunc_normal(k3, (INNER_DIM, D_MODEL)).T)      # (D, INNER)
        b1.append(jnp.zeros((1, INNER_DIM), jnp.float32))
        w2.append(_trunc_normal(k4, (D_MODEL, INNER_DIM)).T)      # (INNER, D)
        b2.append(jnp.zeros((1, D_MODEL), jnp.float32))

    return dict(
        ln1w=jnp.stack(ln1w), ln1b=jnp.stack(ln1b),
        wq=jnp.stack(wq), wk=jnp.stack(wk), wv=jnp.stack(wv),
        bq=jnp.stack(bq), bk=jnp.stack(bk), bv=jnp.stack(bv),
        wo=jnp.stack(wo), bo=jnp.stack(bo),
        ln2w=jnp.stack(ln2w), ln2b=jnp.stack(ln2b),
        w1=jnp.stack(w1), b1=jnp.stack(b1), w2=jnp.stack(w2), b2=jnp.stack(b2),
        lnfw=jnp.ones((1, D_MODEL), jnp.float32),
        lnfb=jnp.zeros((1, D_MODEL), jnp.float32),
    )


# TODO(synk): dropout / StochasticDepth(drop_path) are identity at inference and
# are therefore not materialized in-kernel; training-mode RNG paths, cross-attn,
# padding masks and return_qkv branches are omitted.

if __name__ == "__main__":
    key = jax.random.PRNGKey(0)
    k_x, k_p = jax.random.split(key)
    B, S = 2, 8
    x = jax.random.normal(k_x, (B, S, D_MODEL), jnp.float32)
    params = init_params(k_p)

    out = flash_transformer_forward(x, params)
    out = jax.block_until_ready(out)
    assert out.shape == (B, S, D_MODEL) and out.dtype == jnp.float32
    assert bool(jnp.all(jnp.isfinite(out)))
    print("KERNEL_OK")
</pallas_src>

<mosaic_0001>
module attributes {stable_mosaic.version = 11 : i64} {
  func.func @fused_transformer_kernel(%arg0: i32, %arg1: memref<1x8x32xf32, #tpu.memory_space<vmem>>, %arg2: memref<2x1x32xf32, #tpu.memory_space<vmem>>, %arg3: memref<2x1x32xf32, #tpu.memory_space<vmem>>, %arg4: memref<2x4x32x8xf32, #tpu.memory_space<vmem>>, %arg5: memref<2x4x32x8xf32, #tpu.memory_space<vmem>>, %arg6: memref<2x4x32x8xf32, #tpu.memory_space<vmem>>, %arg7: memref<2x4x1x8xf32, #tpu.memory_space<vmem>>, %arg8: memref<2x4x1x8xf32, #tpu.memory_space<vmem>>, %arg9: memref<2x4x1x8xf32, #tpu.memory_space<vmem>>, %arg10: memref<2x4x8x32xf32, #tpu.memory_space<vmem>>, %arg11: memref<2x1x32xf32, #tpu.memory_space<vmem>>, %arg12: memref<2x1x32xf32, #tpu.memory_space<vmem>>, %arg13: memref<2x1x32xf32, #tpu.memory_space<vmem>>, %arg14: memref<2x32x128xf32, #tpu.memory_space<vmem>>, %arg15: memref<2x1x128xf32, #tpu.memory_space<vmem>>, %arg16: memref<2x128x32xf32, #tpu.memory_space<vmem>>, %arg17: memref<2x1x32xf32, #tpu.memory_space<vmem>>, %arg18: memref<1x32xf32, #tpu.memory_space<vmem>>, %arg19: memref<1x32xf32, #tpu.memory_space<vmem>>, %arg20: memref<1x8x32xf32, #tpu.memory_space<vmem>>) attributes {dimension_semantics = [#tpu.dimension_semantics<parallel>], iteration_bounds = array<i64: 2>, scalar_prefetch = 0 : i64, scratch_operands = 0 : i64, tpu.core_type = #tpu.core_type<tc>, window_params = [{transform_indices = @transform_0, window_bounds = array<i64: 1, 8, 32>}, {pipeline_mode = #tpu.pipeline_mode<synchronous>, transform_indices = @transform_1, window_bounds = array<i64: 2, 1, 32>}, {pipeline_mode = #tpu.pipeline_mode<synchronous>, transform_indices = @transform_2, window_bounds = array<i64: 2, 1, 32>}, {pipeline_mode = #tpu.pipeline_mode<synchronous>, transform_indices = @transform_3, window_bounds = array<i64: 2, 4, 32, 8>}, {pipeline_mode = #tpu.pipeline_mode<synchronous>, transform_indices = @transform_4, window_bounds = array<i64: 2, 4, 32, 8>}, {pipeline_mode = #tpu.pipeline_mode<synchronous>, transform_indices = @transform_5, window_bounds = array<i64: 2, 4, 32, 8>}, {pipeline_mode = #tpu.pipeline_mode<synchronous>, transform_indices = @transform_6, window_bounds = array<i64: 2, 4, 1, 8>}, {pipeline_mode = #tpu.pipeline_mode<synchronous>, transform_indices = @transform_7, window_bounds = array<i64: 2, 4, 1, 8>}, {pipeline_mode = #tpu.pipeline_mode<synchronous>, transform_indices = @transform_8, window_bounds = array<i64: 2, 4, 1, 8>}, {pipeline_mode = #tpu.pipeline_mode<synchronous>, transform_indices = @transform_9, window_bounds = array<i64: 2, 4, 8, 32>}, {pipeline_mode = #tpu.pipeline_mode<synchronous>, transform_indices = @transform_10, window_bounds = array<i64: 2, 1, 32>}, {pipeline_mode = #tpu.pipeline_mode<synchronous>, transform_indices = @transform_11, window_bounds = array<i64: 2, 1, 32>}, {pipeline_mode = #tpu.pipeline_mode<synchronous>, transform_indices = @transform_12, window_bounds = array<i64: 2, 1, 32>}, {pipeline_mode = #tpu.pipeline_mode<synchronous>, transform_indices = @transform_13, window_bounds = array<i64: 2, 32, 128>}, {pipeline_mode = #tpu.pipeline_mode<synchronous>, transform_indices = @transform_14, window_bounds = array<i64: 2, 1, 128>}, {pipeline_mode = #tpu.pipeline_mode<synchronous>, transform_indices = @transform_15, window_bounds = array<i64: 2, 128, 32>}, {pipeline_mode = #tpu.pipeline_mode<synchronous>, transform_indices = @transform_16, window_bounds = array<i64: 2, 1, 32>}, {pipeline_mode = #tpu.pipeline_mode<synchronous>, transform_indices = @transform_17, window_bounds = array<i64: 1, 32>}, {pipeline_mode = #tpu.pipeline_mode<synchronous>, transform_indices = @transform_18, window_bounds = array<i64: 1, 32>}, {transform_indices = @transform_19, window_bounds = array<i64: 1, 8, 32>}]} {
    %c0 = arith.constant 0 : index
    %c0_0 = arith.constant 0 : index
    %c0_1 = arith.constant 0 : index
    %0 = vector.load %arg1[%c0, %c0_0, %c0_1] : memref<1x8x32xf32, #tpu.memory_space<vmem>>, vector<1x8x32xf32>
    %1 = vector.shape_cast %0 : vector<1x8x32xf32> to vector<8x32xf32>
    %cst = arith.constant 0.000000e+00 : f32
    %2 = vector.broadcast %cst : f32 to vector<8x32xf32>
    %3 = arith.addf %1, %2 : vector<8x32xf32>
    %c0_2 = arith.constant 0 : index
    %c0_3 = arith.constant 0 : index
    %c0_4 = arith.constant 0 : index
    %4 = vector.load %arg2[%c0_2, %c0_3, %c0_4] : memref<2x1x32xf32, #tpu.memory_space<vmem>>, vector<1x1x32xf32>
    %5 = vector.shape_cast %4 : vector<1x1x32xf32> to vector<1x32xf32>
    %c0_5 = arith.constant 0 : index
    %c0_6 = arith.constant 0 : index
    %c0_7 = arith.constant 0 : index
    %6 = vector.load %arg3[%c0_5, %c0_6, %c0_7] : memref<2x1x32xf32, #tpu.memory_space<vmem>>, vector<1x1x32xf32>
    %7 = vector.shape_cast %6 : vector<1x1x32xf32> to vector<1x32xf32>
    %cst_8 = arith.constant dense<0.000000e+00> : vector<8xf32>
    %8 = vector.multi_reduction <add>, %3, %cst_8 [1] : vector<8x32xf32> to vector<8xf32>
    %9 = vector.shape_cast %8 : vector<8xf32> to vector<8x1xf32>
    %cst_9 = arith.constant 3.200000e+01 : f32
    %10 = vector.broadcast %cst_9 : f32 to vector<8x1xf32>
    %11 = arith.divf %9, %10 : vector<8x1xf32>
    %12 = vector.broadcast %11 : vector<8x1xf32> to vector<8x32xf32>
    %13 = arith.subf %3, %12 : vector<8x32xf32>
    %14 = arith.mulf %13, %13 : vector<8x32xf32>
    %cst_10 = arith.constant dense<0.000000e+00> : vector<8xf32>
    %15 = vector.multi_reduction <add>, %14, %cst_10 [1] : vector<8x32xf32> to vector<8xf32>
    %16 = vector.shape_cast %15 : vector<8xf32> to vector<8x1xf32>
    %cst_11 = arith.constant 3.200000e+01 : f32
    %17 = vector.broadcast %cst_11 : f32 to vector<8x1xf32>
    %18 = arith.divf %16, %17 : vector<8x1xf32>
    %cst_12 = arith.constant 9.99999974E-6 : f32
    %19 = vector.broadcast %cst_12 : f32 to vector<8x1xf32>
    %20 = arith.addf %18, %19 : vector<8x1xf32>
    %21 = math.rsqrt %20 : vector<8x1xf32>
    %22 = vector.broadcast %21 : vector<8x1xf32> to vector<8x32xf32>
    %23 = arith.mulf %13, %22 : vector<8x32xf32>
    %24 = vector.broadcast %5 : vector<1x32xf32> to vector<8x32xf32>
    %25 = arith.mulf %23, %24 : vector<8x32xf32>
    %26 = vector.broadcast %7 : vector<1x32xf32> to vector<8x32xf32>
    %27 = arith.addf %25, %26 : vector<8x32xf32>
    %cst_13 = arith.constant 0.000000e+00 : f32
    %28 = vector.broadcast %cst_13 : f32 to vector<8x32xf32>
    %c0_14 = arith.constant 0 : index
    %c0_15 = arith.constant 0 : index
    %c0_16 = arith.constant 0 : index
    %c0_17 = arith.constant 0 : index
    %29 = vector.load %arg4[%c0_14, %c0_15, %c0_16, %c0_17] : memref<2x4x32x8xf32, #tpu.memory_space<vmem>>, vector<1x1x32x8xf32>
    %30 = vector.shape_cast %29 : vector<1x1x32x8xf32> to vector<32x8xf32>
    %cst_18 = arith.constant dense<0.000000e+00> : vector<8x8xf32>
    %31 = tpu.matmul %27, %30, %cst_18 {dimension_numbers = #tpu.dot_dimension_numbers<[1], [0], [0], [1], [0, 0, 1, 1], [], []>} : vector<8x32xf32>, vector<32x8xf32>, vector<8x8xf32> -> vector<8x8xf32>
    %c0_19 = arith.constant 0 : index
    %c0_20 = arith.constant 0 : index
    %c0_21 = arith.constant 0 : index
    %c0_22 = arith.constant 0 : index
    %32 = vector.load %arg7[%c0_19, %c0_20, %c0_21, %c0_22] : memref<2x4x1x8xf32, #tpu.memory_space<vmem>>, vector<1x1x1x8xf32>
    %33 = vector.shape_cast %32 : vector<1x1x1x8xf32> to vector<1x8xf32>
    %34 = vector.broadcast %33 : vector<1x8xf32> to vector<8x8xf32>
    %35 = arith.addf %31, %34 : vector<8x8xf32>
    %c0_23 = arith.constant 0 : index
    %c0_24 = arith.constant 0 : index
    %c0_25 = arith.constant 0 : index
    %c0_26 = arith.constant 0 : index
    %36 = vector.load %arg5[%c0_23, %c0_24, %c0_25, %c0_26] : memref<2x4x32x8xf32, #tpu.memory_space<vmem>>, vector<1x1x32x8xf32>
    %37 = vector.shape_cast %36 : vector<1x1x32x8xf32> to vector<32x8xf32>
    %cst_27 = arith.constant dense<0.000000e+00> : vector<8x8xf32>
    %38 = tpu.matmul %27, %37, %cst_27 {dimension_numbers = #tpu.dot_dimension_numbers<[1], [0], [0], [1], [0, 0, 1, 1], [], []>} : vector<8x32xf32>, vector<32x8xf32>, vector<8x8xf32> -> vector<8x8xf32>
    %c0_28 = arith.constant 0 : index
    %c0_29 = arith.constant 0 : index
    %c0_30 = arith.constant 0 : index
    %c0_31 = arith.constant 0 : index
    %39 = vector.load %arg8[%c0_28, %c0_29, %c0_30, %c0_31] : memref<2x4x1x8xf32, #tpu.memory_space<vmem>>, vector<1x1x1x8xf32>
    %40 = vector.shape_cast %39 : vector<1x1x1x8xf32> to vector<1x8xf32>
    %41 = vector.broadcast %40 : vector<1x8xf32> to vector<8x8xf32>
    %42 = arith.addf %38, %41 : vector<8x8xf32>
    %c0_32 = arith.constant 0 : index
    %c0_33 = arith.constant 0 : index
    %c0_34 = arith.constant 0 : index
    %c0_35 = arith.constant 0 : index
    %43 = vector.load %arg6[%c0_32, %c0_33, %c0_34, %c0_35] : memref<2x4x32x8xf32, #tpu.memory_space<vmem>>, vector<1x1x32x8xf32>
    %44 = vector.shape_cast %43 : vector<1x1x32x8xf32> to vector<32x8xf32>
    %cst_36 = arith.constant dense<0.000000e+00> : vector<8x8xf32>
    %45 = tpu.matmul %27, %44, %cst_36 {dimension_numbers = #tpu.dot_dimension_numbers<[1], [0], [0], [1], [0, 0, 1, 1], [], []>} : vector<8x32xf32>, vector<32x8xf32>, vector<8x8xf32> -> vector<8x8xf32>
    %c0_37 = arith.constant 0 : index
    %c0_38 = arith.constant 0 : index
    %c0_39 = arith.constant 0 : index
    %c0_40 = arith.constant 0 : index
    %46 = vector.load %arg9[%c0_37, %c0_38, %c0_39, %c0_40] : memref<2x4x1x8xf32, #tpu.memory_space<vmem>>, vector<1x1x1x8xf32>
    %47 = vector.shape_cast %46 : vector<1x1x1x8xf32> to vector<1x8xf32>
    %48 = vector.broadcast %47 : vector<1x8xf32> to vector<8x8xf32>
    %49 = arith.addf %45, %48 : vector<8x8xf32>
    %cst_41 = arith.constant dense<0.000000e+00> : vector<8x8xf32>
    %50 = tpu.matmul %35, %42, %cst_41 {dimension_numbers = #tpu.dot_dimension_numbers<[1], [1], [0], [0], [0, 0, 1, 0], [], []>} : vector<8x8xf32>, vector<8x8xf32>, vector<8x8xf32> -> vector<8x8xf32>
    %cst_42 = arith.constant 0.353553385 : f32
    %51 = vector.broadcast %cst_42 : f32 to vector<8x8xf32>
    %52 = arith.mulf %50, %51 : vector<8x8xf32>
    %cst_43 = arith.constant dense<0xFF800000> : vector<8xf32>
    %53 = vector.multi_reduction <maximumf>, %52, %cst_43 [1] : vector<8x8xf32> to vector<8xf32>
    %54 = vector.shape_cast %53 : vector<8xf32> to vector<8x1xf32>
    %55 = vector.broadcast %54 : vector<8x1xf32> to vector<8x8xf32>
    %56 = arith.subf %52, %55 : vector<8x8xf32>
    %57 = math.exp %56 : vector<8x8xf32>
    %cst_44 = arith.constant dense<0.000000e+00> : vector<8xf32>
    %58 = vector.multi_reduction <add>, %57, %cst_44 [1] : vector<8x8xf32> to vector<8xf32>
    %59 = vector.shape_cast %58 : vector<8xf32> to vector<8x1xf32>
    %60 = tpu.reciprocal %59 {approx = true} : vector<8x1xf32> -> vector<8x1xf32>
    %61 = vector.broadcast %60 : vector<8x1xf32> to vector<8x8xf32>
    %62 = arith.mulf %57, %61 : vector<8x8xf32>
    %cst_45 = arith.constant dense<0.000000e+00> : vector<8x8xf32>
    %63 = tpu.matmul %62, %49, %cst_45 {dimension_numbers = #tpu.dot_dimension_numbers<[1], [0], [0], [1], [0, 0, 1, 1], [], []>} : vector<8x8xf32>, vector<8x8xf32>, vector<8x8xf32> -> vector<8x8xf32>
    %c0_46 = arith.constant 0 : index
    %c0_47 = arith.constant 0 : index
    %c0_48 = arith.constant 0 : index
    %c0_49 = arith.constant 0 : index
    %64 = vector.load %arg10[%c0_46, %c0_47, %c0_48, %c0_49] : memref<2x4x8x32xf32, #tpu.memory_space<vmem>>, vector<1x1x8x32xf32>
    %65 = vector.shape_cast %64 : vector<1x1x8x32xf32> to vector<8x32xf32>
    %cst_50 = arith.constant dense<0.000000e+00> : vector<8x32xf32>
    %66 = tpu.matmul %63, %65, %cst_50 {dimension_numbers = #tpu.dot_dimension_numbers<[1], [0], [0], [1], [0, 0, 1, 1], [], []>} : vector<8x8xf32>, vector<8x32xf32>, vector<8x32xf32> -> vector<8x32xf32>
    %67 = arith.addf %28, %66 : vector<8x32xf32>
    %c0_51 = arith.constant 0 : index
    %c1 = arith.constant 1 : index
    %c0_52 = arith.constant 0 : index
    %c0_53 = arith.constant 0 : index
    %68 = vector.load %arg4[%c0_51, %c1, %c0_52, %c0_53] : memref<2x4x32x8xf32, #tpu.memory_space<vmem>>, vector<1x1x32x8xf32>
    %69 = vector.shape_cast %68 : vector<1x1x32x8xf32> to vector<32x8xf32>
    %cst_54 = arith.constant dense<0.000000e+00> : vector<8x8xf32>
    %70 = tpu.matmul %27, %69, %cst_54 {dimension_numbers = #tpu.dot_dimension_numbers<[1], [0], [0], [1], [0, 0, 1, 1], [], []>} : vector<8x32xf32>, vector<32x8xf32>, vector<8x8xf32> -> vector<8x8xf32>
    %c0_55 = arith.constant 0 : index
    %c1_56 = arith.constant 1 : index
    %c0_57 = arith.constant 0 : index
    %c0_58 = arith.constant 0 : index
    %71 = vector.load %arg7[%c0_55, %c1_56, %c0_57, %c0_58] : memref<2x4x1x8xf32, #tpu.memory_space<vmem>>, vector<1x1x1x8xf32>
    %72 = vector.shape_cast %71 : vector<1x1x1x8xf32> to vector<1x8xf32>
    %73 = vector.broadcast %72 : vector<1x8xf32> to vector<8x8xf32>
    %74 = arith.addf %70, %73 : vector<8x8xf32>
    %c0_59 = arith.constant 0 : index
    %c1_60 = arith.constant 1 : index
    %c0_61 = arith.constant 0 : index
    %c0_62 = arith.constant 0 : index
    %75 = vector.load %arg5[%c0_59, %c1_60, %c0_61, %c0_62] : memref<2x4x32x8xf32, #tpu.memory_space<vmem>>, vector<1x1x32x8xf32>
    %76 = vector.shape_cast %75 : vector<1x1x32x8xf32> to vector<32x8xf32>
    %cst_63 = arith.constant dense<0.000000e+00> : vector<8x8xf32>
    %77 = tpu.matmul %27, %76, %cst_63 {dimension_numbers = #tpu.dot_dimension_numbers<[1], [0], [0], [1], [0, 0, 1, 1], [], []>} : vector<8x32xf32>, vector<32x8xf32>, vector<8x8xf32> -> vector<8x8xf32>
    %c0_64 = arith.constant 0 : index
    %c1_65 = arith.constant 1 : index
    %c0_66 = arith.constant 0 : index
    %c0_67 = arith.constant 0 : index
    %78 = vector.load %arg8[%c0_64, %c1_65, %c0_66, %c0_67] : memref<2x4x1x8xf32, #tpu.memory_space<vmem>>, vector<1x1x1x8xf32>
    %79 = vector.shape_cast %78 : vector<1x1x1x8xf32> to vector<1x8xf32>
    %80 = vector.broadcast %79 : vector<1x8xf32> to vector<8x8xf32>
    %81 = arith.addf %77, %80 : vector<8x8xf32>
    %c0_68 = arith.constant 0 : index
    %c1_69 = arith.constant 1 : index
    %c0_70 = arith.constant 0 : index
    %c0_71 = arith.constant 0 : index
    %82 = vector.load %arg6[%c0_68, %c1_69, %c0_70, %c0_71] : memref<2x4x32x8xf32, #tpu.memory_space<vmem>>, vector<1x1x32x8xf32>
    %83 = vector.shape_cast %82 : vector<1x1x32x8xf32> to vector<32x8xf32>
    %cst_72 = arith.constant dense<0.000000e+00> : vector<8x8xf32>
    %84 = tpu.matmul %27, %83, %cst_72 {dimension_numbers = #tpu.dot_dimension_numbers<[1], [0], [0], [1], [0, 0, 1, 1], [], []>} : vector<8x32xf32>, vector<32x8xf32>, vector<8x8xf32> -> vector<8x8xf32>
    %c0_73 = arith.constant 0 : index
    %c1_74 = arith.constant 1 : index
    %c0_75 = arith.constant 0 : index
    %c0_76 = arith.constant 0 : index
    %85 = vector.load %arg9[%c0_73, %c1_74, %c0_75, %c0_76] : memref<2x4x1x8xf32, #tpu.memory_space<vmem>>, vector<1x1x1x8xf32>
    %86 = vector.shape_cast %85 : vector<1x1x1x8xf32> to vector<1x8xf32>
    %87 = vector.broadcast %86 : vector<1x8xf32> to vector<8x8xf32>
    %88 = arith.addf %84, %87 : vector<8x8xf32>
    %cst_77 = arith.constant dense<0.000000e+00> : vector<8x8xf32>
    %89 = tpu.matmul %74, %81, %cst_77 {dimension_numbers = #tpu.dot_dimension_numbers<[1], [1], [0], [0], [0, 0, 1, 0], [], []>} : vector<8x8xf32>, vector<8x8xf32>, vector<8x8xf32> -> vector<8x8xf32>
    %cst_78 = arith.constant 0.353553385 : f32
    %90 = vector.broadcast %cst_78 : f32 to vector<8x8xf32>
    %91 = arith.mulf %89, %90 : vector<8x8xf32>
    %cst_79 = arith.constant dense<0xFF800000> : vector<8xf32>
    %92 = vector.multi_reduction <maximumf>, %91, %cst_79 [1] : vector<8x8xf32> to vector<8xf32>
    %93 = vector.shape_cast %92 : vector<8xf32> to vector<8x1xf32>
    %94 = vector.broadcast %93 : vector<8x1xf32> to vector<8x8xf32>
    %95 = arith.subf %91, %94 : vector<8x8xf32>
    %96 = math.exp %95 : vector<8x8xf32>
    %cst_80 = arith.constant dense<0.000000e+00> : vector<8xf32>
    %97 = vector.multi_reduction <add>, %96, %cst_80 [1] : vector<8x8xf32> to vector<8xf32>
    %98 = vector.shape_cast %97 : vector<8xf32> to vector<8x1xf32>
    %99 = tpu.reciprocal %98 {approx = true} : vector<8x1xf32> -> vector<8x1xf32>
    %100 = vector.broadcast %99 : vector<8x1xf32> to vector<8x8xf32>
    %101 = arith.mulf %96, %100 : vector<8x8xf32>
    %cst_81 = arith.constant dense<0.000000e+00> : vector<8x8xf32>
    %102 = tpu.matmul %101, %88, %cst_81 {dimension_numbers = #tpu.dot_dimension_numbers<[1], [0], [0], [1], [0, 0, 1, 1], [], []>} : vector<8x8xf32>, vector<8x8xf32>, vector<8x8xf32> -> vector<8x8xf32>
    %c0_82 = arith.constant 0 : index
    %c1_83 = arith.constant 1 : index
    %c0_84 = arith.constant 0 : index
    %c0_85 = arith.constant 0 : index
    %103 = vector.load %arg10[%c0_82, %c1_83, %c0_84, %c0_85] : memref<2x4x8x32xf32, #tpu.memory_space<vmem>>, vector<1x1x8x32xf32>
    %104 = vector.shape_cast %103 : vector<1x1x8x32xf32> to vector<8x32xf32>
    %cst_86 = arith.constant dense<0.000000e+00> : vector<8x32xf32>
    %105 = tpu.matmul %102, %104, %cst_86 {dimension_numbers = #tpu.dot_dimension_numbers<[1], [0], [0], [1], [0, 0, 1, 1], [], []>} : vector<8x8xf32>, vector<8x32xf32>, vector<8x32xf32> -> vector<8x32xf32>
    %106 = arith.addf %67, %105 : vector<8x32xf32>
    %c0_87 = arith.constant 0 : index
    %c2 = arith.constant 2 : index
    %c0_88 = arith.constant 0 : index
    %c0_89 = arith.constant 0 : index
    %107 = vector.load %arg4[%c0_87, %c2, %c0_88, %c0_89] : memref<2x4x32x8xf32, #tpu.memory_space<vmem>>, vector<1x1x32x8xf32>
    %108 = vector.shape_cast %107 : vector<1x1x32x8xf32> to vector<32x8xf32>
    %cst_90 = arith.constant dense<0.000000e+00> : vector<8x8xf32>
    %109 = tpu.matmul %27, %108, %cst_90 {dimension_numbers = #tpu.dot_dimension_numbers<[1], [0], [0], [1], [0, 0, 1, 1], [], []>} : vector<8x32xf32>, vector<32x8xf32>, vector<8x8xf32> -> vector<8x8xf32>
    %c0_91 = arith.constant 0 : index
    %c2_92 = arith.constant 2 : index
    %c0_93 = arith.constant 0 : index
    %c0_94 = arith.constant 0 : index
    %110 = vector.load %arg7[%c0_91, %c2_92, %c0_93, %c0_94] : memref<2x4x1x8xf32, #tpu.memory_space<vmem>>, vector<1x1x1x8xf32>
    %111 = vector.shape_cast %110 : vector<1x1x1x8xf32> to vector<1x8xf32>
    %112 = vector.broadcast %111 : vector<1x8xf32> to vector<8x8xf32>
    %113 = arith.addf %109, %112 : vector<8x8xf32>
    %c0_95 = arith.constant 0 : index
    %c2_96 = arith.constant 2 : index
    %c0_97 = arith.constant 0 : index
    %c0_98 = arith.constant 0 : index
    %114 = vector.load %arg5[%c0_95, %c2_96, %c0_97, %c0_98] : memref<2x4x32x8xf32, #tpu.memory_space<vmem>>, vector<1x1x32x8xf32>
    %115 = vector.shape_cast %114 : vector<1x1x32x8xf32> to vector<32x8xf32>
    %cst_99 = arith.constant dense<0.000000e+00> : vector<8x8xf32>
    %116 = tpu.matmul %27, %115, %cst_99 {dimension_numbers = #tpu.dot_dimension_numbers<[1], [0], [0], [1], [0, 0, 1, 1], [], []>} : vector<8x32xf32>, vector<32x8xf32>, vector<8x8xf32> -> vector<8x8xf32>
    %c0_100 = arith.constant 0 : index
    %c2_101 = arith.constant 2 : index
    %c0_102 = arith.constant 0 : index
    %c0_103 = arith.constant 0 : index
    %117 = vector.load %arg8[%c0_100, %c2_101, %c0_102, %c0_103] : memref<2x4x1x8xf32, #tpu.memory_space<vmem>>, vector<1x1x1x8xf32>
    %118 = vector.shape_cast %117 : vector<1x1x1x8xf32> to vector<1x8xf32>
    %119 = vector.broadcast %118 : vector<1x8xf32> to vector<8x8xf32>
    %120 = arith.addf %116, %119 : vector<8x8xf32>
    %c0_104 = arith.constant 0 : index
    %c2_105 = arith.constant 2 : index
    %c0_106 = arith.constant 0 : index
    %c0_107 = arith.constant 0 : index
    %121 = vector.load %arg6[%c0_104, %c2_105, %c0_106, %c0_107] : memref<2x4x32x8xf32, #tpu.memory_space<vmem>>, vector<1x1x32x8xf32>
    %122 = vector.shape_cast %121 : vector<1x1x32x8xf32> to vector<32x8xf32>
    %cst_108 = arith.constant dense<0.000000e+00> : vector<8x8xf32>
    %123 = tpu.matmul %27, %122, %cst_108 {dimension_numbers = #tpu.dot_dimension_numbers<[1], [0], [0], [1], [0, 0, 1, 1], [], []>} : vector<8x32xf32>, vector<32x8xf32>, vector<8x8xf32> -> vector<8x8xf32>
    %c0_109 = arith.constant 0 : index
    %c2_110 = arith.constant 2 : index
    %c0_111 = arith.constant 0 : index
    %c0_112 = arith.constant 0 : index
    %124 = vector.load %arg9[%c0_109, %c2_110, %c0_111, %c0_112] : memref<2x4x1x8xf32, #tpu.memory_space<vmem>>, vector<1x1x1x8xf32>
    %125 = vector.shape_cast %124 : vector<1x1x1x8xf32> to vector<1x8xf32>
    %126 = vector.broadcast %125 : vector<1x8xf32> to vector<8x8xf32>
    %127 = arith.addf %123, %126 : vector<8x8xf32>
    %cst_113 = arith.constant dense<0.000000e+00> : vector<8x8xf32>
    %128 = tpu.matmul %113, %120, %cst_113 {dimension_numbers = #tpu.dot_dimension_numbers<[1], [1], [0], [0], [0, 0, 1, 0], [], []>} : vector<8x8xf32>, vector<8x8xf32>, vector<8x8xf32> -> vector<8x8xf32>
    %cst_114 = arith.constant 0.353553385 : f32
    %129 = vector.broadcast %cst_114 : f32 to vector<8x8xf32>
    %130 = arith.mulf %128, %129 : vector<8x8xf32>
    %cst_115 = arith.constant dense<0xFF800000> : vector<8xf32>
    %131 = vector.multi_reduction <maximumf>, %130, %cst_115 [1] : vector<8x8xf32> to vector<8xf32>
    %132 = vector.shape_cast %131 : vector<8xf32> to vector<8x1xf32>
    %133 = vector.broadcast %132 : vector<8x1xf32> to vector<8x8xf32>
    %134 = arith.subf %130, %133 : vector<8x8xf32>
    %135 = math.exp %134 : vector<8x8xf32>
    %cst_116 = arith.constant dense<0.000000e+00> : vector<8xf32>
    %136 = vector.multi_reduction <add>, %135, %cst_116 [1] : vector<8x8xf32> to vector<8xf32>
    %137 = vector.shape_cast %136 : vector<8xf32> to vector<8x1xf32>
    %138 = tpu.reciprocal %137 {approx = true} : vector<8x1xf32> -> vector<8x1xf32>
    %139 = vector.broadcast %138 : vector<8x1xf32> to vector<8x8xf32>
    %140 = arith.mulf %135, %139 : vector<8x8xf32>
    %cst_117 = arith.constant dense<0.000000e+00> : vector<8x8xf32>
    %141 = tpu.matmul %140, %127, %cst_117 {dimension_numbers = #tpu.dot_dimension_numbers<[1], [0], [0], [1], [0, 0, 1, 1], [], []>} : vector<8x8xf32>, vector<8x8xf32>, vector<8x8xf32> -> vector<8x8xf32>
    %c0_118 = arith.constant 0 : index
    %c2_119 = arith.constant 2 : index
    %c0_120 = arith.constant 0 : index
    %c0_121 = arith.constant 0 : index
    %142 = vector.load %arg10[%c0_118, %c2_119, %c0_120, %c0_121] : memref<2x4x8x32xf32, #tpu.memory_space<vmem>>, vector<1x1x8x32xf32>
    %143 = vector.shape_cast %142 : vector<1x1x8x32xf32> to vector<8x32xf32>
    %cst_122 = arith.constant dense<0.000000e+00> : vector<8x32xf32>
    %144 = tpu.matmul %141, %143, %cst_122 {dimension_numbers = #tpu.dot_dimension_numbers<[1], [0], [0], [1], [0, 0, 1, 1], [], []>} : vector<8x8xf32>, vector<8x32xf32>, vector<8x32xf32> -> vector<8x32xf32>
    %145 = arith.addf %106, %144 : vector<8x32xf32>
    %c0_123 = arith.constant 0 : index
    %c3 = arith.constant 3 : index
    %c0_124 = arith.constant 0 : index
    %c0_125 = arith.constant 0 : index
    %146 = vector.load %arg4[%c0_123, %c3, %c0_124, %c0_125] : memref<2x4x32x8xf32, #tpu.memory_space<vmem>>, vector<1x1x32x8xf32>
    %147 = vector.shape_cast %146 : vector<1x1x32x8xf32> to vector<32x8xf32>
    %cst_126 = arith.constant dense<0.000000e+00> : vector<8x8xf32>
    %148 = tpu.matmul %27, %147, %cst_126 {dimension_numbers = #tpu.dot_dimension_numbers<[1], [0], [0], [1], [0, 0, 1, 1], [], []>} : vector<8x32xf32>, vector<32x8xf32>, vector<8x8xf32> -> vector<8x8xf32>
    %c0_127 = arith.constant 0 : index
    %c3_128 = arith.constant 3 : index
    %c0_129 = arith.constant 0 : index
    %c0_130 = arith.constant 0 : index
    %149 = vector.load %arg7[%c0_127, %c3_128, %c0_129, %c0_130] : memref<2x4x1x8xf32, #tpu.memory_space<vmem>>, vector<1x1x1x8xf32>
    %150 = vector.shape_cast %149 : vector<1x1x1x8xf32> to vector<1x8xf32>
    %151 = vector.broadcast %150 : vector<1x8xf32> to vector<8x8xf32>
    %152 = arith.addf %148, %151 : vector<8x8xf32>
    %c0_131 = arith.constant 0 : index
    %c3_132 = arith.constant 3 : index
    %c0_133 = arith.constant 0 : index
    %c0_134 = arith.constant 0 : index
    %153 = vector.load %arg5[%c0_131, %c3_132, %c0_133, %c0_134] : memref<2x4x32x8xf32, #tpu.memory_space<vmem>>, vector<1x1x32x8xf32>
    %154 = vector.shape_cast %153 : vector<1x1x32x8xf32> to vector<32x8xf32>
    %cst_135 = arith.constant dense<0.000000e+00> : vector<8x8xf32>
    %155 = tpu.matmul %27, %154, %cst_135 {dimension_numbers = #tpu.dot_dimension_numbers<[1], [0], [0], [1], [0, 0, 1, 1], [], []>} : vector<8x32xf32>, vector<32x8xf32>, vector<8x8xf32> -> vector<8x8xf32>
    %c0_136 = arith.constant 0 : index
    %c3_137 = arith.constant 3 : index
    %c0_138 = arith.constant 0 : index
    %c0_139 = arith.constant 0 : index
    %156 = vector.load %arg8[%c0_136, %c3_137, %c0_138, %c0_139] : memref<2x4x1x8xf32, #tpu.memory_space<vmem>>, vector<1x1x1x8xf32>
    %157 = vector.shape_cast %156 : vector<1x1x1x8xf32> to vector<1x8xf32>
    %158 = vector.broadcast %157 : vector<1x8xf32> to vector<8x8xf32>
    %159 = arith.addf %155, %158 : vector<8x8xf32>
    %c0_140 = arith.constant 0 : index
    %c3_141 = arith.constant 3 : index
    %c0_142 = arith.constant 0 : index
    %c0_143 = arith.constant 0 : index
    %160 = vector.load %arg6[%c0_140, %c3_141, %c0_142, %c0_143] : memref<2x4x32x8xf32, #tpu.memory_space<vmem>>, vector<1x1x32x8xf32>
    %161 = vector.shape_cast %160 : vector<1x1x32x8xf32> to vector<32x8xf32>
    %cst_144 = arith.constant dense<0.000000e+00> : vector<8x8xf32>
    %162 = tpu.matmul %27, %161, %cst_144 {dimension_numbers = #tpu.dot_dimension_numbers<[1], [0], [0], [1], [0, 0, 1, 1], [], []>} : vector<8x32xf32>, vector<32x8xf32>, vector<8x8xf32> -> vector<8x8xf32>
    %c0_145 = arith.constant 0 : index
    %c3_146 = arith.constant 3 : index
    %c0_147 = arith.constant 0 : index
    %c0_148 = arith.constant 0 : index
    %163 = vector.load %arg9[%c0_145, %c3_146, %c0_147, %c0_148] : memref<2x4x1x8xf32, #tpu.memory_space<vmem>>, vector<1x1x1x8xf32>
    %164 = vector.shape_cast %163 : vector<1x1x1x8xf32> to vector<1x8xf32>
    %165 = vector.broadcast %164 : vector<1x8xf32> to vector<8x8xf32>
    %166 = arith.addf %162, %165 : vector<8x8xf32>
    %cst_149 = arith.constant dense<0.000000e+00> : vector<8x8xf32>
    %167 = tpu.matmul %152, %159, %cst_149 {dimension_numbers = #tpu.dot_dimension_numbers<[1], [1], [0], [0], [0, 0, 1, 0], [], []>} : vector<8x8xf32>, vector<8x8xf32>, vector<8x8xf32> -> vector<8x8xf32>
    %cst_150 = arith.constant 0.353553385 : f32
    %168 = vector.broadcast %cst_150 : f32 to vector<8x8xf32>
    %169 = arith.mulf %167, %168 : vector<8x8xf32>
    %cst_151 = arith.constant dense<0xFF800000> : vector<8xf32>
    %170 = vector.multi_reduction <maximumf>, %169, %cst_151 [1] : vector<8x8xf32> to vector<8xf32>
    %171 = vector.shape_cast %170 : vector<8xf32> to vector<8x1xf32>
    %172 = vector.broadcast %171 : vector<8x1xf32> to vector<8x8xf32>
    %173 = arith.subf %169, %172 : vector<8x8xf32>
    %174 = math.exp %173 : vector<8x8xf32>
    %cst_152 = arith.constant dense<0.000000e+00> : vector<8xf32>
    %175 = vector.multi_reduction <add>, %174, %cst_152 [1] : vector<8x8xf32> to vector<8xf32>
    %176 = vector.shape_cast %175 : vector<8xf32> to vector<8x1xf32>
    %177 = tpu.reciprocal %176 {approx = true} : vector<8x1xf32> -> vector<8x1xf32>
    %178 = vector.broadcast %177 : vector<8x1xf32> to vector<8x8xf32>
    %179 = arith.mulf %174, %178 : vector<8x8xf32>
    %cst_153 = arith.constant dense<0.000000e+00> : vector<8x8xf32>
    %180 = tpu.matmul %179, %166, %cst_153 {dimension_numbers = #tpu.dot_dimension_numbers<[1], [0], [0], [1], [0, 0, 1, 1], [], []>} : vector<8x8xf32>, vector<8x8xf32>, vector<8x8xf32> -> vector<8x8xf32>
    %c0_154 = arith.constant 0 : index
    %c3_155 = arith.constant 3 : index
    %c0_156 = arith.constant 0 : index
    %c0_157 = arith.constant 0 : index
    %181 = vector.load %arg10[%c0_154, %c3_155, %c0_156, %c0_157] : memref<2x4x8x32xf32, #tpu.memory_space<vmem>>, vector<1x1x8x32xf32>
    %182 = vector.shape_cast %181 : vector<1x1x8x32xf32> to vector<8x32xf32>
    %cst_158 = arith.constant dense<0.000000e+00> : vector<8x32xf32>
    %183 = tpu.matmul %180, %182, %cst_158 {dimension_numbers = #tpu.dot_dimension_numbers<[1], [0], [0], [1], [0, 0, 1, 1], [], []>} : vector<8x8xf32>, vector<8x32xf32>, vector<8x32xf32> -> vector<8x32xf32>
    %184 = arith.addf %145, %183 : vector<8x32xf32>
    %c0_159 = arith.constant 0 : index
    %c0_160 = arith.constant 0 : index
    %c0_161 = arith.constant 0 : index
    %185 = vector.load %arg11[%c0_159, %c0_160, %c0_161] : memref<2x1x32xf32, #tpu.memory_space<vmem>>, vector<1x1x32xf32>
    %186 = vector.shape_cast %185 : vector<1x1x32xf32> to vector<1x32xf32>
    %187 = vector.broadcast %186 : vector<1x32xf32> to vector<8x32xf32>
    %188 = arith.addf %184, %187 : vector<8x32xf32>
    %189 = arith.addf %188, %3 : vector<8x32xf32>
    %c0_162 = arith.constant 0 : index
    %c0_163 = arith.constant 0 : index
    %c0_164 = arith.constant 0 : index
    %190 = vector.load %arg12[%c0_162, %c0_163, %c0_164] : memref<2x1x32xf32, #tpu.memory_space<vmem>>, vector<1x1x32xf32>
    %191 = vector.shape_cast %190 : vector<1x1x32xf32> to vector<1x32xf32>
    %c0_165 = arith.constant 0 : index
    %c0_166 = arith.constant 0 : index
    %c0_167 = arith.constant 0 : index
    %192 = vector.load %arg13[%c0_165, %c0_166, %c0_167] : memref<2x1x32xf32, #tpu.memory_space<vmem>>, vector<1x1x32xf32>
    %193 = vector.shape_cast %192 : vector<1x1x32xf32> to vector<1x32xf32>
    %cst_168 = arith.constant dense<0.000000e+00> : vector<8xf32>
    %194 = vector.multi_reduction <add>, %189, %cst_168 [1] : vector<8x32xf32> to vector<8xf32>
    %195 = vector.shape_cast %194 : vector<8xf32> to vector<8x1xf32>
    %cst_169 = arith.constant 3.200000e+01 : f32
    %196 = vector.broadcast %cst_169 : f32 to vector<8x1xf32>
    %197 = arith.divf %195, %196 : vector<8x1xf32>
    %198 = vector.broadcast %197 : vector<8x1xf32> to vector<8x32xf32>
    %199 = arith.subf %189, %198 : vector<8x32xf32>
    %200 = arith.mulf %199, %199 : vector<8x32xf32>
    %cst_170 = arith.constant dense<0.000000e+00> : vector<8xf32>
    %201 = vector.multi_reduction <add>, %200, %cst_170 [1] : vector<8x32xf32> to vector<8xf32>
    %202 = vector.shape_cast %201 : vector<8xf32> to vector<8x1xf32>
    %cst_171 = arith.constant 3.200000e+01 : f32
    %203 = vector.broadcast %cst_171 : f32 to vector<8x1xf32>
    %204 = arith.divf %202, %203 : vector<8x1xf32>
    %cst_172 = arith.constant 9.99999974E-6 : f32
    %205 = vector.broadcast %cst_172 : f32 to vector<8x1xf32>
    %206 = arith.addf %204, %205 : vector<8x1xf32>
    %207 = math.rsqrt %206 : vector<8x1xf32>
    %208 = vector.broadcast %207 : vector<8x1xf32> to vector<8x32xf32>
    %209 = arith.mulf %199, %208 : vector<8x32xf32>
    %210 = vector.broadcast %191 : vector<1x32xf32> to vector<8x32xf32>
    %211 = arith.mulf %209, %210 : vector<8x32xf32>
    %212 = vector.broadcast %193 : vector<1x32xf32> to vector<8x32xf32>
    %213 = arith.addf %211, %212 : vector<8x32xf32>
    %c0_173 = arith.constant 0 : index
    %c0_174 = arith.constant 0 : index
    %c0_175 = arith.constant 0 : index
    %214 = vector.load %arg14[%c0_173, %c0_174, %c0_175] : memref<2x32x128xf32, #tpu.memory_space<vmem>>, vector<1x32x128xf32>
    %215 = vector.shape_cast %214 : vector<1x32x128xf32> to vector<32x128xf32>
    %cst_176 = arith.constant dense<0.000000e+00> : vector<8x128xf32>
    %216 = tpu.matmul %213, %215, %cst_176 {dimension_numbers = #tpu.dot_dimension_numbers<[1], [0], [0], [1], [0, 0, 1, 1], [], []>} : vector<8x32xf32>, vector<32x128xf32>, vector<8x128xf32> -> vector<8x128xf32>
    %c0_177 = arith.constant 0 : index
    %c0_178 = arith.constant 0 : index
    %c0_179 = arith.constant 0 : index
    %217 = vector.load %arg15[%c0_177, %c0_178, %c0_179] : memref<2x1x128xf32, #tpu.memory_space<vmem>>, vector<1x1x128xf32>
    %218 = vector.shape_cast %217 : vector<1x1x128xf32> to vector<1x128xf32>
    %219 = vector.broadcast %218 : vector<1x128xf32> to vector<8x128xf32>
    %220 = arith.addf %216, %219 : vector<8x128xf32>
    %cst_180 = arith.constant 5.000000e-01 : f32
    %221 = vector.broadcast %cst_180 : f32 to vector<8x128xf32>
    %222 = arith.mulf %221, %220 : vector<8x128xf32>
    %cst_181 = arith.constant 0.707106769 : f32
    %223 = vector.broadcast %cst_181 : f32 to vector<8x128xf32>
    %224 = arith.mulf %220, %223 : vector<8x128xf32>
    %cst_182 = arith.constant 0.000000e+00 : f32
    %225 = vector.broadcast %cst_182 : f32 to vector<8x128xf32>
    %226 = arith.cmpf oge, %224, %225 : vector<8x128xf32>
    %cst_183 = arith.constant 1.000000e+00 : f32
    %cst_184 = arith.constant -1.000000e+00 : f32
    %227 = vector.broadcast %cst_183 : f32 to vector<8x128xf32>
    %228 = vector.broadcast %cst_184 : f32 to vector<8x128xf32>
    %229 = arith.select %226, %227, %228 : vector<8x128xi1>, vector<8x128xf32>
    %230 = math.absf %224 : vector<8x128xf32>
    %cst_185 = arith.constant 0.327591091 : f32
    %231 = vector.broadcast %cst_185 : f32 to vector<8x128xf32>
    %232 = arith.mulf %231, %230 : vector<8x128xf32>
    %cst_186 = arith.constant 1.000000e+00 : f32
    %233 = vector.broadcast %cst_186 : f32 to vector<8x128xf32>
    %234 = arith.addf %233, %232 : vector<8x128xf32>
    %cst_187 = arith.constant 1.000000e+00 : f32
    %235 = vector.broadcast %cst_187 : f32 to vector<8x128xf32>
    %236 = arith.divf %235, %234 : vector<8x128xf32>
    %cst_188 = arith.constant 1.06140542 : f32
    %237 = vector.broadcast %cst_188 : f32 to vector<8x128xf32>
    %238 = arith.mulf %237, %236 : vector<8x128xf32>
    %cst_189 = arith.constant -1.45315206 : f32
    %239 = vector.broadcast %cst_189 : f32 to vector<8x128xf32>
    %240 = arith.addf %238, %239 : vector<8x128xf32>
    %241 = arith.mulf %240, %236 : vector<8x128xf32>
    %cst_190 = arith.constant 1.42141378 : f32
    %242 = vector.broadcast %cst_190 : f32 to vector<8x128xf32>
    %243 = arith.addf %241, %242 : vector<8x128xf32>
    %244 = arith.mulf %243, %236 : vector<8x128xf32>
    %cst_191 = arith.constant -0.284496725 : f32
    %245 = vector.broadcast %cst_191 : f32 to vector<8x128xf32>
    %246 = arith.addf %244, %245 : vector<8x128xf32>
    %247 = arith.mulf %246, %236 : vector<8x128xf32>
    %cst_192 = arith.constant 0.254829586 : f32
    %248 = vector.broadcast %cst_192 : f32 to vector<8x128xf32>
    %249 = arith.addf %247, %248 : vector<8x128xf32>
    %250 = arith.mulf %249, %236 : vector<8x128xf32>
    %cst_193 = arith.constant 0.000000e+00 : f32
    %251 = vector.broadcast %cst_193 : f32 to vector<8x128xf32>
    %252 = arith.subf %251, %230 : vector<8x128xf32>
    %253 = arith.mulf %252, %230 : vector<8x128xf32>
    %254 = math.exp %253 : vector<8x128xf32>
    %255 = arith.mulf %250, %254 : vector<8x128xf32>
    %cst_194 = arith.constant 1.000000e+00 : f32
    %256 = vector.broadcast %cst_194 : f32 to vector<8x128xf32>
    %257 = arith.subf %256, %255 : vector<8x128xf32>
    %258 = arith.mulf %229, %257 : vector<8x128xf32>
    %cst_195 = arith.constant 1.000000e+00 : f32
    %259 = vector.broadcast %cst_195 : f32 to vector<8x128xf32>
    %260 = arith.addf %259, %258 : vector<8x128xf32>
    %261 = arith.mulf %222, %260 : vector<8x128xf32>
    %c0_196 = arith.constant 0 : index
    %c0_197 = arith.constant 0 : index
    %c0_198 = arith.constant 0 : index
    %262 = vector.load %arg16[%c0_196, %c0_197, %c0_198] : memref<2x128x32xf32, #tpu.memory_space<vmem>>, vector<1x128x32xf32>
    %263 = vector.shape_cast %262 : vector<1x128x32xf32> to vector<128x32xf32>
    %cst_199 = arith.constant dense<0.000000e+00> : vector<8x32xf32>
    %264 = tpu.matmul %261, %263, %cst_199 {dimension_numbers = #tpu.dot_dimension_numbers<[1], [0], [0], [1], [0, 0, 1, 1], [], []>} : vector<8x128xf32>, vector<128x32xf32>, vector<8x32xf32> -> vector<8x32xf32>
    %c0_200 = arith.constant 0 : index
    %c0_201 = arith.constant 0 : index
    %c0_202 = arith.constant 0 : index
    %265 = vector.load %arg17[%c0_200, %c0_201, %c0_202] : memref<2x1x32xf32, #tpu.memory_space<vmem>>, vector<1x1x32xf32>
    %266 = vector.shape_cast %265 : vector<1x1x32xf32> to vector<1x32xf32>
    %267 = vector.broadcast %266 : vector<1x32xf32> to vector<8x32xf32>
    %268 = arith.addf %264, %267 : vector<8x32xf32>
    %269 = arith.addf %268, %189 : vector<8x32xf32>
    %c1_203 = arith.constant 1 : index
    %c0_204 = arith.constant 0 : index
    %c0_205 = arith.constant 0 : index
    %270 = vector.load %arg2[%c1_203, %c0_204, %c0_205] : memref<2x1x32xf32, #tpu.memory_space<vmem>>, vector<1x1x32xf32>
    %271 = vector.shape_cast %270 : vector<1x1x32xf32> to vector<1x32xf32>
    %c1_206 = arith.constant 1 : index
    %c0_207 = arith.constant 0 : index
    %c0_208 = arith.constant 0 : index
    %272 = vector.load %arg3[%c1_206, %c0_207, %c0_208] : memref<2x1x32xf32, #tpu.memory_space<vmem>>, vector<1x1x32xf32>
    %273 = vector.shape_cast %272 : vector<1x1x32xf32> to vector<1x32xf32>
    %cst_209 = arith.constant dense<0.000000e+00> : vector<8xf32>
    %274 = vector.multi_reduction <add>, %269, %cst_209 [1] : vector<8x32xf32> to vector<8xf32>
    %275 = vector.shape_cast %274 : vector<8xf32> to vector<8x1xf32>
    %cst_210 = arith.constant 3.200000e+01 : f32
    %276 = vector.broadcast %cst_210 : f32 to vector<8x1xf32>
    %277 = arith.divf %275, %276 : vector<8x1xf32>
    %278 = vector.broadcast %277 : vector<8x1xf32> to vector<8x32xf32>
    %279 = arith.subf %269, %278 : vector<8x32xf32>
    %280 = arith.mulf %279, %279 : vector<8x32xf32>
    %cst_211 = arith.constant dense<0.000000e+00> : vector<8xf32>
    %281 = vector.multi_reduction <add>, %280, %cst_211 [1] : vector<8x32xf32> to vector<8xf32>
    %282 = vector.shape_cast %281 : vector<8xf32> to vector<8x1xf32>
    %cst_212 = arith.constant 3.200000e+01 : f32
    %283 = vector.broadcast %cst_212 : f32 to vector<8x1xf32>
    %284 = arith.divf %282, %283 : vector<8x1xf32>
    %cst_213 = arith.constant 9.99999974E-6 : f32
    %285 = vector.broadcast %cst_213 : f32 to vector<8x1xf32>
    %286 = arith.addf %284, %285 : vector<8x1xf32>
    %287 = math.rsqrt %286 : vector<8x1xf32>
    %288 = vector.broadcast %287 : vector<8x1xf32> to vector<8x32xf32>
    %289 = arith.mulf %279, %288 : vector<8x32xf32>
    %290 = vector.broadcast %271 : vector<1x32xf32> to vector<8x32xf32>
    %291 = arith.mulf %289, %290 : vector<8x32xf32>
    %292 = vector.broadcast %273 : vector<1x32xf32> to vector<8x32xf32>
    %293 = arith.addf %291, %292 : vector<8x32xf32>
    %cst_214 = arith.constant 0.000000e+00 : f32
    %294 = vector.broadcast %cst_214 : f32 to vector<8x32xf32>
    %c1_215 = arith.constant 1 : index
    %c0_216 = arith.constant 0 : index
    %c0_217 = arith.constant 0 : index
    %c0_218 = arith.constant 0 : index
    %295 = vector.load %arg4[%c1_215, %c0_216, %c0_217, %c0_218] : memref<2x4x32x8xf32, #tpu.memory_space<vmem>>, vector<1x1x32x8xf32>
    %296 = vector.shape_cast %295 : vector<1x1x32x8xf32> to vector<32x8xf32>
    %cst_219 = arith.constant dense<0.000000e+00> : vector<8x8xf32>
    %297 = tpu.matmul %293, %296, %cst_219 {dimension_numbers = #tpu.dot_dimension_numbers<[1], [0], [0], [1], [0, 0, 1, 1], [], []>} : vector<8x32xf32>, vector<32x8xf32>, vector<8x8xf32> -> vector<8x8xf32>
    %c1_220 = arith.constant 1 : index
    %c0_221 = arith.constant 0 : index
    %c0_222 = arith.constant 0 : index
    %c0_223 = arith.constant 0 : index
    %298 = vector.load %arg7[%c1_220, %c0_221, %c0_222, %c0_223] : memref<2x4x1x8xf32, #tpu.memory_space<vmem>>, vector<1x1x1x8xf32>
    %299 = vector.shape_cast %298 : vector<1x1x1x8xf32> to vector<1x8xf32>
    %300 = vector.broadcast %299 : vector<1x8xf32> to vector<8x8xf32>
    %301 = arith.addf %297, %300 : vector<8x8xf32>
    %c1_224 = arith.constant 1 : index
    %c0_225 = arith.constant 0 : index
    %c0_226 = arith.constant 0 : index
    %c0_227 = arith.constant 0 : index
    %302 = vector.load %arg5[%c1_224, %c0_225, %c0_226, %c0_227] : memref<2x4x32x8xf32, #tpu.memory_space<vmem>>, vector<1x1x32x8xf32>
    %303 = vector.shape_cast %302 : vector<1x1x32x8xf32> to vector<32x8xf32>
    %cst_228 = arith.constant dense<0.000000e+00> : vector<8x8xf32>
    %304 = tpu.matmul %293, %303, %cst_228 {dimension_numbers = #tpu.dot_dimension_numbers<[1], [0], [0], [1], [0, 0, 1, 1], [], []>} : vector<8x32xf32>, vector<32x8xf32>, vector<8x8xf32> -> vector<8x8xf32>
    %c1_229 = arith.constant 1 : index
    %c0_230 = arith.constant 0 : index
    %c0_231 = arith.constant 0 : index
    %c0_232 = arith.constant 0 : index
    %305 = vector.load %arg8[%c1_229, %c0_230, %c0_231, %c0_232] : memref<2x4x1x8xf32, #tpu.memory_space<vmem>>, vector<1x1x1x8xf32>
    %306 = vector.shape_cast %305 : vector<1x1x1x8xf32> to vector<1x8xf32>
    %307 = vector.broadcast %306 : vector<1x8xf32> to vector<8x8xf32>
    %308 = arith.addf %304, %307 : vector<8x8xf32>
    %c1_233 = arith.constant 1 : index
    %c0_234 = arith.constant 0 : index
    %c0_235 = arith.constant 0 : index
    %c0_236 = arith.constant 0 : index
    %309 = vector.load %arg6[%c1_233, %c0_234, %c0_235, %c0_236] : memref<2x4x32x8xf32, #tpu.memory_space<vmem>>, vector<1x1x32x8xf32>
    %310 = vector.shape_cast %309 : vector<1x1x32x8xf32> to vector<32x8xf32>
    %cst_237 = arith.constant dense<0.000000e+00> : vector<8x8xf32>
    %311 = tpu.matmul %293, %310, %cst_237 {dimension_numbers = #tpu.dot_dimension_numbers<[1], [0], [0], [1], [0, 0, 1, 1], [], []>} : vector<8x32xf32>, vector<32x8xf32>, vector<8x8xf32> -> vector<8x8xf32>
    %c1_238 = arith.constant 1 : index
    %c0_239 = arith.constant 0 : index
    %c0_240 = arith.constant 0 : index
    %c0_241 = arith.constant 0 : index
    %312 = vector.load %arg9[%c1_238, %c0_239, %c0_240, %c0_241] : memref<2x4x1x8xf32, #tpu.memory_space<vmem>>, vector<1x1x1x8xf32>
    %313 = vector.shape_cast %312 : vector<1x1x1x8xf32> to vector<1x8xf32>
    %314 = vector.broadcast %313 : vector<1x8xf32> to vector<8x8xf32>
    %315 = arith.addf %311, %314 : vector<8x8xf32>
    %cst_242 = arith.constant dense<0.000000e+00> : vector<8x8xf32>
    %316 = tpu.matmul %301, %308, %cst_242 {dimension_numbers = #tpu.dot_dimension_numbers<[1], [1], [0], [0], [0, 0, 1, 0], [], []>} : vector<8x8xf32>, vector<8x8xf32>, vector<8x8xf32> -> vector<8x8xf32>
    %cst_243 = arith.constant 0.353553385 : f32
    %317 = vector.broadcast %cst_243 : f32 to vector<8x8xf32>
    %318 = arith.mulf %316, %317 : vector<8x8xf32>
    %cst_244 = arith.constant dense<0xFF800000> : vector<8xf32>
    %319 = vector.multi_reduction <maximumf>, %318, %cst_244 [1] : vector<8x8xf32> to vector<8xf32>
    %320 = vector.shape_cast %319 : vector<8xf32> to vector<8x1xf32>
    %321 = vector.broadcast %320 : vector<8x1xf32> to vector<8x8xf32>
    %322 = arith.subf %318, %321 : vector<8x8xf32>
    %323 = math.exp %322 : vector<8x8xf32>
    %cst_245 = arith.constant dense<0.000000e+00> : vector<8xf32>
    %324 = vector.multi_reduction <add>, %323, %cst_245 [1] : vector<8x8xf32> to vector<8xf32>
    %325 = vector.shape_cast %324 : vector<8xf32> to vector<8x1xf32>
    %326 = tpu.reciprocal %325 {approx = true} : vector<8x1xf32> -> vector<8x1xf32>
    %327 = vector.broadcast %326 : vector<8x1xf32> to vector<8x8xf32>
    %328 = arith.mulf %323, %327 : vector<8x8xf32>
    %cst_246 = arith.constant dense<0.000000e+00> : vector<8x8xf32>
    %329 = tpu.matmul %328, %315, %cst_246 {dimension_numbers = #tpu.dot_dimension_numbers<[1], [0], [0], [1], [0, 0, 1, 1], [], []>} : vector<8x8xf32>, vector<8x8xf32>, vector<8x8xf32> -> vector<8x8xf32>
    %c1_247 = arith.constant 1 : index
    %c0_248 = arith.constant 0 : index
    %c0_249 = arith.constant 0 : index
    %c0_250 = arith.constant 0 : index
    %330 = vector.load %arg10[%c1_247, %c0_248, %c0_249, %c0_250] : memref<2x4x8x32xf32, #tpu.memory_space<vmem>>, vector<1x1x8x32xf32>
    %331 = vector.shape_cast %330 : vector<1x1x8x32xf32> to vector<8x32xf32>
    %cst_251 = arith.constant dense<0.000000e+00> : vector<8x32xf32>
    %332 = tpu.matmul %329, %331, %cst_251 {dimension_numbers = #tpu.dot_dimension_numbers<[1], [0], [0], [1], [0, 0, 1, 1], [], []>} : vector<8x8xf32>, vector<8x32xf32>, vector<8x32xf32> -> vector<8x32xf32>
    %333 = arith.addf %294, %332 : vector<8x32xf32>
    %c1_252 = arith.constant 1 : index
    %c1_253 = arith.constant 1 : index
    %c0_254 = arith.constant 0 : index
    %c0_255 = arith.constant 0 : index
    %334 = vector.load %arg4[%c1_252, %c1_253, %c0_254, %c0_255] : memref<2x4x32x8xf32, #tpu.memory_space<vmem>>, vector<1x1x32x8xf32>
    %335 = vector.shape_cast %334 : vector<1x1x32x8xf32> to vector<32x8xf32>
    %cst_256 = arith.constant dense<0.000000e+00> : vector<8x8xf32>
    %336 = tpu.matmul %293, %335, %cst_256 {dimension_numbers = #tpu.dot_dimension_numbers<[1], [0], [0], [1], [0, 0, 1, 1], [], []>} : vector<8x32xf32>, vector<32x8xf32>, vector<8x8xf32> -> vector<8x8xf32>
    %c1_257 = arith.constant 1 : index
    %c1_258 = arith.constant 1 : index
    %c0_259 = arith.constant 0 : index
    %c0_260 = arith.constant 0 : index
    %337 = vector.load %arg7[%c1_257, %c1_258, %c0_259, %c0_260] : memref<2x4x1x8xf32, #tpu.memory_space<vmem>>, vector<1x1x1x8xf32>
    %338 = vector.shape_cast %337 : vector<1x1x1x8xf32> to vector<1x8xf32>
    %339 = vector.broadcast %338 : vector<1x8xf32> to vector<8x8xf32>
    %340 = arith.addf %336, %339 : vector<8x8xf32>
    %c1_261 = arith.constant 1 : index
    %c1_262 = arith.constant 1 : index
    %c0_263 = arith.constant 0 : index
    %c0_264 = arith.constant 0 : index
    %341 = vector.load %arg5[%c1_261, %c1_262, %c0_263, %c0_264] : memref<2x4x32x8xf32, #tpu.memory_space<vmem>>, vector<1x1x32x8xf32>
    %342 = vector.shape_cast %341 : vector<1x1x32x8xf32> to vector<32x8xf32>
    %cst_265 = arith.constant dense<0.000000e+00> : vector<8x8xf32>
    %343 = tpu.matmul %293, %342, %cst_265 {dimension_numbers = #tpu.dot_dimension_numbers<[1], [0], [0], [1], [0, 0, 1, 1], [], []>} : vector<8x32xf32>, vector<32x8xf32>, vector<8x8xf32> -> vector<8x8xf32>
    %c1_266 = arith.constant 1 : index
    %c1_267 = arith.constant 1 : index
    %c0_268 = arith.constant 0 : index
    %c0_269 = arith.constant 0 : index
    %344 = vector.load %arg8[%c1_266, %c1_267, %c0_268, %c0_269] : memref<2x4x1x8xf32, #tpu.memory_space<vmem>>, vector<1x1x1x8xf32>
    %345 = vector.shape_cast %344 : vector<1x1x1x8xf32> to vector<1x8xf32>
    %346 = vector.broadcast %345 : vector<1x8xf32> to vector<8x8xf32>
    %347 = arith.addf %343, %346 : vector<8x8xf32>
    %c1_270 = arith.constant 1 : index
    %c1_271 = arith.constant 1 : index
    %c0_272 = arith.constant 0 : index
    %c0_273 = arith.constant 0 : index
    %348 = vector.load %arg6[%c1_270, %c1_271, %c0_272, %c0_273] : memref<2x4x32x8xf32, #tpu.memory_space<vmem>>, vector<1x1x32x8xf32>
    %349 = vector.shape_cast %348 : vector<1x1x32x8xf32> to vector<32x8xf32>
    %cst_274 = arith.constant dense<0.000000e+00> : vector<8x8xf32>
    %350 = tpu.matmul %293, %349, %cst_274 {dimension_numbers = #tpu.dot_dimension_numbers<[1], [0], [0], [1], [0, 0, 1, 1], [], []>} : vector<8x32xf32>, vector<32x8xf32>, vector<8x8xf32> -> vector<8x8xf32>
    %c1_275 = arith.constant 1 : index
    %c1_276 = arith.constant 1 : index
    %c0_277 = arith.constant 0 : index
    %c0_278 = arith.constant 0 : index
    %351 = vector.load %arg9[%c1_275, %c1_276, %c0_277, %c0_278] : memref<2x4x1x8xf32, #tpu.memory_space<vmem>>, vector<1x1x1x8xf32>
    %352 = vector.shape_cast %351 : vector<1x1x1x8xf32> to vector<1x8xf32>
    %353 = vector.broadcast %352 : vector<1x8xf32> to vector<8x8xf32>
    %354 = arith.addf %350, %353 : vector<8x8xf32>
    %cst_279 = arith.constant dense<0.000000e+00> : vector<8x8xf32>
    %355 = tpu.matmul %340, %347, %cst_279 {dimension_numbers = #tpu.dot_dimension_numbers<[1], [1], [0], [0], [0, 0, 1, 0], [], []>} : vector<8x8xf32>, vector<8x8xf32>, vector<8x8xf32> -> vector<8x8xf32>
    %cst_280 = arith.constant 0.353553385 : f32
    %356 = vector.broadcast %cst_280 : f32 to vector<8x8xf32>
    %357 = arith.mulf %355, %356 : vector<8x8xf32>
    %cst_281 = arith.constant dense<0xFF800000> : vector<8xf32>
    %358 = vector.multi_reduction <maximumf>, %357, %cst_281 [1] : vector<8x8xf32> to vector<8xf32>
    %359 = vector.shape_cast %358 : vector<8xf32> to vector<8x1xf32>
    %360 = vector.broadcast %359 : vector<8x1xf32> to vector<8x8xf32>
    %361 = arith.subf %357, %360 : vector<8x8xf32>
    %362 = math.exp %361 : vector<8x8xf32>
    %cst_282 = arith.constant dense<0.000000e+00> : vector<8xf32>
    %363 = vector.multi_reduction <add>, %362, %cst_282 [1] : vector<8x8xf32> to vector<8xf32>
    %364 = vector.shape_cast %363 : vector<8xf32> to vector<8x1xf32>
    %365 = tpu.reciprocal %364 {approx = true} : vector<8x1xf32> -> vector<8x1xf32>
    %366 = vector.broadcast %365 : vector<8x1xf32> to vector<8x8xf32>
    %367 = arith.mulf %362, %366 : vector<8x8xf32>
    %cst_283 = arith.constant dense<0.000000e+00> : vector<8x8xf32>
    %368 = tpu.matmul %367, %354, %cst_283 {dimension_numbers = #tpu.dot_dimension_numbers<[1], [0], [0], [1], [0, 0, 1, 1], [], []>} : vector<8x8xf32>, vector<8x8xf32>, vector<8x8xf32> -> vector<8x8xf32>
    %c1_284 = arith.constant 1 : index
    %c1_285 = arith.constant 1 : index
    %c0_286 = arith.constant 0 : index
    %c0_287 = arith.constant 0 : index
    %369 = vector.load %arg10[%c1_284, %c1_285, %c0_286, %c0_287] : memref<2x4x8x32xf32, #tpu.memory_space<vmem>>, vector<1x1x8x32xf32>
    %370 = vector.shape_cast %369 : vector<1x1x8x32xf32> to vector<8x32xf32>
    %cst_288 = arith.constant dense<0.000000e+00> : vector<8x32xf32>
    %371 = tpu.matmul %368, %370, %cst_288 {dimension_numbers = #tpu.dot_dimension_numbers<[1], [0], [0], [1], [0, 0, 1, 1], [], []>} : vector<8x8xf32>, vector<8x32xf32>, vector<8x32xf32> -> vector<8x32xf32>
    %372 = arith.addf %333, %371 : vector<8x32xf32>
    %c1_289 = arith.constant 1 : index
    %c2_290 = arith.constant 2 : index
    %c0_291 = arith.constant 0 : index
    %c0_292 = arith.constant 0 : index
    %373 = vector.load %arg4[%c1_289, %c2_290, %c0_291, %c0_292] : memref<2x4x32x8xf32, #tpu.memory_space<vmem>>, vector<1x1x32x8xf32>
    %374 = vector.shape_cast %373 : vector<1x1x32x8xf32> to vector<32x8xf32>
    %cst_293 = arith.constant dense<0.000000e+00> : vector<8x8xf32>
    %375 = tpu.matmul %293, %374, %cst_293 {dimension_numbers = #tpu.dot_dimension_numbers<[1], [0], [0], [1], [0, 0, 1, 1], [], []>} : vector<8x32xf32>, vector<32x8xf32>, vector<8x8xf32> -> vector<8x8xf32>
    %c1_294 = arith.constant 1 : index
    %c2_295 = arith.constant 2 : index
    %c0_296 = arith.constant 0 : index
    %c0_297 = arith.constant 0 : index
    %376 = vector.load %arg7[%c1_294, %c2_295, %c0_296, %c0_297] : memref<2x4x1x8xf32, #tpu.memory_space<vmem>>, vector<1x1x1x8xf32>
    %377 = vector.shape_cast %376 : vector<1x1x1x8xf32> to vector<1x8xf32>
    %378 = vector.broadcast %377 : vector<1x8xf32> to vector<8x8xf32>
    %379 = arith.addf %375, %378 : vector<8x8xf32>
    %c1_298 = arith.constant 1 : index
    %c2_299 = arith.constant 2 : index
    %c0_300 = arith.constant 0 : index
    %c0_301 = arith.constant 0 : index
    %380 = vector.load %arg5[%c1_298, %c2_299, %c0_300, %c0_301] : memref<2x4x32x8xf32, #tpu.memory_space<vmem>>, vector<1x1x32x8xf32>
    %381 = vector.shape_cast %380 : vector<1x1x32x8xf32> to vector<32x8xf32>
    %cst_302 = arith.constant dense<0.000000e+00> : vector<8x8xf32>
    %382 = tpu.matmul %293, %381, %cst_302 {dimension_numbers = #tpu.dot_dimension_numbers<[1], [0], [0], [1], [0, 0, 1, 1], [], []>} : vector<8x32xf32>, vector<32x8xf32>, vector<8x8xf32> -> vector<8x8xf32>
    %c1_303 = arith.constant 1 : index
    %c2_304 = arith.constant 2 : index
    %c0_305 = arith.constant 0 : index
    %c0_306 = arith.constant 0 : index
    %383 = vector.load %arg8[%c1_303, %c2_304, %c0_305, %c0_306] : memref<2x4x1x8xf32, #tpu.memory_space<vmem>>, vector<1x1x1x8xf32>
    %384 = vector.shape_cast %383 : vector<1x1x1x8xf32> to vector<1x8xf32>
    %385 = vector.broadcast %384 : vector<1x8xf32> to vector<8x8xf32>
    %386 = arith.addf %382, %385 : vector<8x8xf32>
    %c1_307 = arith.constant 1 : index
    %c2_308 = arith.constant 2 : index
    %c0_309 = arith.constant 0 : index
    %c0_310 = arith.constant 0 : index
    %387 = vector.load %arg6[%c1_307, %c2_308, %c0_309, %c0_310] : memref<2x4x32x8xf32, #tpu.memory_space<vmem>>, vector<1x1x32x8xf32>
    %388 = vector.shape_cast %387 : vector<1x1x32x8xf32> to vector<32x8xf32>
    %cst_311 = arith.constant dense<0.000000e+00> : vector<8x8xf32>
    %389 = tpu.matmul %293, %388, %cst_311 {dimension_numbers = #tpu.dot_dimension_numbers<[1], [0], [0], [1], [0, 0, 1, 1], [], []>} : vector<8x32xf32>, vector<32x8xf32>, vector<8x8xf32> -> vector<8x8xf32>
    %c1_312 = arith.constant 1 : index
    %c2_313 = arith.constant 2 : index
    %c0_314 = arith.constant 0 : index
    %c0_315 = arith.constant 0 : index
    %390 = vector.load %arg9[%c1_312, %c2_313, %c0_314, %c0_315] : memref<2x4x1x8xf32, #tpu.memory_space<vmem>>, vector<1x1x1x8xf32>
    %391 = vector.shape_cast %390 : vector<1x1x1x8xf32> to vector<1x8xf32>
    %392 = vector.broadcast %391 : vector<1x8xf32> to vector<8x8xf32>
    %393 = arith.addf %389, %392 : vector<8x8xf32>
    %cst_316 = arith.constant dense<0.000000e+00> : vector<8x8xf32>
    %394 = tpu.matmul %379, %386, %cst_316 {dimension_numbers = #tpu.dot_dimension_numbers<[1], [1], [0], [0], [0, 0, 1, 0], [], []>} : vector<8x8xf32>, vector<8x8xf32>, vector<8x8xf32> -> vector<8x8xf32>
    %cst_317 = arith.constant 0.353553385 : f32
    %395 = vector.broadcast %cst_317 : f32 to vector<8x8xf32>
    %396 = arith.mulf %394, %395 : vector<8x8xf32>
    %cst_318 = arith.constant dense<0xFF800000> : vector<8xf32>
    %397 = vector.multi_reduction <maximumf>, %396, %cst_318 [1] : vector<8x8xf32> to vector<8xf32>
    %398 = vector.shape_cast %397 : vector<8xf32> to vector<8x1xf32>
    %399 = vector.broadcast %398 : vector<8x1xf32> to vector<8x8xf32>
    %400 = arith.subf %396, %399 : vector<8x8xf32>
    %401 = math.exp %400 : vector<8x8xf32>
    %cst_319 = arith.constant dense<0.000000e+00> : vector<8xf32>
    %402 = vector.multi_reduction <add>, %401, %cst_319 [1] : vector<8x8xf32> to vector<8xf32>
    %403 = vector.shape_cast %402 : vector<8xf32> to vector<8x1xf32>
    %404 = tpu.reciprocal %403 {approx = true} : vector<8x1xf32> -> vector<8x1xf32>
    %405 = vector.broadcast %404 : vector<8x1xf32> to vector<8x8xf32>
    %406 = arith.mulf %401, %405 : vector<8x8xf32>
    %cst_320 = arith.constant dense<0.000000e+00> : vector<8x8xf32>
    %407 = tpu.matmul %406, %393, %cst_320 {dimension_numbers = #tpu.dot_dimension_numbers<[1], [0], [0], [1], [0, 0, 1, 1], [], []>} : vector<8x8xf32>, vector<8x8xf32>, vector<8x8xf32> -> vector<8x8xf32>
    %c1_321 = arith.constant 1 : index
    %c2_322 = arith.constant 2 : index
    %c0_323 = arith.constant 0 : index
    %c0_324 = arith.constant 0 : index
    %408 = vector.load %arg10[%c1_321, %c2_322, %c0_323, %c0_324] : memref<2x4x8x32xf32, #tpu.memory_space<vmem>>, vector<1x1x8x32xf32>
    %409 = vector.shape_cast %408 : vector<1x1x8x32xf32> to vector<8x32xf32>
    %cst_325 = arith.constant dense<0.000000e+00> : vector<8x32xf32>
    %410 = tpu.matmul %407, %409, %cst_325 {dimension_numbers = #tpu.dot_dimension_numbers<[1], [0], [0], [1], [0, 0, 1, 1], [], []>} : vector<8x8xf32>, vector<8x32xf32>, vector<8x32xf32> -> vector<8x32xf32>
    %411 = arith.addf %372, %410 : vector<8x32xf32>
    %c1_326 = arith.constant 1 : index
    %c3_327 = arith.constant 3 : index
    %c0_328 = arith.constant 0 : index
    %c0_329 = arith.constant 0 : index
    %412 = vector.load %arg4[%c1_326, %c3_327, %c0_328, %c0_329] : memref<2x4x32x8xf32, #tpu.memory_space<vmem>>, vector<1x1x32x8xf32>
    %413 = vector.shape_cast %412 : vector<1x1x32x8xf32> to vector<32x8xf32>
    %cst_330 = arith.constant dense<0.000000e+00> : vector<8x8xf32>
    %414 = tpu.matmul %293, %413, %cst_330 {dimension_numbers = #tpu.dot_dimension_numbers<[1], [0], [0], [1], [0, 0, 1, 1], [], []>} : vector<8x32xf32>, vector<32x8xf32>, vector<8x8xf32> -> vector<8x8xf32>
    %c1_331 = arith.constant 1 : index
    %c3_332 = arith.constant 3 : index
    %c0_333 = arith.constant 0 : index
    %c0_334 = arith.constant 0 : index
    %415 = vector.load %arg7[%c1_331, %c3_332, %c0_333, %c0_334] : memref<2x4x1x8xf32, #tpu.memory_space<vmem>>, vector<1x1x1x8xf32>
    %416 = vector.shape_cast %415 : vector<1x1x1x8xf32> to vector<1x8xf32>
    %417 = vector.broadcast %416 : vector<1x8xf32> to vector<8x8xf32>
    %418 = arith.addf %414, %417 : vector<8x8xf32>
    %c1_335 = arith.constant 1 : index
    %c3_336 = arith.constant 3 : index
    %c0_337 = arith.constant 0 : index
    %c0_338 = arith.constant 0 : index
    %419 = vector.load %arg5[%c1_335, %c3_336, %c0_337, %c0_338] : memref<2x4x32x8xf32, #tpu.memory_space<vmem>>, vector<1x1x32x8xf32>
    %420 = vector.shape_cast %419 : vector<1x1x32x8xf32> to vector<32x8xf32>
    %cst_339 = arith.constant dense<0.000000e+00> : vector<8x8xf32>
    %421 = tpu.matmul %293, %420, %cst_339 {dimension_numbers = #tpu.dot_dimension_numbers<[1], [0], [0], [1], [0, 0, 1, 1], [], []>} : vector<8x32xf32>, vector<32x8xf32>, vector<8x8xf32> -> vector<8x8xf32>
    %c1_340 = arith.constant 1 : index
    %c3_341 = arith.constant 3 : index
    %c0_342 = arith.constant 0 : index
    %c0_343 = arith.constant 0 : index
    %422 = vector.load %arg8[%c1_340, %c3_341, %c0_342, %c0_343] : memref<2x4x1x8xf32, #tpu.memory_space<vmem>>, vector<1x1x1x8xf32>
    %423 = vector.shape_cast %422 : vector<1x1x1x8xf32> to vector<1x8xf32>
    %424 = vector.broadcast %423 : vector<1x8xf32> to vector<8x8xf32>
    %425 = arith.addf %421, %424 : vector<8x8xf32>
    %c1_344 = arith.constant 1 : index
    %c3_345 = arith.constant 3 : index
    %c0_346 = arith.constant 0 : index
    %c0_347 = arith.constant 0 : index
    %426 = vector.load %arg6[%c1_344, %c3_345, %c0_346, %c0_347] : memref<2x4x32x8xf32, #tpu.memory_space<vmem>>, vector<1x1x32x8xf32>
    %427 = vector.shape_cast %426 : vector<1x1x32x8xf32> to vector<32x8xf32>
    %cst_348 = arith.constant dense<0.000000e+00> : vector<8x8xf32>
    %428 = tpu.matmul %293, %427, %cst_348 {dimension_numbers = #tpu.dot_dimension_numbers<[1], [0], [0], [1], [0, 0, 1, 1], [], []>} : vector<8x32xf32>, vector<32x8xf32>, vector<8x8xf32> -> vector<8x8xf32>
    %c1_349 = arith.constant 1 : index
    %c3_350 = arith.constant 3 : index
    %c0_351 = arith.constant 0 : index
    %c0_352 = arith.constant 0 : index
    %429 = vector.load %arg9[%c1_349, %c3_350, %c0_351, %c0_352] : memref<2x4x1x8xf32, #tpu.memory_space<vmem>>, vector<1x1x1x8xf32>
    %430 = vector.shape_cast %429 : vector<1x1x1x8xf32> to vector<1x8xf32>
    %431 = vector.broadcast %430 : vector<1x8xf32> to vector<8x8xf32>
    %432 = arith.addf %428, %431 : vector<8x8xf32>
    %cst_353 = arith.constant dense<0.000000e+00> : vector<8x8xf32>
    %433 = tpu.matmul %418, %425, %cst_353 {dimension_numbers = #tpu.dot_dimension_numbers<[1], [1], [0], [0], [0, 0, 1, 0], [], []>} : vector<8x8xf32>, vector<8x8xf32>, vector<8x8xf32> -> vector<8x8xf32>
    %cst_354 = arith.constant 0.353553385 : f32
    %434 = vector.broadcast %cst_354 : f32 to vector<8x8xf32>
    %435 = arith.mulf %433, %434 : vector<8x8xf32>
    %cst_355 = arith.constant dense<0xFF800000> : vector<8xf32>
    %436 = vector.multi_reduction <maximumf>, %435, %cst_355 [1] : vector<8x8xf32> to vector<8xf32>
    %437 = vector.shape_cast %436 : vector<8xf32> to vector<8x1xf32>
    %438 = vector.broadcast %437 : vector<8x1xf32> to vector<8x8xf32>
    %439 = arith.subf %435, %438 : vector<8x8xf32>
    %440 = math.exp %439 : vector<8x8xf32>
    %cst_356 = arith.constant dense<0.000000e+00> : vector<8xf32>
    %441 = vector.multi_reduction <add>, %440, %cst_356 [1] : vector<8x8xf32> to vector<8xf32>
    %442 = vector.shape_cast %441 : vector<8xf32> to vector<8x1xf32>
    %443 = tpu.reciprocal %442 {approx = true} : vector<8x1xf32> -> vector<8x1xf32>
    %444 = vector.broadcast %443 : vector<8x1xf32> to vector<8x8xf32>
    %445 = arith.mulf %440, %444 : vector<8x8xf32>
    %cst_357 = arith.constant dense<0.000000e+00> : vector<8x8xf32>
    %446 = tpu.matmul %445, %432, %cst_357 {dimension_numbers = #tpu.dot_dimension_numbers<[1], [0], [0], [1], [0, 0, 1, 1], [], []>} : vector<8x8xf32>, vector<8x8xf32>, vector<8x8xf32> -> vector<8x8xf32>
    %c1_358 = arith.constant 1 : index
    %c3_359 = arith.constant 3 : index
    %c0_360 = arith.constant 0 : index
    %c0_361 = arith.constant 0 : index
    %447 = vector.load %arg10[%c1_358, %c3_359, %c0_360, %c0_361] : memref<2x4x8x32xf32, #tpu.memory_space<vmem>>, vector<1x1x8x32xf32>
    %448 = vector.shape_cast %447 : vector<1x1x8x32xf32> to vector<8x32xf32>
    %cst_362 = arith.constant dense<0.000000e+00> : vector<8x32xf32>
    %449 = tpu.matmul %446, %448, %cst_362 {dimension_numbers = #tpu.dot_dimension_numbers<[1], [0], [0], [1], [0, 0, 1, 1], [], []>} : vector<8x8xf32>, vector<8x32xf32>, vector<8x32xf32> -> vector<8x32xf32>
    %450 = arith.addf %411, %449 : vector<8x32xf32>
    %c1_363 = arith.constant 1 : index
    %c0_364 = arith.constant 0 : index
    %c0_365 = arith.constant 0 : index
    %451 = vector.load %arg11[%c1_363, %c0_364, %c0_365] : memref<2x1x32xf32, #tpu.memory_space<vmem>>, vector<1x1x32xf32>
    %452 = vector.shape_cast %451 : vector<1x1x32xf32> to vector<1x32xf32>
    %453 = vector.broadcast %452 : vector<1x32xf32> to vector<8x32xf32>
    %454 = arith.addf %450, %453 : vector<8x32xf32>
    %455 = arith.addf %454, %269 : vector<8x32xf32>
    %c1_366 = arith.constant 1 : index
    %c0_367 = arith.constant 0 : index
    %c0_368 = arith.constant 0 : index
    %456 = vector.load %arg12[%c1_366, %c0_367, %c0_368] : memref<2x1x32xf32, #tpu.memory_space<vmem>>, vector<1x1x32xf32>
    %457 = vector.shape_cast %456 : vector<1x1x32xf32> to vector<1x32xf32>
    %c1_369 = arith.constant 1 : index
    %c0_370 = arith.constant 0 : index
    %c0_371 = arith.constant 0 : index
    %458 = vector.load %arg13[%c1_369, %c0_370, %c0_371] : memref<2x1x32xf32, #tpu.memory_space<vmem>>, vector<1x1x32xf32>
    %459 = vector.shape_cast %458 : vector<1x1x32xf32> to vector<1x32xf32>
    %cst_372 = arith.constant dense<0.000000e+00> : vector<8xf32>
    %460 = vector.multi_reduction <add>, %455, %cst_372 [1] : vector<8x32xf32> to vector<8xf32>
    %461 = vector.shape_cast %460 : vector<8xf32> to vector<8x1xf32>
    %cst_373 = arith.constant 3.200000e+01 : f32
    %462 = vector.broadcast %cst_373 : f32 to vector<8x1xf32>
    %463 = arith.divf %461, %462 : vector<8x1xf32>
    %464 = vector.broadcast %463 : vector<8x1xf32> to vector<8x32xf32>
    %465 = arith.subf %455, %464 : vector<8x32xf32>
    %466 = arith.mulf %465, %465 : vector<8x32xf32>
    %cst_374 = arith.constant dense<0.000000e+00> : vector<8xf32>
    %467 = vector.multi_reduction <add>, %466, %cst_374 [1] : vector<8x32xf32> to vector<8xf32>
    %468 = vector.shape_cast %467 : vector<8xf32> to vector<8x1xf32>
    %cst_375 = arith.constant 3.200000e+01 : f32
    %469 = vector.broadcast %cst_375 : f32 to vector<8x1xf32>
    %470 = arith.divf %468, %469 : vector<8x1xf32>
    %cst_376 = arith.constant 9.99999974E-6 : f32
    %471 = vector.broadcast %cst_376 : f32 to vector<8x1xf32>
    %472 = arith.addf %470, %471 : vector<8x1xf32>
    %473 = math.rsqrt %472 : vector<8x1xf32>
    %474 = vector.broadcast %473 : vector<8x1xf32> to vector<8x32xf32>
    %475 = arith.mulf %465, %474 : vector<8x32xf32>
    %476 = vector.broadcast %457 : vector<1x32xf32> to vector<8x32xf32>
    %477 = arith.mulf %475, %476 : vector<8x32xf32>
    %478 = vector.broadcast %459 : vector<1x32xf32> to vector<8x32xf32>
    %479 = arith.addf %477, %478 : vector<8x32xf32>
    %c1_377 = arith.constant 1 : index
    %c0_378 = arith.constant 0 : index
    %c0_379 = arith.constant 0 : index
    %480 = vector.load %arg14[%c1_377, %c0_378, %c0_379] : memref<2x32x128xf32, #tpu.memory_space<vmem>>, vector<1x32x128xf32>
    %481 = vector.shape_cast %480 : vector<1x32x128xf32> to vector<32x128xf32>
    %cst_380 = arith.constant dense<0.000000e+00> : vector<8x128xf32>
    %482 = tpu.matmul %479, %481, %cst_380 {dimension_numbers = #tpu.dot_dimension_numbers<[1], [0], [0], [1], [0, 0, 1, 1], [], []>} : vector<8x32xf32>, vector<32x128xf32>, vector<8x128xf32> -> vector<8x128xf32>
    %c1_381 = arith.constant 1 : index
    %c0_382 = arith.constant 0 : index
    %c0_383 = arith.constant 0 : index
    %483 = vector.load %arg15[%c1_381, %c0_382, %c0_383] : memref<2x1x128xf32, #tpu.memory_space<vmem>>, vector<1x1x128xf32>
    %484 = vector.shape_cast %483 : vector<1x1x128xf32> to vector<1x128xf32>
    %485 = vector.broadcast %484 : vector<1x128xf32> to vector<8x128xf32>
    %486 = arith.addf %482, %485 : vector<8x128xf32>
    %cst_384 = arith.constant 5.000000e-01 : f32
    %487 = vector.broadcast %cst_384 : f32 to vector<8x128xf32>
    %488 = arith.mulf %487, %486 : vector<8x128xf32>
    %cst_385 = arith.constant 0.707106769 : f32
    %489 = vector.broadcast %cst_385 : f32 to vector<8x128xf32>
    %490 = arith.mulf %486, %489 : vector<8x128xf32>
    %cst_386 = arith.constant 0.000000e+00 : f32
    %491 = vector.broadcast %cst_386 : f32 to vector<8x128xf32>
    %492 = arith.cmpf oge, %490, %491 : vector<8x128xf32>
    %cst_387 = arith.constant 1.000000e+00 : f32
    %cst_388 = arith.constant -1.000000e+00 : f32
    %493 = vector.broadcast %cst_387 : f32 to vector<8x128xf32>
    %494 = vector.broadcast %cst_388 : f32 to vector<8x128xf32>
    %495 = arith.select %492, %493, %494 : vector<8x128xi1>, vector<8x128xf32>
    %496 = math.absf %490 : vector<8x128xf32>
    %cst_389 = arith.constant 0.327591091 : f32
    %497 = vector.broadcast %cst_389 : f32 to vector<8x128xf32>
    %498 = arith.mulf %497, %496 : vector<8x128xf32>
    %cst_390 = arith.constant 1.000000e+00 : f32
    %499 = vector.broadcast %cst_390 : f32 to vector<8x128xf32>
    %500 = arith.addf %499, %498 : vector<8x128xf32>
    %cst_391 = arith.constant 1.000000e+00 : f32
    %501 = vector.broadcast %cst_391 : f32 to vector<8x128xf32>
    %502 = arith.divf %501, %500 : vector<8x128xf32>
    %cst_392 = arith.constant 1.06140542 : f32
    %503 = vector.broadcast %cst_392 : f32 to vector<8x128xf32>
    %504 = arith.mulf %503, %502 : vector<8x128xf32>
    %cst_393 = arith.constant -1.45315206 : f32
    %505 = vector.broadcast %cst_393 : f32 to vector<8x128xf32>
    %506 = arith.addf %504, %505 : vector<8x128xf32>
    %507 = arith.mulf %506, %502 : vector<8x128xf32>
    %cst_394 = arith.constant 1.42141378 : f32
    %508 = vector.broadcast %cst_394 : f32 to vector<8x128xf32>
    %509 = arith.addf %507, %508 : vector<8x128xf32>
    %510 = arith.mulf %509, %502 : vector<8x128xf32>
    %cst_395 = arith.constant -0.284496725 : f32
    %511 = vector.broadcast %cst_395 : f32 to vector<8x128xf32>
    %512 = arith.addf %510, %511 : vector<8x128xf32>
    %513 = arith.mulf %512, %502 : vector<8x128xf32>
    %cst_396 = arith.constant 0.254829586 : f32
    %514 = vector.broadcast %cst_396 : f32 to vector<8x128xf32>
    %515 = arith.addf %513, %514 : vector<8x128xf32>
    %516 = arith.mulf %515, %502 : vector<8x128xf32>
    %cst_397 = arith.constant 0.000000e+00 : f32
    %517 = vector.broadcast %cst_397 : f32 to vector<8x128xf32>
    %518 = arith.subf %517, %496 : vector<8x128xf32>
    %519 = arith.mulf %518, %496 : vector<8x128xf32>
    %520 = math.exp %519 : vector<8x128xf32>
    %521 = arith.mulf %516, %520 : vector<8x128xf32>
    %cst_398 = arith.constant 1.000000e+00 : f32
    %522 = vector.broadcast %cst_398 : f32 to vector<8x128xf32>
    %523 = arith.subf %522, %521 : vector<8x128xf32>
    %524 = arith.mulf %495, %523 : vector<8x128xf32>
    %cst_399 = arith.constant 1.000000e+00 : f32
    %525 = vector.broadcast %cst_399 : f32 to vector<8x128xf32>
    %526 = arith.addf %525, %524 : vector<8x128xf32>
    %527 = arith.mulf %488, %526 : vector<8x128xf32>
    %c1_400 = arith.constant 1 : index
    %c0_401 = arith.constant 0 : index
    %c0_402 = arith.constant 0 : index
    %528 = vector.load %arg16[%c1_400, %c0_401, %c0_402] : memref<2x128x32xf32, #tpu.memory_space<vmem>>, vector<1x128x32xf32>
    %529 = vector.shape_cast %528 : vector<1x128x32xf32> to vector<128x32xf32>
    %cst_403 = arith.constant dense<0.000000e+00> : vector<8x32xf32>
    %530 = tpu.matmul %527, %529, %cst_403 {dimension_numbers = #tpu.dot_dimension_numbers<[1], [0], [0], [1], [0, 0, 1, 1], [], []>} : vector<8x128xf32>, vector<128x32xf32>, vector<8x32xf32> -> vector<8x32xf32>
    %c1_404 = arith.constant 1 : index
    %c0_405 = arith.constant 0 : index
    %c0_406 = arith.constant 0 : index
    %531 = vector.load %arg17[%c1_404, %c0_405, %c0_406] : memref<2x1x32xf32, #tpu.memory_space<vmem>>, vector<1x1x32xf32>
    %532 = vector.shape_cast %531 : vector<1x1x32xf32> to vector<1x32xf32>
    %533 = vector.broadcast %532 : vector<1x32xf32> to vector<8x32xf32>
    %534 = arith.addf %530, %533 : vector<8x32xf32>
    %535 = arith.addf %534, %455 : vector<8x32xf32>
    %c0_407 = arith.constant 0 : index
    %c0_408 = arith.constant 0 : index
    %536 = vector.load %arg18[%c0_407, %c0_408] : memref<1x32xf32, #tpu.memory_space<vmem>>, vector<1x32xf32>
    %c0_409 = arith.constant 0 : index
    %c0_410 = arith.constant 0 : index
    %537 = vector.load %arg19[%c0_409, %c0_410] : memref<1x32xf32, #tpu.memory_space<vmem>>, vector<1x32xf32>
    %cst_411 = arith.constant dense<0.000000e+00> : vector<8xf32>
    %538 = vector.multi_reduction <add>, %535, %cst_411 [1] : vector<8x32xf32> to vector<8xf32>
    %539 = vector.shape_cast %538 : vector<8xf32> to vector<8x1xf32>
    %cst_412 = arith.constant 3.200000e+01 : f32
    %540 = vector.broadcast %cst_412 : f32 to vector<8x1xf32>
    %541 = arith.divf %539, %540 : vector<8x1xf32>
    %542 = vector.broadcast %541 : vector<8x1xf32> to vector<8x32xf32>
    %543 = arith.subf %535, %542 : vector<8x32xf32>
    %544 = arith.mulf %543, %543 : vector<8x32xf32>
    %cst_413 = arith.constant dense<0.000000e+00> : vector<8xf32>
    %545 = vector.multi_reduction <add>, %544, %cst_413 [1] : vector<8x32xf32> to vector<8xf32>
    %546 = vector.shape_cast %545 : vector<8xf32> to vector<8x1xf32>
    %cst_414 = arith.constant 3.200000e+01 : f32
    %547 = vector.broadcast %cst_414 : f32 to vector<8x1xf32>
    %548 = arith.divf %546, %547 : vector<8x1xf32>
    %cst_415 = arith.constant 9.99999997E-7 : f32
    %549 = vector.broadcast %cst_415 : f32 to vector<8x1xf32>
    %550 = arith.addf %548, %549 : vector<8x1xf32>
    %551 = math.rsqrt %550 : vector<8x1xf32>
    %552 = vector.broadcast %551 : vector<8x1xf32> to vector<8x32xf32>
    %553 = arith.mulf %543, %552 : vector<8x32xf32>
    %554 = vector.broadcast %536 : vector<1x32xf32> to vector<8x32xf32>
    %555 = arith.mulf %553, %554 : vector<8x32xf32>
    %556 = vector.broadcast %537 : vector<1x32xf32> to vector<8x32xf32>
    %557 = arith.addf %555, %556 : vector<8x32xf32>
    %c0_416 = arith.constant 0 : index
    %c0_417 = arith.constant 0 : index
    %c0_418 = arith.constant 0 : index
    %558 = vector.load %arg20[%c0_416, %c0_417, %c0_418] : memref<1x8x32xf32, #tpu.memory_space<vmem>>, vector<1x8x32xf32>
    %559 = vector.shape_cast %558 : vector<1x8x32xf32> to vector<8x32xf32>
    %560 = vector.shape_cast %557 : vector<8x32xf32> to vector<1x8x32xf32>
    tpu.vector_store %arg20[%c0_416, %c0_417, %c0_418], %560 {strides = array<i32>} : memref<1x8x32xf32, #tpu.memory_space<vmem>>, vector<1x8x32xf32>,
    return
  }
  func.func @transform_0(%arg0: i32) -> (i32, i32, i32) {
    %c0_i32 = arith.constant 0 : i32
    %c0_i32_0 = arith.constant 0 : i32
    %c0_i32_1 = arith.constant 0 : i32
    return %arg0, %c0_i32, %c0_i32_0 : i32, i32, i32
  }
  func.func @transform_1(%arg0: i32) -> (i32, i32, i32) {
    %c0_i32 = arith.constant 0 : i32
    %c0_i32_0 = arith.constant 0 : i32
    %c0_i32_1 = arith.constant 0 : i32
    %c0_i32_2 = arith.constant 0 : i32
    return %c0_i32, %c0_i32_0, %c0_i32_1 : i32, i32, i32
  }
  func.func @transform_2(%arg0: i32) -> (i32, i32, i32) {
    %c0_i32 = arith.constant 0 : i32
    %c0_i32_0 = arith.constant 0 : i32
    %c0_i32_1 = arith.constant 0 : i32
    %c0_i32_2 = arith.constant 0 : i32
    return %c0_i32, %c0_i32_0, %c0_i32_1 : i32, i32, i32
  }
  func.func @transform_3(%arg0: i32) -> (i32, i32, i32, i32) {
    %c0_i32 = arith.constant 0 : i32
    %c0_i32_0 = arith.constant 0 : i32
    %c0_i32_1 = arith.constant 0 : i32
    %c0_i32_2 = arith.constant 0 : i32
    %c0_i32_3 = arith.constant 0 : i32
    return %c0_i32, %c0_i32_0, %c0_i32_1, %c0_i32_2 : i32, i32, i32, i32
  }
  func.func @transform_4(%arg0: i32) -> (i32, i32, i32, i32) {
    %c0_i32 = arith.constant 0 : i32
    %c0_i32_0 = arith.constant 0 : i32
    %c0_i32_1 = arith.constant 0 : i32
    %c0_i32_2 = arith.constant 0 : i32
    %c0_i32_3 = arith.constant 0 : i32
    return %c0_i32, %c0_i32_0, %c0_i32_1, %c0_i32_2 : i32, i32, i32, i32
  }
  func.func @transform_5(%arg0: i32) -> (i32, i32, i32, i32) {
    %c0_i32 = arith.constant 0 : i32
    %c0_i32_0 = arith.constant 0 : i32
    %c0_i32_1 = arith.constant 0 : i32
    %c0_i32_2 = arith.constant 0 : i32
    %c0_i32_3 = arith.constant 0 : i32
    return %c0_i32, %c0_i32_0, %c0_i32_1, %c0_i32_2 : i32, i32, i32, i32
  }
  func.func @transform_6(%arg0: i32) -> (i32, i32, i32, i32) {
    %c0_i32 = arith.constant 0 : i32
    %c0_i32_0 = arith.constant 0 : i32
    %c0_i32_1 = arith.constant 0 : i32
    %c0_i32_2 = arith.constant 0 : i32
    %c0_i32_3 = arith.constant 0 : i32
    return %c0_i32, %c0_i32_0, %c0_i32_1, %c0_i32_2 : i32, i32, i32, i32
  }
  func.func @transform_7(%arg0: i32) -> (i32, i32, i32, i32) {
    %c0_i32 = arith.constant 0 : i32
    %c0_i32_0 = arith.constant 0 : i32
    %c0_i32_1 = arith.constant 0 : i32
    %c0_i32_2 = arith.constant 0 : i32
    %c0_i32_3 = arith.constant 0 : i32
    return %c0_i32, %c0_i32_0, %c0_i32_1, %c0_i32_2 : i32, i32, i32, i32
  }
  func.func @transform_8(%arg0: i32) -> (i32, i32, i32, i32) {
    %c0_i32 = arith.constant 0 : i32
    %c0_i32_0 = arith.constant 0 : i32
    %c0_i32_1 = arith.constant 0 : i32
    %c0_i32_2 = arith.constant 0 : i32
    %c0_i32_3 = arith.constant 0 : i32
    return %c0_i32, %c0_i32_0, %c0_i32_1, %c0_i32_2 : i32, i32, i32, i32
  }
  func.func @transform_9(%arg0: i32) -> (i32, i32, i32, i32) {
    %c0_i32 = arith.constant 0 : i32
    %c0_i32_0 = arith.constant 0 : i32
    %c0_i32_1 = arith.constant 0 : i32
    %c0_i32_2 = arith.constant 0 : i32
    %c0_i32_3 = arith.constant 0 : i32
    return %c0_i32, %c0_i32_0, %c0_i32_1, %c0_i32_2 : i32, i32, i32, i32
  }
  func.func @transform_10(%arg0: i32) -> (i32, i32, i32) {
    %c0_i32 = arith.constant 0 : i32
    %c0_i32_0 = arith.constant 0 : i32
    %c0_i32_1 = arith.constant 0 : i32
    %c0_i32_2 = arith.constant 0 : i32
    return %c0_i32, %c0_i32_0, %c0_i32_1 : i32, i32, i32
  }
  func.func @transform_11(%arg0: i32) -> (i32, i32, i32) {
    %c0_i32 = arith.constant 0 : i32
    %c0_i32_0 = arith.constant 0 : i32
    %c0_i32_1 = arith.constant 0 : i32
    %c0_i32_2 = arith.constant 0 : i32
    return %c0_i32, %c0_i32_0, %c0_i32_1 : i32, i32, i32
  }
  func.func @transform_12(%arg0: i32) -> (i32, i32, i32) {
    %c0_i32 = arith.constant 0 : i32
    %c0_i32_0 = arith.constant 0 : i32
    %c0_i32_1 = arith.constant 0 : i32
    %c0_i32_2 = arith.constant 0 : i32
    return %c0_i32, %c0_i32_0, %c0_i32_1 : i32, i32, i32
  }
  func.func @transform_13(%arg0: i32) -> (i32, i32, i32) {
    %c0_i32 = arith.constant 0 : i32
    %c0_i32_0 = arith.constant 0 : i32
    %c0_i32_1 = arith.constant 0 : i32
    %c0_i32_2 = arith.constant 0 : i32
    return %c0_i32, %c0_i32_0, %c0_i32_1 : i32, i32, i32
  }
  func.func @transform_14(%arg0: i32) -> (i32, i32, i32) {
    %c0_i32 = arith.constant 0 : i32
    %c0_i32_0 = arith.constant 0 : i32
    %c0_i32_1 = arith.constant 0 : i32
    %c0_i32_2 = arith.constant 0 : i32
    return %c0_i32, %c0_i32_0, %c0_i32_1 : i32, i32, i32
  }
  func.func @transform_15(%arg0: i32) -> (i32, i32, i32) {
    %c0_i32 = arith.constant 0 : i32
    %c0_i32_0 = arith.constant 0 : i32
    %c0_i32_1 = arith.constant 0 : i32
    %c0_i32_2 = arith.constant 0 : i32
    return %c0_i32, %c0_i32_0, %c0_i32_1 : i32, i32, i32
  }
  func.func @transform_16(%arg0: i32) -> (i32, i32, i32) {
    %c0_i32 = arith.constant 0 : i32
    %c0_i32_0 = arith.constant 0 : i32
    %c0_i32_1 = arith.constant 0 : i32
    %c0_i32_2 = arith.constant 0 : i32
    return %c0_i32, %c0_i32_0, %c0_i32_1 : i32, i32, i32
  }
  func.func @transform_17(%arg0: i32) -> (i32, i32) {
    %c0_i32 = arith.constant 0 : i32
    %c0_i32_0 = arith.constant 0 : i32
    %c0_i32_1 = arith.constant 0 : i32
    return %c0_i32, %c0_i32_0 : i32, i32
  }
  func.func @transform_18(%arg0: i32) -> (i32, i32) {
    %c0_i32 = arith.constant 0 : i32
    %c0_i32_0 = arith.constant 0 : i32
    %c0_i32_1 = arith.constant 0 : i32
    return %c0_i32, %c0_i32_0 : i32, i32
  }
  func.func @transform_19(%arg0: i32) -> (i32, i32, i32) {
    %c0_i32 = arith.constant 0 : i32
    %c0_i32_0 = arith.constant 0 : i32
    %c0_i32_1 = arith.constant 0 : i32
    return %arg0, %c0_i32, %c0_i32_0 : i32, i32, i32
  }
}

</mosaic_0001>

<llo_original>
// kernel: flash_transformer_forward.1
$region0: #{flash_transformer_forward.1}
  #allocation0 [shape = 'u32[]', space=smem, size = 0x4, offset = 0x4, fixed_abs, tag = 'smem constant byte address 0x4 - core index']
  #allocation1 [shape = 'u32[144,128]{1,0:T(1,128)}', space=vmem, size = 0x12000, scoped, tag = 'internal scratch']
  %s0 = inlined_call_operand.vmem [shape: f32[2,8,32], index: 0, kind: input, shape index: {}]
  %s1 = inlined_call_operand.vmem [shape: f32[2,1,32], index: 1, kind: input, shape index: {}]
  %s2 = inlined_call_operand.vmem [shape: f32[2,1,32], index: 2, kind: input, shape index: {}]
  %s3 = inlined_call_operand.vmem [shape: f32[2,4,32,8], index: 3, kind: input, shape index: {}]
  %s4 = inlined_call_operand.vmem [shape: f32[2,4,32,8], index: 4, kind: input, shape index: {}]
  %s5 = inlined_call_operand.vmem [shape: f32[2,4,32,8], index: 5, kind: input, shape index: {}]
  %s6 = inlined_call_operand.vmem [shape: f32[2,4,1,8], index: 6, kind: input, shape index: {}]
  %s7 = inlined_call_operand.vmem [shape: f32[2,4,1,8], index: 7, kind: input, shape index: {}]
  %s8 = inlined_call_operand.vmem [shape: f32[2,4,1,8], index: 8, kind: input, shape index: {}]
  %s9 = inlined_call_operand.vmem [shape: f32[2,4,8,32], index: 9, kind: input, shape index: {}]
  %s10 = inlined_call_operand.vmem [shape: f32[2,1,32], index: 10, kind: input, shape index: {}]
  %s11 = inlined_call_operand.vmem [shape: f32[2,1,32], index: 11, kind: input, shape index: {}]
  %s12 = inlined_call_operand.vmem [shape: f32[2,1,32], index: 12, kind: input, shape index: {}]
  %s13 = inlined_call_operand.vmem [shape: f32[2,32,128], index: 13, kind: input, shape index: {}]
  %s14 = inlined_call_operand.vmem [shape: f32[2,1,128], index: 14, kind: input, shape index: {}]
  %s15 = inlined_call_operand.vmem [shape: f32[2,128,32], index: 15, kind: input, shape index: {}]
  %s16 = inlined_call_operand.vmem [shape: f32[2,1,32], index: 16, kind: input, shape index: {}]
  %s17 = inlined_call_operand.vmem [shape: f32[1,32], index: 17, kind: input, shape index: {}]
  %s18 = inlined_call_operand.vmem [shape: f32[1,32], index: 18, kind: input, shape index: {}]
  %s19 = inlined_call_operand.hbm [shape: f32[2,8,32], index: 19, kind: output, shape index: {}]
  %s20 = sld [smem:[#allocation0]]
  $region109: #{flash_transformer_forward.1} parent=0
    _
  %s22 = ssub.s32 1, %s20
  %s23 = scalar_select 0, %s22, %s20
  $region1: #{flash_transformer_forward.1} parent=0
    #allocation2 [shape = 'u8[8192]{0}', space=vmem, size = 0x2000, scoped, tag = 'output window, operand 0']
    #allocation3 [shape = 's32[2]{0}', space=sflag, size = 0x8, scoped, tag = 'scoped memory for flash_transformer_forward.1']
    %24 = vsyncpa [#allocation3], 0
    %s25 = scalar_lea.sflag [#allocation3], 1
    %26 = vsyncpa %s25, 0
    loop: start=0, step=1, limit=4
    $region2: #{flash_transformer_forward.1} parent=1 // loop_pre_header
      _
    $region3: #{flash_transformer_forward.1} parent=1 // loop_header
      %s28 = sphi 0, %s32
      %p29 = scmp.ge.s32.totalorder %s28, 4
      %s38 = sphi 0, %s40
      %s41 = sphi 0, %s38
      %s42 = sphi 0, %s41
      %s58 = sphi 0, %s42
      %s62 = sphi 0, %s62
      %s64 = sphi 0, %s62
      %s65 = sphi 0, %s64
      %s79 = sphi 0, %s65
      %s83 = sphi 0, %s83
      %s85 = sphi 0, %s83
      %s86 = sphi 0, %s85
      %s100 = sphi 0, %s86
      %s104 = sphi 0, %s104
      %s106 = sphi 0, %s104
      %s107 = sphi 0, %s106
      %s121 = sphi 0, %s107
      %s125 = sphi 0, %s125
      %s127 = sphi 0, %s125
      %s128 = sphi 0, %s127
      %s142 = sphi 0, %s128
      %s146 = sphi 0, %s146
      %s148 = sphi 0, %s146
      %s149 = sphi 0, %s148
      %s163 = sphi 0, %s149
      %s167 = sphi 0, %s167
      %s169 = sphi 0, %s167
      %s170 = sphi 0, %s169
      %s184 = sphi 0, %s170
      %s188 = sphi 0, %s188
      %s190 = sphi 0, %s188
      %s191 = sphi 0, %s190
      %s205 = sphi 0, %s191
      %s209 = sphi 0, %s209
      %s211 = sphi 0, %s209
      %s212 = sphi 0, %s211
      %s226 = sphi 0, %s212
      %s230 = sphi 0, %s230
      %s232 = sphi 0, %s230
      %s233 = sphi 0, %s232
      %s247 = sphi 0, %s233
      %s251 = sphi 0, %s251
      %s253 = sphi 0, %s251
      %s254 = sphi 0, %s253
      %s268 = sphi 0, %s254
      %s272 = sphi 0, %s272
      %s274 = sphi 0, %s272
      %s275 = sphi 0, %s274
      %s289 = sphi 0, %s275
      %s293 = sphi 0, %s293
      %s295 = sphi 0, %s293
      %s296 = sphi 0, %s295
      %s310 = sphi 0, %s296
      %s314 = sphi 0, %s314
      %s316 = sphi 0, %s314
      %s317 = sphi 0, %s316
      %s331 = sphi 0, %s317
      %s335 = sphi 0, %s335
      %s337 = sphi 0, %s335
      %s338 = sphi 0, %s337
      %s352 = sphi 0, %s338
      %s356 = sphi 0, %s356
      %s358 = sphi 0, %s356
      %s359 = sphi 0, %s358
      %s373 = sphi 0, %s359
      %s377 = sphi 0, %s377
      %s379 = sphi 0, %s377
      %s380 = sphi 0, %s379
      %s394 = sphi 0, %s380
      %s398 = sphi 0, %s398
      %s400 = sphi 0, %s398
      %s401 = sphi 0, %s400
      %s415 = sphi 0, %s401
      %s419 = sphi 0, %s419
      %s421 = sphi 0, %s419
      %s422 = sphi 0, %s421
      %s436 = sphi 0, %s422
      %s442 = sphi 0, %s444
      %s445 = sphi 0, %s442
      %s446 = sphi 0, %s445
      %s462 = sphi 0, %s446
    $region4: #{flash_transformer_forward.1} parent=1 // loop_header_branch
      %31 = sbr.rel (%p29) target = $region8
    $region5: #{flash_transformer_forward.1} parent=1 // loop_body
      %s33 = ssub.s32 %s28, 1
      %s34 = ssub.s32 %s28, 2
      %s35 = sadd.s32 %s28, 1
      %s36 = ssub.s32 %s28, %s35
      %p37 = scmp.eq.s32.totalorder %s36, 0
      %s39 = sadd.s32 %s38, 1
      %s40 = scalar_select %p37, %s38, %s39
      %p43 = pneg %p37
      %p44 = scmp.eq.s32.totalorder %s28, 1
      %p45 = por %p43, %p44
      %p46 = scmp.ne.s32.totalorder %s38, %s41
      %p47 = scmp.eq.s32.totalorder %s28, 0
      %p48 = por %p46, %p47
      %p49 = scmp.ne.s32.totalorder %s38, %s41
      %p50 = scmp.eq.s32.totalorder %s33, 1
      %p51 = por %p49, %p50
      %p52 = scmp.ne.s32.totalorder %s41, %s42
      %p53 = scmp.eq.s32.totalorder %s33, 0
      %p54 = por %p52, %p53
      %p55 = scmp.ne.s32.totalorder %s41, %s42
      %p56 = scmp.eq.s32.totalorder %s34, 1
      %p57 = por %p55, %p56
      %p59 = scmp.ne.s32.totalorder %s42, %s58
      %p60 = scmp.eq.s32.totalorder %s34, 0
      %p61 = por %p59, %p60
      %s63 = sadd.s32 %s62, 1
      %p66 = scmp.eq.s32.totalorder %s28, 1
      %p67 = scmp.ne.s32.totalorder %s62, %s64
      %p68 = scmp.eq.s32.totalorder %s28, 0
      %p69 = por %p67, %p68
      %p70 = scmp.ne.s32.totalorder %s62, %s64
      %p71 = scmp.eq.s32.totalorder %s33, 1
      %p72 = por %p70, %p71
      %p73 = scmp.ne.s32.totalorder %s64, %s65
      %p74 = scmp.eq.s32.totalorder %s33, 0
      %p75 = por %p73, %p74
      %p76 = scmp.ne.s32.totalorder %s64, %s65
      %p77 = scmp.eq.s32.totalorder %s34, 1
      %p78 = por %p76, %p77
      %p80 = scmp.ne.s32.totalorder %s65, %s79
      %p81 = scmp.eq.s32.totalorder %s34, 0
      %p82 = por %p80, %p81
      %s84 = sadd.s32 %s83, 1
      %p87 = scmp.eq.s32.totalorder %s28, 1
      %p88 = scmp.ne.s32.totalorder %s83, %s85
      %p89 = scmp.eq.s32.totalorder %s28, 0
      %p90 = por %p88, %p89
      %p91 = scmp.ne.s32.totalorder %s83, %s85
      %p92 = scmp.eq.s32.totalorder %s33, 1
      %p93 = por %p91, %p92
      %p94 = scmp.ne.s32.totalorder %s85, %s86
      %p95 = scmp.eq.s32.totalorder %s33, 0
      %p96 = por %p94, %p95
      %p97 = scmp.ne.s32.totalorder %s85, %s86
      %p98 = scmp.eq.s32.totalorder %s34, 1
      %p99 = por %p97, %p98
      %p101 = scmp.ne.s32.totalorder %s86, %s100
      %p102 = scmp.eq.s32.totalorder %s34, 0
      %p103 = por %p101, %p102
      %s105 = sadd.s32 %s104, 1
      %p108 = scmp.eq.s32.totalorder %s28, 1
      %p109 = scmp.ne.s32.totalorder %s104, %s106
      %p110 = scmp.eq.s32.totalorder %s28, 0
      %p111 = por %p109, %p110
      %p112 = scmp.ne.s32.totalorder %s104, %s106
      %p113 = scmp.eq.s32.totalorder %s33, 1
      %p114 = por %p112, %p113
      %p115 = scmp.ne.s32.totalorder %s106, %s107
      %p116 = scmp.eq.s32.totalorder %s33, 0
      %p117 = por %p115, %p116
      %p118 = scmp.ne.s32.totalorder %s106, %s107
      %p119 = scmp.eq.s32.totalorder %s34, 1
      %p120 = por %p118, %p119
      %p122 = scmp.ne.s32.totalorder %s107, %s121
      %p123 = scmp.eq.s32.totalorder %s34, 0
      %p124 = por %p122, %p123
      %s126 = sadd.s32 %s125, 1
      %p129 = scmp.eq.s32.totalorder %s28, 1
      %p130 = scmp.ne.s32.totalorder %s125, %s127
      %p131 = scmp.eq.s32.totalorder %s28, 0
      %p132 = por %p130, %p131
      %p133 = scmp.ne.s32.totalorder %s125, %s127
      %p134 = scmp.eq.s32.totalorder %s33, 1
      %p135 = por %p133, %p134
      %p136 = scmp.ne.s32.totalorder %s127, %s128
      %p137 = scmp.eq.s32.totalorder %s33, 0
      %p138 = por %p136, %p137
      %p139 = scmp.ne.s32.totalorder %s127, %s128
      %p140 = scmp.eq.s32.totalorder %s34, 1
      %p141 = por %p139, %p140
      %p143 = scmp.ne.s32.totalorder %s128, %s142
      %p144 = scmp.eq.s32.totalorder %s34, 0
      %p145 = por %p143, %p144
      %s147 = sadd.s32 %s146, 1
      %p150 = scmp.eq.s32.totalorder %s28, 1
      %p151 = scmp.ne.s32.totalorder %s146, %s148
      %p152 = scmp.eq.s32.totalorder %s28, 0
      %p153 = por %p151, %p152
      %p154 = scmp.ne.s32.totalorder %s146, %s148
      %p155 = scmp.eq.s32.totalorder %s33, 1
      %p156 = por %p154, %p155
      %p157 = scmp.ne.s32.totalorder %s148, %s149
      %p158 = scmp.eq.s32.totalorder %s33, 0
      %p159 = por %p157, %p158
      %p160 = scmp.ne.s32.totalorder %s148, %s149
      %p161 = scmp.eq.s32.totalorder %s34, 1
      %p162 = por %p160, %p161
      %p164 = scmp.ne.s32.totalorder %s149, %s163
      %p165 = scmp.eq.s32.totalorder %s34, 0
      %p166 = por %p164, %p165
      %s168 = sadd.s32 %s167, 1
      %p171 = scmp.eq.s32.totalorder %s28, 1
      %p172 = scmp.ne.s32.totalorder %s167, %s169
      %p173 = scmp.eq.s32.totalorder %s28, 0
      %p174 = por %p172, %p173
      %p175 = scmp.ne.s32.totalorder %s167, %s169
      %p176 = scmp.eq.s32.totalorder %s33, 1
      %p177 = por %p175, %p176
      %p178 = scmp.ne.s32.totalorder %s169, %s170
      %p179 = scmp.eq.s32.totalorder %s33, 0
      %p180 = por %p178, %p179
      %p181 = scmp.ne.s32.totalorder %s169, %s170
      %p182 = scmp.eq.s32.totalorder %s34, 1
      %p183 = por %p181, %p182
      %p185 = scmp.ne.s32.totalorder %s170, %s184
      %p186 = scmp.eq.s32.totalorder %s34, 0
      %p187 = por %p185, %p186
      %s189 = sadd.s32 %s188, 1
      %p192 = scmp.eq.s32.totalorder %s28, 1
      %p193 = scmp.ne.s32.totalorder %s188, %s190
      %p194 = scmp.eq.s32.totalorder %s28, 0
      %p195 = por %p193, %p194
      %p196 = scmp.ne.s32.totalorder %s188, %s190
      %p197 = scmp.eq.s32.totalorder %s33, 1
      %p198 = por %p196, %p197
      %p199 = scmp.ne.s32.totalorder %s190, %s191
      %p200 = scmp.eq.s32.totalorder %s33, 0
      %p201 = por %p199, %p200
      %p202 = scmp.ne.s32.totalorder %s190, %s191
      %p203 = scmp.eq.s32.totalorder %s34, 1
      %p204 = por %p202, %p203
      %p206 = scmp.ne.s32.totalorder %s191, %s205
      %p207 = scmp.eq.s32.totalorder %s34, 0
      %p208 = por %p206, %p207
      %s210 = sadd.s32 %s209, 1
      %p213 = scmp.eq.s32.totalorder %s28, 1
      %p214 = scmp.ne.s32.totalorder %s209, %s211
      %p215 = scmp.eq.s32.totalorder %s28, 0
      %p216 = por %p214, %p215
      %p217 = scmp.ne.s32.totalorder %s209, %s211
      %p218 = scmp.eq.s32.totalorder %s33, 1
      %p219 = por %p217, %p218
      %p220 = scmp.ne.s32.totalorder %s211, %s212
      %p221 = scmp.eq.s32.totalorder %s33, 0
      %p222 = por %p220, %p221
      %p223 = scmp.ne.s32.totalorder %s211, %s212
      %p224 = scmp.eq.s32.totalorder %s34, 1
      %p225 = por %p223, %p224
      %p227 = scmp.ne.s32.totalorder %s212, %s226
      %p228 = scmp.eq.s32.totalorder %s34, 0
      %p229 = por %p227, %p228
      %s231 = sadd.s32 %s230, 1
      %p234 = scmp.eq.s32.totalorder %s28, 1
      %p235 = scmp.ne.s32.totalorder %s230, %s232
      %p236 = scmp.eq.s32.totalorder %s28, 0
      %p237 = por %p235, %p236
      %p238 = scmp.ne.s32.totalorder %s230, %s232
      %p239 = scmp.eq.s32.totalorder %s33, 1
      %p240 = por %p238, %p239
      %p241 = scmp.ne.s32.totalorder %s232, %s233
      %p242 = scmp.eq.s32.totalorder %s33, 0
      %p243 = por %p241, %p242
      %p244 = scmp.ne.s32.totalorder %s232, %s233
      %p245 = scmp.eq.s32.totalorder %s34, 1
      %p246 = por %p244, %p245
      %p248 = scmp.ne.s32.totalorder %s233, %s247
      %p249 = scmp.eq.s32.totalorder %s34, 0
      %p250 = por %p248, %p249
      %s252 = sadd.s32 %s251, 1
      %p255 = scmp.eq.s32.totalorder %s28, 1
      %p256 = scmp.ne.s32.totalorder %s251, %s253
      %p257 = scmp.eq.s32.totalorder %s28, 0
      %p258 = por %p256, %p257
      %p259 = scmp.ne.s32.totalorder %s251, %s253
      %p260 = scmp.eq.s32.totalorder %s33, 1
      %p261 = por %p259, %p260
      %p262 = scmp.ne.s32.totalorder %s253, %s254
      %p263 = scmp.eq.s32.totalorder %s33, 0
      %p264 = por %p262, %p263
      %p265 = scmp.ne.s32.totalorder %s253, %s254
      %p266 = scmp.eq.s32.totalorder %s34, 1
      %p267 = por %p265, %p266
      %p269 = scmp.ne.s32.totalorder %s254, %s268
      %p270 = scmp.eq.s32.totalorder %s34, 0
      %p271 = por %p269, %p270
      %s273 = sadd.s32 %s272, 1
      %p276 = scmp.eq.s32.totalorder %s28, 1
      %p277 = scmp.ne.s32.totalorder %s272, %s274
      %p278 = scmp.eq.s32.totalorder %s28, 0
      %p279 = por %p277, %p278
      %p280 = scmp.ne.s32.totalorder %s272, %s274
      %p281 = scmp.eq.s32.totalorder %s33, 1
      %p282 = por %p280, %p281
      %p283 = scmp.ne.s32.totalorder %s274, %s275
      %p284 = scmp.eq.s32.totalorder %s33, 0
      %p285 = por %p283, %p284
      %p286 = scmp.ne.s32.totalorder %s274, %s275
      %p287 = scmp.eq.s32.totalorder %s34, 1
      %p288 = por %p286, %p287
      %p290 = scmp.ne.s32.totalorder %s275, %s289
      %p291 = scmp.eq.s32.totalorder %s34, 0
      %p292 = por %p290, %p291
      %s294 = sadd.s32 %s293, 1
      %p297 = scmp.eq.s32.totalorder %s28, 1
      %p298 = scmp.ne.s32.totalorder %s293, %s295
      %p299 = scmp.eq.s32.totalorder %s28, 0
      %p300 = por %p298, %p299
      %p301 = scmp.ne.s32.totalorder %s293, %s295
      %p302 = scmp.eq.s32.totalorder %s33, 1
      %p303 = por %p301, %p302
      %p304 = scmp.ne.s32.totalorder %s295, %s296
      %p305 = scmp.eq.s32.totalorder %s33, 0
      %p306 = por %p304, %p305
      %p307 = scmp.ne.s32.totalorder %s295, %s296
      %p308 = scmp.eq.s32.totalorder %s34, 1
      %p309 = por %p307, %p308
      %p311 = scmp.ne.s32.totalorder %s296, %s310
      %p312 = scmp.eq.s32.totalorder %s34, 0
      %p313 = por %p311, %p312
      %s315 = sadd.s32 %s314, 1
      %p318 = scmp.eq.s32.totalorder %s28, 1
      %p319 = scmp.ne.s32.totalorder %s314, %s316
      %p320 = scmp.eq.s32.totalorder %s28, 0
      %p321 = por %p319, %p320
      %p322 = scmp.ne.s32.totalorder %s314, %s316
      %p323 = scmp.eq.s32.totalorder %s33, 1
      %p324 = por %p322, %p323
      %p325 = scmp.ne.s32.totalorder %s316, %s317
      %p326 = scmp.eq.s32.totalorder %s33, 0
      %p327 = por %p325, %p326
      %p328 = scmp.ne.s32.totalorder %s316, %s317
      %p329 = scmp.eq.s32.totalorder %s34, 1
      %p330 = por %p328, %p329
      %p332 = scmp.ne.s32.totalorder %s317, %s331
      %p333 = scmp.eq.s32.totalorder %s34, 0
      %p334 = por %p332, %p333
      %s336 = sadd.s32 %s335, 1
      %p339 = scmp.eq.s32.totalorder %s28, 1
      %p340 = scmp.ne.s32.totalorder %s335, %s337
      %p341 = scmp.eq.s32.totalorder %s28, 0
      %p342 = por %p340, %p341
      %p343 = scmp.ne.s32.totalorder %s335, %s337
      %p344 = scmp.eq.s32.totalorder %s33, 1
      %p345 = por %p343, %p344
      %p346 = scmp.ne.s32.totalorder %s337, %s338
      %p347 = scmp.eq.s32.totalorder %s33, 0
      %p348 = por %p346, %p347
      %p349 = scmp.ne.s32.totalorder %s337, %s338
      %p350 = scmp.eq.s32.totalorder %s34, 1
      %p351 = por %p349, %p350
      %p353 = scmp.ne.s32.totalorder %s338, %s352
      %p354 = scmp.eq.s32.totalorder %s34, 0
      %p355 = por %p353, %p354
      %s357 = sadd.s32 %s356, 1
      %p360 = scmp.eq.s32.totalorder %s28, 1
      %p361 = scmp.ne.s32.totalorder %s356, %s358
      %p362 = scmp.eq.s32.totalorder %s28, 0
      %p363 = por %p361, %p362
      %p364 = scmp.ne.s32.totalorder %s356, %s358
      %p365 = scmp.eq.s32.totalorder %s33, 1
      %p366 = por %p364, %p365
      %p367 = scmp.ne.s32.totalorder %s358, %s359
      %p368 = scmp.eq.s32.totalorder %s33, 0
      %p369 = por %p367, %p368
      %p370 = scmp.ne.s32.totalorder %s358, %s359
      %p371 = scmp.eq.s32.totalorder %s34, 1
      %p372 = por %p370, %p371
      %p374 = scmp.ne.s32.totalorder %s359, %s373
      %p375 = scmp.eq.s32.totalorder %s34, 0
      %p376 = por %p374, %p375
      %s378 = sadd.s32 %s377, 1
      %p381 = scmp.eq.s32.totalorder %s28, 1
      %p382 = scmp.ne.s32.totalorder %s377, %s379
      %p383 = scmp.eq.s32.totalorder %s28, 0
      %p384 = por %p382, %p383
      %p385 = scmp.ne.s32.totalorder %s377, %s379
      %p386 = scmp.eq.s32.totalorder %s33, 1
      %p387 = por %p385, %p386
      %p388 = scmp.ne.s32.totalorder %s379, %s380
      %p389 = scmp.eq.s32.totalorder %s33, 0
      %p390 = por %p388, %p389
      %p391 = scmp.ne.s32.totalorder %s379, %s380
      %p392 = scmp.eq.s32.totalorder %s34, 1
      %p393 = por %p391, %p392
      %p395 = scmp.ne.s32.totalorder %s380, %s394
      %p396 = scmp.eq.s32.totalorder %s34, 0
      %p397 = por %p395, %p396
      %s399 = sadd.s32 %s398, 1
      %p402 = scmp.eq.s32.totalorder %s28, 1
      %p403 = scmp.ne.s32.totalorder %s398, %s400
      %p404 = scmp.eq.s32.totalorder %s28, 0
      %p405 = por %p403, %p404
      %p406 = scmp.ne.s32.totalorder %s398, %s400
      %p407 = scmp.eq.s32.totalorder %s33, 1
      %p408 = por %p406, %p407
      %p409 = scmp.ne.s32.totalorder %s400, %s401
      %p410 = scmp.eq.s32.totalorder %s33, 0
      %p411 = por %p409, %p410
      %p412 = scmp.ne.s32.totalorder %s400, %s401
      %p413 = scmp.eq.s32.totalorder %s34, 1
      %p414 = por %p412, %p413
      %p416 = scmp.ne.s32.totalorder %s401, %s415
      %p417 = scmp.eq.s32.totalorder %s34, 0
      %p418 = por %p416, %p417
      %s420 = sadd.s32 %s419, 1
      %p423 = scmp.eq.s32.totalorder %s28, 1
      %p424 = scmp.ne.s32.totalorder %s419, %s421
      %p425 = scmp.eq.s32.totalorder %s28, 0
      %p426 = por %p424, %p425
      %p427 = scmp.ne.s32.totalorder %s419, %s421
      %p428 = scmp.eq.s32.totalorder %s33, 1
      %p429 = por %p427, %p428
      %p430 = scmp.ne.s32.totalorder %s421, %s422
      %p431 = scmp.eq.s32.totalorder %s33, 0
      %p432 = por %p430, %p431
      %p433 = scmp.ne.s32.totalorder %s421, %s422
      %p434 = scmp.eq.s32.totalorder %s34, 1
      %p435 = por %p433, %p434
      %p437 = scmp.ne.s32.totalorder %s422, %s436
      %p438 = scmp.eq.s32.totalorder %s34, 0
      %p439 = por %p437, %p438
      %s440 = ssub.s32 %s28, %s35
      %p441 = scmp.eq.s32.totalorder %s440, 0
      %s443 = sadd.s32 %s442, 1
      %s444 = scalar_select %p441, %s442, %s443
      %p447 = pneg %p441
      %p448 = scmp.eq.s32.totalorder %s28, 1
      %p449 = por %p447, %p448
      %p450 = scmp.ne.s32.totalorder %s442, %s445
      %p451 = scmp.eq.s32.totalorder %s28, 0
      %p452 = por %p450, %p451
      %p453 = scmp.ne.s32.totalorder %s442, %s445
      %p454 = scmp.eq.s32.totalorder %s33, 1
      %p455 = por %p453, %p454
      %p456 = scmp.ne.s32.totalorder %s445, %s446
      %p457 = scmp.eq.s32.totalorder %s33, 0
      %p458 = por %p456, %p457
      %p459 = scmp.ne.s32.totalorder %s445, %s446
      %p460 = scmp.eq.s32.totalorder %s34, 1
      %p461 = por %p459, %p460
      %p463 = scmp.ne.s32.totalorder %s446, %s462
      %p464 = scmp.eq.s32.totalorder %s34, 0
      %p465 = por %p463, %p464
      %p466 = scmp.le.s32.totalorder 1, %s28
      %p467 = scmp.lt.s32.totalorder %s28, 3
      %p468 = pnand %p466, %p467
      %p469 = pneg %p468
      // Predicated region
      $region9: #{flash_transformer_forward.1} parent=5 // pred_check
        _
      $region10: #{flash_transformer_forward.1} parent=5 // pred_check_branch
        %471 = sbr.rel (%p468) target = $region12
      $region11: #{flash_transformer_forward.1} parent=5 // pred_region
        %s472 = ssub.s32 %s28, 1
        // Predicated region
        $region13: #{flash_transformer_forward.1} parent=11 // pred_check
          %p473 = pneg %p75
        $region14: #{flash_transformer_forward.1} parent=11 // pred_check_branch
          %475 = sbr.rel (%p473) target = $region16
        $region15: #{flash_transformer_forward.1} parent=11 // pred_region
          _
        $region16: #{flash_transformer_forward.1} parent=11 // pred_fallthru
          _
        // Predicated region
        $region17: #{flash_transformer_forward.1} parent=11 // pred_check
          %p476 = pneg %p96
        $region18: #{flash_transformer_forward.1} parent=11 // pred_check_branch
          %478 = sbr.rel (%p476) target = $region20
        $region19: #{flash_transformer_forward.1} parent=11 // pred_region
          _
        $region20: #{flash_transformer_forward.1} parent=11 // pred_fallthru
          _
        // Predicated region
        $region21: #{flash_transformer_forward.1} parent=11 // pred_check
          %p479 = pneg %p117
        $region22: #{flash_transformer_forward.1} parent=11 // pred_check_branch
          %481 = sbr.rel (%p479) target = $region24
        $region23: #{flash_transformer_forward.1} parent=11 // pred_region
          _
        $region24: #{flash_transformer_forward.1} parent=11 // pred_fallthru
          _
        // Predicated region
        $region25: #{flash_transformer_forward.1} parent=11 // pred_check
          %p482 = pneg %p138
        $region26: #{flash_transformer_forward.1} parent=11 // pred_check_branch
          %484 = sbr.rel (%p482) target = $region28
        $region27: #{flash_transformer_forward.1} parent=11 // pred_region
          _
        $region28: #{flash_transformer_forward.1} parent=11 // pred_fallthru
          _
        // Predicated region
        $region29: #{flash_transformer_forward.1} parent=11 // pred_check
          %p485 = pneg %p159
        $region30: #{flash_transformer_forward.1} parent=11 // pred_check_branch
          %487 = sbr.rel (%p485) target = $region32
        $region31: #{flash_transformer_forward.1} parent=11 // pred_region
          _
        $region32: #{flash_transformer_forward.1} parent=11 // pred_fallthru
          _
        // Predicated region
        $region33: #{flash_transformer_forward.1} parent=11 // pred_check
          %p488 = pneg %p180
        $region34: #{flash_transformer_forward.1} parent=11 // pred_check_branch
          %490 = sbr.rel (%p488) target = $region36
        $region35: #{flash_transformer_forward.1} parent=11 // pred_region
          _
        $region36: #{flash_transformer_forward.1} parent=11 // pred_fallthru
          _
        // Predicated region
        $region37: #{flash_transformer_forward.1} parent=11 // pred_check
          %p491 = pneg %p201
        $region38: #{flash_transformer_forward.1} parent=11 // pred_check_branch
          %493 = sbr.rel (%p491) target = $region40
        $region39: #{flash_transformer_forward.1} parent=11 // pred_region
          _
        $region40: #{flash_transformer_forward.1} parent=11 // pred_fallthru
          _
        // Predicated region
        $region41: #{flash_transformer_forward.1} parent=11 // pred_check
          %p494 = pneg %p222
        $region42: #{flash_transformer_forward.1} parent=11 // pred_check_branch
          %496 = sbr.rel (%p494) target = $region44
        $region43: #{flash_transformer_forward.1} parent=11 // pred_region
          _
        $region44: #{flash_transformer_forward.1} parent=11 // pred_fallthru
          _
        // Predicated region
        $region45: #{flash_transformer_forward.1} parent=11 // pred_check
          %p497 = pneg %p243
        $region46: #{flash_transformer_forward.1} parent=11 // pred_check_branch
          %499 = sbr.rel (%p497) target = $region48
        $region47: #{flash_transformer_forward.1} parent=11 // pred_region
          _
        $region48: #{flash_transformer_forward.1} parent=11 // pred_fallthru
          _
        // Predicated region
        $region49: #{flash_transformer_forward.1} parent=11 // pred_check
          %p500 = pneg %p264
        $region50: #{flash_transformer_forward.1} parent=11 // pred_check_branch
          %502 = sbr.rel (%p500) target = $region52
        $region51: #{flash_transformer_forward.1} parent=11 // pred_region
          _
        $region52: #{flash_transformer_forward.1} parent=11 // pred_fallthru
          _
        // Predicated region
        $region53: #{flash_transformer_forward.1} parent=11 // pred_check
          %p503 = pneg %p285
        $region54: #{flash_transformer_forward.1} parent=11 // pred_check_branch
          %505 = sbr.rel (%p503) target = $region56
        $region55: #{flash_transformer_forward.1} parent=11 // pred_region
          _
        $region56: #{flash_transformer_forward.1} parent=11 // pred_fallthru
          _
        // Predicated region
        $region57: #{flash_transformer_forward.1} parent=11 // pred_check
          %p506 = pneg %p306
        $region58: #{flash_transformer_forward.1} parent=11 // pred_check_branch
          %508 = sbr.rel (%p506) target = $region60
        $region59: #{flash_transformer_forward.1} parent=11 // pred_region
          _
        $region60: #{flash_transformer_forward.1} parent=11 // pred_fallthru
          _
        // Predicated region
        $region61: #{flash_transformer_forward.1} parent=11 // pred_check
          %p509 = pneg %p327
        $region62: #{flash_transformer_forward.1} parent=11 // pred_check_branch
          %511 = sbr.rel (%p509) target = $region64
        $region63: #{flash_transformer_forward.1} parent=11 // pred_region
          _
        $region64: #{flash_transformer_forward.1} parent=11 // pred_fallthru
          _
        // Predicated region
        $region65: #{flash_transformer_forward.1} parent=11 // pred_check
          %p512 = pneg %p348
        $region66: #{flash_transformer_forward.1} parent=11 // pred_check_branch
          %514 = sbr.rel (%p512) target = $region68
        $region67: #{flash_transformer_forward.1} parent=11 // pred_region
          _
        $region68: #{flash_transformer_forward.1} parent=11 // pred_fallthru
          _
        // Predicated region
        $region69: #{flash_transformer_forward.1} parent=11 // pred_check
          %p515 = pneg %p369
        $region70: #{flash_transformer_forward.1} parent=11 // pred_check_branch
          %517 = sbr.rel (%p515) target = $region72
        $region71: #{flash_transformer_forward.1} parent=11 // pred_region
          _
        $region72: #{flash_transformer_forward.1} parent=11 // pred_fallthru
          _
        // Predicated region
        $region73: #{flash_transformer_forward.1} parent=11 // pred_check
          %p518 = pneg %p390
        $region74: #{flash_transformer_forward.1} parent=11 // pred_check_branch
          %520 = sbr.rel (%p518) target = $region76
        $region75: #{flash_transformer_forward.1} parent=11 // pred_region
          _
        $region76: #{flash_transformer_forward.1} parent=11 // pred_fallthru
          _
        // Predicated region
        $region77: #{flash_transformer_forward.1} parent=11 // pred_check
          %p521 = pneg %p411
        $region78: #{flash_transformer_forward.1} parent=11 // pred_check_branch
          %523 = sbr.rel (%p521) target = $region80
        $region79: #{flash_transformer_forward.1} parent=11 // pred_region
          _
        $region80: #{flash_transformer_forward.1} parent=11 // pred_fallthru
          _
        // Predicated region
        $region81: #{flash_transformer_forward.1} parent=11 // pred_check
          %p524 = pneg %p432
        $region82: #{flash_transformer_forward.1} parent=11 // pred_check_branch
          %526 = sbr.rel (%p524) target = $region84
        $region83: #{flash_transformer_forward.1} parent=11 // pred_region
          _
        $region84: #{flash_transformer_forward.1} parent=11 // pred_fallthru
          _
      $region12: #{flash_transformer_forward.1} parent=5 // pred_fallthru
        _
      %p527 = scmp.lt.s32.totalorder %s28, 2
      // Predicated region
      $region85: #{flash_transformer_forward.1} parent=5 // pred_check
        %p528 = pneg %p527
      $region86: #{flash_transformer_forward.1} parent=5 // pred_check_branch
        %530 = sbr.rel (%p528) target = $region88
      $region87: #{flash_transformer_forward.1} parent=5 // pred_region
        // Predicated region
        $region89: #{flash_transformer_forward.1} parent=87 // pred_check
          %p531 = pneg %p48
        $region90: #{flash_transformer_forward.1} parent=87 // pred_check_branch
          %533 = sbr.rel (%p531) target = $region92
        $region91: #{flash_transformer_forward.1} parent=87 // pred_region
          %p534 = scmp.lt.s32.totalorder %s28, 1
          %s535 = scalar_select %p534, %s28, 1
          %s536 = smul.addr %s535, 8
          %s537 = scalar_lea.vmem %s0, %s536
        $region92: #{flash_transformer_forward.1} parent=87 // pred_fallthru
          _
      $region88: #{flash_transformer_forward.1} parent=5 // pred_fallthru
        _
      %p538 = scmp.le.s32.totalorder 1, %s28
      %p539 = scmp.lt.s32.totalorder %s28, 3
      %p540 = pnand %p538, %p539
      %p541 = pneg %p540
      // Predicated region
      $region93: #{flash_transformer_forward.1} parent=5 // pred_check
        _
      $region94: #{flash_transformer_forward.1} parent=5 // pred_check_branch
        %543 = sbr.rel (%p540) target = $region96
      $region95: #{flash_transformer_forward.1} parent=5 // pred_region
        %s544 = ssub.s32 %s28, 1
        %p545 = scmp.lt.s32.totalorder %s33, 1
        %s546 = scalar_select %p545, %s33, 1
        %s547 = smul.addr %s546, 8
        %s548 = scalar_lea.vmem %s0, %s547
        %p549 = pneg %p54
        %p550 = pneg %p51
        %p551 = pneg %p75
        %p552 = pneg %p72
        %p553 = pneg %p96
        %p554 = pneg %p93
        %p555 = pneg %p117
        %p556 = pneg %p114
        %p557 = pneg %p138
        %p558 = pneg %p135
        %p559 = pneg %p159
        %p560 = pneg %p156
        %p561 = pneg %p180
        %p562 = pneg %p177
        %p563 = pneg %p201
        %p564 = pneg %p198
        %p565 = pneg %p222
        %p566 = pneg %p219
        %p567 = pneg %p243
        %p568 = pneg %p240
        %p569 = pneg %p264
        %p570 = pneg %p261
        %p571 = pneg %p285
        %p572 = pneg %p282
        %p573 = pneg %p306
        %p574 = pneg %p303
        %p575 = pneg %p327
        %p576 = pneg %p324
        %p577 = pneg %p348
        %p578 = pneg %p345
        %p579 = pneg %p369
        %p580 = pneg %p366
        %p581 = pneg %p390
        %p582 = pneg %p387
        %p583 = pneg %p411
        %p584 = pneg %p408
        %p585 = pneg %p432
        %p586 = pneg %p429
        %p587 = pneg %p458
        %p588 = pneg %p455
        %s589 = sand.u32 %s445, 1
        %s590 = scalar_lea.sflag [#allocation3], %s589
        %s591 = sand.u32 %s445, 1
        %s592 = smul.addr %s591, 8
        %s593 = scalar_lea.vmem [#allocation2], %s592
        %p594 = scmp.lt.s32.totalorder %s33, 1
        %s595 = scalar_select %p594, %s33, 1
        %s596 = smul.addr %s595, 8
        %s597 = scalar_lea.vmem %s0, %s596
        %v598 = vld [vmem:[%s597] sm:$0xff]
        %v599 = vadd.f32 %v598, 0.0
        %v600 = vld [vmem:[%s1] sm:$0x1]
        %v601 = vld [vmem:[%s2] sm:$0x1]
        %vm602 = vcmask 261120
        %v603 = vsel %vm602, %v599, 0.0
        %604 = vadd.xlane.f32.xlu0 %v603
        %v605 = vpop.xlane.xlu0 %604
        %v606 = vrcp.pop 32.0
        %v607 = vmul.f32 %v605, %v606
        %v608 = vsub.f32 %v599, %v607
        %v609 = vmul.f32 %v608, %v608
        %v610 = vsel %vm602, %v609, 0.0
        %611 = vadd.xlane.f32.xlu0 %v610
        %v612 = vpop.xlane.xlu0 %611
        %v613 = vmul.f32 %v612, %v606
        %v614 = vadd.f32 %v613, 1e-05
        %v615 = vrsqrt.pop %v614
        %v616 = vmul.f32 %v608, %v615
        %v618 = vlaneseq
        %v619 = vshrl.u32 %v618, 7
        %v620 = vsub.s32 0, %v619
        %v621 = vrot.slane %v600, %v620
        %v623 = vmul.f32 %v616, %v621
        %v625 = vlaneseq
        %v626 = vshrl.u32 %v625, 7
        %v627 = vsub.s32 0, %v626
        %v628 = vrot.slane %v601, %v627
        %v630 = vadd.f32 %v623, %v628
        %v631 = vld [vmem:[%s3] sm:$0xff]
        %v632 = vld [vmem:[%s3 + $0x8] sm:$0xff]
        %v633 = vld [vmem:[%s3 + $0x10] sm:$0xff]
        %v634 = vld [vmem:[%s3 + $0x18] sm:$0xff]
        %v635 = vld [vmem:[%s6] sm:$0x1]
        %v637 = vlaneseq
        %v638 = vshrl.u32 %v637, 7
        %v639 = vsub.s32 0, %v638
        %v640 = vrot.slane %v635, %v639
        %v643 = vsel %vm602, %v630, 0
        %645 = vmatprep.subr.mxu0 0.0
        %646 = vmatpush1.msra.mxu0 0.0
        %647 = vmatprep.subr.mxu0 0.0
        %648 = vmatpush1.msra.mxu0 0.0
        %649 = vmatprep.subr.mxu0 0.0
        %650 = vmatpush1.msra.mxu0 0.0
        %651 = vmatprep.subr.mxu0 0.0
        %652 = vmatpush1.msra.mxu0 0.0
        %653 = vmatprep.subr.mxu0 0.0
        %654 = vmatpush1.msra.mxu0 0.0
        %655 = vmatprep.subr.mxu0 0.0
        %656 = vmatpush1.msra.mxu0 0.0
        %657 = vmatprep.subr.mxu0 0.0
        %658 = vmatpush1.msra.mxu0 0.0
        %659 = vmatprep.subr.mxu0 0.0
        %660 = vmatpush1.msra.mxu0 0.0
        %661 = vmatprep.subr.mxu0 0.0
        %662 = vmatpush1.msra.mxu0 0.0
        %663 = vmatprep.subr.mxu0 0.0
        %664 = vmatpush1.msra.mxu0 0.0
        %665 = vmatprep.subr.mxu0 0.0
        %666 = vmatpush1.msra.mxu0 0.0
        %667 = vmatprep.subr.mxu0 0.0
        %668 = vmatpush1.msra.mxu0 0.0
        %669 = vmatprep.subr.mxu0 0.0
        %670 = vmatpush1.msra.mxu0 %v634
        %671 = vmatprep.subr.mxu0 0.0
        %672 = vmatpush1.msra.mxu0 %v633
        %673 = vmatprep.subr.mxu0 0.0
        %674 = vmatpush1.msra.mxu0 %v632
        %675 = vmatprep.subr.mxu0 0.0
        %676 = vmatpush1.msra.mxu0 %v631
        %677 = vmatprep.subr.mxu0 0.0
        %678 = vmatpush2.msra.mxu0 0.0
        %679 = vmatprep.subr.mxu0 0.0
        %680 = vmatpush2.msra.mxu0 0.0
        %681 = vmatprep.subr.mxu0 0.0
        %682 = vmatpush2.msra.mxu0 0.0
        %683 = vmatprep.subr.mxu0 0.0
        %684 = vmatpush2.msra.mxu0 0.0
        %685 = vmatprep.subr.mxu0 0.0
        %686 = vmatpush2.msra.mxu0 0.0
        %687 = vmatprep.subr.mxu0 0.0
        %688 = vmatpush2.msra.mxu0 0.0
        %689 = vmatprep.subr.mxu0 0.0
        %690 = vmatpush2.msra.mxu0 0.0
        %691 = vmatprep.subr.mxu0 0.0
        %692 = vmatpush2.msra.mxu0 0.0
        %693 = vmatprep.subr.mxu0 0.0
        %694 = vmatpush2.msra.mxu0 0.0
        %695 = vmatprep.subr.mxu0 0.0
        %696 = vmatpush2.msra.mxu0 0.0
        %697 = vmatprep.subr.mxu0 0.0
        %698 = vmatpush2.msra.mxu0 0.0
        %699 = vmatprep.subr.mxu0 0.0
        %700 = vmatpush2.msra.mxu0 0.0
        %701 = vmatprep.subr.mxu0 0.0
        %702 = vmatpush2.msra.mxu0 0.0
        %703 = vmatprep.subr.mxu0 0.0
        %704 = vmatpush2.msra.mxu0 0.0
        %705 = vmatprep.subr.mxu0 0.0
        %706 = vmatpush2.msra.mxu0 0.0
        %707 = vmatprep.subr.mxu0 0.0
        %708 = vmatpush2.msra.mxu0 0.0
        %709 = vmatprep.mubr.f32.mxu0 0.0
        %710 = vmatmul.mubr.f32.gmra.mxu0 %v643
        %v711 = vpop.f32.mrf.mxu0
        %v712 = vadd.f32 %v640, %v711
        %v713 = vpop.f32.mrf.mxu0
        %714 = vdwg.mxu0
        %v715 = vld [vmem:[%s4] sm:$0xff]
        %v716 = vld [vmem:[%s4 + $0x8] sm:$0xff]
        %v717 = vld [vmem:[%s4 + $0x10] sm:$0xff]
        %v718 = vld [vmem:[%s4 + $0x18] sm:$0xff]
        %v719 = vld [vmem:[%s7] sm:$0x1]
        %v721 = vlaneseq
        %v722 = vshrl.u32 %v721, 7
        %v723 = vsub.s32 0, %v722
        %v724 = vrot.slane %v719, %v723
        %726 = vmatprep.subr.mxu0 0.0
        %727 = vmatpush1.msra.mxu0 0.0
        %728 = vmatprep.subr.mxu0 0.0
        %729 = vmatpush1.msra.mxu0 0.0
        %730 = vmatprep.subr.mxu0 0.0
        %731 = vmatpush1.msra.mxu0 0.0
        %732 = vmatprep.subr.mxu0 0.0
        %733 = vmatpush1.msra.mxu0 0.0
        %734 = vmatprep.subr.mxu0 0.0
        %735 = vmatpush1.msra.mxu0 0.0
        %736 = vmatprep.subr.mxu0 0.0
        %737 = vmatpush1.msra.mxu0 0.0
        %738 = vmatprep.subr.mxu0 0.0
        %739 = vmatpush1.msra.mxu0 0.0
        %740 = vmatprep.subr.mxu0 0.0
        %741 = vmatpush1.msra.mxu0 0.0
        %742 = vmatprep.subr.mxu0 0.0
        %743 = vmatpush1.msra.mxu0 0.0
        %744 = vmatprep.subr.mxu0 0.0
        %745 = vmatpush1.msra.mxu0 0.0
        %746 = vmatprep.subr.mxu0 0.0
        %747 = vmatpush1.msra.mxu0 0.0
        %748 = vmatprep.subr.mxu0 0.0
        %749 = vmatpush1.msra.mxu0 0.0
        %750 = vmatprep.subr.mxu0 0.0
        %751 = vmatpush1.msra.mxu0 %v718
        %752 = vmatprep.subr.mxu0 0.0
        %753 = vmatpush1.msra.mxu0 %v717
        %754 = vmatprep.subr.mxu0 0.0
        %755 = vmatpush1.msra.mxu0 %v716
        %756 = vmatprep.subr.mxu0 0.0
        %757 = vmatpush1.msra.mxu0 %v715
        %758 = vmatprep.subr.mxu0 0.0
        %759 = vmatpush2.msra.mxu0 0.0
        %760 = vmatprep.subr.mxu0 0.0
        %761 = vmatpush2.msra.mxu0 0.0
        %762 = vmatprep.subr.mxu0 0.0
        %763 = vmatpush2.msra.mxu0 0.0
        %764 = vmatprep.subr.mxu0 0.0
        %765 = vmatpush2.msra.mxu0 0.0
        %766 = vmatprep.subr.mxu0 0.0
        %767 = vmatpush2.msra.mxu0 0.0
        %768 = vmatprep.subr.mxu0 0.0
        %769 = vmatpush2.msra.mxu0 0.0
        %770 = vmatprep.subr.mxu0 0.0
        %771 = vmatpush2.msra.mxu0 0.0
        %772 = vmatprep.subr.mxu0 0.0
        %773 = vmatpush2.msra.mxu0 0.0
        %774 = vmatprep.subr.mxu0 0.0
        %775 = vmatpush2.msra.mxu0 0.0
        %776 = vmatprep.subr.mxu0 0.0
        %777 = vmatpush2.msra.mxu0 0.0
        %778 = vmatprep.subr.mxu0 0.0
        %779 = vmatpush2.msra.mxu0 0.0
        %780 = vmatprep.subr.mxu0 0.0
        %781 = vmatpush2.msra.mxu0 0.0
        %782 = vmatprep.subr.mxu0 0.0
        %783 = vmatpush2.msra.mxu0 0.0
        %784 = vmatprep.subr.mxu0 0.0
        %785 = vmatpush2.msra.mxu0 0.0
        %786 = vmatprep.subr.mxu0 0.0
        %787 = vmatpush2.msra.mxu0 0.0
        %788 = vmatprep.subr.mxu0 0.0
        %789 = vmatpush2.msra.mxu0 0.0
        %790 = vmatprep.mubr.f32.mxu0 0.0
        %791 = vmatmul.mubr.f32.gmra.mxu0 %v643
        %v792 = vpop.f32.mrf.mxu0
        %v793 = vadd.f32 %v724, %v792
        %v794 = vpop.f32.mrf.mxu0
        %795 = vdwg.mxu0
        %v796 = vld [vmem:[%s5] sm:$0xff]
        %v797 = vld [vmem:[%s5 + $0x8] sm:$0xff]
        %v798 = vld [vmem:[%s5 + $0x10] sm:$0xff]
        %v799 = vld [vmem:[%s5 + $0x18] sm:$0xff]
        %v800 = vld [vmem:[%s8] sm:$0x1]
        %v802 = vlaneseq
        %v803 = vshrl.u32 %v802, 7
        %v804 = vsub.s32 0, %v803
        %v805 = vrot.slane %v800, %v804
        %807 = vmatprep.subr.mxu0 0.0
        %808 = vmatpush1.msra.mxu0 0.0
        %809 = vmatprep.subr.mxu0 0.0
        %810 = vmatpush1.msra.mxu0 0.0
        %811 = vmatprep.subr.mxu0 0.0
        %812 = vmatpush1.msra.mxu0 0.0
        %813 = vmatprep.subr.mxu0 0.0
        %814 = vmatpush1.msra.mxu0 0.0
        %815 = vmatprep.subr.mxu0 0.0
        %816 = vmatpush1.msra.mxu0 0.0
        %817 = vmatprep.subr.mxu0 0.0
        %818 = vmatpush1.msra.mxu0 0.0
        %819 = vmatprep.subr.mxu0 0.0
        %820 = vmatpush1.msra.mxu0 0.0
        %821 = vmatprep.subr.mxu0 0.0
        %822 = vmatpush1.msra.mxu0 0.0
        %823 = vmatprep.subr.mxu0 0.0
        %824 = vmatpush1.msra.mxu0 0.0
        %825 = vmatprep.subr.mxu0 0.0
        %826 = vmatpush1.msra.mxu0 0.0
        %827 = vmatprep.subr.mxu0 0.0
        %828 = vmatpush1.msra.mxu0 0.0
        %829 = vmatprep.subr.mxu0 0.0
        %830 = vmatpush1.msra.mxu0 0.0
        %831 = vmatprep.subr.mxu0 0.0
        %832 = vmatpush1.msra.mxu0 %v799
        %833 = vmatprep.subr.mxu0 0.0
        %834 = vmatpush1.msra.mxu0 %v798
        %835 = vmatprep.subr.mxu0 0.0
        %836 = vmatpush1.msra.mxu0 %v797
        %837 = vmatprep.subr.mxu0 0.0
        %838 = vmatpush1.msra.mxu0 %v796
        %839 = vmatprep.subr.mxu0 0.0
        %840 = vmatpush2.msra.mxu0 0.0
        %841 = vmatprep.subr.mxu0 0.0
        %842 = vmatpush2.msra.mxu0 0.0
        %843 = vmatprep.subr.mxu0 0.0
        %844 = vmatpush2.msra.mxu0 0.0
        %845 = vmatprep.subr.mxu0 0.0
        %846 = vmatpush2.msra.mxu0 0.0
        %847 = vmatprep.subr.mxu0 0.0
        %848 = vmatpush2.msra.mxu0 0.0
        %849 = vmatprep.subr.mxu0 0.0
        %850 = vmatpush2.msra.mxu0 0.0
        %851 = vmatprep.subr.mxu0 0.0
        %852 = vmatpush2.msra.mxu0 0.0
        %853 = vmatprep.subr.mxu0 0.0
        %854 = vmatpush2.msra.mxu0 0.0
        %855 = vmatprep.subr.mxu0 0.0
        %856 = vmatpush2.msra.mxu0 0.0
        %857 = vmatprep.subr.mxu0 0.0
        %858 = vmatpush2.msra.mxu0 0.0
        %859 = vmatprep.subr.mxu0 0.0
        %860 = vmatpush2.msra.mxu0 0.0
        %861 = vmatprep.subr.mxu0 0.0
        %862 = vmatpush2.msra.mxu0 0.0
        %863 = vmatprep.subr.mxu0 0.0
        %864 = vmatpush2.msra.mxu0 0.0
        %865 = vmatprep.subr.mxu0 0.0
        %866 = vmatpush2.msra.mxu0 0.0
        %867 = vmatprep.subr.mxu0 0.0
        %868 = vmatpush2.msra.mxu0 0.0
        %869 = vmatprep.subr.mxu0 0.0
        %870 = vmatpush2.msra.mxu0 0.0
        %871 = vmatprep.mubr.f32.mxu0 0.0
        %872 = vmatmul.mubr.f32.gmra.mxu0 %v643
        %v873 = vpop.f32.mrf.mxu0
        %v874 = vadd.f32 %v805, %v873
        %v875 = vpop.f32.mrf.mxu0
        %876 = vdwg.mxu0
        %vm877 = vcmask 64512
        %v879 = vsel %vm877, %v712, 0
        %v882 = vsel %vm877, %v793, 0
        %884 = vmatprep.subr.mxu0 0.0
        %885 = vmatpush1.xpose.msra.mxu0 0.0
        %886 = vmatprep.subr.mxu0 0.0
        %887 = vmatpush1.xpose.msra.mxu0 0.0
        %888 = vmatprep.subr.mxu0 0.0
        %889 = vmatpush1.xpose.msra.mxu0 0.0
        %890 = vmatprep.subr.mxu0 0.0
        %891 = vmatpush1.xpose.msra.mxu0 0.0
        %892 = vmatprep.subr.mxu0 0.0
        %893 = vmatpush1.xpose.msra.mxu0 0.0
        %894 = vmatprep.subr.mxu0 0.0
        %895 = vmatpush1.xpose.msra.mxu0 0.0
        %896 = vmatprep.subr.mxu0 0.0
        %897 = vmatpush1.xpose.msra.mxu0 0.0
        %898 = vmatprep.subr.mxu0 0.0
        %899 = vmatpush1.xpose.msra.mxu0 0.0
        %900 = vmatprep.subr.mxu0 0.0
        %901 = vmatpush1.xpose.msra.mxu0 0.0
        %902 = vmatprep.subr.mxu0 0.0
        %903 = vmatpush1.xpose.msra.mxu0 0.0
        %904 = vmatprep.subr.mxu0 0.0
        %905 = vmatpush1.xpose.msra.mxu0 0.0
        %906 = vmatprep.subr.mxu0 0.0
        %907 = vmatpush1.xpose.msra.mxu0 0.0
        %908 = vmatprep.subr.mxu0 0.0
        %909 = vmatpush1.xpose.msra.mxu0 0.0
        %910 = vmatprep.subr.mxu0 0.0
        %911 = vmatpush1.xpose.msra.mxu0 0.0
        %912 = vmatprep.subr.mxu0 0.0
        %913 = vmatpush1.xpose.msra.mxu0 0.0
        %914 = vmatprep.subr.mxu0 0.0
        %915 = vmatpush1.xpose.msra.mxu0 %v882
        %916 = vmatprep.subr.mxu0 0.0
        %917 = vmatpush2.xpose.msra.mxu0 0.0
        %918 = vmatprep.subr.mxu0 0.0
        %919 = vmatpush2.xpose.msra.mxu0 0.0
        %920 = vmatprep.subr.mxu0 0.0
        %921 = vmatpush2.xpose.msra.mxu0 0.0
        %922 = vmatprep.subr.mxu0 0.0
        %923 = vmatpush2.xpose.msra.mxu0 0.0
        %924 = vmatprep.subr.mxu0 0.0
        %925 = vmatpush2.xpose.msra.mxu0 0.0
        %926 = vmatprep.subr.mxu0 0.0
        %927 = vmatpush2.xpose.msra.mxu0 0.0
        %928 = vmatprep.subr.mxu0 0.0
        %929 = vmatpush2.xpose.msra.mxu0 0.0
        %930 = vmatprep.subr.mxu0 0.0
        %931 = vmatpush2.xpose.msra.mxu0 0.0
        %932 = vmatprep.subr.mxu0 0.0
        %933 = vmatpush2.xpose.msra.mxu0 0.0
        %934 = vmatprep.subr.mxu0 0.0
        %935 = vmatpush2.xpose.msra.mxu0 0.0
        %936 = vmatprep.subr.mxu0 0.0
        %937 = vmatpush2.xpose.msra.mxu0 0.0
        %938 = vmatprep.subr.mxu0 0.0
        %939 = vmatpush2.xpose.msra.mxu0 0.0
        %940 = vmatprep.subr.mxu0 0.0
        %941 = vmatpush2.xpose.msra.mxu0 0.0
        %942 = vmatprep.subr.mxu0 0.0
        %943 = vmatpush2.xpose.msra.mxu0 0.0
        %944 = vmatprep.subr.mxu0 0.0
        %945 = vmatpush2.xpose.msra.mxu0 0.0
        %946 = vmatprep.subr.mxu0 0.0
        %947 = vmatpush2.xpose.msra.mxu0 0.0
        %948 = vmatprep.mubr.f32.mxu0 0.0
        %949 = vmatmul.mubr.f32.gmra.mxu0 %v879
        %v950 = vpop.f32.mrf.mxu0
        %v951 = vadd.f32 0.0, %v950
        %v952 = vpop.f32.mrf.mxu0
        %953 = vdwg.mxu0
        %v954 = vmul.f32 %v951, 0.35355338
        %v955 = vsel %vm877, %v954, -inf
        %956 = vmax.xlane.f32.xlu0 %v955
        %v957 = vpop.xlane.xlu0 %956
        %v958 = vsub.f32 %v954, %v957
        %v959 = vmul.f32 %v958, 1.442695
        %v960 = vpow.pop %v959
        %v961 = vsel %vm877, %v960, 0.0
        %962 = vadd.xlane.f32.xlu0 %v961
        %v963 = vpop.xlane.xlu0 %962
        %v964 = vrcp.pop %v963
        %v965 = vmul.f32 %v960, %v964
        %v967 = vsel %vm877, %v965, 0
        %969 = vmatprep.subr.mxu0 0.0
        %970 = vmatpush1.msra.mxu0 0.0
        %971 = vmatprep.subr.mxu0 0.0
        %972 = vmatpush1.msra.mxu0 0.0
        %973 = vmatprep.subr.mxu0 0.0
        %974 = vmatpush1.msra.mxu0 0.0
        %975 = vmatprep.subr.mxu0 0.0
        %976 = vmatpush1.msra.mxu0 0.0
        %977 = vmatprep.subr.mxu0 0.0
        %978 = vmatpush1.msra.mxu0 0.0
        %979 = vmatprep.subr.mxu0 0.0
        %980 = vmatpush1.msra.mxu0 0.0
        %981 = vmatprep.subr.mxu0 0.0
        %982 = vmatpush1.msra.mxu0 0.0
        %983 = vmatprep.subr.mxu0 0.0
        %984 = vmatpush1.msra.mxu0 0.0
        %985 = vmatprep.subr.mxu0 0.0
        %986 = vmatpush1.msra.mxu0 0.0
        %987 = vmatprep.subr.mxu0 0.0
        %988 = vmatpush1.msra.mxu0 0.0
        %989 = vmatprep.subr.mxu0 0.0
        %990 = vmatpush1.msra.mxu0 0.0
        %991 = vmatprep.subr.mxu0 0.0
        %992 = vmatpush1.msra.mxu0 0.0
        %993 = vmatprep.subr.mxu0 0.0
        %994 = vmatpush1.msra.mxu0 0.0
        %995 = vmatprep.subr.mxu0 0.0
        %996 = vmatpush1.msra.mxu0 0.0
        %997 = vmatprep.subr.mxu0 0.0
        %998 = vmatpush1.msra.mxu0 0.0
        %999 = vmatprep.subr.mxu0 0.0
        %1000 = vmatpush1.msra.mxu0 %v874
        %1001 = vmatprep.subr.mxu0 0.0
        %1002 = vmatpush2.msra.mxu0 0.0
        %1003 = vmatprep.subr.mxu0 0.0
        %1004 = vmatpush2.msra.mxu0 0.0
        %1005 = vmatprep.subr.mxu0 0.0
        %1006 = vmatpush2.msra.mxu0 0.0
        %1007 = vmatprep.subr.mxu0 0.0
        %1008 = vmatpush2.msra.mxu0 0.0
        %1009 = vmatprep.subr.mxu0 0.0
        %1010 = vmatpush2.msra.mxu0 0.0
        %1011 = vmatprep.subr.mxu0 0.0
        %1012 = vmatpush2.msra.mxu0 0.0
        %1013 = vmatprep.subr.mxu0 0.0
        %1014 = vmatpush2.msra.mxu0 0.0
        %1015 = vmatprep.subr.mxu0 0.0
        %1016 = vmatpush2.msra.mxu0 0.0
        %1017 = vmatprep.subr.mxu0 0.0
        %1018 = vmatpush2.msra.mxu0 0.0
        %1019 = vmatprep.subr.mxu0 0.0
        %1020 = vmatpush2.msra.mxu0 0.0
        %1021 = vmatprep.subr.mxu0 0.0
        %1022 = vmatpush2.msra.mxu0 0.0
        %1023 = vmatprep.subr.mxu0 0.0
        %1024 = vmatpush2.msra.mxu0 0.0
        %1025 = vmatprep.subr.mxu0 0.0
        %1026 = vmatpush2.msra.mxu0 0.0
        %1027 = vmatprep.subr.mxu0 0.0
        %1028 = vmatpush2.msra.mxu0 0.0
        %1029 = vmatprep.subr.mxu0 0.0
        %1030 = vmatpush2.msra.mxu0 0.0
        %1031 = vmatprep.subr.mxu0 0.0
        %1032 = vmatpush2.msra.mxu0 0.0
        %1033 = vmatprep.mubr.f32.mxu0 0.0
        %1034 = vmatmul.mubr.f32.gmra.mxu0 %v967
        %v1035 = vpop.f32.mrf.mxu0
        %v1036 = vadd.f32 0.0, %v1035
        %v1037 = vpop.f32.mrf.mxu0
        %1038 = vdwg.mxu0
        %v1039 = vld [vmem:[%s9] sm:$0xff]
        %s1040 = scalar_lea.vmem %s3, 32
        %v1041 = vld [vmem:[%s1040] sm:$0xff]
        %v1042 = vld [vmem:[%s1040 + $0x8] sm:$0xff]
        %v1043 = vld [vmem:[%s1040 + $0x10] sm:$0xff]
        %v1044 = vld [vmem:[%s1040 + $0x18] sm:$0xff]
        %s1045 = scalar_lea.vmem %s6, 1
        %v1046 = vld [vmem:[%s1045] sm:$0x1]
        %v1048 = vlaneseq
        %v1049 = vshrl.u32 %v1048, 7
        %v1050 = vsub.s32 0, %v1049
        %v1051 = vrot.slane %v1046, %v1050
        %1053 = vmatprep.subr.mxu0 0.0
        %1054 = vmatpush1.msra.mxu0 0.0
        %1055 = vmatprep.subr.mxu0 0.0
        %1056 = vmatpush1.msra.mxu0 0.0
        %1057 = vmatprep.subr.mxu0 0.0
        %1058 = vmatpush1.msra.mxu0 0.0
        %1059 = vmatprep.subr.mxu0 0.0
        %1060 = vmatpush1.msra.mxu0 0.0
        %1061 = vmatprep.subr.mxu0 0.0
        %1062 = vmatpush1.msra.mxu0 0.0
        %1063 = vmatprep.subr.mxu0 0.0
        %1064 = vmatpush1.msra.mxu0 0.0
        %1065 = vmatprep.subr.mxu0 0.0
        %1066 = vmatpush1.msra.mxu0 0.0
        %1067 = vmatprep.subr.mxu0 0.0
        %1068 = vmatpush1.msra.mxu0 0.0
        %1069 = vmatprep.subr.mxu0 0.0
        %1070 = vmatpush1.msra.mxu0 0.0
        %1071 = vmatprep.subr.mxu0 0.0
        %1072 = vmatpush1.msra.mxu0 0.0
        %1073 = vmatprep.subr.mxu0 0.0
        %1074 = vmatpush1.msra.mxu0 0.0
        %1075 = vmatprep.subr.mxu0 0.0
        %1076 = vmatpush1.msra.mxu0 0.0
        %1077 = vmatprep.subr.mxu0 0.0
        %1078 = vmatpush1.msra.mxu0 %v1044
        %1079 = vmatprep.subr.mxu0 0.0
        %1080 = vmatpush1.msra.mxu0 %v1043
        %1081 = vmatprep.subr.mxu0 0.0
        %1082 = vmatpush1.msra.mxu0 %v1042
        %1083 = vmatprep.subr.mxu0 0.0
        %1084 = vmatpush1.msra.mxu0 %v1041
        %1085 = vmatprep.subr.mxu0 0.0
        %1086 = vmatpush2.msra.mxu0 0.0
        %1087 = vmatprep.subr.mxu0 0.0
        %1088 = vmatpush2.msra.mxu0 0.0
        %1089 = vmatprep.subr.mxu0 0.0
        %1090 = vmatpush2.msra.mxu0 0.0
        %1091 = vmatprep.subr.mxu0 0.0
        %1092 = vmatpush2.msra.mxu0 0.0
        %1093 = vmatprep.subr.mxu0 0.0
        %1094 = vmatpush2.msra.mxu0 0.0
        %1095 = vmatprep.subr.mxu0 0.0
        %1096 = vmatpush2.msra.mxu0 0.0
        %1097 = vmatprep.subr.mxu0 0.0
        %1098 = vmatpush2.msra.mxu0 0.0
        %1099 = vmatprep.subr.mxu0 0.0
        %1100 = vmatpush2.msra.mxu0 0.0
        %1101 = vmatprep.subr.mxu0 0.0
        %1102 = vmatpush2.msra.mxu0 0.0
        %1103 = vmatprep.subr.mxu0 0.0
        %1104 = vmatpush2.msra.mxu0 0.0
        %1105 = vmatprep.subr.mxu0 0.0
        %1106 = vmatpush2.msra.mxu0 0.0
        %1107 = vmatprep.subr.mxu0 0.0
        %1108 = vmatpush2.msra.mxu0 0.0
        %1109 = vmatprep.subr.mxu0 0.0
        %1110 = vmatpush2.msra.mxu0 0.0
        %1111 = vmatprep.subr.mxu0 0.0
        %1112 = vmatpush2.msra.mxu0 0.0
        %1113 = vmatprep.subr.mxu0 0.0
        %1114 = vmatpush2.msra.mxu0 0.0
        %1115 = vmatprep.subr.mxu0 0.0
        %1116 = vmatpush2.msra.mxu0 0.0
        %1117 = vmatprep.mubr.f32.mxu0 0.0
        %1118 = vmatmul.mubr.f32.gmra.mxu0 %v643
        %v1119 = vpop.f32.mrf.mxu0
        %v1120 = vadd.f32 %v1051, %v1119
        %v1121 = vpop.f32.mrf.mxu0
        %1122 = vdwg.mxu0
        %s1123 = scalar_lea.vmem %s4, 32
        %v1124 = vld [vmem:[%s1123] sm:$0xff]
        %v1125 = vld [vmem:[%s1123 + $0x8] sm:$0xff]
        %v1126 = vld [vmem:[%s1123 + $0x10] sm:$0xff]
        %v1127 = vld [vmem:[%s1123 + $0x18] sm:$0xff]
        %s1128 = scalar_lea.vmem %s7, 1
        %v1129 = vld [vmem:[%s1128] sm:$0x1]
        %v1131 = vlaneseq
        %v1132 = vshrl.u32 %v1131, 7
        %v1133 = vsub.s32 0, %v1132
        %v1134 = vrot.slane %v1129, %v1133
        %1136 = vmatprep.subr.mxu0 0.0
        %1137 = vmatpush1.msra.mxu0 0.0
        %1138 = vmatprep.subr.mxu0 0.0
        %1139 = vmatpush1.msra.mxu0 0.0
        %1140 = vmatprep.subr.mxu0 0.0
        %1141 = vmatpush1.msra.mxu0 0.0
        %1142 = vmatprep.subr.mxu0 0.0
        %1143 = vmatpush1.msra.mxu0 0.0
        %1144 = vmatprep.subr.mxu0 0.0
        %1145 = vmatpush1.msra.mxu0 0.0
        %1146 = vmatprep.subr.mxu0 0.0
        %1147 = vmatpush1.msra.mxu0 0.0
        %1148 = vmatprep.subr.mxu0 0.0
        %1149 = vmatpush1.msra.mxu0 0.0
        %1150 = vmatprep.subr.mxu0 0.0
        %1151 = vmatpush1.msra.mxu0 0.0
        %1152 = vmatprep.subr.mxu0 0.0
        %1153 = vmatpush1.msra.mxu0 0.0
        %1154 = vmatprep.subr.mxu0 0.0
        %1155 = vmatpush1.msra.mxu0 0.0
        %1156 = vmatprep.subr.mxu0 0.0
        %1157 = vmatpush1.msra.mxu0 0.0
        %1158 = vmatprep.subr.mxu0 0.0
        %1159 = vmatpush1.msra.mxu0 0.0
        %1160 = vmatprep.subr.mxu0 0.0
        %1161 = vmatpush1.msra.mxu0 %v1127
        %1162 = vmatprep.subr.mxu0 0.0
        %1163 = vmatpush1.msra.mxu0 %v1126
        %1164 = vmatprep.subr.mxu0 0.0
        %1165 = vmatpush1.msra.mxu0 %v1125
        %1166 = vmatprep.subr.mxu0 0.0
        %1167 = vmatpush1.msra.mxu0 %v1124
        %1168 = vmatprep.subr.mxu0 0.0
        %1169 = vmatpush2.msra.mxu0 0.0
        %1170 = vmatprep.subr.mxu0 0.0
        %1171 = vmatpush2.msra.mxu0 0.0
        %1172 = vmatprep.subr.mxu0 0.0
        %1173 = vmatpush2.msra.mxu0 0.0
        %1174 = vmatprep.subr.mxu0 0.0
        %1175 = vmatpush2.msra.mxu0 0.0
        %1176 = vmatprep.subr.mxu0 0.0
        %1177 = vmatpush2.msra.mxu0 0.0
        %1178 = vmatprep.subr.mxu0 0.0
        %1179 = vmatpush2.msra.mxu0 0.0
        %1180 = vmatprep.subr.mxu0 0.0
        %1181 = vmatpush2.msra.mxu0 0.0
        %1182 = vmatprep.subr.mxu0 0.0
        %1183 = vmatpush2.msra.mxu0 0.0
        %1184 = vmatprep.subr.mxu0 0.0
        %1185 = vmatpush2.msra.mxu0 0.0
        %1186 = vmatprep.subr.mxu0 0.0
        %1187 = vmatpush2.msra.mxu0 0.0
        %1188 = vmatprep.subr.mxu0 0.0
        %1189 = vmatpush2.msra.mxu0 0.0
        %1190 = vmatprep.subr.mxu0 0.0
        %1191 = vmatpush2.msra.mxu0 0.0
        %1192 = vmatprep.subr.mxu0 0.0
        %1193 = vmatpush2.msra.mxu0 0.0
        %1194 = vmatprep.subr.mxu0 0.0
        %1195 = vmatpush2.msra.mxu0 0.0
        %1196 = vmatprep.subr.mxu0 0.0
        %1197 = vmatpush2.msra.mxu0 0.0
        %1198 = vmatprep.subr.mxu0 0.0
        %1199 = vmatpush2.msra.mxu0 0.0
        %1200 = vmatprep.mubr.f32.mxu0 0.0
        %1201 = vmatmul.mubr.f32.gmra.mxu0 %v643
        %v1202 = vpop.f32.mrf.mxu0
        %v1203 = vadd.f32 %v1134, %v1202
        %v1204 = vpop.f32.mrf.mxu0
        %1205 = vdwg.mxu0
        %s1206 = scalar_lea.vmem %s5, 32
        %v1207 = vld [vmem:[%s1206] sm:$0xff]
        %v1208 = vld [vmem:[%s1206 + $0x8] sm:$0xff]
        %v1209 = vld [vmem:[%s1206 + $0x10] sm:$0xff]
        %v1210 = vld [vmem:[%s1206 + $0x18] sm:$0xff]
        %s1211 = scalar_lea.vmem %s8, 1
        %v1212 = vld [vmem:[%s1211] sm:$0x1]
        %v1214 = vlaneseq
        %v1215 = vshrl.u32 %v1214, 7
        %v1216 = vsub.s32 0, %v1215
        %v1217 = vrot.slane %v1212, %v1216
        %1219 = vmatprep.subr.mxu0 0.0
        %1220 = vmatpush1.msra.mxu0 0.0
        %1221 = vmatprep.subr.mxu0 0.0
        %1222 = vmatpush1.msra.mxu0 0.0
        %1223 = vmatprep.subr.mxu0 0.0
        %1224 = vmatpush1.msra.mxu0 0.0
        %1225 = vmatprep.subr.mxu0 0.0
        %1226 = vmatpush1.msra.mxu0 0.0
        %1227 = vmatprep.subr.mxu0 0.0
        %1228 = vmatpush1.msra.mxu0 0.0
        %1229 = vmatprep.subr.mxu0 0.0
        %1230 = vmatpush1.msra.mxu0 0.0
        %1231 = vmatprep.subr.mxu0 0.0
        %1232 = vmatpush1.msra.mxu0 0.0
        %1233 = vmatprep.subr.mxu0 0.0
        %1234 = vmatpush1.msra.mxu0 0.0
        %1235 = vmatprep.subr.mxu0 0.0
        %1236 = vmatpush1.msra.mxu0 0.0
        %1237 = vmatprep.subr.mxu0 0.0
        %1238 = vmatpush1.msra.mxu0 0.0
        %1239 = vmatprep.subr.mxu0 0.0
        %1240 = vmatpush1.msra.mxu0 0.0
        %1241 = vmatprep.subr.mxu0 0.0
        %1242 = vmatpush1.msra.mxu0 0.0
        %1243 = vmatprep.subr.mxu0 0.0
        %1244 = vmatpush1.msra.mxu0 %v1210
        %1245 = vmatprep.subr.mxu0 0.0
        %1246 = vmatpush1.msra.mxu0 %v1209
        %1247 = vmatprep.subr.mxu0 0.0
        %1248 = vmatpush1.msra.mxu0 %v1208
        %1249 = vmatprep.subr.mxu0 0.0
        %1250 = vmatpush1.msra.mxu0 %v1207
        %1251 = vmatprep.subr.mxu0 0.0
        %1252 = vmatpush2.msra.mxu0 0.0
        %1253 = vmatprep.subr.mxu0 0.0
        %1254 = vmatpush2.msra.mxu0 0.0
        %1255 = vmatprep.subr.mxu0 0.0
        %1256 = vmatpush2.msra.mxu0 0.0
        %1257 = vmatprep.subr.mxu0 0.0
        %1258 = vmatpush2.msra.mxu0 0.0
        %1259 = vmatprep.subr.mxu0 0.0
        %1260 = vmatpush2.msra.mxu0 0.0
        %1261 = vmatprep.subr.mxu0 0.0
        %1262 = vmatpush2.msra.mxu0 0.0
        %1263 = vmatprep.subr.mxu0 0.0
        %1264 = vmatpush2.msra.mxu0 0.0
        %1265 = vmatprep.subr.mxu0 0.0
        %1266 = vmatpush2.msra.mxu0 0.0
        %1267 = vmatprep.subr.mxu0 0.0
        %1268 = vmatpush2.msra.mxu0 0.0
        %1269 = vmatprep.subr.mxu0 0.0
        %1270 = vmatpush2.msra.mxu0 0.0
        %1271 = vmatprep.subr.mxu0 0.0
        %1272 = vmatpush2.msra.mxu0 0.0
        %1273 = vmatprep.subr.mxu0 0.0
        %1274 = vmatpush2.msra.mxu0 0.0
        %1275 = vmatprep.subr.mxu0 0.0
        %1276 = vmatpush2.msra.mxu0 0.0
        %1277 = vmatprep.subr.mxu0 0.0
        %1278 = vmatpush2.msra.mxu0 0.0
        %1279 = vmatprep.subr.mxu0 0.0
        %1280 = vmatpush2.msra.mxu0 0.0
        %1281 = vmatprep.subr.mxu0 0.0
        %1282 = vmatpush2.msra.mxu0 0.0
        %1283 = vmatprep.mubr.f32.mxu0 0.0
        %1284 = vmatmul.mubr.f32.gmra.mxu0 %v643
        %v1285 = vpop.f32.mrf.mxu0
        %v1286 = vadd.f32 %v1217, %v1285
        %v1287 = vpop.f32.mrf.mxu0
        %1288 = vdwg.mxu0
        %v1290 = vsel %vm877, %v1120, 0
        %v1293 = vsel %vm877, %v1203, 0
        %1295 = vmatprep.subr.mxu0 0.0
        %1296 = vmatpush1.xpose.msra.mxu0 0.0
        %1297 = vmatprep.subr.mxu0 0.0
        %1298 = vmatpush1.xpose.msra.mxu0 0.0
        %1299 = vmatprep.subr.mxu0 0.0
        %1300 = vmatpush1.xpose.msra.mxu0 0.0
        %1301 = vmatprep.subr.mxu0 0.0
        %1302 = vmatpush1.xpose.msra.mxu0 0.0
        %1303 = vmatprep.subr.mxu0 0.0
        %1304 = vmatpush1.xpose.msra.mxu0 0.0
        %1305 = vmatprep.subr.mxu0 0.0
        %1306 = vmatpush1.xpose.msra.mxu0 0.0
        %1307 = vmatprep.subr.mxu0 0.0
        %1308 = vmatpush1.xpose.msra.mxu0 0.0
        %1309 = vmatprep.subr.mxu0 0.0
        %1310 = vmatpush1.xpose.msra.mxu0 0.0
        %1311 = vmatprep.subr.mxu0 0.0
        %1312 = vmatpush1.xpose.msra.mxu0 0.0
        %1313 = vmatprep.subr.mxu0 0.0
        %1314 = vmatpush1.xpose.msra.mxu0 0.0
        %1315 = vmatprep.subr.mxu0 0.0
        %1316 = vmatpush1.xpose.msra.mxu0 0.0
        %1317 = vmatprep.subr.mxu0 0.0
        %1318 = vmatpush1.xpose.msra.mxu0 0.0
        %1319 = vmatprep.subr.mxu0 0.0
        %1320 = vmatpush1.xpose.msra.mxu0 0.0
        %1321 = vmatprep.subr.mxu0 0.0
        %1322 = vmatpush1.xpose.msra.mxu0 0.0
        %1323 = vmatprep.subr.mxu0 0.0
        %1324 = vmatpush1.xpose.msra.mxu0 0.0
        %1325 = vmatprep.subr.mxu0 0.0
        %1326 = vmatpush1.xpose.msra.mxu0 %v1293
        %1327 = vmatprep.subr.mxu0 0.0
        %1328 = vmatpush2.xpose.msra.mxu0 0.0
        %1329 = vmatprep.subr.mxu0 0.0
        %1330 = vmatpush2.xpose.msra.mxu0 0.0
        %1331 = vmatprep.subr.mxu0 0.0
        %1332 = vmatpush2.xpose.msra.mxu0 0.0
        %1333 = vmatprep.subr.mxu0 0.0
        %1334 = vmatpush2.xpose.msra.mxu0 0.0
        %1335 = vmatprep.subr.mxu0 0.0
        %1336 = vmatpush2.xpose.msra.mxu0 0.0
        %1337 = vmatprep.subr.mxu0 0.0
        %1338 = vmatpush2.xpose.msra.mxu0 0.0
        %1339 = vmatprep.subr.mxu0 0.0
        %1340 = vmatpush2.xpose.msra.mxu0 0.0
        %1341 = vmatprep.subr.mxu0 0.0
        %1342 = vmatpush2.xpose.msra.mxu0 0.0
        %1343 = vmatprep.subr.mxu0 0.0
        %1344 = vmatpush2.xpose.msra.mxu0 0.0
        %1345 = vmatprep.subr.mxu0 0.0
        %1346 = vmatpush2.xpose.msra.mxu0 0.0
        %1347 = vmatprep.subr.mxu0 0.0
        %1348 = vmatpush2.xpose.msra.mxu0 0.0
        %1349 = vmatprep.subr.mxu0 0.0
        %1350 = vmatpush2.xpose.msra.mxu0 0.0
        %1351 = vmatprep.subr.mxu0 0.0
        %1352 = vmatpush2.xpose.msra.mxu0 0.0
        %1353 = vmatprep.subr.mxu0 0.0
        %1354 = vmatpush2.xpose.msra.mxu0 0.0
        %1355 = vmatprep.subr.mxu0 0.0
        %1356 = vmatpush2.xpose.msra.mxu0 0.0
        %1357 = vmatprep.subr.mxu0 0.0
        %1358 = vmatpush2.xpose.msra.mxu0 0.0
        %1359 = vmatprep.mubr.f32.mxu0 0.0
        %1360 = vmatmul.mubr.f32.gmra.mxu0 %v1290
        %v1361 = vpop.f32.mrf.mxu0
        %v1362 = vadd.f32 0.0, %v1361
        %v1363 = vpop.f32.mrf.mxu0
        %1364 = vdwg.mxu0
        %v1365 = vmul.f32 %v1362, 0.35355338
        %v1366 = vsel %vm877, %v1365, -inf
        %1367 = vmax.xlane.f32.xlu0 %v1366
        %v1368 = vpop.xlane.xlu0 %1367
        %v1369 = vsub.f32 %v1365, %v1368
        %v1370 = vmul.f32 %v1369, 1.442695
        %v1371 = vpow.pop %v1370
        %v1372 = vsel %vm877, %v1371, 0.0
        %1373 = vadd.xlane.f32.xlu0 %v1372
        %v1374 = vpop.xlane.xlu0 %1373
        %v1375 = vrcp.pop %v1374
        %v1376 = vmul.f32 %v1371, %v1375
        %v1378 = vsel %vm877, %v1376, 0
        %1380 = vmatprep.subr.mxu0 0.0
        %1381 = vmatpush1.msra.mxu0 0.0
        %1382 = vmatprep.subr.mxu0 0.0
        %1383 = vmatpush1.msra.mxu0 0.0
        %1384 = vmatprep.subr.mxu0 0.0
        %1385 = vmatpush1.msra.mxu0 0.0
        %1386 = vmatprep.subr.mxu0 0.0
        %1387 = vmatpush1.msra.mxu0 0.0
        %1388 = vmatprep.subr.mxu0 0.0
        %1389 = vmatpush1.msra.mxu0 0.0
        %1390 = vmatprep.subr.mxu0 0.0
        %1391 = vmatpush1.msra.mxu0 0.0
        %1392 = vmatprep.subr.mxu0 0.0
        %1393 = vmatpush1.msra.mxu0 0.0
        %1394 = vmatprep.subr.mxu0 0.0
        %1395 = vmatpush1.msra.mxu0 0.0
        %1396 = vmatprep.subr.mxu0 0.0
        %1397 = vmatpush1.msra.mxu0 0.0
        %1398 = vmatprep.subr.mxu0 0.0
        %1399 = vmatpush1.msra.mxu0 0.0
        %1400 = vmatprep.subr.mxu0 0.0
        %1401 = vmatpush1.msra.mxu0 0.0
        %1402 = vmatprep.subr.mxu0 0.0
        %1403 = vmatpush1.msra.mxu0 0.0
        %1404 = vmatprep.subr.mxu0 0.0
        %1405 = vmatpush1.msra.mxu0 0.0
        %1406 = vmatprep.subr.mxu0 0.0
        %1407 = vmatpush1.msra.mxu0 0.0
        %1408 = vmatprep.subr.mxu0 0.0
        %1409 = vmatpush1.msra.mxu0 0.0
        %1410 = vmatprep.subr.mxu0 0.0
        %1411 = vmatpush1.msra.mxu0 %v1286
        %1412 = vmatprep.subr.mxu0 0.0
        %1413 = vmatpush2.msra.mxu0 0.0
        %1414 = vmatprep.subr.mxu0 0.0
        %1415 = vmatpush2.msra.mxu0 0.0
        %1416 = vmatprep.subr.mxu0 0.0
        %1417 = vmatpush2.msra.mxu0 0.0
        %1418 = vmatprep.subr.mxu0 0.0
        %1419 = vmatpush2.msra.mxu0 0.0
        %1420 = vmatprep.subr.mxu0 0.0
        %1421 = vmatpush2.msra.mxu0 0.0
        %1422 = vmatprep.subr.mxu0 0.0
        %1423 = vmatpush2.msra.mxu0 0.0
        %1424 = vmatprep.subr.mxu0 0.0
        %1425 = vmatpush2.msra.mxu0 0.0
        %1426 = vmatprep.subr.mxu0 0.0
        %1427 = vmatpush2.msra.mxu0 0.0
        %1428 = vmatprep.subr.mxu0 0.0
        %1429 = vmatpush2.msra.mxu0 0.0
        %1430 = vmatprep.subr.mxu0 0.0
        %1431 = vmatpush2.msra.mxu0 0.0
        %1432 = vmatprep.subr.mxu0 0.0
        %1433 = vmatpush2.msra.mxu0 0.0
        %1434 = vmatprep.subr.mxu0 0.0
        %1435 = vmatpush2.msra.mxu0 0.0
        %1436 = vmatprep.subr.mxu0 0.0
        %1437 = vmatpush2.msra.mxu0 0.0
        %1438 = vmatprep.subr.mxu0 0.0
        %1439 = vmatpush2.msra.mxu0 0.0
        %1440 = vmatprep.subr.mxu0 0.0
        %1441 = vmatpush2.msra.mxu0 0.0
        %1442 = vmatprep.subr.mxu0 0.0
        %1443 = vmatpush2.msra.mxu0 0.0
        %1444 = vmatprep.mubr.f32.mxu0 0.0
        %1445 = vmatmul.mubr.f32.gmra.mxu0 %v1378
        %v1446 = vpop.f32.mrf.mxu0
        %v1447 = vadd.f32 0.0, %v1446
        %v1448 = vpop.f32.mrf.mxu0
        %1449 = vdwg.mxu0
        %s1450 = scalar_lea.vmem %s9, 8
        %v1451 = vld [vmem:[%s1450] sm:$0xff]
        %v1453 = vsel %vm877, %v1447, 0
        %1455 = vmatprep.subr.mxu0 0.0
        %1456 = vmatpush1.msra.mxu0 0.0
        %1457 = vmatprep.subr.mxu0 0.0
        %1458 = vmatpush1.msra.mxu0 0.0
        %1459 = vmatprep.subr.mxu0 0.0
        %1460 = vmatpush1.msra.mxu0 0.0
        %1461 = vmatprep.subr.mxu0 0.0
        %1462 = vmatpush1.msra.mxu0 0.0
        %1463 = vmatprep.subr.mxu0 0.0
        %1464 = vmatpush1.msra.mxu0 0.0
        %1465 = vmatprep.subr.mxu0 0.0
        %1466 = vmatpush1.msra.mxu0 0.0
        %1467 = vmatprep.subr.mxu0 0.0
        %1468 = vmatpush1.msra.mxu0 0.0
        %1469 = vmatprep.subr.mxu0 0.0
        %1470 = vmatpush1.msra.mxu0 0.0
        %1471 = vmatprep.subr.mxu0 0.0
        %1472 = vmatpush1.msra.mxu0 0.0
        %1473 = vmatprep.subr.mxu0 0.0
        %1474 = vmatpush1.msra.mxu0 0.0
        %1475 = vmatprep.subr.mxu0 0.0
        %1476 = vmatpush1.msra.mxu0 0.0
        %1477 = vmatprep.subr.mxu0 0.0
        %1478 = vmatpush1.msra.mxu0 0.0
        %1479 = vmatprep.subr.mxu0 0.0
        %1480 = vmatpush1.msra.mxu0 0.0
        %1481 = vmatprep.subr.mxu0 0.0
        %1482 = vmatpush1.msra.mxu0 0.0
        %1483 = vmatprep.subr.mxu0 0.0
        %1484 = vmatpush1.msra.mxu0 0.0
        %1485 = vmatprep.subr.mxu0 0.0
        %1486 = vmatpush1.msra.mxu0 %v1451
        %1487 = vmatprep.subr.mxu0 0.0
        %1488 = vmatpush2.msra.mxu0 0.0
        %1489 = vmatprep.subr.mxu0 0.0
        %1490 = vmatpush2.msra.mxu0 0.0
        %1491 = vmatprep.subr.mxu0 0.0
        %1492 = vmatpush2.msra.mxu0 0.0
        %1493 = vmatprep.subr.mxu0 0.0
        %1494 = vmatpush2.msra.mxu0 0.0
        %1495 = vmatprep.subr.mxu0 0.0
        %1496 = vmatpush2.msra.mxu0 0.0
        %1497 = vmatprep.subr.mxu0 0.0
        %1498 = vmatpush2.msra.mxu0 0.0
        %1499 = vmatprep.subr.mxu0 0.0
        %1500 = vmatpush2.msra.mxu0 0.0
        %1501 = vmatprep.subr.mxu0 0.0
        %1502 = vmatpush2.msra.mxu0 0.0
        %1503 = vmatprep.subr.mxu0 0.0
        %1504 = vmatpush2.msra.mxu0 0.0
        %1505 = vmatprep.subr.mxu0 0.0
        %1506 = vmatpush2.msra.mxu0 0.0
        %1507 = vmatprep.subr.mxu0 0.0
        %1508 = vmatpush2.msra.mxu0 0.0
        %1509 = vmatprep.subr.mxu0 0.0
        %1510 = vmatpush2.msra.mxu0 0.0
        %1511 = vmatprep.subr.mxu0 0.0
        %1512 = vmatpush2.msra.mxu0 0.0
        %1513 = vmatprep.subr.mxu0 0.0
        %1514 = vmatpush2.msra.mxu0 0.0
        %1515 = vmatprep.subr.mxu0 0.0
        %1516 = vmatpush2.msra.mxu0 0.0
        %1517 = vmatprep.subr.mxu0 0.0
        %1518 = vmatpush2.msra.mxu0 0.0
        %1519 = vmatprep.mubr.f32.mxu0 0.0
        %1520 = vmatmul.mubr.f32.gmra.mxu0 %v1453
        %v1521 = vpop.f32.mrf.mxu0
        %v1522 = vadd.f32 0.0, %v1521
        %v1523 = vpop.f32.mrf.mxu0
        %1524 = vdwg.mxu0
        %v1526 = vsel %vm877, %v1036, 0
        %1528 = vmatprep.subr.mxu0 0.0
        %1529 = vmatpush1.msra.mxu0 0.0
        %1530 = vmatprep.subr.mxu0 0.0
        %1531 = vmatpush1.msra.mxu0 0.0
        %1532 = vmatprep.subr.mxu0 0.0
        %1533 = vmatpush1.msra.mxu0 0.0
        %1534 = vmatprep.subr.mxu0 0.0
        %1535 = vmatpush1.msra.mxu0 0.0
        %1536 = vmatprep.subr.mxu0 0.0
        %1537 = vmatpush1.msra.mxu0 0.0
        %1538 = vmatprep.subr.mxu0 0.0
        %1539 = vmatpush1.msra.mxu0 0.0
        %1540 = vmatprep.subr.mxu0 0.0
        %1541 = vmatpush1.msra.mxu0 0.0
        %1542 = vmatprep.subr.mxu0 0.0
        %1543 = vmatpush1.msra.mxu0 0.0
        %1544 = vmatprep.subr.mxu0 0.0
        %1545 = vmatpush1.msra.mxu0 0.0
        %1546 = vmatprep.subr.mxu0 0.0
        %1547 = vmatpush1.msra.mxu0 0.0
        %1548 = vmatprep.subr.mxu0 0.0
        %1549 = vmatpush1.msra.mxu0 0.0
        %1550 = vmatprep.subr.mxu0 0.0
        %1551 = vmatpush1.msra.mxu0 0.0
        %1552 = vmatprep.subr.mxu0 0.0
        %1553 = vmatpush1.msra.mxu0 0.0
        %1554 = vmatprep.subr.mxu0 0.0
        %1555 = vmatpush1.msra.mxu0 0.0
        %1556 = vmatprep.subr.mxu0 0.0
        %1557 = vmatpush1.msra.mxu0 0.0
        %1558 = vmatprep.subr.mxu0 0.0
        %1559 = vmatpush1.msra.mxu0 %v1039
        %1560 = vmatprep.subr.mxu0 0.0
        %1561 = vmatpush2.msra.mxu0 0.0
        %1562 = vmatprep.subr.mxu0 0.0
        %1563 = vmatpush2.msra.mxu0 0.0
        %1564 = vmatprep.subr.mxu0 0.0
        %1565 = vmatpush2.msra.mxu0 0.0
        %1566 = vmatprep.subr.mxu0 0.0
        %1567 = vmatpush2.msra.mxu0 0.0
        %1568 = vmatprep.subr.mxu0 0.0
        %1569 = vmatpush2.msra.mxu0 0.0
        %1570 = vmatprep.subr.mxu0 0.0
        %1571 = vmatpush2.msra.mxu0 0.0
        %1572 = vmatprep.subr.mxu0 0.0
        %1573 = vmatpush2.msra.mxu0 0.0
        %1574 = vmatprep.subr.mxu0 0.0
        %1575 = vmatpush2.msra.mxu0 0.0
        %1576 = vmatprep.subr.mxu0 0.0
        %1577 = vmatpush2.msra.mxu0 0.0
        %1578 = vmatprep.subr.mxu0 0.0
        %1579 = vmatpush2.msra.mxu0 0.0
        %1580 = vmatprep.subr.mxu0 0.0
        %1581 = vmatpush2.msra.mxu0 0.0
        %1582 = vmatprep.subr.mxu0 0.0
        %1583 = vmatpush2.msra.mxu0 0.0
        %1584 = vmatprep.subr.mxu0 0.0
        %1585 = vmatpush2.msra.mxu0 0.0
        %1586 = vmatprep.subr.mxu0 0.0
        %1587 = vmatpush2.msra.mxu0 0.0
        %1588 = vmatprep.subr.mxu0 0.0
        %1589 = vmatpush2.msra.mxu0 0.0
        %1590 = vmatprep.subr.mxu0 0.0
        %1591 = vmatpush2.msra.mxu0 0.0
        %1592 = vmatprep.mubr.f32.mxu0 0.0
        %1593 = vmatmul.mubr.f32.gmra.mxu0 %v1526
        %v1594 = vpop.f32.mrf.mxu0
        %v1595 = vadd.f32 %v1522, %v1594
        %v1596 = vpop.f32.mrf.mxu0
        %1597 = vdwg.mxu0
        %s1598 = scalar_lea.vmem %s3, 64
        %v1599 = vld [vmem:[%s1598] sm:$0xff]
        %v1600 = vld [vmem:[%s1598 + $0x8] sm:$0xff]
        %v1601 = vld [vmem:[%s1598 + $0x10] sm:$0xff]
        %v1602 = vld [vmem:[%s1598 + $0x18] sm:$0xff]
        %s1603 = scalar_lea.vmem %s6, 2
        %v1604 = vld [vmem:[%s1603] sm:$0x1]
        %v1606 = vlaneseq
        %v1607 = vshrl.u32 %v1606, 7
        %v1608 = vsub.s32 0, %v1607
        %v1609 = vrot.slane %v1604, %v1608
        %1611 = vmatprep.subr.mxu0 0.0
        %1612 = vmatpush1.msra.mxu0 0.0
        %1613 = vmatprep.subr.mxu0 0.0
        %1614 = vmatpush1.msra.mxu0 0.0
        %1615 = vmatprep.subr.mxu0 0.0
        %1616 = vmatpush1.msra.mxu0 0.0
        %1617 = vmatprep.subr.mxu0 0.0
        %1618 = vmatpush1.msra.mxu0 0.0
        %1619 = vmatprep.subr.mxu0 0.0
        %1620 = vmatpush1.msra.mxu0 0.0
        %1621 = vmatprep.subr.mxu0 0.0
        %1622 = vmatpush1.msra.mxu0 0.0
        %1623 = vmatprep.subr.mxu0 0.0
        %1624 = vmatpush1.msra.mxu0 0.0
        %1625 = vmatprep.subr.mxu0 0.0
        %1626 = vmatpush1.msra.mxu0 0.0
        %1627 = vmatprep.subr.mxu0 0.0
        %1628 = vmatpush1.msra.mxu0 0.0
        %1629 = vmatprep.subr.mxu0 0.0
        %1630 = vmatpush1.msra.mxu0 0.0
        %1631 = vmatprep.subr.mxu0 0.0
        %1632 = vmatpush1.msra.mxu0 0.0
        %1633 = vmatprep.subr.mxu0 0.0
        %1634 = vmatpush1.msra.mxu0 0.0
        %1635 = vmatprep.subr.mxu0 0.0
        %1636 = vmatpush1.msra.mxu0 %v1602
        %1637 = vmatprep.subr.mxu0 0.0
        %1638 = vmatpush1.msra.mxu0 %v1601
        %1639 = vmatprep.subr.mxu0 0.0
        %1640 = vmatpush1.msra.mxu0 %v1600
        %1641 = vmatprep.subr.mxu0 0.0
        %1642 = vmatpush1.msra.mxu0 %v1599
        %1643 = vmatprep.subr.mxu0 0.0
        %1644 = vmatpush2.msra.mxu0 0.0
        %1645 = vmatprep.subr.mxu0 0.0
        %1646 = vmatpush2.msra.mxu0 0.0
        %1647 = vmatprep.subr.mxu0 0.0
        %1648 = vmatpush2.msra.mxu0 0.0
        %1649 = vmatprep.subr.mxu0 0.0
        %1650 = vmatpush2.msra.mxu0 0.0
        %1651 = vmatprep.subr.mxu0 0.0
        %1652 = vmatpush2.msra.mxu0 0.0
        %1653 = vmatprep.subr.mxu0 0.0
        %1654 = vmatpush2.msra.mxu0 0.0
        %1655 = vmatprep.subr.mxu0 0.0
        %1656 = vmatpush2.msra.mxu0 0.0
        %1657 = vmatprep.subr.mxu0 0.0
        %1658 = vmatpush2.msra.mxu0 0.0
        %1659 = vmatprep.subr.mxu0 0.0
        %1660 = vmatpush2.msra.mxu0 0.0
        %1661 = vmatprep.subr.mxu0 0.0
        %1662 = vmatpush2.msra.mxu0 0.0
        %1663 = vmatprep.subr.mxu0 0.0
        %1664 = vmatpush2.msra.mxu0 0.0
        %1665 = vmatprep.subr.mxu0 0.0
        %1666 = vmatpush2.msra.mxu0 0.0
        %1667 = vmatprep.subr.mxu0 0.0
        %1668 = vmatpush2.msra.mxu0 0.0
        %1669 = vmatprep.subr.mxu0 0.0
        %1670 = vmatpush2.msra.mxu0 0.0
        %1671 = vmatprep.subr.mxu0 0.0
        %1672 = vmatpush2.msra.mxu0 0.0
        %1673 = vmatprep.subr.mxu0 0.0
        %1674 = vmatpush2.msra.mxu0 0.0
        %1675 = vmatprep.mubr.f32.mxu0 0.0
        %1676 = vmatmul.mubr.f32.gmra.mxu0 %v643
        %v1677 = vpop.f32.mrf.mxu0
        %v1678 = vadd.f32 %v1609, %v1677
        %v1679 = vpop.f32.mrf.mxu0
        %1680 = vdwg.mxu0
        %s1681 = scalar_lea.vmem %s4, 64
        %v1682 = vld [vmem:[%s1681] sm:$0xff]
        %v1683 = vld [vmem:[%s1681 + $0x8] sm:$0xff]
        %v1684 = vld [vmem:[%s1681 + $0x10] sm:$0xff]
        %v1685 = vld [vmem:[%s1681 + $0x18] sm:$0xff]
        %s1686 = scalar_lea.vmem %s7, 2
        %v1687 = vld [vmem:[%s1686] sm:$0x1]
        %v1689 = vlaneseq
        %v1690 = vshrl.u32 %v1689, 7
        %v1691 = vsub.s32 0, %v1690
        %v1692 = vrot.slane %v1687, %v1691
        %1694 = vmatprep.subr.mxu0 0.0
        %1695 = vmatpush1.msra.mxu0 0.0
        %1696 = vmatprep.subr.mxu0 0.0
        %1697 = vmatpush1.msra.mxu0 0.0
        %1698 = vmatprep.subr.mxu0 0.0
        %1699 = vmatpush1.msra.mxu0 0.0
        %1700 = vmatprep.subr.mxu0 0.0
        %1701 = vmatpush1.msra.mxu0 0.0
        %1702 = vmatprep.subr.mxu0 0.0
        %1703 = vmatpush1.msra.mxu0 0.0
        %1704 = vmatprep.subr.mxu0 0.0
        %1705 = vmatpush1.msra.mxu0 0.0
        %1706 = vmatprep.subr.mxu0 0.0
        %1707 = vmatpush1.msra.mxu0 0.0
        %1708 = vmatprep.subr.mxu0 0.0
        %1709 = vmatpush1.msra.mxu0 0.0
        %1710 = vmatprep.subr.mxu0 0.0
        %1711 = vmatpush1.msra.mxu0 0.0
        %1712 = vmatprep.subr.mxu0 0.0
        %1713 = vmatpush1.msra.mxu0 0.0
        %1714 = vmatprep.subr.mxu0 0.0
        %1715 = vmatpush1.msra.mxu0 0.0
        %1716 = vmatprep.subr.mxu0 0.0
        %1717 = vmatpush1.msra.mxu0 0.0
        %1718 = vmatprep.subr.mxu0 0.0
        %1719 = vmatpush1.msra.mxu0 %v1685
        %1720 = vmatprep.subr.mxu0 0.0
        %1721 = vmatpush1.msra.mxu0 %v1684
        %1722 = vmatprep.subr.mxu0 0.0
        %1723 = vmatpush1.msra.mxu0 %v1683
        %1724 = vmatprep.subr.mxu0 0.0
        %1725 = vmatpush1.msra.mxu0 %v1682
        %1726 = vmatprep.subr.mxu0 0.0
        %1727 = vmatpush2.msra.mxu0 0.0
        %1728 = vmatprep.subr.mxu0 0.0
        %1729 = vmatpush2.msra.mxu0 0.0
        %1730 = vmatprep.subr.mxu0 0.0
        %1731 = vmatpush2.msra.mxu0 0.0
        %1732 = vmatprep.subr.mxu0 0.0
        %1733 = vmatpush2.msra.mxu0 0.0
        %1734 = vmatprep.subr.mxu0 0.0
        %1735 = vmatpush2.msra.mxu0 0.0
        %1736 = vmatprep.subr.mxu0 0.0
        %1737 = vmatpush2.msra.mxu0 0.0
        %1738 = vmatprep.subr.mxu0 0.0
        %1739 = vmatpush2.msra.mxu0 0.0
        %1740 = vmatprep.subr.mxu0 0.0
        %1741 = vmatpush2.msra.mxu0 0.0
        %1742 = vmatprep.subr.mxu0 0.0
        %1743 = vmatpush2.msra.mxu0 0.0
        %1744 = vmatprep.subr.mxu0 0.0
        %1745 = vmatpush2.msra.mxu0 0.0
        %1746 = vmatprep.subr.mxu0 0.0
        %1747 = vmatpush2.msra.mxu0 0.0
        %1748 = vmatprep.subr.mxu0 0.0
        %1749 = vmatpush2.msra.mxu0 0.0
        %1750 = vmatprep.subr.mxu0 0.0
        %1751 = vmatpush2.msra.mxu0 0.0
        %1752 = vmatprep.subr.mxu0 0.0
        %1753 = vmatpush2.msra.mxu0 0.0
        %1754 = vmatprep.subr.mxu0 0.0
        %1755 = vmatpush2.msra.mxu0 0.0
        %1756 = vmatprep.subr.mxu0 0.0
        %1757 = vmatpush2.msra.mxu0 0.0
        %1758 = vmatprep.mubr.f32.mxu0 0.0
        %1759 = vmatmul.mubr.f32.gmra.mxu0 %v643
        %v1760 = vpop.f32.mrf.mxu0
        %v1761 = vadd.f32 %v1692, %v1760
        %v1762 = vpop.f32.mrf.mxu0
        %1763 = vdwg.mxu0
        %s1764 = scalar_lea.vmem %s5, 64
        %v1765 = vld [vmem:[%s1764] sm:$0xff]
        %v1766 = vld [vmem:[%s1764 + $0x8] sm:$0xff]
        %v1767 = vld [vmem:[%s1764 + $0x10] sm:$0xff]
        %v1768 = vld [vmem:[%s1764 + $0x18] sm:$0xff]
        %s1769 = scalar_lea.vmem %s8, 2
        %v1770 = vld [vmem:[%s1769] sm:$0x1]
        %v1772 = vlaneseq
        %v1773 = vshrl.u32 %v1772, 7
        %v1774 = vsub.s32 0, %v1773
        %v1775 = vrot.slane %v1770, %v1774
        %1777 = vmatprep.subr.mxu0 0.0
        %1778 = vmatpush1.msra.mxu0 0.0
        %1779 = vmatprep.subr.mxu0 0.0
        %1780 = vmatpush1.msra.mxu0 0.0
        %1781 = vmatprep.subr.mxu0 0.0
        %1782 = vmatpush1.msra.mxu0 0.0
        %1783 = vmatprep.subr.mxu0 0.0
        %1784 = vmatpush1.msra.mxu0 0.0
        %1785 = vmatprep.subr.mxu0 0.0
        %1786 = vmatpush1.msra.mxu0 0.0
        %1787 = vmatprep.subr.mxu0 0.0
        %1788 = vmatpush1.msra.mxu0 0.0
        %1789 = vmatprep.subr.mxu0 0.0
        %1790 = vmatpush1.msra.mxu0 0.0
        %1791 = vmatprep.subr.mxu0 0.0
        %1792 = vmatpush1.msra.mxu0 0.0
        %1793 = vmatprep.subr.mxu0 0.0
        %1794 = vmatpush1.msra.mxu0 0.0
        %1795 = vmatprep.subr.mxu0 0.0
        %1796 = vmatpush1.msra.mxu0 0.0
        %1797 = vmatprep.subr.mxu0 0.0
        %1798 = vmatpush1.msra.mxu0 0.0
        %1799 = vmatprep.subr.mxu0 0.0
        %1800 = vmatpush1.msra.mxu0 0.0
        %1801 = vmatprep.subr.mxu0 0.0
        %1802 = vmatpush1.msra.mxu0 %v1768
        %1803 = vmatprep.subr.mxu0 0.0
        %1804 = vmatpush1.msra.mxu0 %v1767
        %1805 = vmatprep.subr.mxu0 0.0
        %1806 = vmatpush1.msra.mxu0 %v1766
        %1807 = vmatprep.subr.mxu0 0.0
        %1808 = vmatpush1.msra.mxu0 %v1765
        %1809 = vmatprep.subr.mxu0 0.0
        %1810 = vmatpush2.msra.mxu0 0.0
        %1811 = vmatprep.subr.mxu0 0.0
        %1812 = vmatpush2.msra.mxu0 0.0
        %1813 = vmatprep.subr.mxu0 0.0
        %1814 = vmatpush2.msra.mxu0 0.0
        %1815 = vmatprep.subr.mxu0 0.0
        %1816 = vmatpush2.msra.mxu0 0.0
        %1817 = vmatprep.subr.mxu0 0.0
        %1818 = vmatpush2.msra.mxu0 0.0
        %1819 = vmatprep.subr.mxu0 0.0
        %1820 = vmatpush2.msra.mxu0 0.0
        %1821 = vmatprep.subr.mxu0 0.0
        %1822 = vmatpush2.msra.mxu0 0.0
        %1823 = vmatprep.subr.mxu0 0.0
        %1824 = vmatpush2.msra.mxu0 0.0
        %1825 = vmatprep.subr.mxu0 0.0
        %1826 = vmatpush2.msra.mxu0 0.0
        %1827 = vmatprep.subr.mxu0 0.0
        %1828 = vmatpush2.msra.mxu0 0.0
        %1829 = vmatprep.subr.mxu0 0.0
        %1830 = vmatpush2.msra.mxu0 0.0
        %1831 = vmatprep.subr.mxu0 0.0
        %1832 = vmatpush2.msra.mxu0 0.0
        %1833 = vmatprep.subr.mxu0 0.0
        %1834 = vmatpush2.msra.mxu0 0.0
        %1835 = vmatprep.subr.mxu0 0.0
        %1836 = vmatpush2.msra.mxu0 0.0
        %1837 = vmatprep.subr.mxu0 0.0
        %1838 = vmatpush2.msra.mxu0 0.0
        %1839 = vmatprep.subr.mxu0 0.0
        %1840 = vmatpush2.msra.mxu0 0.0
        %1841 = vmatprep.mubr.f32.mxu0 0.0
        %1842 = vmatmul.mubr.f32.gmra.mxu0 %v643
        %v1843 = vpop.f32.mrf.mxu0
        %v1844 = vadd.f32 %v1775, %v1843
        %v1845 = vpop.f32.mrf.mxu0
        %1846 = vdwg.mxu0
        %v1848 = vsel %vm877, %v1678, 0
        %v1851 = vsel %vm877, %v1761, 0
        %1853 = vmatprep.subr.mxu0 0.0
        %1854 = vmatpush1.xpose.msra.mxu0 0.0
        %1855 = vmatprep.subr.mxu0 0.0
        %1856 = vmatpush1.xpose.msra.mxu0 0.0
        %1857 = vmatprep.subr.mxu0 0.0
        %1858 = vmatpush1.xpose.msra.mxu0 0.0
        %1859 = vmatprep.subr.mxu0 0.0
        %1860 = vmatpush1.xpose.msra.mxu0 0.0
        %1861 = vmatprep.subr.mxu0 0.0
        %1862 = vmatpush1.xpose.msra.mxu0 0.0
        %1863 = vmatprep.subr.mxu0 0.0
        %1864 = vmatpush1.xpose.msra.mxu0 0.0
        %1865 = vmatprep.subr.mxu0 0.0
        %1866 = vmatpush1.xpose.msra.mxu0 0.0
        %1867 = vmatprep.subr.mxu0 0.0
        %1868 = vmatpush1.xpose.msra.mxu0 0.0
        %1869 = vmatprep.subr.mxu0 0.0
        %1870 = vmatpush1.xpose.msra.mxu0 0.0
        %1871 = vmatprep.subr.mxu0 0.0
        %1872 = vmatpush1.xpose.msra.mxu0 0.0
        %1873 = vmatprep.subr.mxu0 0.0
        %1874 = vmatpush1.xpose.msra.mxu0 0.0
        %1875 = vmatprep.subr.mxu0 0.0
        %1876 = vmatpush1.xpose.msra.mxu0 0.0
        %1877 = vmatprep.subr.mxu0 0.0
        %1878 = vmatpush1.xpose.msra.mxu0 0.0
        %1879 = vmatprep.subr.mxu0 0.0
        %1880 = vmatpush1.xpose.msra.mxu0 0.0
        %1881 = vmatprep.subr.mxu0 0.0
        %1882 = vmatpush1.xpose.msra.mxu0 0.0
        %1883 = vmatprep.subr.mxu0 0.0
        %1884 = vmatpush1.xpose.msra.mxu0 %v1851
        %1885 = vmatprep.subr.mxu0 0.0
        %1886 = vmatpush2.xpose.msra.mxu0 0.0
        %1887 = vmatprep.subr.mxu0 0.0
        %1888 = vmatpush2.xpose.msra.mxu0 0.0
        %1889 = vmatprep.subr.mxu0 0.0
        %1890 = vmatpush2.xpose.msra.mxu0 0.0
        %1891 = vmatprep.subr.mxu0 0.0
        %1892 = vmatpush2.xpose.msra.mxu0 0.0
        %1893 = vmatprep.subr.mxu0 0.0
        %1894 = vmatpush2.xpose.msra.mxu0 0.0
        %1895 = vmatprep.subr.mxu0 0.0
        %1896 = vmatpush2.xpose.msra.mxu0 0.0
        %1897 = vmatprep.subr.mxu0 0.0
        %1898 = vmatpush2.xpose.msra.mxu0 0.0
        %1899 = vmatprep.subr.mxu0 0.0
        %1900 = vmatpush2.xpose.msra.mxu0 0.0
        %1901 = vmatprep.subr.mxu0 0.0
        %1902 = vmatpush2.xpose.msra.mxu0 0.0
        %1903 = vmatprep.subr.mxu0 0.0
        %1904 = vmatpush2.xpose.msra.mxu0 0.0
        %1905 = vmatprep.subr.mxu0 0.0
        %1906 = vmatpush2.xpose.msra.mxu0 0.0
        %1907 = vmatprep.subr.mxu0 0.0
        %1908 = vmatpush2.xpose.msra.mxu0 0.0
        %1909 = vmatprep.subr.mxu0 0.0
        %1910 = vmatpush2.xpose.msra.mxu0 0.0
        %1911 = vmatprep.subr.mxu0 0.0
        %1912 = vmatpush2.xpose.msra.mxu0 0.0
        %1913 = vmatprep.subr.mxu0 0.0
        %1914 = vmatpush2.xpose.msra.mxu0 0.0
        %1915 = vmatprep.subr.mxu0 0.0
        %1916 = vmatpush2.xpose.msra.mxu0 0.0
        %1917 = vmatprep.mubr.f32.mxu0 0.0
        %1918 = vmatmul.mubr.f32.gmra.mxu0 %v1848
        %v1919 = vpop.f32.mrf.mxu0
        %v1920 = vadd.f32 0.0, %v1919
        %v1921 = vpop.f32.mrf.mxu0
        %1922 = vdwg.mxu0
        %v1923 = vmul.f32 %v1920, 0.35355338
        %v1924 = vsel %vm877, %v1923, -inf
        %1925 = vmax.xlane.f32.xlu0 %v1924
        %v1926 = vpop.xlane.xlu0 %1925
        %v1927 = vsub.f32 %v1923, %v1926
        %v1928 = vmul.f32 %v1927, 1.442695
        %v1929 = vpow.pop %v1928
        %v1930 = vsel %vm877, %v1929, 0.0
        %1931 = vadd.xlane.f32.xlu0 %v1930
        %v1932 = vpop.xlane.xlu0 %1931
        %v1933 = vrcp.pop %v1932
        %v1934 = vmul.f32 %v1929, %v1933
        %v1936 = vsel %vm877, %v1934, 0
        %1938 = vmatprep.subr.mxu0 0.0
        %1939 = vmatpush1.msra.mxu0 0.0
        %1940 = vmatprep.subr.mxu0 0.0
        %1941 = vmatpush1.msra.mxu0 0.0
        %1942 = vmatprep.subr.mxu0 0.0
        %1943 = vmatpush1.msra.mxu0 0.0
        %1944 = vmatprep.subr.mxu0 0.0
        %1945 = vmatpush1.msra.mxu0 0.0
        %1946 = vmatprep.subr.mxu0 0.0
        %1947 = vmatpush1.msra.mxu0 0.0
        %1948 = vmatprep.subr.mxu0 0.0
        %1949 = vmatpush1.msra.mxu0 0.0
        %1950 = vmatprep.subr.mxu0 0.0
        %1951 = vmatpush1.msra.mxu0 0.0
        %1952 = vmatprep.subr.mxu0 0.0
        %1953 = vmatpush1.msra.mxu0 0.0
        %1954 = vmatprep.subr.mxu0 0.0
        %1955 = vmatpush1.msra.mxu0 0.0
        %1956 = vmatprep.subr.mxu0 0.0
        %1957 = vmatpush1.msra.mxu0 0.0
        %1958 = vmatprep.subr.mxu0 0.0
        %1959 = vmatpush1.msra.mxu0 0.0
        %1960 = vmatprep.subr.mxu0 0.0
        %1961 = vmatpush1.msra.mxu0 0.0
        %1962 = vmatprep.subr.mxu0 0.0
        %1963 = vmatpush1.msra.mxu0 0.0
        %1964 = vmatprep.subr.mxu0 0.0
        %1965 = vmatpush1.msra.mxu0 0.0
        %1966 = vmatprep.subr.mxu0 0.0
        %1967 = vmatpush1.msra.mxu0 0.0
        %1968 = vmatprep.subr.mxu0 0.0
        %1969 = vmatpush1.msra.mxu0 %v1844
        %1970 = vmatprep.subr.mxu0 0.0
        %1971 = vmatpush2.msra.mxu0 0.0
        %1972 = vmatprep.subr.mxu0 0.0
        %1973 = vmatpush2.msra.mxu0 0.0
        %1974 = vmatprep.subr.mxu0 0.0
        %1975 = vmatpush2.msra.mxu0 0.0
        %1976 = vmatprep.subr.mxu0 0.0
        %1977 = vmatpush2.msra.mxu0 0.0
        %1978 = vmatprep.subr.mxu0 0.0
        %1979 = vmatpush2.msra.mxu0 0.0
        %1980 = vmatprep.subr.mxu0 0.0
        %1981 = vmatpush2.msra.mxu0 0.0
        %1982 = vmatprep.subr.mxu0 0.0
        %1983 = vmatpush2.msra.mxu0 0.0
        %1984 = vmatprep.subr.mxu0 0.0
        %1985 = vmatpush2.msra.mxu0 0.0
        %1986 = vmatprep.subr.mxu0 0.0
        %1987 = vmatpush2.msra.mxu0 0.0
        %1988 = vmatprep.subr.mxu0 0.0
        %1989 = vmatpush2.msra.mxu0 0.0
        %1990 = vmatprep.subr.mxu0 0.0
        %1991 = vmatpush2.msra.mxu0 0.0
        %1992 = vmatprep.subr.mxu0 0.0
        %1993 = vmatpush2.msra.mxu0 0.0
        %1994 = vmatprep.subr.mxu0 0.0
        %1995 = vmatpush2.msra.mxu0 0.0
        %1996 = vmatprep.subr.mxu0 0.0
        %1997 = vmatpush2.msra.mxu0 0.0
        %1998 = vmatprep.subr.mxu0 0.0
        %1999 = vmatpush2.msra.mxu0 0.0
        %2000 = vmatprep.subr.mxu0 0.0
        %2001 = vmatpush2.msra.mxu0 0.0
        %2002 = vmatprep.mubr.f32.mxu0 0.0
        %2003 = vmatmul.mubr.f32.gmra.mxu0 %v1936
        %v2004 = vpop.f32.mrf.mxu0
        %v2005 = vadd.f32 0.0, %v2004
        %v2006 = vpop.f32.mrf.mxu0
        %2007 = vdwg.mxu0
        %s2008 = scalar_lea.vmem %s9, 16
        %v2009 = vld [vmem:[%s2008] sm:$0xff]
        %v2011 = vsel %vm877, %v2005, 0
        %2013 = vmatprep.subr.mxu0 0.0
        %2014 = vmatpush1.msra.mxu0 0.0
        %2015 = vmatprep.subr.mxu0 0.0
        %2016 = vmatpush1.msra.mxu0 0.0
        %2017 = vmatprep.subr.mxu0 0.0
        %2018 = vmatpush1.msra.mxu0 0.0
        %2019 = vmatprep.subr.mxu0 0.0
        %2020 = vmatpush1.msra.mxu0 0.0
        %2021 = vmatprep.subr.mxu0 0.0
        %2022 = vmatpush1.msra.mxu0 0.0
        %2023 = vmatprep.subr.mxu0 0.0
        %2024 = vmatpush1.msra.mxu0 0.0
        %2025 = vmatprep.subr.mxu0 0.0
        %2026 = vmatpush1.msra.mxu0 0.0
        %2027 = vmatprep.subr.mxu0 0.0
        %2028 = vmatpush1.msra.mxu0 0.0
        %2029 = vmatprep.subr.mxu0 0.0
        %2030 = vmatpush1.msra.mxu0 0.0
        %2031 = vmatprep.subr.mxu0 0.0
        %2032 = vmatpush1.msra.mxu0 0.0
        %2033 = vmatprep.subr.mxu0 0.0
        %2034 = vmatpush1.msra.mxu0 0.0
        %2035 = vmatprep.subr.mxu0 0.0
        %2036 = vmatpush1.msra.mxu0 0.0
        %2037 = vmatprep.subr.mxu0 0.0
        %2038 = vmatpush1.msra.mxu0 0.0
        %2039 = vmatprep.subr.mxu0 0.0
        %2040 = vmatpush1.msra.mxu0 0.0
        %2041 = vmatprep.subr.mxu0 0.0
        %2042 = vmatpush1.msra.mxu0 0.0
        %2043 = vmatprep.subr.mxu0 0.0
        %2044 = vmatpush1.msra.mxu0 %v2009
        %2045 = vmatprep.subr.mxu0 0.0
        %2046 = vmatpush2.msra.mxu0 0.0
        %2047 = vmatprep.subr.mxu0 0.0
        %2048 = vmatpush2.msra.mxu0 0.0
        %2049 = vmatprep.subr.mxu0 0.0
        %2050 = vmatpush2.msra.mxu0 0.0
        %2051 = vmatprep.subr.mxu0 0.0
        %2052 = vmatpush2.msra.mxu0 0.0
        %2053 = vmatprep.subr.mxu0 0.0
        %2054 = vmatpush2.msra.mxu0 0.0
        %2055 = vmatprep.subr.mxu0 0.0
        %2056 = vmatpush2.msra.mxu0 0.0
        %2057 = vmatprep.subr.mxu0 0.0
        %2058 = vmatpush2.msra.mxu0 0.0
        %2059 = vmatprep.subr.mxu0 0.0
        %2060 = vmatpush2.msra.mxu0 0.0
        %2061 = vmatprep.subr.mxu0 0.0
        %2062 = vmatpush2.msra.mxu0 0.0
        %2063 = vmatprep.subr.mxu0 0.0
        %2064 = vmatpush2.msra.mxu0 0.0
        %2065 = vmatprep.subr.mxu0 0.0
        %2066 = vmatpush2.msra.mxu0 0.0
        %2067 = vmatprep.subr.mxu0 0.0
        %2068 = vmatpush2.msra.mxu0 0.0
        %2069 = vmatprep.subr.mxu0 0.0
        %2070 = vmatpush2.msra.mxu0 0.0
        %2071 = vmatprep.subr.mxu0 0.0
        %2072 = vmatpush2.msra.mxu0 0.0
        %2073 = vmatprep.subr.mxu0 0.0
        %2074 = vmatpush2.msra.mxu0 0.0
        %2075 = vmatprep.subr.mxu0 0.0
        %2076 = vmatpush2.msra.mxu0 0.0
        %2077 = vmatprep.mubr.f32.mxu0 0.0
        %2078 = vmatmul.mubr.f32.gmra.mxu0 %v2011
        %v2079 = vpop.f32.mrf.mxu0
        %v2080 = vadd.f32 0.0, %v2079
        %v2081 = vpop.f32.mrf.mxu0
        %2082 = vdwg.mxu0
        %v2083 = vadd.f32 %v1595, %v2080
        %s2084 = scalar_lea.vmem %s3, 96
        %v2085 = vld [vmem:[%s2084] sm:$0xff]
        %v2086 = vld [vmem:[%s2084 + $0x8] sm:$0xff]
        %v2087 = vld [vmem:[%s2084 + $0x10] sm:$0xff]
        %v2088 = vld [vmem:[%s2084 + $0x18] sm:$0xff]
        %s2089 = scalar_lea.vmem %s6, 3
        %v2090 = vld [vmem:[%s2089] sm:$0x1]
        %v2092 = vlaneseq
        %v2093 = vshrl.u32 %v2092, 7
        %v2094 = vsub.s32 0, %v2093
        %v2095 = vrot.slane %v2090, %v2094
        %2097 = vmatprep.subr.mxu0 0.0
        %2098 = vmatpush1.msra.mxu0 0.0
        %2099 = vmatprep.subr.mxu0 0.0
        %2100 = vmatpush1.msra.mxu0 0.0
        %2101 = vmatprep.subr.mxu0 0.0
        %2102 = vmatpush1.msra.mxu0 0.0
        %2103 = vmatprep.subr.mxu0 0.0
        %2104 = vmatpush1.msra.mxu0 0.0
        %2105 = vmatprep.subr.mxu0 0.0
        %2106 = vmatpush1.msra.mxu0 0.0
        %2107 = vmatprep.subr.mxu0 0.0
        %2108 = vmatpush1.msra.mxu0 0.0
        %2109 = vmatprep.subr.mxu0 0.0
        %2110 = vmatpush1.msra.mxu0 0.0
        %2111 = vmatprep.subr.mxu0 0.0
        %2112 = vmatpush1.msra.mxu0 0.0
        %2113 = vmatprep.subr.mxu0 0.0
        %2114 = vmatpush1.msra.mxu0 0.0
        %2115 = vmatprep.subr.mxu0 0.0
        %2116 = vmatpush1.msra.mxu0 0.0
        %2117 = vmatprep.subr.mxu0 0.0
        %2118 = vmatpush1.msra.mxu0 0.0
        %2119 = vmatprep.subr.mxu0 0.0
        %2120 = vmatpush1.msra.mxu0 0.0
        %2121 = vmatprep.subr.mxu0 0.0
        %2122 = vmatpush1.msra.mxu0 %v2088
        %2123 = vmatprep.subr.mxu0 0.0
        %2124 = vmatpush1.msra.mxu0 %v2087
        %2125 = vmatprep.subr.mxu0 0.0
        %2126 = vmatpush1.msra.mxu0 %v2086
        %2127 = vmatprep.subr.mxu0 0.0
        %2128 = vmatpush1.msra.mxu0 %v2085
        %2129 = vmatprep.subr.mxu0 0.0
        %2130 = vmatpush2.msra.mxu0 0.0
        %2131 = vmatprep.subr.mxu0 0.0
        %2132 = vmatpush2.msra.mxu0 0.0
        %2133 = vmatprep.subr.mxu0 0.0
        %2134 = vmatpush2.msra.mxu0 0.0
        %2135 = vmatprep.subr.mxu0 0.0
        %2136 = vmatpush2.msra.mxu0 0.0
        %2137 = vmatprep.subr.mxu0 0.0
        %2138 = vmatpush2.msra.mxu0 0.0
        %2139 = vmatprep.subr.mxu0 0.0
        %2140 = vmatpush2.msra.mxu0 0.0
        %2141 = vmatprep.subr.mxu0 0.0
        %2142 = vmatpush2.msra.mxu0 0.0
        %2143 = vmatprep.subr.mxu0 0.0
        %2144 = vmatpush2.msra.mxu0 0.0
        %2145 = vmatprep.subr.mxu0 0.0
        %2146 = vmatpush2.msra.mxu0 0.0
        %2147 = vmatprep.subr.mxu0 0.0
        %2148 = vmatpush2.msra.mxu0 0.0
        %2149 = vmatprep.subr.mxu0 0.0
        %2150 = vmatpush2.msra.mxu0 0.0
        %2151 = vmatprep.subr.mxu0 0.0
        %2152 = vmatpush2.msra.mxu0 0.0
        %2153 = vmatprep.subr.mxu0 0.0
        %2154 = vmatpush2.msra.mxu0 0.0
        %2155 = vmatprep.subr.mxu0 0.0
        %2156 = vmatpush2.msra.mxu0 0.0
        %2157 = vmatprep.subr.mxu0 0.0
        %2158 = vmatpush2.msra.mxu0 0.0
        %2159 = vmatprep.subr.mxu0 0.0
        %2160 = vmatpush2.msra.mxu0 0.0
        %2161 = vmatprep.mubr.f32.mxu0 0.0
        %2162 = vmatmul.mubr.f32.gmra.mxu0 %v643
        %v2163 = vpop.f32.mrf.mxu0
        %v2164 = vadd.f32 %v2095, %v2163
        %v2165 = vpop.f32.mrf.mxu0
        %2166 = vdwg.mxu0
        %s2167 = scalar_lea.vmem %s4, 96
        %v2168 = vld [vmem:[%s2167] sm:$0xff]
        %v2169 = vld [vmem:[%s2167 + $0x8] sm:$0xff]
        %v2170 = vld [vmem:[%s2167 + $0x10] sm:$0xff]
        %v2171 = vld [vmem:[%s2167 + $0x18] sm:$0xff]
        %s2172 = scalar_lea.vmem %s7, 3
        %v2173 = vld [vmem:[%s2172] sm:$0x1]
        %v2175 = vlaneseq
        %v2176 = vshrl.u32 %v2175, 7
        %v2177 = vsub.s32 0, %v2176
        %v2178 = vrot.slane %v2173, %v2177
        %2180 = vmatprep.subr.mxu0 0.0
        %2181 = vmatpush1.msra.mxu0 0.0
        %2182 = vmatprep.subr.mxu0 0.0
        %2183 = vmatpush1.msra.mxu0 0.0
        %2184 = vmatprep.subr.mxu0 0.0
        %2185 = vmatpush1.msra.mxu0 0.0
        %2186 = vmatprep.subr.mxu0 0.0
        %2187 = vmatpush1.msra.mxu0 0.0
        %2188 = vmatprep.subr.mxu0 0.0
        %2189 = vmatpush1.msra.mxu0 0.0
        %2190 = vmatprep.subr.mxu0 0.0
        %2191 = vmatpush1.msra.mxu0 0.0
        %2192 = vmatprep.subr.mxu0 0.0
        %2193 = vmatpush1.msra.mxu0 0.0
        %2194 = vmatprep.subr.mxu0 0.0
        %2195 = vmatpush1.msra.mxu0 0.0
        %2196 = vmatprep.subr.mxu0 0.0
        %2197 = vmatpush1.msra.mxu0 0.0
        %2198 = vmatprep.subr.mxu0 0.0
        %2199 = vmatpush1.msra.mxu0 0.0
        %2200 = vmatprep.subr.mxu0 0.0
        %2201 = vmatpush1.msra.mxu0 0.0
        %2202 = vmatprep.subr.mxu0 0.0
        %2203 = vmatpush1.msra.mxu0 0.0
        %2204 = vmatprep.subr.mxu0 0.0
        %2205 = vmatpush1.msra.mxu0 %v2171
        %2206 = vmatprep.subr.mxu0 0.0
        %2207 = vmatpush1.msra.mxu0 %v2170
        %2208 = vmatprep.subr.mxu0 0.0
        %2209 = vmatpush1.msra.mxu0 %v2169
        %2210 = vmatprep.subr.mxu0 0.0
        %2211 = vmatpush1.msra.mxu0 %v2168
        %2212 = vmatprep.subr.mxu0 0.0
        %2213 = vmatpush2.msra.mxu0 0.0
        %2214 = vmatprep.subr.mxu0 0.0
        %2215 = vmatpush2.msra.mxu0 0.0
        %2216 = vmatprep.subr.mxu0 0.0
        %2217 = vmatpush2.msra.mxu0 0.0
        %2218 = vmatprep.subr.mxu0 0.0
        %2219 = vmatpush2.msra.mxu0 0.0
        %2220 = vmatprep.subr.mxu0 0.0
        %2221 = vmatpush2.msra.mxu0 0.0
        %2222 = vmatprep.subr.mxu0 0.0
        %2223 = vmatpush2.msra.mxu0 0.0
        %2224 = vmatprep.subr.mxu0 0.0
        %2225 = vmatpush2.msra.mxu0 0.0
        %2226 = vmatprep.subr.mxu0 0.0
        %2227 = vmatpush2.msra.mxu0 0.0
        %2228 = vmatprep.subr.mxu0 0.0
        %2229 = vmatpush2.msra.mxu0 0.0
        %2230 = vmatprep.subr.mxu0 0.0
        %2231 = vmatpush2.msra.mxu0 0.0
        %2232 = vmatprep.subr.mxu0 0.0
        %2233 = vmatpush2.msra.mxu0 0.0
        %2234 = vmatprep.subr.mxu0 0.0
        %2235 = vmatpush2.msra.mxu0 0.0
        %2236 = vmatprep.subr.mxu0 0.0
        %2237 = vmatpush2.msra.mxu0 0.0
        %2238 = vmatprep.subr.mxu0 0.0
        %2239 = vmatpush2.msra.mxu0 0.0
        %2240 = vmatprep.subr.mxu0 0.0
        %2241 = vmatpush2.msra.mxu0 0.0
        %2242 = vmatprep.subr.mxu0 0.0
        %2243 = vmatpush2.msra.mxu0 0.0
        %2244 = vmatprep.mubr.f32.mxu0 0.0
        %2245 = vmatmul.mubr.f32.gmra.mxu0 %v643
        %v2246 = vpop.f32.mrf.mxu0
        %v2247 = vadd.f32 %v2178, %v2246
        %v2248 = vpop.f32.mrf.mxu0
        %2249 = vdwg.mxu0
        %s2250 = scalar_lea.vmem %s5, 96
        %v2251 = vld [vmem:[%s2250] sm:$0xff]
        %v2252 = vld [vmem:[%s2250 + $0x8] sm:$0xff]
        %v2253 = vld [vmem:[%s2250 + $0x10] sm:$0xff]
        %v2254 = vld [vmem:[%s2250 + $0x18] sm:$0xff]
        %s2255 = scalar_lea.vmem %s8, 3
        %v2256 = vld [vmem:[%s2255] sm:$0x1]
        %v2258 = vlaneseq
        %v2259 = vshrl.u32 %v2258, 7
        %v2260 = vsub.s32 0, %v2259
        %v2261 = vrot.slane %v2256, %v2260
        %2263 = vmatprep.subr.mxu0 0.0
        %2264 = vmatpush1.msra.mxu0 0.0
        %2265 = vmatprep.subr.mxu0 0.0
        %2266 = vmatpush1.msra.mxu0 0.0
        %2267 = vmatprep.subr.mxu0 0.0
        %2268 = vmatpush1.msra.mxu0 0.0
        %2269 = vmatprep.subr.mxu0 0.0
        %2270 = vmatpush1.msra.mxu0 0.0
        %2271 = vmatprep.subr.mxu0 0.0
        %2272 = vmatpush1.msra.mxu0 0.0
        %2273 = vmatprep.subr.mxu0 0.0
        %2274 = vmatpush1.msra.mxu0 0.0
        %2275 = vmatprep.subr.mxu0 0.0
        %2276 = vmatpush1.msra.mxu0 0.0
        %2277 = vmatprep.subr.mxu0 0.0
        %2278 = vmatpush1.msra.mxu0 0.0
        %2279 = vmatprep.subr.mxu0 0.0
        %2280 = vmatpush1.msra.mxu0 0.0
        %2281 = vmatprep.subr.mxu0 0.0
        %2282 = vmatpush1.msra.mxu0 0.0
        %2283 = vmatprep.subr.mxu0 0.0
        %2284 = vmatpush1.msra.mxu0 0.0
        %2285 = vmatprep.subr.mxu0 0.0
        %2286 = vmatpush1.msra.mxu0 0.0
        %2287 = vmatprep.subr.mxu0 0.0
        %2288 = vmatpush1.msra.mxu0 %v2254
        %2289 = vmatprep.subr.mxu0 0.0
        %2290 = vmatpush1.msra.mxu0 %v2253
        %2291 = vmatprep.subr.mxu0 0.0
        %2292 = vmatpush1.msra.mxu0 %v2252
        %2293 = vmatprep.subr.mxu0 0.0
        %2294 = vmatpush1.msra.mxu0 %v2251
        %2295 = vmatprep.subr.mxu0 0.0
        %2296 = vmatpush2.msra.mxu0 0.0
        %2297 = vmatprep.subr.mxu0 0.0
        %2298 = vmatpush2.msra.mxu0 0.0
        %2299 = vmatprep.subr.mxu0 0.0
        %2300 = vmatpush2.msra.mxu0 0.0
        %2301 = vmatprep.subr.mxu0 0.0
        %2302 = vmatpush2.msra.mxu0 0.0
        %2303 = vmatprep.subr.mxu0 0.0
        %2304 = vmatpush2.msra.mxu0 0.0
        %2305 = vmatprep.subr.mxu0 0.0
        %2306 = vmatpush2.msra.mxu0 0.0
        %2307 = vmatprep.subr.mxu0 0.0
        %2308 = vmatpush2.msra.mxu0 0.0
        %2309 = vmatprep.subr.mxu0 0.0
        %2310 = vmatpush2.msra.mxu0 0.0
        %2311 = vmatprep.subr.mxu0 0.0
        %2312 = vmatpush2.msra.mxu0 0.0
        %2313 = vmatprep.subr.mxu0 0.0
        %2314 = vmatpush2.msra.mxu0 0.0
        %2315 = vmatprep.subr.mxu0 0.0
        %2316 = vmatpush2.msra.mxu0 0.0
        %2317 = vmatprep.subr.mxu0 0.0
        %2318 = vmatpush2.msra.mxu0 0.0
        %2319 = vmatprep.subr.mxu0 0.0
        %2320 = vmatpush2.msra.mxu0 0.0
        %2321 = vmatprep.subr.mxu0 0.0
        %2322 = vmatpush2.msra.mxu0 0.0
        %2323 = vmatprep.subr.mxu0 0.0
        %2324 = vmatpush2.msra.mxu0 0.0
        %2325 = vmatprep.subr.mxu0 0.0
        %2326 = vmatpush2.msra.mxu0 0.0
        %2327 = vmatprep.mubr.f32.mxu0 0.0
        %2328 = vmatmul.mubr.f32.gmra.mxu0 %v643
        %v2329 = vpop.f32.mrf.mxu0
        %v2330 = vadd.f32 %v2261, %v2329
        %v2331 = vpop.f32.mrf.mxu0
        %2332 = vdwg.mxu0
        %v2334 = vsel %vm877, %v2164, 0
        %v2337 = vsel %vm877, %v2247, 0
        %2339 = vmatprep.subr.mxu0 0.0
        %2340 = vmatpush1.xpose.msra.mxu0 0.0
        %2341 = vmatprep.subr.mxu0 0.0
        %2342 = vmatpush1.xpose.msra.mxu0 0.0
        %2343 = vmatprep.subr.mxu0 0.0
        %2344 = vmatpush1.xpose.msra.mxu0 0.0
        %2345 = vmatprep.subr.mxu0 0.0
        %2346 = vmatpush1.xpose.msra.mxu0 0.0
        %2347 = vmatprep.subr.mxu0 0.0
        %2348 = vmatpush1.xpose.msra.mxu0 0.0
        %2349 = vmatprep.subr.mxu0 0.0
        %2350 = vmatpush1.xpose.msra.mxu0 0.0
        %2351 = vmatprep.subr.mxu0 0.0
        %2352 = vmatpush1.xpose.msra.mxu0 0.0
        %2353 = vmatprep.subr.mxu0 0.0
        %2354 = vmatpush1.xpose.msra.mxu0 0.0
        %2355 = vmatprep.subr.mxu0 0.0
        %2356 = vmatpush1.xpose.msra.mxu0 0.0
        %2357 = vmatprep.subr.mxu0 0.0
        %2358 = vmatpush1.xpose.msra.mxu0 0.0
        %2359 = vmatprep.subr.mxu0 0.0
        %2360 = vmatpush1.xpose.msra.mxu0 0.0
        %2361 = vmatprep.subr.mxu0 0.0
        %2362 = vmatpush1.xpose.msra.mxu0 0.0
        %2363 = vmatprep.subr.mxu0 0.0
        %2364 = vmatpush1.xpose.msra.mxu0 0.0
        %2365 = vmatprep.subr.mxu0 0.0
        %2366 = vmatpush1.xpose.msra.mxu0 0.0
        %2367 = vmatprep.subr.mxu0 0.0
        %2368 = vmatpush1.xpose.msra.mxu0 0.0
        %2369 = vmatprep.subr.mxu0 0.0
        %2370 = vmatpush1.xpose.msra.mxu0 %v2337
        %2371 = vmatprep.subr.mxu0 0.0
        %2372 = vmatpush2.xpose.msra.mxu0 0.0
        %2373 = vmatprep.subr.mxu0 0.0
        %2374 = vmatpush2.xpose.msra.mxu0 0.0
        %2375 = vmatprep.subr.mxu0 0.0
        %2376 = vmatpush2.xpose.msra.mxu0 0.0
        %2377 = vmatprep.subr.mxu0 0.0
        %2378 = vmatpush2.xpose.msra.mxu0 0.0
        %2379 = vmatprep.subr.mxu0 0.0
        %2380 = vmatpush2.xpose.msra.mxu0 0.0
        %2381 = vmatprep.subr.mxu0 0.0
        %2382 = vmatpush2.xpose.msra.mxu0 0.0
        %2383 = vmatprep.subr.mxu0 0.0
        %2384 = vmatpush2.xpose.msra.mxu0 0.0
        %2385 = vmatprep.subr.mxu0 0.0
        %2386 = vmatpush2.xpose.msra.mxu0 0.0
        %2387 = vmatprep.subr.mxu0 0.0
        %2388 = vmatpush2.xpose.msra.mxu0 0.0
        %2389 = vmatprep.subr.mxu0 0.0
        %2390 = vmatpush2.xpose.msra.mxu0 0.0
        %2391 = vmatprep.subr.mxu0 0.0
        %2392 = vmatpush2.xpose.msra.mxu0 0.0
        %2393 = vmatprep.subr.mxu0 0.0
        %2394 = vmatpush2.xpose.msra.mxu0 0.0
        %2395 = vmatprep.subr.mxu0 0.0
        %2396 = vmatpush2.xpose.msra.mxu0 0.0
        %2397 = vmatprep.subr.mxu0 0.0
        %2398 = vmatpush2.xpose.msra.mxu0 0.0
        %2399 = vmatprep.subr.mxu0 0.0
        %2400 = vmatpush2.xpose.msra.mxu0 0.0
        %2401 = vmatprep.subr.mxu0 0.0
        %2402 = vmatpush2.xpose.msra.mxu0 0.0
        %2403 = vmatprep.mubr.f32.mxu0 0.0
        %2404 = vmatmul.mubr.f32.gmra.mxu0 %v2334
        %v2405 = vpop.f32.mrf.mxu0
        %v2406 = vadd.f32 0.0, %v2405
        %v2407 = vpop.f32.mrf.mxu0
        %2408 = vdwg.mxu0
        %v2409 = vmul.f32 %v2406, 0.35355338
        %v2410 = vsel %vm877, %v2409, -inf
        %2411 = vmax.xlane.f32.xlu0 %v2410
        %v2412 = vpop.xlane.xlu0 %2411
        %v2413 = vsub.f32 %v2409, %v2412
        %v2414 = vmul.f32 %v2413, 1.442695
        %v2415 = vpow.pop %v2414
        %v2416 = vsel %vm877, %v2415, 0.0
        %2417 = vadd.xlane.f32.xlu0 %v2416
        %v2418 = vpop.xlane.xlu0 %2417
        %v2419 = vrcp.pop %v2418
        %v2420 = vmul.f32 %v2415, %v2419
        %v2422 = vsel %vm877, %v2420, 0
        %2424 = vmatprep.subr.mxu0 0.0
        %2425 = vmatpush1.msra.mxu0 0.0
        %2426 = vmatprep.subr.mxu0 0.0
        %2427 = vmatpush1.msra.mxu0 0.0
        %2428 = vmatprep.subr.mxu0 0.0
        %2429 = vmatpush1.msra.mxu0 0.0
        %2430 = vmatprep.subr.mxu0 0.0
        %2431 = vmatpush1.msra.mxu0 0.0
        %2432 = vmatprep.subr.mxu0 0.0
        %2433 = vmatpush1.msra.mxu0 0.0
        %2434 = vmatprep.subr.mxu0 0.0
        %2435 = vmatpush1.msra.mxu0 0.0
        %2436 = vmatprep.subr.mxu0 0.0
        %2437 = vmatpush1.msra.mxu0 0.0
        %2438 = vmatprep.subr.mxu0 0.0
        %2439 = vmatpush1.msra.mxu0 0.0
        %2440 = vmatprep.subr.mxu0 0.0
        %2441 = vmatpush1.msra.mxu0 0.0
        %2442 = vmatprep.subr.mxu0 0.0
        %2443 = vmatpush1.msra.mxu0 0.0
        %2444 = vmatprep.subr.mxu0 0.0
        %2445 = vmatpush1.msra.mxu0 0.0
        %2446 = vmatprep.subr.mxu0 0.0
        %2447 = vmatpush1.msra.mxu0 0.0
        %2448 = vmatprep.subr.mxu0 0.0
        %2449 = vmatpush1.msra.mxu0 0.0
        %2450 = vmatprep.subr.mxu0 0.0
        %2451 = vmatpush1.msra.mxu0 0.0
        %2452 = vmatprep.subr.mxu0 0.0
        %2453 = vmatpush1.msra.mxu0 0.0
        %2454 = vmatprep.subr.mxu0 0.0
        %2455 = vmatpush1.msra.mxu0 %v2330
        %2456 = vmatprep.subr.mxu0 0.0
        %2457 = vmatpush2.msra.mxu0 0.0
        %2458 = vmatprep.subr.mxu0 0.0
        %2459 = vmatpush2.msra.mxu0 0.0
        %2460 = vmatprep.subr.mxu0 0.0
        %2461 = vmatpush2.msra.mxu0 0.0
        %2462 = vmatprep.subr.mxu0 0.0
        %2463 = vmatpush2.msra.mxu0 0.0
        %2464 = vmatprep.subr.mxu0 0.0
        %2465 = vmatpush2.msra.mxu0 0.0
        %2466 = vmatprep.subr.mxu0 0.0
        %2467 = vmatpush2.msra.mxu0 0.0
        %2468 = vmatprep.subr.mxu0 0.0
        %2469 = vmatpush2.msra.mxu0 0.0
        %2470 = vmatprep.subr.mxu0 0.0
        %2471 = vmatpush2.msra.mxu0 0.0
        %2472 = vmatprep.subr.mxu0 0.0
        %2473 = vmatpush2.msra.mxu0 0.0
        %2474 = vmatprep.subr.mxu0 0.0
        %2475 = vmatpush2.msra.mxu0 0.0
        %2476 = vmatprep.subr.mxu0 0.0
        %2477 = vmatpush2.msra.mxu0 0.0
        %2478 = vmatprep.subr.mxu0 0.0
        %2479 = vmatpush2.msra.mxu0 0.0
        %2480 = vmatprep.subr.mxu0 0.0
        %2481 = vmatpush2.msra.mxu0 0.0
        %2482 = vmatprep.subr.mxu0 0.0
        %2483 = vmatpush2.msra.mxu0 0.0
        %2484 = vmatprep.subr.mxu0 0.0
        %2485 = vmatpush2.msra.mxu0 0.0
        %2486 = vmatprep.subr.mxu0 0.0
        %2487 = vmatpush2.msra.mxu0 0.0
        %2488 = vmatprep.mubr.f32.mxu0 0.0
        %2489 = vmatmul.mubr.f32.gmra.mxu0 %v2422
        %v2490 = vpop.f32.mrf.mxu0
        %v2491 = vadd.f32 0.0, %v2490
        %v2492 = vpop.f32.mrf.mxu0
        %2493 = vdwg.mxu0
        %s2494 = scalar_lea.vmem %s9, 24
        %v2495 = vld [vmem:[%s2494] sm:$0xff]
        %v2497 = vsel %vm877, %v2491, 0
        %2499 = vmatprep.subr.mxu0 0.0
        %2500 = vmatpush1.msra.mxu0 0.0
        %2501 = vmatprep.subr.mxu0 0.0
        %2502 = vmatpush1.msra.mxu0 0.0
        %2503 = vmatprep.subr.mxu0 0.0
        %2504 = vmatpush1.msra.mxu0 0.0
        %2505 = vmatprep.subr.mxu0 0.0
        %2506 = vmatpush1.msra.mxu0 0.0
        %2507 = vmatprep.subr.mxu0 0.0
        %2508 = vmatpush1.msra.mxu0 0.0
        %2509 = vmatprep.subr.mxu0 0.0
        %2510 = vmatpush1.msra.mxu0 0.0
        %2511 = vmatprep.subr.mxu0 0.0
        %2512 = vmatpush1.msra.mxu0 0.0
        %2513 = vmatprep.subr.mxu0 0.0
        %2514 = vmatpush1.msra.mxu0 0.0
        %2515 = vmatprep.subr.mxu0 0.0
        %2516 = vmatpush1.msra.mxu0 0.0
        %2517 = vmatprep.subr.mxu0 0.0
        %2518 = vmatpush1.msra.mxu0 0.0
        %2519 = vmatprep.subr.mxu0 0.0
        %2520 = vmatpush1.msra.mxu0 0.0
        %2521 = vmatprep.subr.mxu0 0.0
        %2522 = vmatpush1.msra.mxu0 0.0
        %2523 = vmatprep.subr.mxu0 0.0
        %2524 = vmatpush1.msra.mxu0 0.0
        %2525 = vmatprep.subr.mxu0 0.0
        %2526 = vmatpush1.msra.mxu0 0.0
        %2527 = vmatprep.subr.mxu0 0.0
        %2528 = vmatpush1.msra.mxu0 0.0
        %2529 = vmatprep.subr.mxu0 0.0
        %2530 = vmatpush1.msra.mxu0 %v2495
        %2531 = vmatprep.subr.mxu0 0.0
        %2532 = vmatpush2.msra.mxu0 0.0
        %2533 = vmatprep.subr.mxu0 0.0
        %2534 = vmatpush2.msra.mxu0 0.0
        %2535 = vmatprep.subr.mxu0 0.0
        %2536 = vmatpush2.msra.mxu0 0.0
        %2537 = vmatprep.subr.mxu0 0.0
        %2538 = vmatpush2.msra.mxu0 0.0
        %2539 = vmatprep.subr.mxu0 0.0
        %2540 = vmatpush2.msra.mxu0 0.0
        %2541 = vmatprep.subr.mxu0 0.0
        %2542 = vmatpush2.msra.mxu0 0.0
        %2543 = vmatprep.subr.mxu0 0.0
        %2544 = vmatpush2.msra.mxu0 0.0
        %2545 = vmatprep.subr.mxu0 0.0
        %2546 = vmatpush2.msra.mxu0 0.0
        %2547 = vmatprep.subr.mxu0 0.0
        %2548 = vmatpush2.msra.mxu0 0.0
        %2549 = vmatprep.subr.mxu0 0.0
        %2550 = vmatpush2.msra.mxu0 0.0
        %2551 = vmatprep.subr.mxu0 0.0
        %2552 = vmatpush2.msra.mxu0 0.0
        %2553 = vmatprep.subr.mxu0 0.0
        %2554 = vmatpush2.msra.mxu0 0.0
        %2555 = vmatprep.subr.mxu0 0.0
        %2556 = vmatpush2.msra.mxu0 0.0
        %2557 = vmatprep.subr.mxu0 0.0
        %2558 = vmatpush2.msra.mxu0 0.0
        %2559 = vmatprep.subr.mxu0 0.0
        %2560 = vmatpush2.msra.mxu0 0.0
        %2561 = vmatprep.subr.mxu0 0.0
        %2562 = vmatpush2.msra.mxu0 0.0
        %2563 = vmatprep.mubr.f32.mxu0 0.0
        %2564 = vmatmul.mubr.f32.gmra.mxu0 %v2497
        %v2565 = vpop.f32.mrf.mxu0
        %v2566 = vadd.f32 0.0, %v2565
        %v2567 = vpop.f32.mrf.mxu0
        %2568 = vdwg.mxu0
        %v2569 = vadd.f32 %v2083, %v2566
        %v2570 = vld [vmem:[%s10] sm:$0x1]
        %v2572 = vlaneseq
        %v2573 = vshrl.u32 %v2572, 7
        %v2574 = vsub.s32 0, %v2573
        %v2575 = vrot.slane %v2570, %v2574
        %v2577 = vadd.f32 %v2569, %v2575
        %v2578 = vadd.f32 %v2577, %v599
        %v2579 = vld [vmem:[%s11] sm:$0x1]
        %v2580 = vld [vmem:[%s12] sm:$0x1]
        %v2581 = vsel %vm602, %v2578, 0.0
        %2582 = vadd.xlane.f32.xlu0 %v2581
        %v2583 = vpop.xlane.xlu0 %2582
        %v2584 = vmul.f32 %v2583, %v606
        %v2585 = vsub.f32 %v2578, %v2584
        %v2586 = vmul.f32 %v2585, %v2585
        %v2587 = vsel %vm602, %v2586, 0.0
        %2588 = vadd.xlane.f32.xlu0 %v2587
        %v2589 = vpop.xlane.xlu0 %2588
        %v2590 = vmul.f32 %v2589, %v606
        %v2591 = vadd.f32 %v2590, 1e-05
        %v2592 = vrsqrt.pop %v2591
        %v2593 = vmul.f32 %v2585, %v2592
        %v2595 = vlaneseq
        %v2596 = vshrl.u32 %v2595, 7
        %v2597 = vsub.s32 0, %v2596
        %v2598 = vrot.slane %v2579, %v2597
        %v2600 = vmul.f32 %v2593, %v2598
        %v2602 = vlaneseq
        %v2603 = vshrl.u32 %v2602, 7
        %v2604 = vsub.s32 0, %v2603
        %v2605 = vrot.slane %v2580, %v2604
        %v2607 = vadd.f32 %v2600, %v2605
        %v2608 = vld [vmem:[%s13] sm:$0xff]
        %v2609 = vld [vmem:[%s13 + $0x8] sm:$0xff]
        %v2610 = vld [vmem:[%s13 + $0x10] sm:$0xff]
        %v2611 = vld [vmem:[%s13 + $0x18] sm:$0xff]
        %v2612 = vld [vmem:[%s14] sm:$0x1]
        %v2614 = vlaneseq
        %v2615 = vshrl.u32 %v2614, 7
        %v2616 = vsub.s32 0, %v2615
        %v2617 = vrot.slane %v2612, %v2616
        %v2620 = vsel %vm602, %v2607, 0
        %2622 = vmatprep.subr.mxu0 0.0
        %2623 = vmatpush1.msra.mxu0 0.0
        %2624 = vmatprep.subr.mxu0 0.0
        %2625 = vmatpush1.msra.mxu0 0.0
        %2626 = vmatprep.subr.mxu0 0.0
        %2627 = vmatpush1.msra.mxu0 0.0
        %2628 = vmatprep.subr.mxu0 0.0
        %2629 = vmatpush1.msra.mxu0 0.0
        %2630 = vmatprep.subr.mxu0 0.0
        %2631 = vmatpush1.msra.mxu0 0.0
        %2632 = vmatprep.subr.mxu0 0.0
        %2633 = vmatpush1.msra.mxu0 0.0
        %2634 = vmatprep.subr.mxu0 0.0
        %2635 = vmatpush1.msra.mxu0 0.0
        %2636 = vmatprep.subr.mxu0 0.0
        %2637 = vmatpush1.msra.mxu0 0.0
        %2638 = vmatprep.subr.mxu0 0.0
        %2639 = vmatpush1.msra.mxu0 0.0
        %2640 = vmatprep.subr.mxu0 0.0
        %2641 = vmatpush1.msra.mxu0 0.0
        %2642 = vmatprep.subr.mxu0 0.0
        %2643 = vmatpush1.msra.mxu0 0.0
        %2644 = vmatprep.subr.mxu0 0.0
        %2645 = vmatpush1.msra.mxu0 0.0
        %2646 = vmatprep.subr.mxu0 0.0
        %2647 = vmatpush1.msra.mxu0 %v2611
        %2648 = vmatprep.subr.mxu0 0.0
        %2649 = vmatpush1.msra.mxu0 %v2610
        %2650 = vmatprep.subr.mxu0 0.0
        %2651 = vmatpush1.msra.mxu0 %v2609
        %2652 = vmatprep.subr.mxu0 0.0
        %2653 = vmatpush1.msra.mxu0 %v2608
        %2654 = vmatprep.subr.mxu0 0.0
        %2655 = vmatpush2.msra.mxu0 0.0
        %2656 = vmatprep.subr.mxu0 0.0
        %2657 = vmatpush2.msra.mxu0 0.0
        %2658 = vmatprep.subr.mxu0 0.0
        %2659 = vmatpush2.msra.mxu0 0.0
        %2660 = vmatprep.subr.mxu0 0.0
        %2661 = vmatpush2.msra.mxu0 0.0
        %2662 = vmatprep.subr.mxu0 0.0
        %2663 = vmatpush2.msra.mxu0 0.0
        %2664 = vmatprep.subr.mxu0 0.0
        %2665 = vmatpush2.msra.mxu0 0.0
        %2666 = vmatprep.subr.mxu0 0.0
        %2667 = vmatpush2.msra.mxu0 0.0
        %2668 = vmatprep.subr.mxu0 0.0
        %2669 = vmatpush2.msra.mxu0 0.0
        %2670 = vmatprep.subr.mxu0 0.0
        %2671 = vmatpush2.msra.mxu0 0.0
        %2672 = vmatprep.subr.mxu0 0.0
        %2673 = vmatpush2.msra.mxu0 0.0
        %2674 = vmatprep.subr.mxu0 0.0
        %2675 = vmatpush2.msra.mxu0 0.0
        %2676 = vmatprep.subr.mxu0 0.0
        %2677 = vmatpush2.msra.mxu0 0.0
        %2678 = vmatprep.subr.mxu0 0.0
        %2679 = vmatpush2.msra.mxu0 0.0
        %2680 = vmatprep.subr.mxu0 0.0
        %2681 = vmatpush2.msra.mxu0 0.0
        %2682 = vmatprep.subr.mxu0 0.0
        %2683 = vmatpush2.msra.mxu0 0.0
        %2684 = vmatprep.subr.mxu0 0.0
        %2685 = vmatpush2.msra.mxu0 0.0
        %2686 = vmatprep.mubr.f32.mxu0 0.0
        %2687 = vmatmul.mubr.f32.gmra.mxu0 %v2620
        %v2688 = vpop.f32.mrf.mxu0
        %v2689 = vadd.f32 %v2617, %v2688
        %v2690 = vpop.f32.mrf.mxu0
        %2691 = vdwg.mxu0
        %v2692 = vmul.f32 %v2689, 0.5
        %v2693 = vmul.f32 %v2689, 0.70710677
        %vm2694 = vcmp.ge.f32.partialorder %v2693, 0.0
        %v2695 = vsel %vm2694, 1.0, -1.0
        %v2696 = vand.u32 2147483647, %v2693
        %v2697 = vmul.f32 %v2696, 0.3275911
        %v2698 = vadd.f32 %v2697, 1.0
        %v2699 = vrcp.pop %v2698
        %v2700 = vmul.f32 1.0, %v2699
        %v2701 = vmul.f32 %v2700, 1.0614054
        %v2702 = vadd.f32 %v2701, -1.4531521
        %v2703 = vmul.f32 %v2702, %v2700
        %v2704 = vadd.f32 %v2703, 1.4214138
        %v2705 = vmul.f32 %v2704, %v2700
        %v2706 = vadd.f32 %v2705, -0.28449672
        %v2707 = vmul.f32 %v2706, %v2700
        %v2708 = vadd.f32 %v2707, 0.2548296
        %v2709 = vmul.f32 %v2708, %v2700
        %v2710 = vsub.f32 0.0, %v2696
        %v2711 = vmul.f32 %v2710, %v2696
        %v2712 = vmul.f32 %v2711, 1.442695
        %v2713 = vpow.pop %v2712
        %v2714 = vmul.f32 %v2709, %v2713
        %v2715 = vsub.f32 1.0, %v2714
        %v2716 = vmul.f32 %v2695, %v2715
        %v2717 = vadd.f32 %v2716, 1.0
        %v2718 = vmul.f32 %v2692, %v2717
        %v2719 = vld [vmem:[%s15] sm:$0xff]
        %v2720 = vld [vmem:[%s15 + $0x8] sm:$0xff]
        %v2721 = vld [vmem:[%s15 + $0x10] sm:$0xff]
        %v2722 = vld [vmem:[%s15 + $0x18] sm:$0xff]
        %v2723 = vld [vmem:[%s15 + $0x20] sm:$0xff]
        %v2724 = vld [vmem:[%s15 + $0x28] sm:$0xff]
        %v2725 = vld [vmem:[%s15 + $0x30] sm:$0xff]
        %v2726 = vld [vmem:[%s15 + $0x38] sm:$0xff]
        %v2727 = vld [vmem:[%s15 + $0x40] sm:$0xff]
        %v2728 = vld [vmem:[%s15 + $0x48] sm:$0xff]
        %v2729 = vld [vmem:[%s15 + $0x50] sm:$0xff]
        %v2730 = vld [vmem:[%s15 + $0x58] sm:$0xff]
        %v2731 = vld [vmem:[%s15 + $0x60] sm:$0xff]
        %v2732 = vld [vmem:[%s15 + $0x68] sm:$0xff]
        %v2733 = vld [vmem:[%s15 + $0x70] sm:$0xff]
        %v2734 = vld [vmem:[%s15 + $0x78] sm:$0xff]
        %v2735 = vld [vmem:[%s16] sm:$0x1]
        %v2737 = vlaneseq
        %v2738 = vshrl.u32 %v2737, 7
        %v2739 = vsub.s32 0, %v2738
        %v2740 = vrot.slane %v2735, %v2739
        %2742 = vmatprep.subr.mxu0 0.0
        %2743 = vmatpush1.msra.mxu0 %v2734
        %2744 = vmatprep.subr.mxu0 0.0
        %2745 = vmatpush1.msra.mxu0 %v2733
        %2746 = vmatprep.subr.mxu0 0.0
        %2747 = vmatpush1.msra.mxu0 %v2732
        %2748 = vmatprep.subr.mxu0 0.0
        %2749 = vmatpush1.msra.mxu0 %v2731
        %2750 = vmatprep.subr.mxu0 0.0
        %2751 = vmatpush1.msra.mxu0 %v2730
        %2752 = vmatprep.subr.mxu0 0.0
        %2753 = vmatpush1.msra.mxu0 %v2729
        %2754 = vmatprep.subr.mxu0 0.0
        %2755 = vmatpush1.msra.mxu0 %v2728
        %2756 = vmatprep.subr.mxu0 0.0
        %2757 = vmatpush1.msra.mxu0 %v2727
        %2758 = vmatprep.subr.mxu0 0.0
        %2759 = vmatpush1.msra.mxu0 %v2726
        %2760 = vmatprep.subr.mxu0 0.0
        %2761 = vmatpush1.msra.mxu0 %v2725
        %2762 = vmatprep.subr.mxu0 0.0
        %2763 = vmatpush1.msra.mxu0 %v2724
        %2764 = vmatprep.subr.mxu0 0.0
        %2765 = vmatpush1.msra.mxu0 %v2723
        %2766 = vmatprep.subr.mxu0 0.0
        %2767 = vmatpush1.msra.mxu0 %v2722
        %2768 = vmatprep.subr.mxu0 0.0
        %2769 = vmatpush1.msra.mxu0 %v2721
        %2770 = vmatprep.subr.mxu0 0.0
        %2771 = vmatpush1.msra.mxu0 %v2720
        %2772 = vmatprep.subr.mxu0 0.0
        %2773 = vmatpush1.msra.mxu0 %v2719
        %2774 = vmatprep.subr.mxu0 0.0
        %2775 = vmatpush2.msra.mxu0 0.0
        %2776 = vmatprep.subr.mxu0 0.0
        %2777 = vmatpush2.msra.mxu0 0.0
        %2778 = vmatprep.subr.mxu0 0.0
        %2779 = vmatpush2.msra.mxu0 0.0
        %2780 = vmatprep.subr.mxu0 0.0
        %2781 = vmatpush2.msra.mxu0 0.0
        %2782 = vmatprep.subr.mxu0 0.0
        %2783 = vmatpush2.msra.mxu0 0.0
        %2784 = vmatprep.subr.mxu0 0.0
        %2785 = vmatpush2.msra.mxu0 0.0
        %2786 = vmatprep.subr.mxu0 0.0
        %2787 = vmatpush2.msra.mxu0 0.0
        %2788 = vmatprep.subr.mxu0 0.0
        %2789 = vmatpush2.msra.mxu0 0.0
        %2790 = vmatprep.subr.mxu0 0.0
        %2791 = vmatpush2.msra.mxu0 0.0
        %2792 = vmatprep.subr.mxu0 0.0
        %2793 = vmatpush2.msra.mxu0 0.0
        %2794 = vmatprep.subr.mxu0 0.0
        %2795 = vmatpush2.msra.mxu0 0.0
        %2796 = vmatprep.subr.mxu0 0.0
        %2797 = vmatpush2.msra.mxu0 0.0
        %2798 = vmatprep.subr.mxu0 0.0
        %2799 = vmatpush2.msra.mxu0 0.0
        %2800 = vmatprep.subr.mxu0 0.0
        %2801 = vmatpush2.msra.mxu0 0.0
        %2802 = vmatprep.subr.mxu0 0.0
        %2803 = vmatpush2.msra.mxu0 0.0
        %2804 = vmatprep.subr.mxu0 0.0
        %2805 = vmatpush2.msra.mxu0 0.0
        %2806 = vmatprep.mubr.f32.mxu0 0.0
        %2807 = vmatmul.mubr.f32.gmra.mxu0 %v2718
        %v2808 = vpop.f32.mrf.mxu0
        %v2809 = vadd.f32 %v2740, %v2808
        %v2810 = vpop.f32.mrf.mxu0
        %2811 = vdwg.mxu0
        %v2812 = vadd.f32 %v2809, %v2578
        %s2813 = scalar_lea.vmem %s1, 1
        %v2814 = vld [vmem:[%s2813] sm:$0x1]
        %s2815 = scalar_lea.vmem %s2, 1
        %v2816 = vld [vmem:[%s2815] sm:$0x1]
        %v2817 = vsel %vm602, %v2812, 0.0
        %2818 = vadd.xlane.f32.xlu0 %v2817
        %v2819 = vpop.xlane.xlu0 %2818
        %v2820 = vmul.f32 %v2819, %v606
        %v2821 = vsub.f32 %v2812, %v2820
        %v2822 = vmul.f32 %v2821, %v2821
        %v2823 = vsel %vm602, %v2822, 0.0
        %2824 = vadd.xlane.f32.xlu0 %v2823
        %v2825 = vpop.xlane.xlu0 %2824
        %v2826 = vmul.f32 %v2825, %v606
        %v2827 = vadd.f32 %v2826, 1e-05
        %v2828 = vrsqrt.pop %v2827
        %v2829 = vmul.f32 %v2821, %v2828
        %v2831 = vlaneseq
        %v2832 = vshrl.u32 %v2831, 7
        %v2833 = vsub.s32 0, %v2832
        %v2834 = vrot.slane %v2814, %v2833
        %v2836 = vmul.f32 %v2829, %v2834
        %v2838 = vlaneseq
        %v2839 = vshrl.u32 %v2838, 7
        %v2840 = vsub.s32 0, %v2839
        %v2841 = vrot.slane %v2816, %v2840
        %v2843 = vadd.f32 %v2836, %v2841
        %s2844 = scalar_lea.vmem %s3, 128
        %v2845 = vld [vmem:[%s2844] sm:$0xff]
        %v2846 = vld [vmem:[%s2844 + $0x8] sm:$0xff]
        %v2847 = vld [vmem:[%s2844 + $0x10] sm:$0xff]
        %v2848 = vld [vmem:[%s2844 + $0x18] sm:$0xff]
        %s2849 = scalar_lea.vmem %s6, 4
        %v2850 = vld [vmem:[%s2849] sm:$0x1]
        %v2852 = vlaneseq
        %v2853 = vshrl.u32 %v2852, 7
        %v2854 = vsub.s32 0, %v2853
        %v2855 = vrot.slane %v2850, %v2854
        %v2858 = vsel %vm602, %v2843, 0
        %2860 = vmatprep.subr.mxu0 0.0
        %2861 = vmatpush1.msra.mxu0 0.0
        %2862 = vmatprep.subr.mxu0 0.0
        %2863 = vmatpush1.msra.mxu0 0.0
        %2864 = vmatprep.subr.mxu0 0.0
        %2865 = vmatpush1.msra.mxu0 0.0
        %2866 = vmatprep.subr.mxu0 0.0
        %2867 = vmatpush1.msra.mxu0 0.0
        %2868 = vmatprep.subr.mxu0 0.0
        %2869 = vmatpush1.msra.mxu0 0.0
        %2870 = vmatprep.subr.mxu0 0.0
        %2871 = vmatpush1.msra.mxu0 0.0
        %2872 = vmatprep.subr.mxu0 0.0
        %2873 = vmatpush1.msra.mxu0 0.0
        %2874 = vmatprep.subr.mxu0 0.0
        %2875 = vmatpush1.msra.mxu0 0.0
        %2876 = vmatprep.subr.mxu0 0.0
        %2877 = vmatpush1.msra.mxu0 0.0
        %2878 = vmatprep.subr.mxu0 0.0
        %2879 = vmatpush1.msra.mxu0 0.0
        %2880 = vmatprep.subr.mxu0 0.0
        %2881 = vmatpush1.msra.mxu0 0.0
        %2882 = vmatprep.subr.mxu0 0.0
        %2883 = vmatpush1.msra.mxu0 0.0
        %2884 = vmatprep.subr.mxu0 0.0
        %2885 = vmatpush1.msra.mxu0 %v2848
        %2886 = vmatprep.subr.mxu0 0.0
        %2887 = vmatpush1.msra.mxu0 %v2847
        %2888 = vmatprep.subr.mxu0 0.0
        %2889 = vmatpush1.msra.mxu0 %v2846
        %2890 = vmatprep.subr.mxu0 0.0
        %2891 = vmatpush1.msra.mxu0 %v2845
        %2892 = vmatprep.subr.mxu0 0.0
        %2893 = vmatpush2.msra.mxu0 0.0
        %2894 = vmatprep.subr.mxu0 0.0
        %2895 = vmatpush2.msra.mxu0 0.0
        %2896 = vmatprep.subr.mxu0 0.0
        %2897 = vmatpush2.msra.mxu0 0.0
        %2898 = vmatprep.subr.mxu0 0.0
        %2899 = vmatpush2.msra.mxu0 0.0
        %2900 = vmatprep.subr.mxu0 0.0
        %2901 = vmatpush2.msra.mxu0 0.0
        %2902 = vmatprep.subr.mxu0 0.0
        %2903 = vmatpush2.msra.mxu0 0.0
        %2904 = vmatprep.subr.mxu0 0.0
        %2905 = vmatpush2.msra.mxu0 0.0
        %2906 = vmatprep.subr.mxu0 0.0
        %2907 = vmatpush2.msra.mxu0 0.0
        %2908 = vmatprep.subr.mxu0 0.0
        %2909 = vmatpush2.msra.mxu0 0.0
        %2910 = vmatprep.subr.mxu0 0.0
        %2911 = vmatpush2.msra.mxu0 0.0
        %2912 = vmatprep.subr.mxu0 0.0
        %2913 = vmatpush2.msra.mxu0 0.0
        %2914 = vmatprep.subr.mxu0 0.0
        %2915 = vmatpush2.msra.mxu0 0.0
        %2916 = vmatprep.subr.mxu0 0.0
        %2917 = vmatpush2.msra.mxu0 0.0
        %2918 = vmatprep.subr.mxu0 0.0
        %2919 = vmatpush2.msra.mxu0 0.0
        %2920 = vmatprep.subr.mxu0 0.0
        %2921 = vmatpush2.msra.mxu0 0.0
        %2922 = vmatprep.subr.mxu0 0.0
        %2923 = vmatpush2.msra.mxu0 0.0
        %2924 = vmatprep.mubr.f32.mxu0 0.0
        %2925 = vmatmul.mubr.f32.gmra.mxu0 %v2858
        %v2926 = vpop.f32.mrf.mxu0
        %v2927 = vadd.f32 %v2855, %v2926
        %v2928 = vpop.f32.mrf.mxu0
        %2929 = vdwg.mxu0
        %s2930 = scalar_lea.vmem %s4, 128
        %v2931 = vld [vmem:[%s2930] sm:$0xff]
        %v2932 = vld [vmem:[%s2930 + $0x8] sm:$0xff]
        %v2933 = vld [vmem:[%s2930 + $0x10] sm:$0xff]
        %v2934 = vld [vmem:[%s2930 + $0x18] sm:$0xff]
        %s2935 = scalar_lea.vmem %s7, 4
        %v2936 = vld [vmem:[%s2935] sm:$0x1]
        %v2938 = vlaneseq
        %v2939 = vshrl.u32 %v2938, 7
        %v2940 = vsub.s32 0, %v2939
        %v2941 = vrot.slane %v2936, %v2940
        %2943 = vmatprep.subr.mxu0 0.0
        %2944 = vmatpush1.msra.mxu0 0.0
        %2945 = vmatprep.subr.mxu0 0.0
        %2946 = vmatpush1.msra.mxu0 0.0
        %2947 = vmatprep.subr.mxu0 0.0
        %2948 = vmatpush1.msra.mxu0 0.0
        %2949 = vmatprep.subr.mxu0 0.0
        %2950 = vmatpush1.msra.mxu0 0.0
        %2951 = vmatprep.subr.mxu0 0.0
        %2952 = vmatpush1.msra.mxu0 0.0
        %2953 = vmatprep.subr.mxu0 0.0
        %2954 = vmatpush1.msra.mxu0 0.0
        %2955 = vmatprep.subr.mxu0 0.0
        %2956 = vmatpush1.msra.mxu0 0.0
        %2957 = vmatprep.subr.mxu0 0.0
        %2958 = vmatpush1.msra.mxu0 0.0
        %2959 = vmatprep.subr.mxu0 0.0
        %2960 = vmatpush1.msra.mxu0 0.0
        %2961 = vmatprep.subr.mxu0 0.0
        %2962 = vmatpush1.msra.mxu0 0.0
        %2963 = vmatprep.subr.mxu0 0.0
        %2964 = vmatpush1.msra.mxu0 0.0
        %2965 = vmatprep.subr.mxu0 0.0
        %2966 = vmatpush1.msra.mxu0 0.0
        %2967 = vmatprep.subr.mxu0 0.0
        %2968 = vmatpush1.msra.mxu0 %v2934
        %2969 = vmatprep.subr.mxu0 0.0
        %2970 = vmatpush1.msra.mxu0 %v2933
        %2971 = vmatprep.subr.mxu0 0.0
        %2972 = vmatpush1.msra.mxu0 %v2932
        %2973 = vmatprep.subr.mxu0 0.0
        %2974 = vmatpush1.msra.mxu0 %v2931
        %2975 = vmatprep.subr.mxu0 0.0
        %2976 = vmatpush2.msra.mxu0 0.0
        %2977 = vmatprep.subr.mxu0 0.0
        %2978 = vmatpush2.msra.mxu0 0.0
        %2979 = vmatprep.subr.mxu0 0.0
        %2980 = vmatpush2.msra.mxu0 0.0
        %2981 = vmatprep.subr.mxu0 0.0
        %2982 = vmatpush2.msra.mxu0 0.0
        %2983 = vmatprep.subr.mxu0 0.0
        %2984 = vmatpush2.msra.mxu0 0.0
        %2985 = vmatprep.subr.mxu0 0.0
        %2986 = vmatpush2.msra.mxu0 0.0
        %2987 = vmatprep.subr.mxu0 0.0
        %2988 = vmatpush2.msra.mxu0 0.0
        %2989 = vmatprep.subr.mxu0 0.0
        %2990 = vmatpush2.msra.mxu0 0.0
        %2991 = vmatprep.subr.mxu0 0.0
        %2992 = vmatpush2.msra.mxu0 0.0
        %2993 = vmatprep.subr.mxu0 0.0
        %2994 = vmatpush2.msra.mxu0 0.0
        %2995 = vmatprep.subr.mxu0 0.0
        %2996 = vmatpush2.msra.mxu0 0.0
        %2997 = vmatprep.subr.mxu0 0.0
        %2998 = vmatpush2.msra.mxu0 0.0
        %2999 = vmatprep.subr.mxu0 0.0
        %3000 = vmatpush2.msra.mxu0 0.0
        %3001 = vmatprep.subr.mxu0 0.0
        %3002 = vmatpush2.msra.mxu0 0.0
        %3003 = vmatprep.subr.mxu0 0.0
        %3004 = vmatpush2.msra.mxu0 0.0
        %3005 = vmatprep.subr.mxu0 0.0
        %3006 = vmatpush2.msra.mxu0 0.0
        %3007 = vmatprep.mubr.f32.mxu0 0.0
        %3008 = vmatmul.mubr.f32.gmra.mxu0 %v2858
        %v3009 = vpop.f32.mrf.mxu0
        %v3010 = vadd.f32 %v2941, %v3009
        %v3011 = vpop.f32.mrf.mxu0
        %3012 = vdwg.mxu0
        %s3013 = scalar_lea.vmem %s5, 128
        %v3014 = vld [vmem:[%s3013] sm:$0xff]
        %v3015 = vld [vmem:[%s3013 + $0x8] sm:$0xff]
        %v3016 = vld [vmem:[%s3013 + $0x10] sm:$0xff]
        %v3017 = vld [vmem:[%s3013 + $0x18] sm:$0xff]
        %s3018 = scalar_lea.vmem %s8, 4
        %v3019 = vld [vmem:[%s3018] sm:$0x1]
        %v3021 = vlaneseq
        %v3022 = vshrl.u32 %v3021, 7
        %v3023 = vsub.s32 0, %v3022
        %v3024 = vrot.slane %v3019, %v3023
        %3026 = vmatprep.subr.mxu0 0.0
        %3027 = vmatpush1.msra.mxu0 0.0
        %3028 = vmatprep.subr.mxu0 0.0
        %3029 = vmatpush1.msra.mxu0 0.0
        %3030 = vmatprep.subr.mxu0 0.0
        %3031 = vmatpush1.msra.mxu0 0.0
        %3032 = vmatprep.subr.mxu0 0.0
        %3033 = vmatpush1.msra.mxu0 0.0
        %3034 = vmatprep.subr.mxu0 0.0
        %3035 = vmatpush1.msra.mxu0 0.0
        %3036 = vmatprep.subr.mxu0 0.0
        %3037 = vmatpush1.msra.mxu0 0.0
        %3038 = vmatprep.subr.mxu0 0.0
        %3039 = vmatpush1.msra.mxu0 0.0
        %3040 = vmatprep.subr.mxu0 0.0
        %3041 = vmatpush1.msra.mxu0 0.0
        %3042 = vmatprep.subr.mxu0 0.0
        %3043 = vmatpush1.msra.mxu0 0.0
        %3044 = vmatprep.subr.mxu0 0.0
        %3045 = vmatpush1.msra.mxu0 0.0
        %3046 = vmatprep.subr.mxu0 0.0
        %3047 = vmatpush1.msra.mxu0 0.0
        %3048 = vmatprep.subr.mxu0 0.0
        %3049 = vmatpush1.msra.mxu0 0.0
        %3050 = vmatprep.subr.mxu0 0.0
        %3051 = vmatpush1.msra.mxu0 %v3017
        %3052 = vmatprep.subr.mxu0 0.0
        %3053 = vmatpush1.msra.mxu0 %v3016
        %3054 = vmatprep.subr.mxu0 0.0
        %3055 = vmatpush1.msra.mxu0 %v3015
        %3056 = vmatprep.subr.mxu0 0.0
        %3057 = vmatpush1.msra.mxu0 %v3014
        %3058 = vmatprep.subr.mxu0 0.0
        %3059 = vmatpush2.msra.mxu0 0.0
        %3060 = vmatprep.subr.mxu0 0.0
        %3061 = vmatpush2.msra.mxu0 0.0
        %3062 = vmatprep.subr.mxu0 0.0
        %3063 = vmatpush2.msra.mxu0 0.0
        %3064 = vmatprep.subr.mxu0 0.0
        %3065 = vmatpush2.msra.mxu0 0.0
        %3066 = vmatprep.subr.mxu0 0.0
        %3067 = vmatpush2.msra.mxu0 0.0
        %3068 = vmatprep.subr.mxu0 0.0
        %3069 = vmatpush2.msra.mxu0 0.0
        %3070 = vmatprep.subr.mxu0 0.0
        %3071 = vmatpush2.msra.mxu0 0.0
        %3072 = vmatprep.subr.mxu0 0.0
        %3073 = vmatpush2.msra.mxu0 0.0
        %3074 = vmatprep.subr.mxu0 0.0
        %3075 = vmatpush2.msra.mxu0 0.0
        %3076 = vmatprep.subr.mxu0 0.0
        %3077 = vmatpush2.msra.mxu0 0.0
        %3078 = vmatprep.subr.mxu0 0.0
        %3079 = vmatpush2.msra.mxu0 0.0
        %3080 = vmatprep.subr.mxu0 0.0
        %3081 = vmatpush2.msra.mxu0 0.0
        %3082 = vmatprep.subr.mxu0 0.0
        %3083 = vmatpush2.msra.mxu0 0.0
        %3084 = vmatprep.subr.mxu0 0.0
        %3085 = vmatpush2.msra.mxu0 0.0
        %3086 = vmatprep.subr.mxu0 0.0
        %3087 = vmatpush2.msra.mxu0 0.0
        %3088 = vmatprep.subr.mxu0 0.0
        %3089 = vmatpush2.msra.mxu0 0.0
        %3090 = vmatprep.mubr.f32.mxu0 0.0
        %3091 = vmatmul.mubr.f32.gmra.mxu0 %v2858
        %v3092 = vpop.f32.mrf.mxu0
        %v3093 = vadd.f32 %v3024, %v3092
        %v3094 = vpop.f32.mrf.mxu0
        %3095 = vdwg.mxu0
        %v3097 = vsel %vm877, %v2927, 0
        %v3100 = vsel %vm877, %v3010, 0
        %3102 = vmatprep.subr.mxu0 0.0
        %3103 = vmatpush1.xpose.msra.mxu0 0.0
        %3104 = vmatprep.subr.mxu0 0.0
        %3105 = vmatpush1.xpose.msra.mxu0 0.0
        %3106 = vmatprep.subr.mxu0 0.0
        %3107 = vmatpush1.xpose.msra.mxu0 0.0
        %3108 = vmatprep.subr.mxu0 0.0
        %3109 = vmatpush1.xpose.msra.mxu0 0.0
        %3110 = vmatprep.subr.mxu0 0.0
        %3111 = vmatpush1.xpose.msra.mxu0 0.0
        %3112 = vmatprep.subr.mxu0 0.0
        %3113 = vmatpush1.xpose.msra.mxu0 0.0
        %3114 = vmatprep.subr.mxu0 0.0
        %3115 = vmatpush1.xpose.msra.mxu0 0.0
        %3116 = vmatprep.subr.mxu0 0.0
        %3117 = vmatpush1.xpose.msra.mxu0 0.0
        %3118 = vmatprep.subr.mxu0 0.0
        %3119 = vmatpush1.xpose.msra.mxu0 0.0
        %3120 = vmatprep.subr.mxu0 0.0
        %3121 = vmatpush1.xpose.msra.mxu0 0.0
        %3122 = vmatprep.subr.mxu0 0.0
        %3123 = vmatpush1.xpose.msra.mxu0 0.0
        %3124 = vmatprep.subr.mxu0 0.0
        %3125 = vmatpush1.xpose.msra.mxu0 0.0
        %3126 = vmatprep.subr.mxu0 0.0
        %3127 = vmatpush1.xpose.msra.mxu0 0.0
        %3128 = vmatprep.subr.mxu0 0.0
        %3129 = vmatpush1.xpose.msra.mxu0 0.0
        %3130 = vmatprep.subr.mxu0 0.0
        %3131 = vmatpush1.xpose.msra.mxu0 0.0
        %3132 = vmatprep.subr.mxu0 0.0
        %3133 = vmatpush1.xpose.msra.mxu0 %v3100
        %3134 = vmatprep.subr.mxu0 0.0
        %3135 = vmatpush2.xpose.msra.mxu0 0.0
        %3136 = vmatprep.subr.mxu0 0.0
        %3137 = vmatpush2.xpose.msra.mxu0 0.0
        %3138 = vmatprep.subr.mxu0 0.0
        %3139 = vmatpush2.xpose.msra.mxu0 0.0
        %3140 = vmatprep.subr.mxu0 0.0
        %3141 = vmatpush2.xpose.msra.mxu0 0.0
        %3142 = vmatprep.subr.mxu0 0.0
        %3143 = vmatpush2.xpose.msra.mxu0 0.0
        %3144 = vmatprep.subr.mxu0 0.0
        %3145 = vmatpush2.xpose.msra.mxu0 0.0
        %3146 = vmatprep.subr.mxu0 0.0
        %3147 = vmatpush2.xpose.msra.mxu0 0.0
        %3148 = vmatprep.subr.mxu0 0.0
        %3149 = vmatpush2.xpose.msra.mxu0 0.0
        %3150 = vmatprep.subr.mxu0 0.0
        %3151 = vmatpush2.xpose.msra.mxu0 0.0
        %3152 = vmatprep.subr.mxu0 0.0
        %3153 = vmatpush2.xpose.msra.mxu0 0.0
        %3154 = vmatprep.subr.mxu0 0.0
        %3155 = vmatpush2.xpose.msra.mxu0 0.0
        %3156 = vmatprep.subr.mxu0 0.0
        %3157 = vmatpush2.xpose.msra.mxu0 0.0
        %3158 = vmatprep.subr.mxu0 0.0
        %3159 = vmatpush2.xpose.msra.mxu0 0.0
        %3160 = vmatprep.subr.mxu0 0.0
        %3161 = vmatpush2.xpose.msra.mxu0 0.0
        %3162 = vmatprep.subr.mxu0 0.0
        %3163 = vmatpush2.xpose.msra.mxu0 0.0
        %3164 = vmatprep.subr.mxu0 0.0
        %3165 = vmatpush2.xpose.msra.mxu0 0.0
        %3166 = vmatprep.mubr.f32.mxu0 0.0
        %3167 = vmatmul.mubr.f32.gmra.mxu0 %v3097
        %v3168 = vpop.f32.mrf.mxu0
        %v3169 = vadd.f32 0.0, %v3168
        %v3170 = vpop.f32.mrf.mxu0
        %3171 = vdwg.mxu0
        %v3172 = vmul.f32 %v3169, 0.35355338
        %v3173 = vsel %vm877, %v3172, -inf
        %3174 = vmax.xlane.f32.xlu0 %v3173
        %v3175 = vpop.xlane.xlu0 %3174
        %v3176 = vsub.f32 %v3172, %v3175
        %v3177 = vmul.f32 %v3176, 1.442695
        %v3178 = vpow.pop %v3177
        %v3179 = vsel %vm877, %v3178, 0.0
        %3180 = vadd.xlane.f32.xlu0 %v3179
        %v3181 = vpop.xlane.xlu0 %3180
        %v3182 = vrcp.pop %v3181
        %v3183 = vmul.f32 %v3178, %v3182
        %v3185 = vsel %vm877, %v3183, 0
        %3187 = vmatprep.subr.mxu0 0.0
        %3188 = vmatpush1.msra.mxu0 0.0
        %3189 = vmatprep.subr.mxu0 0.0
        %3190 = vmatpush1.msra.mxu0 0.0
        %3191 = vmatprep.subr.mxu0 0.0
        %3192 = vmatpush1.msra.mxu0 0.0
        %3193 = vmatprep.subr.mxu0 0.0
        %3194 = vmatpush1.msra.mxu0 0.0
        %3195 = vmatprep.subr.mxu0 0.0
        %3196 = vmatpush1.msra.mxu0 0.0
        %3197 = vmatprep.subr.mxu0 0.0
        %3198 = vmatpush1.msra.mxu0 0.0
        %3199 = vmatprep.subr.mxu0 0.0
        %3200 = vmatpush1.msra.mxu0 0.0
        %3201 = vmatprep.subr.mxu0 0.0
        %3202 = vmatpush1.msra.mxu0 0.0
        %3203 = vmatprep.subr.mxu0 0.0
        %3204 = vmatpush1.msra.mxu0 0.0
        %3205 = vmatprep.subr.mxu0 0.0
        %3206 = vmatpush1.msra.mxu0 0.0
        %3207 = vmatprep.subr.mxu0 0.0
        %3208 = vmatpush1.msra.mxu0 0.0
        %3209 = vmatprep.subr.mxu0 0.0
        %3210 = vmatpush1.msra.mxu0 0.0
        %3211 = vmatprep.subr.mxu0 0.0
        %3212 = vmatpush1.msra.mxu0 0.0
        %3213 = vmatprep.subr.mxu0 0.0
        %3214 = vmatpush1.msra.mxu0 0.0
        %3215 = vmatprep.subr.mxu0 0.0
        %3216 = vmatpush1.msra.mxu0 0.0
        %3217 = vmatprep.subr.mxu0 0.0
        %3218 = vmatpush1.msra.mxu0 %v3093
        %3219 = vmatprep.subr.mxu0 0.0
        %3220 = vmatpush2.msra.mxu0 0.0
        %3221 = vmatprep.subr.mxu0 0.0
        %3222 = vmatpush2.msra.mxu0 0.0
        %3223 = vmatprep.subr.mxu0 0.0
        %3224 = vmatpush2.msra.mxu0 0.0
        %3225 = vmatprep.subr.mxu0 0.0
        %3226 = vmatpush2.msra.mxu0 0.0
        %3227 = vmatprep.subr.mxu0 0.0
        %3228 = vmatpush2.msra.mxu0 0.0
        %3229 = vmatprep.subr.mxu0 0.0
        %3230 = vmatpush2.msra.mxu0 0.0
        %3231 = vmatprep.subr.mxu0 0.0
        %3232 = vmatpush2.msra.mxu0 0.0
        %3233 = vmatprep.subr.mxu0 0.0
        %3234 = vmatpush2.msra.mxu0 0.0
        %3235 = vmatprep.subr.mxu0 0.0
        %3236 = vmatpush2.msra.mxu0 0.0
        %3237 = vmatprep.subr.mxu0 0.0
        %3238 = vmatpush2.msra.mxu0 0.0
        %3239 = vmatprep.subr.mxu0 0.0
        %3240 = vmatpush2.msra.mxu0 0.0
        %3241 = vmatprep.subr.mxu0 0.0
        %3242 = vmatpush2.msra.mxu0 0.0
        %3243 = vmatprep.subr.mxu0 0.0
        %3244 = vmatpush2.msra.mxu0 0.0
        %3245 = vmatprep.subr.mxu0 0.0
        %3246 = vmatpush2.msra.mxu0 0.0
        %3247 = vmatprep.subr.mxu0 0.0
        %3248 = vmatpush2.msra.mxu0 0.0
        %3249 = vmatprep.subr.mxu0 0.0
        %3250 = vmatpush2.msra.mxu0 0.0
        %3251 = vmatprep.mubr.f32.mxu0 0.0
        %3252 = vmatmul.mubr.f32.gmra.mxu0 %v3185
        %v3253 = vpop.f32.mrf.mxu0
        %v3254 = vadd.f32 0.0, %v3253
        %v3255 = vpop.f32.mrf.mxu0
        %3256 = vdwg.mxu0
        %s3257 = scalar_lea.vmem %s9, 32
        %v3258 = vld [vmem:[%s3257] sm:$0xff]
        %s3259 = scalar_lea.vmem %s3, 160
        %v3260 = vld [vmem:[%s3259] sm:$0xff]
        %v3261 = vld [vmem:[%s3259 + $0x8] sm:$0xff]
        %v3262 = vld [vmem:[%s3259 + $0x10] sm:$0xff]
        %v3263 = vld [vmem:[%s3259 + $0x18] sm:$0xff]
        %s3264 = scalar_lea.vmem %s6, 5
        %v3265 = vld [vmem:[%s3264] sm:$0x1]
        %v3267 = vlaneseq
        %v3268 = vshrl.u32 %v3267, 7
        %v3269 = vsub.s32 0, %v3268
        %v3270 = vrot.slane %v3265, %v3269
        %3272 = vmatprep.subr.mxu0 0.0
        %3273 = vmatpush1.msra.mxu0 0.0
        %3274 = vmatprep.subr.mxu0 0.0
        %3275 = vmatpush1.msra.mxu0 0.0
        %3276 = vmatprep.subr.mxu0 0.0
        %3277 = vmatpush1.msra.mxu0 0.0
        %3278 = vmatprep.subr.mxu0 0.0
        %3279 = vmatpush1.msra.mxu0 0.0
        %3280 = vmatprep.subr.mxu0 0.0
        %3281 = vmatpush1.msra.mxu0 0.0
        %3282 = vmatprep.subr.mxu0 0.0
        %3283 = vmatpush1.msra.mxu0 0.0
        %3284 = vmatprep.subr.mxu0 0.0
        %3285 = vmatpush1.msra.mxu0 0.0
        %3286 = vmatprep.subr.mxu0 0.0
        %3287 = vmatpush1.msra.mxu0 0.0
        %3288 = vmatprep.subr.mxu0 0.0
        %3289 = vmatpush1.msra.mxu0 0.0
        %3290 = vmatprep.subr.mxu0 0.0
        %3291 = vmatpush1.msra.mxu0 0.0
        %3292 = vmatprep.subr.mxu0 0.0
        %3293 = vmatpush1.msra.mxu0 0.0
        %3294 = vmatprep.subr.mxu0 0.0
        %3295 = vmatpush1.msra.mxu0 0.0
        %3296 = vmatprep.subr.mxu0 0.0
        %3297 = vmatpush1.msra.mxu0 %v3263
        %3298 = vmatprep.subr.mxu0 0.0
        %3299 = vmatpush1.msra.mxu0 %v3262
        %3300 = vmatprep.subr.mxu0 0.0
        %3301 = vmatpush1.msra.mxu0 %v3261
        %3302 = vmatprep.subr.mxu0 0.0
        %3303 = vmatpush1.msra.mxu0 %v3260
        %3304 = vmatprep.subr.mxu0 0.0
        %3305 = vmatpush2.msra.mxu0 0.0
        %3306 = vmatprep.subr.mxu0 0.0
        %3307 = vmatpush2.msra.mxu0 0.0
        %3308 = vmatprep.subr.mxu0 0.0
        %3309 = vmatpush2.msra.mxu0 0.0
        %3310 = vmatprep.subr.mxu0 0.0
        %3311 = vmatpush2.msra.mxu0 0.0
        %3312 = vmatprep.subr.mxu0 0.0
        %3313 = vmatpush2.msra.mxu0 0.0
        %3314 = vmatprep.subr.mxu0 0.0
        %3315 = vmatpush2.msra.mxu0 0.0
        %3316 = vmatprep.subr.mxu0 0.0
        %3317 = vmatpush2.msra.mxu0 0.0
        %3318 = vmatprep.subr.mxu0 0.0
        %3319 = vmatpush2.msra.mxu0 0.0
        %3320 = vmatprep.subr.mxu0 0.0
        %3321 = vmatpush2.msra.mxu0 0.0
        %3322 = vmatprep.subr.mxu0 0.0
        %3323 = vmatpush2.msra.mxu0 0.0
        %3324 = vmatprep.subr.mxu0 0.0
        %3325 = vmatpush2.msra.mxu0 0.0
        %3326 = vmatprep.subr.mxu0 0.0
        %3327 = vmatpush2.msra.mxu0 0.0
        %3328 = vmatprep.subr.mxu0 0.0
        %3329 = vmatpush2.msra.mxu0 0.0
        %3330 = vmatprep.subr.mxu0 0.0
        %3331 = vmatpush2.msra.mxu0 0.0
        %3332 = vmatprep.subr.mxu0 0.0
        %3333 = vmatpush2.msra.mxu0 0.0
        %3334 = vmatprep.subr.mxu0 0.0
        %3335 = vmatpush2.msra.mxu0 0.0
        %3336 = vmatprep.mubr.f32.mxu0 0.0
        %3337 = vmatmul.mubr.f32.gmra.mxu0 %v2858
        %v3338 = vpop.f32.mrf.mxu0
        %v3339 = vadd.f32 %v3270, %v3338
        %v3340 = vpop.f32.mrf.mxu0
        %3341 = vdwg.mxu0
        %s3342 = scalar_lea.vmem %s4, 160
        %v3343 = vld [vmem:[%s3342] sm:$0xff]
        %v3344 = vld [vmem:[%s3342 + $0x8] sm:$0xff]
        %v3345 = vld [vmem:[%s3342 + $0x10] sm:$0xff]
        %v3346 = vld [vmem:[%s3342 + $0x18] sm:$0xff]
        %s3347 = scalar_lea.vmem %s7, 5
        %v3348 = vld [vmem:[%s3347] sm:$0x1]
        %v3350 = vlaneseq
        %v3351 = vshrl.u32 %v3350, 7
        %v3352 = vsub.s32 0, %v3351
        %v3353 = vrot.slane %v3348, %v3352
        %3355 = vmatprep.subr.mxu0 0.0
        %3356 = vmatpush1.msra.mxu0 0.0
        %3357 = vmatprep.subr.mxu0 0.0
        %3358 = vmatpush1.msra.mxu0 0.0
        %3359 = vmatprep.subr.mxu0 0.0
        %3360 = vmatpush1.msra.mxu0 0.0
        %3361 = vmatprep.subr.mxu0 0.0
        %3362 = vmatpush1.msra.mxu0 0.0
        %3363 = vmatprep.subr.mxu0 0.0
        %3364 = vmatpush1.msra.mxu0 0.0
        %3365 = vmatprep.subr.mxu0 0.0
        %3366 = vmatpush1.msra.mxu0 0.0
        %3367 = vmatprep.subr.mxu0 0.0
        %3368 = vmatpush1.msra.mxu0 0.0
        %3369 = vmatprep.subr.mxu0 0.0
        %3370 = vmatpush1.msra.mxu0 0.0
        %3371 = vmatprep.subr.mxu0 0.0
        %3372 = vmatpush1.msra.mxu0 0.0
        %3373 = vmatprep.subr.mxu0 0.0
        %3374 = vmatpush1.msra.mxu0 0.0
        %3375 = vmatprep.subr.mxu0 0.0
        %3376 = vmatpush1.msra.mxu0 0.0
        %3377 = vmatprep.subr.mxu0 0.0
        %3378 = vmatpush1.msra.mxu0 0.0
        %3379 = vmatprep.subr.mxu0 0.0
        %3380 = vmatpush1.msra.mxu0 %v3346
        %3381 = vmatprep.subr.mxu0 0.0
        %3382 = vmatpush1.msra.mxu0 %v3345
        %3383 = vmatprep.subr.mxu0 0.0
        %3384 = vmatpush1.msra.mxu0 %v3344
        %3385 = vmatprep.subr.mxu0 0.0
        %3386 = vmatpush1.msra.mxu0 %v3343
        %3387 = vmatprep.subr.mxu0 0.0
        %3388 = vmatpush2.msra.mxu0 0.0
        %3389 = vmatprep.subr.mxu0 0.0
        %3390 = vmatpush2.msra.mxu0 0.0
        %3391 = vmatprep.subr.mxu0 0.0
        %3392 = vmatpush2.msra.mxu0 0.0
        %3393 = vmatprep.subr.mxu0 0.0
        %3394 = vmatpush2.msra.mxu0 0.0
        %3395 = vmatprep.subr.mxu0 0.0
        %3396 = vmatpush2.msra.mxu0 0.0
        %3397 = vmatprep.subr.mxu0 0.0
        %3398 = vmatpush2.msra.mxu0 0.0
        %3399 = vmatprep.subr.mxu0 0.0
        %3400 = vmatpush2.msra.mxu0 0.0
        %3401 = vmatprep.subr.mxu0 0.0
        %3402 = vmatpush2.msra.mxu0 0.0
        %3403 = vmatprep.subr.mxu0 0.0
        %3404 = vmatpush2.msra.mxu0 0.0
        %3405 = vmatprep.subr.mxu0 0.0
        %3406 = vmatpush2.msra.mxu0 0.0
        %3407 = vmatprep.subr.mxu0 0.0
        %3408 = vmatpush2.msra.mxu0 0.0
        %3409 = vmatprep.subr.mxu0 0.0
        %3410 = vmatpush2.msra.mxu0 0.0
        %3411 = vmatprep.subr.mxu0 0.0
        %3412 = vmatpush2.msra.mxu0 0.0
        %3413 = vmatprep.subr.mxu0 0.0
        %3414 = vmatpush2.msra.mxu0 0.0
        %3415 = vmatprep.subr.mxu0 0.0
        %3416 = vmatpush2.msra.mxu0 0.0
        %3417 = vmatprep.subr.mxu0 0.0
        %3418 = vmatpush2.msra.mxu0 0.0
        %3419 = vmatprep.mubr.f32.mxu0 0.0
        %3420 = vmatmul.mubr.f32.gmra.mxu0 %v2858
        %v3421 = vpop.f32.mrf.mxu0
        %v3422 = vadd.f32 %v3353, %v3421
        %v3423 = vpop.f32.mrf.mxu0
        %3424 = vdwg.mxu0
        %s3425 = scalar_lea.vmem %s5, 160
        %v3426 = vld [vmem:[%s3425] sm:$0xff]
        %v3427 = vld [vmem:[%s3425 + $0x8] sm:$0xff]
        %v3428 = vld [vmem:[%s3425 + $0x10] sm:$0xff]
        %v3429 = vld [vmem:[%s3425 + $0x18] sm:$0xff]
        %s3430 = scalar_lea.vmem %s8, 5
        %v3431 = vld [vmem:[%s3430] sm:$0x1]
        %v3433 = vlaneseq
        %v3434 = vshrl.u32 %v3433, 7
        %v3435 = vsub.s32 0, %v3434
        %v3436 = vrot.slane %v3431, %v3435
        %3438 = vmatprep.subr.mxu0 0.0
        %3439 = vmatpush1.msra.mxu0 0.0
        %3440 = vmatprep.subr.mxu0 0.0
        %3441 = vmatpush1.msra.mxu0 0.0
        %3442 = vmatprep.subr.mxu0 0.0
        %3443 = vmatpush1.msra.mxu0 0.0
        %3444 = vmatprep.subr.mxu0 0.0
        %3445 = vmatpush1.msra.mxu0 0.0
        %3446 = vmatprep.subr.mxu0 0.0
        %3447 = vmatpush1.msra.mxu0 0.0
        %3448 = vmatprep.subr.mxu0 0.0
        %3449 = vmatpush1.msra.mxu0 0.0
        %3450 = vmatprep.subr.mxu0 0.0
        %3451 = vmatpush1.msra.mxu0 0.0
        %3452 = vmatprep.subr.mxu0 0.0
        %3453 = vmatpush1.msra.mxu0 0.0
        %3454 = vmatprep.subr.mxu0 0.0
        %3455 = vmatpush1.msra.mxu0 0.0
        %3456 = vmatprep.subr.mxu0 0.0
        %3457 = vmatpush1.msra.mxu0 0.0
        %3458 = vmatprep.subr.mxu0 0.0
        %3459 = vmatpush1.msra.mxu0 0.0
        %3460 = vmatprep.subr.mxu0 0.0
        %3461 = vmatpush1.msra.mxu0 0.0
        %3462 = vmatprep.subr.mxu0 0.0
        %3463 = vmatpush1.msra.mxu0 %v3429
        %3464 = vmatprep.subr.mxu0 0.0
        %3465 = vmatpush1.msra.mxu0 %v3428
        %3466 = vmatprep.subr.mxu0 0.0
        %3467 = vmatpush1.msra.mxu0 %v3427
        %3468 = vmatprep.subr.mxu0 0.0
        %3469 = vmatpush1.msra.mxu0 %v3426
        %3470 = vmatprep.subr.mxu0 0.0
        %3471 = vmatpush2.msra.mxu0 0.0
        %3472 = vmatprep.subr.mxu0 0.0
        %3473 = vmatpush2.msra.mxu0 0.0
        %3474 = vmatprep.subr.mxu0 0.0
        %3475 = vmatpush2.msra.mxu0 0.0
        %3476 = vmatprep.subr.mxu0 0.0
        %3477 = vmatpush2.msra.mxu0 0.0
        %3478 = vmatprep.subr.mxu0 0.0
        %3479 = vmatpush2.msra.mxu0 0.0
        %3480 = vmatprep.subr.mxu0 0.0
        %3481 = vmatpush2.msra.mxu0 0.0
        %3482 = vmatprep.subr.mxu0 0.0
        %3483 = vmatpush2.msra.mxu0 0.0
        %3484 = vmatprep.subr.mxu0 0.0
        %3485 = vmatpush2.msra.mxu0 0.0
        %3486 = vmatprep.subr.mxu0 0.0
        %3487 = vmatpush2.msra.mxu0 0.0
        %3488 = vmatprep.subr.mxu0 0.0
        %3489 = vmatpush2.msra.mxu0 0.0
        %3490 = vmatprep.subr.mxu0 0.0
        %3491 = vmatpush2.msra.mxu0 0.0
        %3492 = vmatprep.subr.mxu0 0.0
        %3493 = vmatpush2.msra.mxu0 0.0
        %3494 = vmatprep.subr.mxu0 0.0
        %3495 = vmatpush2.msra.mxu0 0.0
        %3496 = vmatprep.subr.mxu0 0.0
        %3497 = vmatpush2.msra.mxu0 0.0
        %3498 = vmatprep.subr.mxu0 0.0
        %3499 = vmatpush2.msra.mxu0 0.0
        %3500 = vmatprep.subr.mxu0 0.0
        %3501 = vmatpush2.msra.mxu0 0.0
        %3502 = vmatprep.mubr.f32.mxu0 0.0
        %3503 = vmatmul.mubr.f32.gmra.mxu0 %v2858
        %v3504 = vpop.f32.mrf.mxu0
        %v3505 = vadd.f32 %v3436, %v3504
        %v3506 = vpop.f32.mrf.mxu0
        %3507 = vdwg.mxu0
        %v3509 = vsel %vm877, %v3339, 0
        %v3512 = vsel %vm877, %v3422, 0
        %3514 = vmatprep.subr.mxu0 0.0
        %3515 = vmatpush1.xpose.msra.mxu0 0.0
        %3516 = vmatprep.subr.mxu0 0.0
        %3517 = vmatpush1.xpose.msra.mxu0 0.0
        %3518 = vmatprep.subr.mxu0 0.0
        %3519 = vmatpush1.xpose.msra.mxu0 0.0
        %3520 = vmatprep.subr.mxu0 0.0
        %3521 = vmatpush1.xpose.msra.mxu0 0.0
        %3522 = vmatprep.subr.mxu0 0.0
        %3523 = vmatpush1.xpose.msra.mxu0 0.0
        %3524 = vmatprep.subr.mxu0 0.0
        %3525 = vmatpush1.xpose.msra.mxu0 0.0
        %3526 = vmatprep.subr.mxu0 0.0
        %3527 = vmatpush1.xpose.msra.mxu0 0.0
        %3528 = vmatprep.subr.mxu0 0.0
        %3529 = vmatpush1.xpose.msra.mxu0 0.0
        %3530 = vmatprep.subr.mxu0 0.0
        %3531 = vmatpush1.xpose.msra.mxu0 0.0
        %3532 = vmatprep.subr.mxu0 0.0
        %3533 = vmatpush1.xpose.msra.mxu0 0.0
        %3534 = vmatprep.subr.mxu0 0.0
        %3535 = vmatpush1.xpose.msra.mxu0 0.0
        %3536 = vmatprep.subr.mxu0 0.0
        %3537 = vmatpush1.xpose.msra.mxu0 0.0
        %3538 = vmatprep.subr.mxu0 0.0
        %3539 = vmatpush1.xpose.msra.mxu0 0.0
        %3540 = vmatprep.subr.mxu0 0.0
        %3541 = vmatpush1.xpose.msra.mxu0 0.0
        %3542 = vmatprep.subr.mxu0 0.0
        %3543 = vmatpush1.xpose.msra.mxu0 0.0
        %3544 = vmatprep.subr.mxu0 0.0
        %3545 = vmatpush1.xpose.msra.mxu0 %v3512
        %3546 = vmatprep.subr.mxu0 0.0
        %3547 = vmatpush2.xpose.msra.mxu0 0.0
        %3548 = vmatprep.subr.mxu0 0.0
        %3549 = vmatpush2.xpose.msra.mxu0 0.0
        %3550 = vmatprep.subr.mxu0 0.0
        %3551 = vmatpush2.xpose.msra.mxu0 0.0
        %3552 = vmatprep.subr.mxu0 0.0
        %3553 = vmatpush2.xpose.msra.mxu0 0.0
        %3554 = vmatprep.subr.mxu0 0.0
        %3555 = vmatpush2.xpose.msra.mxu0 0.0
        %3556 = vmatprep.subr.mxu0 0.0
        %3557 = vmatpush2.xpose.msra.mxu0 0.0
        %3558 = vmatprep.subr.mxu0 0.0
        %3559 = vmatpush2.xpose.msra.mxu0 0.0
        %3560 = vmatprep.subr.mxu0 0.0
        %3561 = vmatpush2.xpose.msra.mxu0 0.0
        %3562 = vmatprep.subr.mxu0 0.0
        %3563 = vmatpush2.xpose.msra.mxu0 0.0
        %3564 = vmatprep.subr.mxu0 0.0
        %3565 = vmatpush2.xpose.msra.mxu0 0.0
        %3566 = vmatprep.subr.mxu0 0.0
        %3567 = vmatpush2.xpose.msra.mxu0 0.0
        %3568 = vmatprep.subr.mxu0 0.0
        %3569 = vmatpush2.xpose.msra.mxu0 0.0
        %3570 = vmatprep.subr.mxu0 0.0
        %3571 = vmatpush2.xpose.msra.mxu0 0.0
        %3572 = vmatprep.subr.mxu0 0.0
        %3573 = vmatpush2.xpose.msra.mxu0 0.0
        %3574 = vmatprep.subr.mxu0 0.0
        %3575 = vmatpush2.xpose.msra.mxu0 0.0
        %3576 = vmatprep.subr.mxu0 0.0
        %3577 = vmatpush2.xpose.msra.mxu0 0.0
        %3578 = vmatprep.mubr.f32.mxu0 0.0
        %3579 = vmatmul.mubr.f32.gmra.mxu0 %v3509
        %v3580 = vpop.f32.mrf.mxu0
        %v3581 = vadd.f32 0.0, %v3580
        %v3582 = vpop.f32.mrf.mxu0
        %3583 = vdwg.mxu0
        %v3584 = vmul.f32 %v3581, 0.35355338
        %v3585 = vsel %vm877, %v3584, -inf
        %3586 = vmax.xlane.f32.xlu0 %v3585
        %v3587 = vpop.xlane.xlu0 %3586
        %v3588 = vsub.f32 %v3584, %v3587
        %v3589 = vmul.f32 %v3588, 1.442695
        %v3590 = vpow.pop %v3589
        %v3591 = vsel %vm877, %v3590, 0.0
        %3592 = vadd.xlane.f32.xlu0 %v3591
        %v3593 = vpop.xlane.xlu0 %3592
        %v3594 = vrcp.pop %v3593
        %v3595 = vmul.f32 %v3590, %v3594
        %v3597 = vsel %vm877, %v3595, 0
        %3599 = vmatprep.subr.mxu0 0.0
        %3600 = vmatpush1.msra.mxu0 0.0
        %3601 = vmatprep.subr.mxu0 0.0
        %3602 = vmatpush1.msra.mxu0 0.0
        %3603 = vmatprep.subr.mxu0 0.0
        %3604 = vmatpush1.msra.mxu0 0.0
        %3605 = vmatprep.subr.mxu0 0.0
        %3606 = vmatpush1.msra.mxu0 0.0
        %3607 = vmatprep.subr.mxu0 0.0
        %3608 = vmatpush1.msra.mxu0 0.0
        %3609 = vmatprep.subr.mxu0 0.0
        %3610 = vmatpush1.msra.mxu0 0.0
        %3611 = vmatprep.subr.mxu0 0.0
        %3612 = vmatpush1.msra.mxu0 0.0
        %3613 = vmatprep.subr.mxu0 0.0
        %3614 = vmatpush1.msra.mxu0 0.0
        %3615 = vmatprep.subr.mxu0 0.0
        %3616 = vmatpush1.msra.mxu0 0.0
        %3617 = vmatprep.subr.mxu0 0.0
        %3618 = vmatpush1.msra.mxu0 0.0
        %3619 = vmatprep.subr.mxu0 0.0
        %3620 = vmatpush1.msra.mxu0 0.0
        %3621 = vmatprep.subr.mxu0 0.0
        %3622 = vmatpush1.msra.mxu0 0.0
        %3623 = vmatprep.subr.mxu0 0.0
        %3624 = vmatpush1.msra.mxu0 0.0
        %3625 = vmatprep.subr.mxu0 0.0
        %3626 = vmatpush1.msra.mxu0 0.0
        %3627 = vmatprep.subr.mxu0 0.0
        %3628 = vmatpush1.msra.mxu0 0.0
        %3629 = vmatprep.subr.mxu0 0.0
        %3630 = vmatpush1.msra.mxu0 %v3505
        %3631 = vmatprep.subr.mxu0 0.0
        %3632 = vmatpush2.msra.mxu0 0.0
        %3633 = vmatprep.subr.mxu0 0.0
        %3634 = vmatpush2.msra.mxu0 0.0
        %3635 = vmatprep.subr.mxu0 0.0
        %3636 = vmatpush2.msra.mxu0 0.0
        %3637 = vmatprep.subr.mxu0 0.0
        %3638 = vmatpush2.msra.mxu0 0.0
        %3639 = vmatprep.subr.mxu0 0.0
        %3640 = vmatpush2.msra.mxu0 0.0
        %3641 = vmatprep.subr.mxu0 0.0
        %3642 = vmatpush2.msra.mxu0 0.0
        %3643 = vmatprep.subr.mxu0 0.0
        %3644 = vmatpush2.msra.mxu0 0.0
        %3645 = vmatprep.subr.mxu0 0.0
        %3646 = vmatpush2.msra.mxu0 0.0
        %3647 = vmatprep.subr.mxu0 0.0
        %3648 = vmatpush2.msra.mxu0 0.0
        %3649 = vmatprep.subr.mxu0 0.0
        %3650 = vmatpush2.msra.mxu0 0.0
        %3651 = vmatprep.subr.mxu0 0.0
        %3652 = vmatpush2.msra.mxu0 0.0
        %3653 = vmatprep.subr.mxu0 0.0
        %3654 = vmatpush2.msra.mxu0 0.0
        %3655 = vmatprep.subr.mxu0 0.0
        %3656 = vmatpush2.msra.mxu0 0.0
        %3657 = vmatprep.subr.mxu0 0.0
        %3658 = vmatpush2.msra.mxu0 0.0
        %3659 = vmatprep.subr.mxu0 0.0
        %3660 = vmatpush2.msra.mxu0 0.0
        %3661 = vmatprep.subr.mxu0 0.0
        %3662 = vmatpush2.msra.mxu0 0.0
        %3663 = vmatprep.mubr.f32.mxu0 0.0
        %3664 = vmatmul.mubr.f32.gmra.mxu0 %v3597
        %v3665 = vpop.f32.mrf.mxu0
        %v3666 = vadd.f32 0.0, %v3665
        %v3667 = vpop.f32.mrf.mxu0
        %3668 = vdwg.mxu0
        %s3669 = scalar_lea.vmem %s9, 40
        %v3670 = vld [vmem:[%s3669] sm:$0xff]
        %v3672 = vsel %vm877, %v3666, 0
        %3674 = vmatprep.subr.mxu0 0.0
        %3675 = vmatpush1.msra.mxu0 0.0
        %3676 = vmatprep.subr.mxu0 0.0
        %3677 = vmatpush1.msra.mxu0 0.0
        %3678 = vmatprep.subr.mxu0 0.0
        %3679 = vmatpush1.msra.mxu0 0.0
        %3680 = vmatprep.subr.mxu0 0.0
        %3681 = vmatpush1.msra.mxu0 0.0
        %3682 = vmatprep.subr.mxu0 0.0
        %3683 = vmatpush1.msra.mxu0 0.0
        %3684 = vmatprep.subr.mxu0 0.0
        %3685 = vmatpush1.msra.mxu0 0.0
        %3686 = vmatprep.subr.mxu0 0.0
        %3687 = vmatpush1.msra.mxu0 0.0
        %3688 = vmatprep.subr.mxu0 0.0
        %3689 = vmatpush1.msra.mxu0 0.0
        %3690 = vmatprep.subr.mxu0 0.0
        %3691 = vmatpush1.msra.mxu0 0.0
        %3692 = vmatprep.subr.mxu0 0.0
        %3693 = vmatpush1.msra.mxu0 0.0
        %3694 = vmatprep.subr.mxu0 0.0
        %3695 = vmatpush1.msra.mxu0 0.0
        %3696 = vmatprep.subr.mxu0 0.0
        %3697 = vmatpush1.msra.mxu0 0.0
        %3698 = vmatprep.subr.mxu0 0.0
        %3699 = vmatpush1.msra.mxu0 0.0
        %3700 = vmatprep.subr.mxu0 0.0
        %3701 = vmatpush1.msra.mxu0 0.0
        %3702 = vmatprep.subr.mxu0 0.0
        %3703 = vmatpush1.msra.mxu0 0.0
        %3704 = vmatprep.subr.mxu0 0.0
        %3705 = vmatpush1.msra.mxu0 %v3670
        %3706 = vmatprep.subr.mxu0 0.0
        %3707 = vmatpush2.msra.mxu0 0.0
        %3708 = vmatprep.subr.mxu0 0.0
        %3709 = vmatpush2.msra.mxu0 0.0
        %3710 = vmatprep.subr.mxu0 0.0
        %3711 = vmatpush2.msra.mxu0 0.0
        %3712 = vmatprep.subr.mxu0 0.0
        %3713 = vmatpush2.msra.mxu0 0.0
        %3714 = vmatprep.subr.mxu0 0.0
        %3715 = vmatpush2.msra.mxu0 0.0
        %3716 = vmatprep.subr.mxu0 0.0
        %3717 = vmatpush2.msra.mxu0 0.0
        %3718 = vmatprep.subr.mxu0 0.0
        %3719 = vmatpush2.msra.mxu0 0.0
        %3720 = vmatprep.subr.mxu0 0.0
        %3721 = vmatpush2.msra.mxu0 0.0
        %3722 = vmatprep.subr.mxu0 0.0
        %3723 = vmatpush2.msra.mxu0 0.0
        %3724 = vmatprep.subr.mxu0 0.0
        %3725 = vmatpush2.msra.mxu0 0.0
        %3726 = vmatprep.subr.mxu0 0.0
        %3727 = vmatpush2.msra.mxu0 0.0
        %3728 = vmatprep.subr.mxu0 0.0
        %3729 = vmatpush2.msra.mxu0 0.0
        %3730 = vmatprep.subr.mxu0 0.0
        %3731 = vmatpush2.msra.mxu0 0.0
        %3732 = vmatprep.subr.mxu0 0.0
        %3733 = vmatpush2.msra.mxu0 0.0
        %3734 = vmatprep.subr.mxu0 0.0
        %3735 = vmatpush2.msra.mxu0 0.0
        %3736 = vmatprep.subr.mxu0 0.0
        %3737 = vmatpush2.msra.mxu0 0.0
        %3738 = vmatprep.mubr.f32.mxu0 0.0
        %3739 = vmatmul.mubr.f32.gmra.mxu0 %v3672
        %v3740 = vpop.f32.mrf.mxu0
        %v3741 = vadd.f32 0.0, %v3740
        %v3742 = vpop.f32.mrf.mxu0
        %3743 = vdwg.mxu0
        %v3745 = vsel %vm877, %v3254, 0
        %3747 = vmatprep.subr.mxu0 0.0
        %3748 = vmatpush1.msra.mxu0 0.0
        %3749 = vmatprep.subr.mxu0 0.0
        %3750 = vmatpush1.msra.mxu0 0.0
        %3751 = vmatprep.subr.mxu0 0.0
        %3752 = vmatpush1.msra.mxu0 0.0
        %3753 = vmatprep.subr.mxu0 0.0
        %3754 = vmatpush1.msra.mxu0 0.0
        %3755 = vmatprep.subr.mxu0 0.0
        %3756 = vmatpush1.msra.mxu0 0.0
        %3757 = vmatprep.subr.mxu0 0.0
        %3758 = vmatpush1.msra.mxu0 0.0
        %3759 = vmatprep.subr.mxu0 0.0
        %3760 = vmatpush1.msra.mxu0 0.0
        %3761 = vmatprep.subr.mxu0 0.0
        %3762 = vmatpush1.msra.mxu0 0.0
        %3763 = vmatprep.subr.mxu0 0.0
        %3764 = vmatpush1.msra.mxu0 0.0
        %3765 = vmatprep.subr.mxu0 0.0
        %3766 = vmatpush1.msra.mxu0 0.0
        %3767 = vmatprep.subr.mxu0 0.0
        %3768 = vmatpush1.msra.mxu0 0.0
        %3769 = vmatprep.subr.mxu0 0.0
        %3770 = vmatpush1.msra.mxu0 0.0
        %3771 = vmatprep.subr.mxu0 0.0
        %3772 = vmatpush1.msra.mxu0 0.0
        %3773 = vmatprep.subr.mxu0 0.0
        %3774 = vmatpush1.msra.mxu0 0.0
        %3775 = vmatprep.subr.mxu0 0.0
        %3776 = vmatpush1.msra.mxu0 0.0
        %3777 = vmatprep.subr.mxu0 0.0
        %3778 = vmatpush1.msra.mxu0 %v3258
        %3779 = vmatprep.subr.mxu0 0.0
        %3780 = vmatpush2.msra.mxu0 0.0
        %3781 = vmatprep.subr.mxu0 0.0
        %3782 = vmatpush2.msra.mxu0 0.0
        %3783 = vmatprep.subr.mxu0 0.0
        %3784 = vmatpush2.msra.mxu0 0.0
        %3785 = vmatprep.subr.mxu0 0.0
        %3786 = vmatpush2.msra.mxu0 0.0
        %3787 = vmatprep.subr.mxu0 0.0
        %3788 = vmatpush2.msra.mxu0 0.0
        %3789 = vmatprep.subr.mxu0 0.0
        %3790 = vmatpush2.msra.mxu0 0.0
        %3791 = vmatprep.subr.mxu0 0.0
        %3792 = vmatpush2.msra.mxu0 0.0
        %3793 = vmatprep.subr.mxu0 0.0
        %3794 = vmatpush2.msra.mxu0 0.0
        %3795 = vmatprep.subr.mxu0 0.0
        %3796 = vmatpush2.msra.mxu0 0.0
        %3797 = vmatprep.subr.mxu0 0.0
        %3798 = vmatpush2.msra.mxu0 0.0
        %3799 = vmatprep.subr.mxu0 0.0
        %3800 = vmatpush2.msra.mxu0 0.0
        %3801 = vmatprep.subr.mxu0 0.0
        %3802 = vmatpush2.msra.mxu0 0.0
        %3803 = vmatprep.subr.mxu0 0.0
        %3804 = vmatpush2.msra.mxu0 0.0
        %3805 = vmatprep.subr.mxu0 0.0
        %3806 = vmatpush2.msra.mxu0 0.0
        %3807 = vmatprep.subr.mxu0 0.0
        %3808 = vmatpush2.msra.mxu0 0.0
        %3809 = vmatprep.subr.mxu0 0.0
        %3810 = vmatpush2.msra.mxu0 0.0
        %3811 = vmatprep.mubr.f32.mxu0 0.0
        %3812 = vmatmul.mubr.f32.gmra.mxu0 %v3745
        %v3813 = vpop.f32.mrf.mxu0
        %v3814 = vadd.f32 %v3741, %v3813
        %v3815 = vpop.f32.mrf.mxu0
        %3816 = vdwg.mxu0
        %s3817 = scalar_lea.vmem %s3, 192
        %v3818 = vld [vmem:[%s3817] sm:$0xff]
        %v3819 = vld [vmem:[%s3817 + $0x8] sm:$0xff]
        %v3820 = vld [vmem:[%s3817 + $0x10] sm:$0xff]
        %v3821 = vld [vmem:[%s3817 + $0x18] sm:$0xff]
        %s3822 = scalar_lea.vmem %s6, 6
        %v3823 = vld [vmem:[%s3822] sm:$0x1]
        %v3825 = vlaneseq
        %v3826 = vshrl.u32 %v3825, 7
        %v3827 = vsub.s32 0, %v3826
        %v3828 = vrot.slane %v3823, %v3827
        %3830 = vmatprep.subr.mxu0 0.0
        %3831 = vmatpush1.msra.mxu0 0.0
        %3832 = vmatprep.subr.mxu0 0.0
        %3833 = vmatpush1.msra.mxu0 0.0
        %3834 = vmatprep.subr.mxu0 0.0
        %3835 = vmatpush1.msra.mxu0 0.0
        %3836 = vmatprep.subr.mxu0 0.0
        %3837 = vmatpush1.msra.mxu0 0.0
        %3838 = vmatprep.subr.mxu0 0.0
        %3839 = vmatpush1.msra.mxu0 0.0
        %3840 = vmatprep.subr.mxu0 0.0
        %3841 = vmatpush1.msra.mxu0 0.0
        %3842 = vmatprep.subr.mxu0 0.0
        %3843 = vmatpush1.msra.mxu0 0.0
        %3844 = vmatprep.subr.mxu0 0.0
        %3845 = vmatpush1.msra.mxu0 0.0
        %3846 = vmatprep.subr.mxu0 0.0
        %3847 = vmatpush1.msra.mxu0 0.0
        %3848 = vmatprep.subr.mxu0 0.0
        %3849 = vmatpush1.msra.mxu0 0.0
        %3850 = vmatprep.subr.mxu0 0.0
        %3851 = vmatpush1.msra.mxu0 0.0
        %3852 = vmatprep.subr.mxu0 0.0
        %3853 = vmatpush1.msra.mxu0 0.0
        %3854 = vmatprep.subr.mxu0 0.0
        %3855 = vmatpush1.msra.mxu0 %v3821
        %3856 = vmatprep.subr.mxu0 0.0
        %3857 = vmatpush1.msra.mxu0 %v3820
        %3858 = vmatprep.subr.mxu0 0.0
        %3859 = vmatpush1.msra.mxu0 %v3819
        %3860 = vmatprep.subr.mxu0 0.0
        %3861 = vmatpush1.msra.mxu0 %v3818
        %3862 = vmatprep.subr.mxu0 0.0
        %3863 = vmatpush2.msra.mxu0 0.0
        %3864 = vmatprep.subr.mxu0 0.0
        %3865 = vmatpush2.msra.mxu0 0.0
        %3866 = vmatprep.subr.mxu0 0.0
        %3867 = vmatpush2.msra.mxu0 0.0
        %3868 = vmatprep.subr.mxu0 0.0
        %3869 = vmatpush2.msra.mxu0 0.0
        %3870 = vmatprep.subr.mxu0 0.0
        %3871 = vmatpush2.msra.mxu0 0.0
        %3872 = vmatprep.subr.mxu0 0.0
        %3873 = vmatpush2.msra.mxu0 0.0
        %3874 = vmatprep.subr.mxu0 0.0
        %3875 = vmatpush2.msra.mxu0 0.0
        %3876 = vmatprep.subr.mxu0 0.0
        %3877 = vmatpush2.msra.mxu0 0.0
        %3878 = vmatprep.subr.mxu0 0.0
        %3879 = vmatpush2.msra.mxu0 0.0
        %3880 = vmatprep.subr.mxu0 0.0
        %3881 = vmatpush2.msra.mxu0 0.0
        %3882 = vmatprep.subr.mxu0 0.0
        %3883 = vmatpush2.msra.mxu0 0.0
        %3884 = vmatprep.subr.mxu0 0.0
        %3885 = vmatpush2.msra.mxu0 0.0
        %3886 = vmatprep.subr.mxu0 0.0
        %3887 = vmatpush2.msra.mxu0 0.0
        %3888 = vmatprep.subr.mxu0 0.0
        %3889 = vmatpush2.msra.mxu0 0.0
        %3890 = vmatprep.subr.mxu0 0.0
        %3891 = vmatpush2.msra.mxu0 0.0
        %3892 = vmatprep.subr.mxu0 0.0
        %3893 = vmatpush2.msra.mxu0 0.0
        %3894 = vmatprep.mubr.f32.mxu0 0.0
        %3895 = vmatmul.mubr.f32.gmra.mxu0 %v2858
        %v3896 = vpop.f32.mrf.mxu0
        %v3897 = vadd.f32 %v3828, %v3896
        %v3898 = vpop.f32.mrf.mxu0
        %3899 = vdwg.mxu0
        %s3900 = scalar_lea.vmem %s4, 192
        %v3901 = vld [vmem:[%s3900] sm:$0xff]
        %v3902 = vld [vmem:[%s3900 + $0x8] sm:$0xff]
        %v3903 = vld [vmem:[%s3900 + $0x10] sm:$0xff]
        %v3904 = vld [vmem:[%s3900 + $0x18] sm:$0xff]
        %s3905 = scalar_lea.vmem %s7, 6
        %v3906 = vld [vmem:[%s3905] sm:$0x1]
        %v3908 = vlaneseq
        %v3909 = vshrl.u32 %v3908, 7
        %v3910 = vsub.s32 0, %v3909
        %v3911 = vrot.slane %v3906, %v3910
        %3913 = vmatprep.subr.mxu0 0.0
        %3914 = vmatpush1.msra.mxu0 0.0
        %3915 = vmatprep.subr.mxu0 0.0
        %3916 = vmatpush1.msra.mxu0 0.0
        %3917 = vmatprep.subr.mxu0 0.0
        %3918 = vmatpush1.msra.mxu0 0.0
        %3919 = vmatprep.subr.mxu0 0.0
        %3920 = vmatpush1.msra.mxu0 0.0
        %3921 = vmatprep.subr.mxu0 0.0
        %3922 = vmatpush1.msra.mxu0 0.0
        %3923 = vmatprep.subr.mxu0 0.0
        %3924 = vmatpush1.msra.mxu0 0.0
        %3925 = vmatprep.subr.mxu0 0.0
        %3926 = vmatpush1.msra.mxu0 0.0
        %3927 = vmatprep.subr.mxu0 0.0
        %3928 = vmatpush1.msra.mxu0 0.0
        %3929 = vmatprep.subr.mxu0 0.0
        %3930 = vmatpush1.msra.mxu0 0.0
        %3931 = vmatprep.subr.mxu0 0.0
        %3932 = vmatpush1.msra.mxu0 0.0
        %3933 = vmatprep.subr.mxu0 0.0
        %3934 = vmatpush1.msra.mxu0 0.0
        %3935 = vmatprep.subr.mxu0 0.0
        %3936 = vmatpush1.msra.mxu0 0.0
        %3937 = vmatprep.subr.mxu0 0.0
        %3938 = vmatpush1.msra.mxu0 %v3904
        %3939 = vmatprep.subr.mxu0 0.0
        %3940 = vmatpush1.msra.mxu0 %v3903
        %3941 = vmatprep.subr.mxu0 0.0
        %3942 = vmatpush1.msra.mxu0 %v3902
        %3943 = vmatprep.subr.mxu0 0.0
        %3944 = vmatpush1.msra.mxu0 %v3901
        %3945 = vmatprep.subr.mxu0 0.0
        %3946 = vmatpush2.msra.mxu0 0.0
        %3947 = vmatprep.subr.mxu0 0.0
        %3948 = vmatpush2.msra.mxu0 0.0
        %3949 = vmatprep.subr.mxu0 0.0
        %3950 = vmatpush2.msra.mxu0 0.0
        %3951 = vmatprep.subr.mxu0 0.0
        %3952 = vmatpush2.msra.mxu0 0.0
        %3953 = vmatprep.subr.mxu0 0.0
        %3954 = vmatpush2.msra.mxu0 0.0
        %3955 = vmatprep.subr.mxu0 0.0
        %3956 = vmatpush2.msra.mxu0 0.0
        %3957 = vmatprep.subr.mxu0 0.0
        %3958 = vmatpush2.msra.mxu0 0.0
        %3959 = vmatprep.subr.mxu0 0.0
        %3960 = vmatpush2.msra.mxu0 0.0
        %3961 = vmatprep.subr.mxu0 0.0
        %3962 = vmatpush2.msra.mxu0 0.0
        %3963 = vmatprep.subr.mxu0 0.0
        %3964 = vmatpush2.msra.mxu0 0.0
        %3965 = vmatprep.subr.mxu0 0.0
        %3966 = vmatpush2.msra.mxu0 0.0
        %3967 = vmatprep.subr.mxu0 0.0
        %3968 = vmatpush2.msra.mxu0 0.0
        %3969 = vmatprep.subr.mxu0 0.0
        %3970 = vmatpush2.msra.mxu0 0.0
        %3971 = vmatprep.subr.mxu0 0.0
        %3972 = vmatpush2.msra.mxu0 0.0
        %3973 = vmatprep.subr.mxu0 0.0
        %3974 = vmatpush2.msra.mxu0 0.0
        %3975 = vmatprep.subr.mxu0 0.0
        %3976 = vmatpush2.msra.mxu0 0.0
        %3977 = vmatprep.mubr.f32.mxu0 0.0
        %3978 = vmatmul.mubr.f32.gmra.mxu0 %v2858
        %v3979 = vpop.f32.mrf.mxu0
        %v3980 = vadd.f32 %v3911, %v3979
        %v3981 = vpop.f32.mrf.mxu0
        %3982 = vdwg.mxu0
        %s3983 = scalar_lea.vmem %s5, 192
        %v3984 = vld [vmem:[%s3983] sm:$0xff]
        %v3985 = vld [vmem:[%s3983 + $0x8] sm:$0xff]
        %v3986 = vld [vmem:[%s3983 + $0x10] sm:$0xff]
        %v3987 = vld [vmem:[%s3983 + $0x18] sm:$0xff]
        %s3988 = scalar_lea.vmem %s8, 6
        %v3989 = vld [vmem:[%s3988] sm:$0x1]
        %v3991 = vlaneseq
        %v3992 = vshrl.u32 %v3991, 7
        %v3993 = vsub.s32 0, %v3992
        %v3994 = vrot.slane %v3989, %v3993
        %3996 = vmatprep.subr.mxu0 0.0
        %3997 = vmatpush1.msra.mxu0 0.0
        %3998 = vmatprep.subr.mxu0 0.0
        %3999 = vmatpush1.msra.mxu0 0.0
        %4000 = vmatprep.subr.mxu0 0.0
        %4001 = vmatpush1.msra.mxu0 0.0
        %4002 = vmatprep.subr.mxu0 0.0
        %4003 = vmatpush1.msra.mxu0 0.0
        %4004 = vmatprep.subr.mxu0 0.0
        %4005 = vmatpush1.msra.mxu0 0.0
        %4006 = vmatprep.subr.mxu0 0.0
        %4007 = vmatpush1.msra.mxu0 0.0
        %4008 = vmatprep.subr.mxu0 0.0
        %4009 = vmatpush1.msra.mxu0 0.0
        %4010 = vmatprep.subr.mxu0 0.0
        %4011 = vmatpush1.msra.mxu0 0.0
        %4012 = vmatprep.subr.mxu0 0.0
        %4013 = vmatpush1.msra.mxu0 0.0
        %4014 = vmatprep.subr.mxu0 0.0
        %4015 = vmatpush1.msra.mxu0 0.0
        %4016 = vmatprep.subr.mxu0 0.0
        %4017 = vmatpush1.msra.mxu0 0.0
        %4018 = vmatprep.subr.mxu0 0.0
        %4019 = vmatpush1.msra.mxu0 0.0
        %4020 = vmatprep.subr.mxu0 0.0
        %4021 = vmatpush1.msra.mxu0 %v3987
        %4022 = vmatprep.subr.mxu0 0.0
        %4023 = vmatpush1.msra.mxu0 %v3986
        %4024 = vmatprep.subr.mxu0 0.0
        %4025 = vmatpush1.msra.mxu0 %v3985
        %4026 = vmatprep.subr.mxu0 0.0
        %4027 = vmatpush1.msra.mxu0 %v3984
        %4028 = vmatprep.subr.mxu0 0.0
        %4029 = vmatpush2.msra.mxu0 0.0
        %4030 = vmatprep.subr.mxu0 0.0
        %4031 = vmatpush2.msra.mxu0 0.0
        %4032 = vmatprep.subr.mxu0 0.0
        %4033 = vmatpush2.msra.mxu0 0.0
        %4034 = vmatprep.subr.mxu0 0.0
        %4035 = vmatpush2.msra.mxu0 0.0
        %4036 = vmatprep.subr.mxu0 0.0
        %4037 = vmatpush2.msra.mxu0 0.0
        %4038 = vmatprep.subr.mxu0 0.0
        %4039 = vmatpush2.msra.mxu0 0.0
        %4040 = vmatprep.subr.mxu0 0.0
        %4041 = vmatpush2.msra.mxu0 0.0
        %4042 = vmatprep.subr.mxu0 0.0
        %4043 = vmatpush2.msra.mxu0 0.0
        %4044 = vmatprep.subr.mxu0 0.0
        %4045 = vmatpush2.msra.mxu0 0.0
        %4046 = vmatprep.subr.mxu0 0.0
        %4047 = vmatpush2.msra.mxu0 0.0
        %4048 = vmatprep.subr.mxu0 0.0
        %4049 = vmatpush2.msra.mxu0 0.0
        %4050 = vmatprep.subr.mxu0 0.0
        %4051 = vmatpush2.msra.mxu0 0.0
        %4052 = vmatprep.subr.mxu0 0.0
        %4053 = vmatpush2.msra.mxu0 0.0
        %4054 = vmatprep.subr.mxu0 0.0
        %4055 = vmatpush2.msra.mxu0 0.0
        %4056 = vmatprep.subr.mxu0 0.0
        %4057 = vmatpush2.msra.mxu0 0.0
        %4058 = vmatprep.subr.mxu0 0.0
        %4059 = vmatpush2.msra.mxu0 0.0
        %4060 = vmatprep.mubr.f32.mxu0 0.0
        %4061 = vmatmul.mubr.f32.gmra.mxu0 %v2858
        %v4062 = vpop.f32.mrf.mxu0
        %v4063 = vadd.f32 %v3994, %v4062
        %v4064 = vpop.f32.mrf.mxu0
        %4065 = vdwg.mxu0
        %v4067 = vsel %vm877, %v3897, 0
        %v4070 = vsel %vm877, %v3980, 0
        %4072 = vmatprep.subr.mxu0 0.0
        %4073 = vmatpush1.xpose.msra.mxu0 0.0
        %4074 = vmatprep.subr.mxu0 0.0
        %4075 = vmatpush1.xpose.msra.mxu0 0.0
        %4076 = vmatprep.subr.mxu0 0.0
        %4077 = vmatpush1.xpose.msra.mxu0 0.0
        %4078 = vmatprep.subr.mxu0 0.0
        %4079 = vmatpush1.xpose.msra.mxu0 0.0
        %4080 = vmatprep.subr.mxu0 0.0
        %4081 = vmatpush1.xpose.msra.mxu0 0.0
        %4082 = vmatprep.subr.mxu0 0.0
        %4083 = vmatpush1.xpose.msra.mxu0 0.0
        %4084 = vmatprep.subr.mxu0 0.0
        %4085 = vmatpush1.xpose.msra.mxu0 0.0
        %4086 = vmatprep.subr.mxu0 0.0
        %4087 = vmatpush1.xpose.msra.mxu0 0.0
        %4088 = vmatprep.subr.mxu0 0.0
        %4089 = vmatpush1.xpose.msra.mxu0 0.0
        %4090 = vmatprep.subr.mxu0 0.0
        %4091 = vmatpush1.xpose.msra.mxu0 0.0
        %4092 = vmatprep.subr.mxu0 0.0
        %4093 = vmatpush1.xpose.msra.mxu0 0.0
        %4094 = vmatprep.subr.mxu0 0.0
        %4095 = vmatpush1.xpose.msra.mxu0 0.0
        %4096 = vmatprep.subr.mxu0 0.0
        %4097 = vmatpush1.xpose.msra.mxu0 0.0
        %4098 = vmatprep.subr.mxu0 0.0
        %4099 = vmatpush1.xpose.msra.mxu0 0.0
        %4100 = vmatprep.subr.mxu0 0.0
        %4101 = vmatpush1.xpose.msra.mxu0 0.0
        %4102 = vmatprep.subr.mxu0 0.0
        %4103 = vmatpush1.xpose.msra.mxu0 %v4070
        %4104 = vmatprep.subr.mxu0 0.0
        %4105 = vmatpush2.xpose.msra.mxu0 0.0
        %4106 = vmatprep.subr.mxu0 0.0
        %4107 = vmatpush2.xpose.msra.mxu0 0.0
        %4108 = vmatprep.subr.mxu0 0.0
        %4109 = vmatpush2.xpose.msra.mxu0 0.0
        %4110 = vmatprep.subr.mxu0 0.0
        %4111 = vmatpush2.xpose.msra.mxu0 0.0
        %4112 = vmatprep.subr.mxu0 0.0
        %4113 = vmatpush2.xpose.msra.mxu0 0.0
        %4114 = vmatprep.subr.mxu0 0.0
        %4115 = vmatpush2.xpose.msra.mxu0 0.0
        %4116 = vmatprep.subr.mxu0 0.0
        %4117 = vmatpush2.xpose.msra.mxu0 0.0
        %4118 = vmatprep.subr.mxu0 0.0
        %4119 = vmatpush2.xpose.msra.mxu0 0.0
        %4120 = vmatprep.subr.mxu0 0.0
        %4121 = vmatpush2.xpose.msra.mxu0 0.0
        %4122 = vmatprep.subr.mxu0 0.0
        %4123 = vmatpush2.xpose.msra.mxu0 0.0
        %4124 = vmatprep.subr.mxu0 0.0
        %4125 = vmatpush2.xpose.msra.mxu0 0.0
        %4126 = vmatprep.subr.mxu0 0.0
        %4127 = vmatpush2.xpose.msra.mxu0 0.0
        %4128 = vmatprep.subr.mxu0 0.0
        %4129 = vmatpush2.xpose.msra.mxu0 0.0
        %4130 = vmatprep.subr.mxu0 0.0
        %4131 = vmatpush2.xpose.msra.mxu0 0.0
        %4132 = vmatprep.subr.mxu0 0.0
        %4133 = vmatpush2.xpose.msra.mxu0 0.0
        %4134 = vmatprep.subr.mxu0 0.0
        %4135 = vmatpush2.xpose.msra.mxu0 0.0
        %4136 = vmatprep.mubr.f32.mxu0 0.0
        %4137 = vmatmul.mubr.f32.gmra.mxu0 %v4067
        %v4138 = vpop.f32.mrf.mxu0
        %v4139 = vadd.f32 0.0, %v4138
        %v4140 = vpop.f32.mrf.mxu0
        %4141 = vdwg.mxu0
        %v4142 = vmul.f32 %v4139, 0.35355338
        %v4143 = vsel %vm877, %v4142, -inf
        %4144 = vmax.xlane.f32.xlu0 %v4143
        %v4145 = vpop.xlane.xlu0 %4144
        %v4146 = vsub.f32 %v4142, %v4145
        %v4147 = vmul.f32 %v4146, 1.442695
        %v4148 = vpow.pop %v4147
        %v4149 = vsel %vm877, %v4148, 0.0
        %4150 = vadd.xlane.f32.xlu0 %v4149
        %v4151 = vpop.xlane.xlu0 %4150
        %v4152 = vrcp.pop %v4151
        %v4153 = vmul.f32 %v4148, %v4152
        %v4155 = vsel %vm877, %v4153, 0
        %4157 = vmatprep.subr.mxu0 0.0
        %4158 = vmatpush1.msra.mxu0 0.0
        %4159 = vmatprep.subr.mxu0 0.0
        %4160 = vmatpush1.msra.mxu0 0.0
        %4161 = vmatprep.subr.mxu0 0.0
        %4162 = vmatpush1.msra.mxu0 0.0
        %4163 = vmatprep.subr.mxu0 0.0
        %4164 = vmatpush1.msra.mxu0 0.0
        %4165 = vmatprep.subr.mxu0 0.0
        %4166 = vmatpush1.msra.mxu0 0.0
        %4167 = vmatprep.subr.mxu0 0.0
        %4168 = vmatpush1.msra.mxu0 0.0
        %4169 = vmatprep.subr.mxu0 0.0
        %4170 = vmatpush1.msra.mxu0 0.0
        %4171 = vmatprep.subr.mxu0 0.0
        %4172 = vmatpush1.msra.mxu0 0.0
        %4173 = vmatprep.subr.mxu0 0.0
        %4174 = vmatpush1.msra.mxu0 0.0
        %4175 = vmatprep.subr.mxu0 0.0
        %4176 = vmatpush1.msra.mxu0 0.0
        %4177 = vmatprep.subr.mxu0 0.0
        %4178 = vmatpush1.msra.mxu0 0.0
        %4179 = vmatprep.subr.mxu0 0.0
        %4180 = vmatpush1.msra.mxu0 0.0
        %4181 = vmatprep.subr.mxu0 0.0
        %4182 = vmatpush1.msra.mxu0 0.0
        %4183 = vmatprep.subr.mxu0 0.0
        %4184 = vmatpush1.msra.mxu0 0.0
        %4185 = vmatprep.subr.mxu0 0.0
        %4186 = vmatpush1.msra.mxu0 0.0
        %4187 = vmatprep.subr.mxu0 0.0
        %4188 = vmatpush1.msra.mxu0 %v4063
        %4189 = vmatprep.subr.mxu0 0.0
        %4190 = vmatpush2.msra.mxu0 0.0
        %4191 = vmatprep.subr.mxu0 0.0
        %4192 = vmatpush2.msra.mxu0 0.0
        %4193 = vmatprep.subr.mxu0 0.0
        %4194 = vmatpush2.msra.mxu0 0.0
        %4195 = vmatprep.subr.mxu0 0.0
        %4196 = vmatpush2.msra.mxu0 0.0
        %4197 = vmatprep.subr.mxu0 0.0
        %4198 = vmatpush2.msra.mxu0 0.0
        %4199 = vmatprep.subr.mxu0 0.0
        %4200 = vmatpush2.msra.mxu0 0.0
        %4201 = vmatprep.subr.mxu0 0.0
        %4202 = vmatpush2.msra.mxu0 0.0
        %4203 = vmatprep.subr.mxu0 0.0
        %4204 = vmatpush2.msra.mxu0 0.0
        %4205 = vmatprep.subr.mxu0 0.0
        %4206 = vmatpush2.msra.mxu0 0.0
        %4207 = vmatprep.subr.mxu0 0.0
        %4208 = vmatpush2.msra.mxu0 0.0
        %4209 = vmatprep.subr.mxu0 0.0
        %4210 = vmatpush2.msra.mxu0 0.0
        %4211 = vmatprep.subr.mxu0 0.0
        %4212 = vmatpush2.msra.mxu0 0.0
        %4213 = vmatprep.subr.mxu0 0.0
        %4214 = vmatpush2.msra.mxu0 0.0
        %4215 = vmatprep.subr.mxu0 0.0
        %4216 = vmatpush2.msra.mxu0 0.0
        %4217 = vmatprep.subr.mxu0 0.0
        %4218 = vmatpush2.msra.mxu0 0.0
        %4219 = vmatprep.subr.mxu0 0.0
        %4220 = vmatpush2.msra.mxu0 0.0
        %4221 = vmatprep.mubr.f32.mxu0 0.0
        %4222 = vmatmul.mubr.f32.gmra.mxu0 %v4155
        %v4223 = vpop.f32.mrf.mxu0
        %v4224 = vadd.f32 0.0, %v4223
        %v4225 = vpop.f32.mrf.mxu0
        %4226 = vdwg.mxu0
        %s4227 = scalar_lea.vmem %s9, 48
        %v4228 = vld [vmem:[%s4227] sm:$0xff]
        %v4230 = vsel %vm877, %v4224, 0
        %4232 = vmatprep.subr.mxu0 0.0
        %4233 = vmatpush1.msra.mxu0 0.0
        %4234 = vmatprep.subr.mxu0 0.0
        %4235 = vmatpush1.msra.mxu0 0.0
        %4236 = vmatprep.subr.mxu0 0.0
        %4237 = vmatpush1.msra.mxu0 0.0
        %4238 = vmatprep.subr.mxu0 0.0
        %4239 = vmatpush1.msra.mxu0 0.0
        %4240 = vmatprep.subr.mxu0 0.0
        %4241 = vmatpush1.msra.mxu0 0.0
        %4242 = vmatprep.subr.mxu0 0.0
        %4243 = vmatpush1.msra.mxu0 0.0
        %4244 = vmatprep.subr.mxu0 0.0
        %4245 = vmatpush1.msra.mxu0 0.0
        %4246 = vmatprep.subr.mxu0 0.0
        %4247 = vmatpush1.msra.mxu0 0.0
        %4248 = vmatprep.subr.mxu0 0.0
        %4249 = vmatpush1.msra.mxu0 0.0
        %4250 = vmatprep.subr.mxu0 0.0
        %4251 = vmatpush1.msra.mxu0 0.0
        %4252 = vmatprep.subr.mxu0 0.0
        %4253 = vmatpush1.msra.mxu0 0.0
        %4254 = vmatprep.subr.mxu0 0.0
        %4255 = vmatpush1.msra.mxu0 0.0
        %4256 = vmatprep.subr.mxu0 0.0
        %4257 = vmatpush1.msra.mxu0 0.0
        %4258 = vmatprep.subr.mxu0 0.0
        %4259 = vmatpush1.msra.mxu0 0.0
        %4260 = vmatprep.subr.mxu0 0.0
        %4261 = vmatpush1.msra.mxu0 0.0
        %4262 = vmatprep.subr.mxu0 0.0
        %4263 = vmatpush1.msra.mxu0 %v4228
        %4264 = vmatprep.subr.mxu0 0.0
        %4265 = vmatpush2.msra.mxu0 0.0
        %4266 = vmatprep.subr.mxu0 0.0
        %4267 = vmatpush2.msra.mxu0 0.0
        %4268 = vmatprep.subr.mxu0 0.0
        %4269 = vmatpush2.msra.mxu0 0.0
        %4270 = vmatprep.subr.mxu0 0.0
        %4271 = vmatpush2.msra.mxu0 0.0
        %4272 = vmatprep.subr.mxu0 0.0
        %4273 = vmatpush2.msra.mxu0 0.0
        %4274 = vmatprep.subr.mxu0 0.0
        %4275 = vmatpush2.msra.mxu0 0.0
        %4276 = vmatprep.subr.mxu0 0.0
        %4277 = vmatpush2.msra.mxu0 0.0
        %4278 = vmatprep.subr.mxu0 0.0
        %4279 = vmatpush2.msra.mxu0 0.0
        %4280 = vmatprep.subr.mxu0 0.0
        %4281 = vmatpush2.msra.mxu0 0.0
        %4282 = vmatprep.subr.mxu0 0.0
        %4283 = vmatpush2.msra.mxu0 0.0
        %4284 = vmatprep.subr.mxu0 0.0
        %4285 = vmatpush2.msra.mxu0 0.0
        %4286 = vmatprep.subr.mxu0 0.0
        %4287 = vmatpush2.msra.mxu0 0.0
        %4288 = vmatprep.subr.mxu0 0.0
        %4289 = vmatpush2.msra.mxu0 0.0
        %4290 = vmatprep.subr.mxu0 0.0
        %4291 = vmatpush2.msra.mxu0 0.0
        %4292 = vmatprep.subr.mxu0 0.0
        %4293 = vmatpush2.msra.mxu0 0.0
        %4294 = vmatprep.subr.mxu0 0.0
        %4295 = vmatpush2.msra.mxu0 0.0
        %4296 = vmatprep.mubr.f32.mxu0 0.0
        %4297 = vmatmul.mubr.f32.gmra.mxu0 %v4230
        %v4298 = vpop.f32.mrf.mxu0
        %v4299 = vadd.f32 0.0, %v4298
        %v4300 = vpop.f32.mrf.mxu0
        %4301 = vdwg.mxu0
        %v4302 = vadd.f32 %v3814, %v4299
        %s4303 = scalar_lea.vmem %s3, 224
        %v4304 = vld [vmem:[%s4303] sm:$0xff]
        %v4305 = vld [vmem:[%s4303 + $0x8] sm:$0xff]
        %v4306 = vld [vmem:[%s4303 + $0x10] sm:$0xff]
        %v4307 = vld [vmem:[%s4303 + $0x18] sm:$0xff]
        %s4308 = scalar_lea.vmem %s6, 7
        %v4309 = vld [vmem:[%s4308] sm:$0x1]
        %v4311 = vlaneseq
        %v4312 = vshrl.u32 %v4311, 7
        %v4313 = vsub.s32 0, %v4312
        %v4314 = vrot.slane %v4309, %v4313
        %4316 = vmatprep.subr.mxu0 0.0
        %4317 = vmatpush1.msra.mxu0 0.0
        %4318 = vmatprep.subr.mxu0 0.0
        %4319 = vmatpush1.msra.mxu0 0.0
        %4320 = vmatprep.subr.mxu0 0.0
        %4321 = vmatpush1.msra.mxu0 0.0
        %4322 = vmatprep.subr.mxu0 0.0
        %4323 = vmatpush1.msra.mxu0 0.0
        %4324 = vmatprep.subr.mxu0 0.0
        %4325 = vmatpush1.msra.mxu0 0.0
        %4326 = vmatprep.subr.mxu0 0.0
        %4327 = vmatpush1.msra.mxu0 0.0
        %4328 = vmatprep.subr.mxu0 0.0
        %4329 = vmatpush1.msra.mxu0 0.0
        %4330 = vmatprep.subr.mxu0 0.0
        %4331 = vmatpush1.msra.mxu0 0.0
        %4332 = vmatprep.subr.mxu0 0.0
        %4333 = vmatpush1.msra.mxu0 0.0
        %4334 = vmatprep.subr.mxu0 0.0
        %4335 = vmatpush1.msra.mxu0 0.0
        %4336 = vmatprep.subr.mxu0 0.0
        %4337 = vmatpush1.msra.mxu0 0.0
        %4338 = vmatprep.subr.mxu0 0.0
        %4339 = vmatpush1.msra.mxu0 0.0
        %4340 = vmatprep.subr.mxu0 0.0
        %4341 = vmatpush1.msra.mxu0 %v4307
        %4342 = vmatprep.subr.mxu0 0.0
        %4343 = vmatpush1.msra.mxu0 %v4306
        %4344 = vmatprep.subr.mxu0 0.0
        %4345 = vmatpush1.msra.mxu0 %v4305
        %4346 = vmatprep.subr.mxu0 0.0
        %4347 = vmatpush1.msra.mxu0 %v4304
        %4348 = vmatprep.subr.mxu0 0.0
        %4349 = vmatpush2.msra.mxu0 0.0
        %4350 = vmatprep.subr.mxu0 0.0
        %4351 = vmatpush2.msra.mxu0 0.0
        %4352 = vmatprep.subr.mxu0 0.0
        %4353 = vmatpush2.msra.mxu0 0.0
        %4354 = vmatprep.subr.mxu0 0.0
        %4355 = vmatpush2.msra.mxu0 0.0
        %4356 = vmatprep.subr.mxu0 0.0
        %4357 = vmatpush2.msra.mxu0 0.0
        %4358 = vmatprep.subr.mxu0 0.0
        %4359 = vmatpush2.msra.mxu0 0.0
        %4360 = vmatprep.subr.mxu0 0.0
        %4361 = vmatpush2.msra.mxu0 0.0
        %4362 = vmatprep.subr.mxu0 0.0
        %4363 = vmatpush2.msra.mxu0 0.0
        %4364 = vmatprep.subr.mxu0 0.0
        %4365 = vmatpush2.msra.mxu0 0.0
        %4366 = vmatprep.subr.mxu0 0.0
        %4367 = vmatpush2.msra.mxu0 0.0
        %4368 = vmatprep.subr.mxu0 0.0
        %4369 = vmatpush2.msra.mxu0 0.0
        %4370 = vmatprep.subr.mxu0 0.0
        %4371 = vmatpush2.msra.mxu0 0.0
        %4372 = vmatprep.subr.mxu0 0.0
        %4373 = vmatpush2.msra.mxu0 0.0
        %4374 = vmatprep.subr.mxu0 0.0
        %4375 = vmatpush2.msra.mxu0 0.0
        %4376 = vmatprep.subr.mxu0 0.0
        %4377 = vmatpush2.msra.mxu0 0.0
        %4378 = vmatprep.subr.mxu0 0.0
        %4379 = vmatpush2.msra.mxu0 0.0
        %4380 = vmatprep.mubr.f32.mxu0 0.0
        %4381 = vmatmul.mubr.f32.gmra.mxu0 %v2858
        %v4382 = vpop.f32.mrf.mxu0
        %v4383 = vadd.f32 %v4314, %v4382
        %v4384 = vpop.f32.mrf.mxu0
        %4385 = vdwg.mxu0
        %s4386 = scalar_lea.vmem %s4, 224
        %v4387 = vld [vmem:[%s4386] sm:$0xff]
        %v4388 = vld [vmem:[%s4386 + $0x8] sm:$0xff]
        %v4389 = vld [vmem:[%s4386 + $0x10] sm:$0xff]
        %v4390 = vld [vmem:[%s4386 + $0x18] sm:$0xff]
        %s4391 = scalar_lea.vmem %s7, 7
        %v4392 = vld [vmem:[%s4391] sm:$0x1]
        %v4394 = vlaneseq
        %v4395 = vshrl.u32 %v4394, 7
        %v4396 = vsub.s32 0, %v4395
        %v4397 = vrot.slane %v4392, %v4396
        %4399 = vmatprep.subr.mxu0 0.0
        %4400 = vmatpush1.msra.mxu0 0.0
        %4401 = vmatprep.subr.mxu0 0.0
        %4402 = vmatpush1.msra.mxu0 0.0
        %4403 = vmatprep.subr.mxu0 0.0
        %4404 = vmatpush1.msra.mxu0 0.0
        %4405 = vmatprep.subr.mxu0 0.0
        %4406 = vmatpush1.msra.mxu0 0.0
        %4407 = vmatprep.subr.mxu0 0.0
        %4408 = vmatpush1.msra.mxu0 0.0
        %4409 = vmatprep.subr.mxu0 0.0
        %4410 = vmatpush1.msra.mxu0 0.0
        %4411 = vmatprep.subr.mxu0 0.0
        %4412 = vmatpush1.msra.mxu0 0.0
        %4413 = vmatprep.subr.mxu0 0.0
        %4414 = vmatpush1.msra.mxu0 0.0
        %4415 = vmatprep.subr.mxu0 0.0
        %4416 = vmatpush1.msra.mxu0 0.0
        %4417 = vmatprep.subr.mxu0 0.0
        %4418 = vmatpush1.msra.mxu0 0.0
        %4419 = vmatprep.subr.mxu0 0.0
        %4420 = vmatpush1.msra.mxu0 0.0
        %4421 = vmatprep.subr.mxu0 0.0
        %4422 = vmatpush1.msra.mxu0 0.0
        %4423 = vmatprep.subr.mxu0 0.0
        %4424 = vmatpush1.msra.mxu0 %v4390
        %4425 = vmatprep.subr.mxu0 0.0
        %4426 = vmatpush1.msra.mxu0 %v4389
        %4427 = vmatprep.subr.mxu0 0.0
        %4428 = vmatpush1.msra.mxu0 %v4388
        %4429 = vmatprep.subr.mxu0 0.0
        %4430 = vmatpush1.msra.mxu0 %v4387
        %4431 = vmatprep.subr.mxu0 0.0
        %4432 = vmatpush2.msra.mxu0 0.0
        %4433 = vmatprep.subr.mxu0 0.0
        %4434 = vmatpush2.msra.mxu0 0.0
        %4435 = vmatprep.subr.mxu0 0.0
        %4436 = vmatpush2.msra.mxu0 0.0
        %4437 = vmatprep.subr.mxu0 0.0
        %4438 = vmatpush2.msra.mxu0 0.0
        %4439 = vmatprep.subr.mxu0 0.0
        %4440 = vmatpush2.msra.mxu0 0.0
        %4441 = vmatprep.subr.mxu0 0.0
        %4442 = vmatpush2.msra.mxu0 0.0
        %4443 = vmatprep.subr.mxu0 0.0
        %4444 = vmatpush2.msra.mxu0 0.0
        %4445 = vmatprep.subr.mxu0 0.0
        %4446 = vmatpush2.msra.mxu0 0.0
        %4447 = vmatprep.subr.mxu0 0.0
        %4448 = vmatpush2.msra.mxu0 0.0
        %4449 = vmatprep.subr.mxu0 0.0
        %4450 = vmatpush2.msra.mxu0 0.0
        %4451 = vmatprep.subr.mxu0 0.0
        %4452 = vmatpush2.msra.mxu0 0.0
        %4453 = vmatprep.subr.mxu0 0.0
        %4454 = vmatpush2.msra.mxu0 0.0
        %4455 = vmatprep.subr.mxu0 0.0
        %4456 = vmatpush2.msra.mxu0 0.0
        %4457 = vmatprep.subr.mxu0 0.0
        %4458 = vmatpush2.msra.mxu0 0.0
        %4459 = vmatprep.subr.mxu0 0.0
        %4460 = vmatpush2.msra.mxu0 0.0
        %4461 = vmatprep.subr.mxu0 0.0
        %4462 = vmatpush2.msra.mxu0 0.0
        %4463 = vmatprep.mubr.f32.mxu0 0.0
        %4464 = vmatmul.mubr.f32.gmra.mxu0 %v2858
        %v4465 = vpop.f32.mrf.mxu0
        %v4466 = vadd.f32 %v4397, %v4465
        %v4467 = vpop.f32.mrf.mxu0
        %4468 = vdwg.mxu0
        %s4469 = scalar_lea.vmem %s5, 224
        %v4470 = vld [vmem:[%s4469] sm:$0xff]
        %v4471 = vld [vmem:[%s4469 + $0x8] sm:$0xff]
        %v4472 = vld [vmem:[%s4469 + $0x10] sm:$0xff]
        %v4473 = vld [vmem:[%s4469 + $0x18] sm:$0xff]
        %s4474 = scalar_lea.vmem %s8, 7
        %v4475 = vld [vmem:[%s4474] sm:$0x1]
        %v4477 = vlaneseq
        %v4478 = vshrl.u32 %v4477, 7
        %v4479 = vsub.s32 0, %v4478
        %v4480 = vrot.slane %v4475, %v4479
        %4482 = vmatprep.subr.mxu0 0.0
        %4483 = vmatpush1.msra.mxu0 0.0
        %4484 = vmatprep.subr.mxu0 0.0
        %4485 = vmatpush1.msra.mxu0 0.0
        %4486 = vmatprep.subr.mxu0 0.0
        %4487 = vmatpush1.msra.mxu0 0.0
        %4488 = vmatprep.subr.mxu0 0.0
        %4489 = vmatpush1.msra.mxu0 0.0
        %4490 = vmatprep.subr.mxu0 0.0
        %4491 = vmatpush1.msra.mxu0 0.0
        %4492 = vmatprep.subr.mxu0 0.0
        %4493 = vmatpush1.msra.mxu0 0.0
        %4494 = vmatprep.subr.mxu0 0.0
        %4495 = vmatpush1.msra.mxu0 0.0
        %4496 = vmatprep.subr.mxu0 0.0
        %4497 = vmatpush1.msra.mxu0 0.0
        %4498 = vmatprep.subr.mxu0 0.0
        %4499 = vmatpush1.msra.mxu0 0.0
        %4500 = vmatprep.subr.mxu0 0.0
        %4501 = vmatpush1.msra.mxu0 0.0
        %4502 = vmatprep.subr.mxu0 0.0
        %4503 = vmatpush1.msra.mxu0 0.0
        %4504 = vmatprep.subr.mxu0 0.0
        %4505 = vmatpush1.msra.mxu0 0.0
        %4506 = vmatprep.subr.mxu0 0.0
        %4507 = vmatpush1.msra.mxu0 %v4473
        %4508 = vmatprep.subr.mxu0 0.0
        %4509 = vmatpush1.msra.mxu0 %v4472
        %4510 = vmatprep.subr.mxu0 0.0
        %4511 = vmatpush1.msra.mxu0 %v4471
        %4512 = vmatprep.subr.mxu0 0.0
        %4513 = vmatpush1.msra.mxu0 %v4470
        %4514 = vmatprep.subr.mxu0 0.0
        %4515 = vmatpush2.msra.mxu0 0.0
        %4516 = vmatprep.subr.mxu0 0.0
        %4517 = vmatpush2.msra.mxu0 0.0
        %4518 = vmatprep.subr.mxu0 0.0
        %4519 = vmatpush2.msra.mxu0 0.0
        %4520 = vmatprep.subr.mxu0 0.0
        %4521 = vmatpush2.msra.mxu0 0.0
        %4522 = vmatprep.subr.mxu0 0.0
        %4523 = vmatpush2.msra.mxu0 0.0
        %4524 = vmatprep.subr.mxu0 0.0
        %4525 = vmatpush2.msra.mxu0 0.0
        %4526 = vmatprep.subr.mxu0 0.0
        %4527 = vmatpush2.msra.mxu0 0.0
        %4528 = vmatprep.subr.mxu0 0.0
        %4529 = vmatpush2.msra.mxu0 0.0
        %4530 = vmatprep.subr.mxu0 0.0
        %4531 = vmatpush2.msra.mxu0 0.0
        %4532 = vmatprep.subr.mxu0 0.0
        %4533 = vmatpush2.msra.mxu0 0.0
        %4534 = vmatprep.subr.mxu0 0.0
        %4535 = vmatpush2.msra.mxu0 0.0
        %4536 = vmatprep.subr.mxu0 0.0
        %4537 = vmatpush2.msra.mxu0 0.0
        %4538 = vmatprep.subr.mxu0 0.0
        %4539 = vmatpush2.msra.mxu0 0.0
        %4540 = vmatprep.subr.mxu0 0.0
        %4541 = vmatpush2.msra.mxu0 0.0
        %4542 = vmatprep.subr.mxu0 0.0
        %4543 = vmatpush2.msra.mxu0 0.0
        %4544 = vmatprep.subr.mxu0 0.0
        %4545 = vmatpush2.msra.mxu0 0.0
        %4546 = vmatprep.mubr.f32.mxu0 0.0
        %4547 = vmatmul.mubr.f32.gmra.mxu0 %v2858
        %v4548 = vpop.f32.mrf.mxu0
        %v4549 = vadd.f32 %v4480, %v4548
        %v4550 = vpop.f32.mrf.mxu0
        %4551 = vdwg.mxu0
        %v4553 = vsel %vm877, %v4383, 0
        %v4556 = vsel %vm877, %v4466, 0
        %4558 = vmatprep.subr.mxu0 0.0
        %4559 = vmatpush1.xpose.msra.mxu0 0.0
        %4560 = vmatprep.subr.mxu0 0.0
        %4561 = vmatpush1.xpose.msra.mxu0 0.0
        %4562 = vmatprep.subr.mxu0 0.0
        %4563 = vmatpush1.xpose.msra.mxu0 0.0
        %4564 = vmatprep.subr.mxu0 0.0
        %4565 = vmatpush1.xpose.msra.mxu0 0.0
        %4566 = vmatprep.subr.mxu0 0.0
        %4567 = vmatpush1.xpose.msra.mxu0 0.0
        %4568 = vmatprep.subr.mxu0 0.0
        %4569 = vmatpush1.xpose.msra.mxu0 0.0
        %4570 = vmatprep.subr.mxu0 0.0
        %4571 = vmatpush1.xpose.msra.mxu0 0.0
        %4572 = vmatprep.subr.mxu0 0.0
        %4573 = vmatpush1.xpose.msra.mxu0 0.0
        %4574 = vmatprep.subr.mxu0 0.0
        %4575 = vmatpush1.xpose.msra.mxu0 0.0
        %4576 = vmatprep.subr.mxu0 0.0
        %4577 = vmatpush1.xpose.msra.mxu0 0.0
        %4578 = vmatprep.subr.mxu0 0.0
        %4579 = vmatpush1.xpose.msra.mxu0 0.0
        %4580 = vmatprep.subr.mxu0 0.0
        %4581 = vmatpush1.xpose.msra.mxu0 0.0
        %4582 = vmatprep.subr.mxu0 0.0
        %4583 = vmatpush1.xpose.msra.mxu0 0.0
        %4584 = vmatprep.subr.mxu0 0.0
        %4585 = vmatpush1.xpose.msra.mxu0 0.0
        %4586 = vmatprep.subr.mxu0 0.0
        %4587 = vmatpush1.xpose.msra.mxu0 0.0
        %4588 = vmatprep.subr.mxu0 0.0
        %4589 = vmatpush1.xpose.msra.mxu0 %v4556
        %4590 = vmatprep.subr.mxu0 0.0
        %4591 = vmatpush2.xpose.msra.mxu0 0.0
        %4592 = vmatprep.subr.mxu0 0.0
        %4593 = vmatpush2.xpose.msra.mxu0 0.0
        %4594 = vmatprep.subr.mxu0 0.0
        %4595 = vmatpush2.xpose.msra.mxu0 0.0
        %4596 = vmatprep.subr.mxu0 0.0
        %4597 = vmatpush2.xpose.msra.mxu0 0.0
        %4598 = vmatprep.subr.mxu0 0.0
        %4599 = vmatpush2.xpose.msra.mxu0 0.0
        %4600 = vmatprep.subr.mxu0 0.0
        %4601 = vmatpush2.xpose.msra.mxu0 0.0
        %4602 = vmatprep.subr.mxu0 0.0
        %4603 = vmatpush2.xpose.msra.mxu0 0.0
        %4604 = vmatprep.subr.mxu0 0.0
        %4605 = vmatpush2.xpose.msra.mxu0 0.0
        %4606 = vmatprep.subr.mxu0 0.0
        %4607 = vmatpush2.xpose.msra.mxu0 0.0
        %4608 = vmatprep.subr.mxu0 0.0
        %4609 = vmatpush2.xpose.msra.mxu0 0.0
        %4610 = vmatprep.subr.mxu0 0.0
        %4611 = vmatpush2.xpose.msra.mxu0 0.0
        %4612 = vmatprep.subr.mxu0 0.0
        %4613 = vmatpush2.xpose.msra.mxu0 0.0
        %4614 = vmatprep.subr.mxu0 0.0
        %4615 = vmatpush2.xpose.msra.mxu0 0.0
        %4616 = vmatprep.subr.mxu0 0.0
        %4617 = vmatpush2.xpose.msra.mxu0 0.0
        %4618 = vmatprep.subr.mxu0 0.0
        %4619 = vmatpush2.xpose.msra.mxu0 0.0
        %4620 = vmatprep.subr.mxu0 0.0
        %4621 = vmatpush2.xpose.msra.mxu0 0.0
        %4622 = vmatprep.mubr.f32.mxu0 0.0
        %4623 = vmatmul.mubr.f32.gmra.mxu0 %v4553
        %v4624 = vpop.f32.mrf.mxu0
        %v4625 = vadd.f32 0.0, %v4624
        %v4626 = vpop.f32.mrf.mxu0
        %4627 = vdwg.mxu0
        %v4628 = vmul.f32 %v4625, 0.35355338
        %v4629 = vsel %vm877, %v4628, -inf
        %4630 = vmax.xlane.f32.xlu0 %v4629
        %v4631 = vpop.xlane.xlu0 %4630
        %v4632 = vsub.f32 %v4628, %v4631
        %v4633 = vmul.f32 %v4632, 1.442695
        %v4634 = vpow.pop %v4633
        %v4635 = vsel %vm877, %v4634, 0.0
        %4636 = vadd.xlane.f32.xlu0 %v4635
        %v4637 = vpop.xlane.xlu0 %4636
        %v4638 = vrcp.pop %v4637
        %v4639 = vmul.f32 %v4634, %v4638
        %v4641 = vsel %vm877, %v4639, 0
        %4643 = vmatprep.subr.mxu0 0.0
        %4644 = vmatpush1.msra.mxu0 0.0
        %4645 = vmatprep.subr.mxu0 0.0
        %4646 = vmatpush1.msra.mxu0 0.0
        %4647 = vmatprep.subr.mxu0 0.0
        %4648 = vmatpush1.msra.mxu0 0.0
        %4649 = vmatprep.subr.mxu0 0.0
        %4650 = vmatpush1.msra.mxu0 0.0
        %4651 = vmatprep.subr.mxu0 0.0
        %4652 = vmatpush1.msra.mxu0 0.0
        %4653 = vmatprep.subr.mxu0 0.0
        %4654 = vmatpush1.msra.mxu0 0.0
        %4655 = vmatprep.subr.mxu0 0.0
        %4656 = vmatpush1.msra.mxu0 0.0
        %4657 = vmatprep.subr.mxu0 0.0
        %4658 = vmatpush1.msra.mxu0 0.0
        %4659 = vmatprep.subr.mxu0 0.0
        %4660 = vmatpush1.msra.mxu0 0.0
        %4661 = vmatprep.subr.mxu0 0.0
        %4662 = vmatpush1.msra.mxu0 0.0
        %4663 = vmatprep.subr.mxu0 0.0
        %4664 = vmatpush1.msra.mxu0 0.0
        %4665 = vmatprep.subr.mxu0 0.0
        %4666 = vmatpush1.msra.mxu0 0.0
        %4667 = vmatprep.subr.mxu0 0.0
        %4668 = vmatpush1.msra.mxu0 0.0
        %4669 = vmatprep.subr.mxu0 0.0
        %4670 = vmatpush1.msra.mxu0 0.0
        %4671 = vmatprep.subr.mxu0 0.0
        %4672 = vmatpush1.msra.mxu0 0.0
        %4673 = vmatprep.subr.mxu0 0.0
        %4674 = vmatpush1.msra.mxu0 %v4549
        %4675 = vmatprep.subr.mxu0 0.0
        %4676 = vmatpush2.msra.mxu0 0.0
        %4677 = vmatprep.subr.mxu0 0.0
        %4678 = vmatpush2.msra.mxu0 0.0
        %4679 = vmatprep.subr.mxu0 0.0
        %4680 = vmatpush2.msra.mxu0 0.0
        %4681 = vmatprep.subr.mxu0 0.0
        %4682 = vmatpush2.msra.mxu0 0.0
        %4683 = vmatprep.subr.mxu0 0.0
        %4684 = vmatpush2.msra.mxu0 0.0
        %4685 = vmatprep.subr.mxu0 0.0
        %4686 = vmatpush2.msra.mxu0 0.0
        %4687 = vmatprep.subr.mxu0 0.0
        %4688 = vmatpush2.msra.mxu0 0.0
        %4689 = vmatprep.subr.mxu0 0.0
        %4690 = vmatpush2.msra.mxu0 0.0
        %4691 = vmatprep.subr.mxu0 0.0
        %4692 = vmatpush2.msra.mxu0 0.0
        %4693 = vmatprep.subr.mxu0 0.0
        %4694 = vmatpush2.msra.mxu0 0.0
        %4695 = vmatprep.subr.mxu0 0.0
        %4696 = vmatpush2.msra.mxu0 0.0
        %4697 = vmatprep.subr.mxu0 0.0
        %4698 = vmatpush2.msra.mxu0 0.0
        %4699 = vmatprep.subr.mxu0 0.0
        %4700 = vmatpush2.msra.mxu0 0.0
        %4701 = vmatprep.subr.mxu0 0.0
        %4702 = vmatpush2.msra.mxu0 0.0
        %4703 = vmatprep.subr.mxu0 0.0
        %4704 = vmatpush2.msra.mxu0 0.0
        %4705 = vmatprep.subr.mxu0 0.0
        %4706 = vmatpush2.msra.mxu0 0.0
        %4707 = vmatprep.mubr.f32.mxu0 0.0
        %4708 = vmatmul.mubr.f32.gmra.mxu0 %v4641
        %v4709 = vpop.f32.mrf.mxu0
        %v4710 = vadd.f32 0.0, %v4709
        %v4711 = vpop.f32.mrf.mxu0
        %4712 = vdwg.mxu0
        %s4713 = scalar_lea.vmem %s9, 56
        %v4714 = vld [vmem:[%s4713] sm:$0xff]
        %v4716 = vsel %vm877, %v4710, 0
        %4718 = vmatprep.subr.mxu0 0.0
        %4719 = vmatpush1.msra.mxu0 0.0
        %4720 = vmatprep.subr.mxu0 0.0
        %4721 = vmatpush1.msra.mxu0 0.0
        %4722 = vmatprep.subr.mxu0 0.0
        %4723 = vmatpush1.msra.mxu0 0.0
        %4724 = vmatprep.subr.mxu0 0.0
        %4725 = vmatpush1.msra.mxu0 0.0
        %4726 = vmatprep.subr.mxu0 0.0
        %4727 = vmatpush1.msra.mxu0 0.0
        %4728 = vmatprep.subr.mxu0 0.0
        %4729 = vmatpush1.msra.mxu0 0.0
        %4730 = vmatprep.subr.mxu0 0.0
        %4731 = vmatpush1.msra.mxu0 0.0
        %4732 = vmatprep.subr.mxu0 0.0
        %4733 = vmatpush1.msra.mxu0 0.0
        %4734 = vmatprep.subr.mxu0 0.0
        %4735 = vmatpush1.msra.mxu0 0.0
        %4736 = vmatprep.subr.mxu0 0.0
        %4737 = vmatpush1.msra.mxu0 0.0
        %4738 = vmatprep.subr.mxu0 0.0
        %4739 = vmatpush1.msra.mxu0 0.0
        %4740 = vmatprep.subr.mxu0 0.0
        %4741 = vmatpush1.msra.mxu0 0.0
        %4742 = vmatprep.subr.mxu0 0.0
        %4743 = vmatpush1.msra.mxu0 0.0
        %4744 = vmatprep.subr.mxu0 0.0
        %4745 = vmatpush1.msra.mxu0 0.0
        %4746 = vmatprep.subr.mxu0 0.0
        %4747 = vmatpush1.msra.mxu0 0.0
        %4748 = vmatprep.subr.mxu0 0.0
        %4749 = vmatpush1.msra.mxu0 %v4714
        %4750 = vmatprep.subr.mxu0 0.0
        %4751 = vmatpush2.msra.mxu0 0.0
        %4752 = vmatprep.subr.mxu0 0.0
        %4753 = vmatpush2.msra.mxu0 0.0
        %4754 = vmatprep.subr.mxu0 0.0
        %4755 = vmatpush2.msra.mxu0 0.0
        %4756 = vmatprep.subr.mxu0 0.0
        %4757 = vmatpush2.msra.mxu0 0.0
        %4758 = vmatprep.subr.mxu0 0.0
        %4759 = vmatpush2.msra.mxu0 0.0
        %4760 = vmatprep.subr.mxu0 0.0
        %4761 = vmatpush2.msra.mxu0 0.0
        %4762 = vmatprep.subr.mxu0 0.0
        %4763 = vmatpush2.msra.mxu0 0.0
        %4764 = vmatprep.subr.mxu0 0.0
        %4765 = vmatpush2.msra.mxu0 0.0
        %4766 = vmatprep.subr.mxu0 0.0
        %4767 = vmatpush2.msra.mxu0 0.0
        %4768 = vmatprep.subr.mxu0 0.0
        %4769 = vmatpush2.msra.mxu0 0.0
        %4770 = vmatprep.subr.mxu0 0.0
        %4771 = vmatpush2.msra.mxu0 0.0
        %4772 = vmatprep.subr.mxu0 0.0
        %4773 = vmatpush2.msra.mxu0 0.0
        %4774 = vmatprep.subr.mxu0 0.0
        %4775 = vmatpush2.msra.mxu0 0.0
        %4776 = vmatprep.subr.mxu0 0.0
        %4777 = vmatpush2.msra.mxu0 0.0
        %4778 = vmatprep.subr.mxu0 0.0
        %4779 = vmatpush2.msra.mxu0 0.0
        %4780 = vmatprep.subr.mxu0 0.0
        %4781 = vmatpush2.msra.mxu0 0.0
        %4782 = vmatprep.mubr.f32.mxu0 0.0
        %4783 = vmatmul.mubr.f32.gmra.mxu0 %v4716
        %v4784 = vpop.f32.mrf.mxu0
        %v4785 = vadd.f32 0.0, %v4784
        %v4786 = vpop.f32.mrf.mxu0
        %4787 = vdwg.mxu0
        %v4788 = vadd.f32 %v4302, %v4785
        %s4789 = scalar_lea.vmem %s10, 1
        %v4790 = vld [vmem:[%s4789] sm:$0x1]
        %v4792 = vlaneseq
        %v4793 = vshrl.u32 %v4792, 7
        %v4794 = vsub.s32 0, %v4793
        %v4795 = vrot.slane %v4790, %v4794
        %v4797 = vadd.f32 %v4788, %v4795
        %v4798 = vadd.f32 %v4797, %v2812
        %s4799 = scalar_lea.vmem %s11, 1
        %v4800 = vld [vmem:[%s4799] sm:$0x1]
        %s4801 = scalar_lea.vmem %s12, 1
        %v4802 = vld [vmem:[%s4801] sm:$0x1]
        %v4803 = vsel %vm602, %v4798, 0.0
        %4804 = vadd.xlane.f32.xlu0 %v4803
        %v4805 = vpop.xlane.xlu0 %4804
        %v4806 = vmul.f32 %v4805, %v606
        %v4807 = vsub.f32 %v4798, %v4806
        %v4808 = vmul.f32 %v4807, %v4807
        %v4809 = vsel %vm602, %v4808, 0.0
        %4810 = vadd.xlane.f32.xlu0 %v4809
        %v4811 = vpop.xlane.xlu0 %4810
        %v4812 = vmul.f32 %v4811, %v606
        %v4813 = vadd.f32 %v4812, 1e-05
        %v4814 = vrsqrt.pop %v4813
        %v4815 = vmul.f32 %v4807, %v4814
        %v4817 = vlaneseq
        %v4818 = vshrl.u32 %v4817, 7
        %v4819 = vsub.s32 0, %v4818
        %v4820 = vrot.slane %v4800, %v4819
        %v4822 = vmul.f32 %v4815, %v4820
        %v4824 = vlaneseq
        %v4825 = vshrl.u32 %v4824, 7
        %v4826 = vsub.s32 0, %v4825
        %v4827 = vrot.slane %v4802, %v4826
        %v4829 = vadd.f32 %v4822, %v4827
        %s4830 = scalar_lea.vmem %s13, 32
        %v4831 = vld [vmem:[%s4830] sm:$0xff]
        %v4832 = vld [vmem:[%s4830 + $0x8] sm:$0xff]
        %v4833 = vld [vmem:[%s4830 + $0x10] sm:$0xff]
        %v4834 = vld [vmem:[%s4830 + $0x18] sm:$0xff]
        %s4835 = scalar_lea.vmem %s14, 1
        %v4836 = vld [vmem:[%s4835] sm:$0x1]
        %v4838 = vlaneseq
        %v4839 = vshrl.u32 %v4838, 7
        %v4840 = vsub.s32 0, %v4839
        %v4841 = vrot.slane %v4836, %v4840
        %v4844 = vsel %vm602, %v4829, 0
        %4846 = vmatprep.subr.mxu0 0.0
        %4847 = vmatpush1.msra.mxu0 0.0
        %4848 = vmatprep.subr.mxu0 0.0
        %4849 = vmatpush1.msra.mxu0 0.0
        %4850 = vmatprep.subr.mxu0 0.0
        %4851 = vmatpush1.msra.mxu0 0.0
        %4852 = vmatprep.subr.mxu0 0.0
        %4853 = vmatpush1.msra.mxu0 0.0
        %4854 = vmatprep.subr.mxu0 0.0
        %4855 = vmatpush1.msra.mxu0 0.0
        %4856 = vmatprep.subr.mxu0 0.0
        %4857 = vmatpush1.msra.mxu0 0.0
        %4858 = vmatprep.subr.mxu0 0.0
        %4859 = vmatpush1.msra.mxu0 0.0
        %4860 = vmatprep.subr.mxu0 0.0
        %4861 = vmatpush1.msra.mxu0 0.0
        %4862 = vmatprep.subr.mxu0 0.0
        %4863 = vmatpush1.msra.mxu0 0.0
        %4864 = vmatprep.subr.mxu0 0.0
        %4865 = vmatpush1.msra.mxu0 0.0
        %4866 = vmatprep.subr.mxu0 0.0
        %4867 = vmatpush1.msra.mxu0 0.0
        %4868 = vmatprep.subr.mxu0 0.0
        %4869 = vmatpush1.msra.mxu0 0.0
        %4870 = vmatprep.subr.mxu0 0.0
        %4871 = vmatpush1.msra.mxu0 %v4834
        %4872 = vmatprep.subr.mxu0 0.0
        %4873 = vmatpush1.msra.mxu0 %v4833
        %4874 = vmatprep.subr.mxu0 0.0
        %4875 = vmatpush1.msra.mxu0 %v4832
        %4876 = vmatprep.subr.mxu0 0.0
        %4877 = vmatpush1.msra.mxu0 %v4831
        %4878 = vmatprep.subr.mxu0 0.0
        %4879 = vmatpush2.msra.mxu0 0.0
        %4880 = vmatprep.subr.mxu0 0.0
        %4881 = vmatpush2.msra.mxu0 0.0
        %4882 = vmatprep.subr.mxu0 0.0
        %4883 = vmatpush2.msra.mxu0 0.0
        %4884 = vmatprep.subr.mxu0 0.0
        %4885 = vmatpush2.msra.mxu0 0.0
        %4886 = vmatprep.subr.mxu0 0.0
        %4887 = vmatpush2.msra.mxu0 0.0
        %4888 = vmatprep.subr.mxu0 0.0
        %4889 = vmatpush2.msra.mxu0 0.0
        %4890 = vmatprep.subr.mxu0 0.0
        %4891 = vmatpush2.msra.mxu0 0.0
        %4892 = vmatprep.subr.mxu0 0.0
        %4893 = vmatpush2.msra.mxu0 0.0
        %4894 = vmatprep.subr.mxu0 0.0
        %4895 = vmatpush2.msra.mxu0 0.0
        %4896 = vmatprep.subr.mxu0 0.0
        %4897 = vmatpush2.msra.mxu0 0.0
        %4898 = vmatprep.subr.mxu0 0.0
        %4899 = vmatpush2.msra.mxu0 0.0
        %4900 = vmatprep.subr.mxu0 0.0
        %4901 = vmatpush2.msra.mxu0 0.0
        %4902 = vmatprep.subr.mxu0 0.0
        %4903 = vmatpush2.msra.mxu0 0.0
        %4904 = vmatprep.subr.mxu0 0.0
        %4905 = vmatpush2.msra.mxu0 0.0
        %4906 = vmatprep.subr.mxu0 0.0
        %4907 = vmatpush2.msra.mxu0 0.0
        %4908 = vmatprep.subr.mxu0 0.0
        %4909 = vmatpush2.msra.mxu0 0.0
        %4910 = vmatprep.mubr.f32.mxu0 0.0
        %4911 = vmatmul.mubr.f32.gmra.mxu0 %v4844
        %v4912 = vpop.f32.mrf.mxu0
        %v4913 = vadd.f32 %v4841, %v4912
        %v4914 = vpop.f32.mrf.mxu0
        %4915 = vdwg.mxu0
        %v4916 = vmul.f32 %v4913, 0.5
        %v4917 = vmul.f32 %v4913, 0.70710677
        %vm4918 = vcmp.ge.f32.partialorder %v4917, 0.0
        %v4919 = vsel %vm4918, 1.0, -1.0
        %v4920 = vand.u32 2147483647, %v4917
        %v4921 = vmul.f32 %v4920, 0.3275911
        %v4922 = vadd.f32 %v4921, 1.0
        %v4923 = vrcp.pop %v4922
        %v4924 = vmul.f32 1.0, %v4923
        %v4925 = vmul.f32 %v4924, 1.0614054
        %v4926 = vadd.f32 %v4925, -1.4531521
        %v4927 = vmul.f32 %v4926, %v4924
        %v4928 = vadd.f32 %v4927, 1.4214138
        %v4929 = vmul.f32 %v4928, %v4924
        %v4930 = vadd.f32 %v4929, -0.28449672
        %v4931 = vmul.f32 %v4930, %v4924
        %v4932 = vadd.f32 %v4931, 0.2548296
        %v4933 = vmul.f32 %v4932, %v4924
        %v4934 = vsub.f32 0.0, %v4920
        %v4935 = vmul.f32 %v4934, %v4920
        %v4936 = vmul.f32 %v4935, 1.442695
        %v4937 = vpow.pop %v4936
        %v4938 = vmul.f32 %v4933, %v4937
        %v4939 = vsub.f32 1.0, %v4938
        %v4940 = vmul.f32 %v4919, %v4939
        %v4941 = vadd.f32 %v4940, 1.0
        %v4942 = vmul.f32 %v4916, %v4941
        %s4943 = scalar_lea.vmem %s15, 128
        %v4944 = vld [vmem:[%s4943] sm:$0xff]
        %v4945 = vld [vmem:[%s4943 + $0x8] sm:$0xff]
        %v4946 = vld [vmem:[%s4943 + $0x10] sm:$0xff]
        %v4947 = vld [vmem:[%s4943 + $0x18] sm:$0xff]
        %v4948 = vld [vmem:[%s4943 + $0x20] sm:$0xff]
        %v4949 = vld [vmem:[%s4943 + $0x28] sm:$0xff]
        %v4950 = vld [vmem:[%s4943 + $0x30] sm:$0xff]
        %v4951 = vld [vmem:[%s4943 + $0x38] sm:$0xff]
        %v4952 = vld [vmem:[%s4943 + $0x40] sm:$0xff]
        %v4953 = vld [vmem:[%s4943 + $0x48] sm:$0xff]
        %v4954 = vld [vmem:[%s4943 + $0x50] sm:$0xff]
        %v4955 = vld [vmem:[%s4943 + $0x58] sm:$0xff]
        %v4956 = vld [vmem:[%s4943 + $0x60] sm:$0xff]
        %v4957 = vld [vmem:[%s4943 + $0x68] sm:$0xff]
        %v4958 = vld [vmem:[%s4943 + $0x70] sm:$0xff]
        %v4959 = vld [vmem:[%s4943 + $0x78] sm:$0xff]
        %s4960 = scalar_lea.vmem %s16, 1
        %v4961 = vld [vmem:[%s4960] sm:$0x1]
        %v4963 = vlaneseq
        %v4964 = vshrl.u32 %v4963, 7
        %v4965 = vsub.s32 0, %v4964
        %v4966 = vrot.slane %v4961, %v4965
        %4968 = vmatprep.subr.mxu0 0.0
        %4969 = vmatpush1.msra.mxu0 %v4959
        %4970 = vmatprep.subr.mxu0 0.0
        %4971 = vmatpush1.msra.mxu0 %v4958
        %4972 = vmatprep.subr.mxu0 0.0
        %4973 = vmatpush1.msra.mxu0 %v4957
        %4974 = vmatprep.subr.mxu0 0.0
        %4975 = vmatpush1.msra.mxu0 %v4956
        %4976 = vmatprep.subr.mxu0 0.0
        %4977 = vmatpush1.msra.mxu0 %v4955
        %4978 = vmatprep.subr.mxu0 0.0
        %4979 = vmatpush1.msra.mxu0 %v4954
        %4980 = vmatprep.subr.mxu0 0.0
        %4981 = vmatpush1.msra.mxu0 %v4953
        %4982 = vmatprep.subr.mxu0 0.0
        %4983 = vmatpush1.msra.mxu0 %v4952
        %4984 = vmatprep.subr.mxu0 0.0
        %4985 = vmatpush1.msra.mxu0 %v4951
        %4986 = vmatprep.subr.mxu0 0.0
        %4987 = vmatpush1.msra.mxu0 %v4950
        %4988 = vmatprep.subr.mxu0 0.0
        %4989 = vmatpush1.msra.mxu0 %v4949
        %4990 = vmatprep.subr.mxu0 0.0
        %4991 = vmatpush1.msra.mxu0 %v4948
        %4992 = vmatprep.subr.mxu0 0.0
        %4993 = vmatpush1.msra.mxu0 %v4947
        %4994 = vmatprep.subr.mxu0 0.0
        %4995 = vmatpush1.msra.mxu0 %v4946
        %4996 = vmatprep.subr.mxu0 0.0
        %4997 = vmatpush1.msra.mxu0 %v4945
        %4998 = vmatprep.subr.mxu0 0.0
        %4999 = vmatpush1.msra.mxu0 %v4944
        %5000 = vmatprep.subr.mxu0 0.0
        %5001 = vmatpush2.msra.mxu0 0.0
        %5002 = vmatprep.subr.mxu0 0.0
        %5003 = vmatpush2.msra.mxu0 0.0
        %5004 = vmatprep.subr.mxu0 0.0
        %5005 = vmatpush2.msra.mxu0 0.0
        %5006 = vmatprep.subr.mxu0 0.0
        %5007 = vmatpush2.msra.mxu0 0.0
        %5008 = vmatprep.subr.mxu0 0.0
        %5009 = vmatpush2.msra.mxu0 0.0
        %5010 = vmatprep.subr.mxu0 0.0
        %5011 = vmatpush2.msra.mxu0 0.0
        %5012 = vmatprep.subr.mxu0 0.0
        %5013 = vmatpush2.msra.mxu0 0.0
        %5014 = vmatprep.subr.mxu0 0.0
        %5015 = vmatpush2.msra.mxu0 0.0
        %5016 = vmatprep.subr.mxu0 0.0
        %5017 = vmatpush2.msra.mxu0 0.0
        %5018 = vmatprep.subr.mxu0 0.0
        %5019 = vmatpush2.msra.mxu0 0.0
        %5020 = vmatprep.subr.mxu0 0.0
        %5021 = vmatpush2.msra.mxu0 0.0
        %5022 = vmatprep.subr.mxu0 0.0
        %5023 = vmatpush2.msra.mxu0 0.0
        %5024 = vmatprep.subr.mxu0 0.0
        %5025 = vmatpush2.msra.mxu0 0.0
        %5026 = vmatprep.subr.mxu0 0.0
        %5027 = vmatpush2.msra.mxu0 0.0
        %5028 = vmatprep.subr.mxu0 0.0
        %5029 = vmatpush2.msra.mxu0 0.0
        %5030 = vmatprep.subr.mxu0 0.0
        %5031 = vmatpush2.msra.mxu0 0.0
        %5032 = vmatprep.mubr.f32.mxu0 0.0
        %5033 = vmatmul.mubr.f32.gmra.mxu0 %v4942
        %v5034 = vpop.f32.mrf.mxu0
        %v5035 = vadd.f32 %v4966, %v5034
        %v5036 = vpop.f32.mrf.mxu0
        %5037 = vdwg.mxu0
        %v5038 = vadd.f32 %v5035, %v4798
        %v5039 = vld [vmem:[%s17] sm:$0x1]
        %v5040 = vld [vmem:[%s18] sm:$0x1]
        %v5041 = vsel %vm602, %v5038, 0.0
        %5042 = vadd.xlane.f32.xlu0 %v5041
        %v5043 = vpop.xlane.xlu0 %5042
        %v5044 = vmul.f32 %v5043, %v606
        %v5045 = vsub.f32 %v5038, %v5044
        %v5046 = vmul.f32 %v5045, %v5045
        %v5047 = vsel %vm602, %v5046, 0.0
        %5048 = vadd.xlane.f32.xlu0 %v5047
        %v5049 = vpop.xlane.xlu0 %5048
        %v5050 = vmul.f32 %v5049, %v606
        %v5051 = vadd.f32 %v5050, 1e-06
        %v5052 = vrsqrt.pop %v5051
        %v5053 = vmul.f32 %v5045, %v5052
        %v5055 = vlaneseq
        %v5056 = vshrl.u32 %v5055, 7
        %v5057 = vsub.s32 0, %v5056
        %v5058 = vrot.slane %v5039, %v5057
        %v5060 = vmul.f32 %v5053, %v5058
        %v5062 = vlaneseq
        %v5063 = vshrl.u32 %v5062, 7
        %v5064 = vsub.s32 0, %v5063
        %v5065 = vrot.slane %v5040, %v5064
        %v5067 = vadd.f32 %v5060, %v5065
        %5068 = vst.msk [vmem:[%s593] sm:$0xff] %vm602, %v5067
        %s5069 = sand.u32 %s445, 1
        %s5070 = scalar_lea.sflag [#allocation3], %s5069
        %s5071 = sand.u32 %s445, 1
        %s5072 = smul.addr %s5071, 8
        %s5073 = scalar_lea.vmem [#allocation2], %s5072
        // Predicated region
        $region97: #{flash_transformer_forward.1} parent=95 // pred_check
          %p5074 = pneg %p455
        $region98: #{flash_transformer_forward.1} parent=95 // pred_check_branch
          %5076 = sbr.rel (%p5074) target = $region100
        $region99: #{flash_transformer_forward.1} parent=95 // pred_region
          %s5078 = ssub.s32 128, 128
          %5079 = vsyncadd %s5070, %s5078
          %s5080 = smul.addr %s33, 128
          %s5081 = scalar_lea.hbm %s19, %s5080
          %s5083 = sshll.u32 %s5073, 4
          %s5084 = int_to_ptr.vmem [resolvable:$true] %s5083
          %5086 = dma.vmem_to_hbm [thread:$0]  %s5084, 128, %s5081, %s5070
        $region100: #{flash_transformer_forward.1} parent=95 // pred_fallthru
          _
      $region96: #{flash_transformer_forward.1} parent=5 // pred_fallthru
        _
      %p5087 = scmp.le.s32.totalorder 2, %s28
      // Predicated region
      $region101: #{flash_transformer_forward.1} parent=5 // pred_check
        %p5088 = pneg %p5087
      $region102: #{flash_transformer_forward.1} parent=5 // pred_check_branch
        %5090 = sbr.rel (%p5088) target = $region104
      $region103: #{flash_transformer_forward.1} parent=5 // pred_region
        %s5091 = ssub.s32 %s28, 2
        // Predicated region
        $region105: #{flash_transformer_forward.1} parent=103 // pred_check
          %p5092 = pneg %p461
        $region106: #{flash_transformer_forward.1} parent=103 // pred_check_branch
          %5094 = sbr.rel (%p5092) target = $region108
        $region107: #{flash_transformer_forward.1} parent=103 // pred_region
          %s5095 = sand.u32 %s446, 1
          %s5096 = scalar_lea.sflag [#allocation3], %s5095
          %s5097 = sand.u32 %s446, 1
          %s5098 = smul.addr %s5097, 8
          %s5099 = scalar_lea.vmem [#allocation2], %s5098
          %5100 = dma.done %s5096, 128
        $region108: #{flash_transformer_forward.1} parent=103 // pred_fallthru
          _
      $region104: #{flash_transformer_forward.1} parent=5 // pred_fallthru
        _
    $region6: #{flash_transformer_forward.1} parent=1 // loop_footer
      %s32 = sadd.s32 1, %s28
    $region7: #{flash_transformer_forward.1} parent=1 // loop_footer_branch
      %27 = sbr.rel target = $region3
    $region8: #{flash_transformer_forward.1} parent=1 // loop_exit
      _
    %5101 = vsyncpa [#allocation3], 1
    %s5102 = scalar_lea.sflag [#allocation3], 1
    %5103 = vsyncpa %s5102, 1

</llo_original>
